<compile_context>
chip_gen: v7x
topology: tpu7x:2x2x1
jax: 0.10.0
libtpu: 0.0.40
codegen_flags: <defaults>
</compile_context>

<pallas_src>
import functools
import math

import numpy as np
import jax
import jax.numpy as jnp
from jax.experimental import pallas as pl
from jax.experimental.pallas import tpu as pltpu


# ----------------------------------------------------------------------------
# Elementwise helpers (in-kernel only)
# ----------------------------------------------------------------------------
def _erf(x):
    # Abramowitz & Stegun 7.1.26 rational approximation (|err| < 1.5e-7):
    # elementwise VPU ops + one EUP exp.
    a1, a2, a3, a4, a5 = 0.254829592, -0.284496736, 1.421413741, -1.453152027, 1.061405429
    p = 0.3275911
    sign = jnp.where(x >= 0.0, 1.0, -1.0)
    ax = jnp.abs(x)
    t = 1.0 / (1.0 + p * ax)
    poly = ((((a5 * t + a4) * t + a3) * t + a2) * t + a1) * t
    return sign * (1.0 - poly * jnp.exp(-ax * ax))


def _gelu(x):
    # exact (erf-based) GELU, matching torch.nn.GELU() default
    return 0.5 * x * (1.0 + _erf(x * 0.7071067811865475))


# ----------------------------------------------------------------------------
# In-kernel building blocks.  Channel-major layout: activations are (C, N) with
# N = Bt * H * W tokens on the lane axis (token t of image b is lane b*H*W + t_local).
# ----------------------------------------------------------------------------
def _edge_masks(N, H, W):
    """(1, N) float masks marking whether a (dy,dx) neighbour of each token lies inside
    the same image (images are stacked contiguously along the lane/token axis)."""
    t = jax.lax.broadcasted_iota(jnp.int32, (1, N), 1)
    ti = jnp.bitwise_and(t, H * W - 1)          # token index within its image (H*W power of 2)
    col = jnp.bitwise_and(ti, W - 1)            # column within the row (W power of 2)
    f32 = jnp.float32
    left = (col >= 1).astype(f32)               # dx = -1 valid
    right = (col <= W - 2).astype(f32)          # dx = +1 valid
    top = (ti >= W).astype(f32)                 # dy = -1 valid  (row >= 1)
    bot = (ti < (H - 1) * W).astype(f32)        # dy = +1 valid  (row <= H-2)
    return left, right, top, bot


def _shift_tokens(xT, d):
    """xT[:, t] -> xT[:, t + d] via an XLU lane rotation (callers mask wrapped lanes)."""
    if d == 0:
        return xT
    n = xT.shape[1]
    return pltpu.roll(xT, (-d) % n, axis=1)


def _conv3x3(xT, W, masks, tap_term):
    """3x3 'same' conv in channel-major layout.  xT: (Cin, N).  tap_term(k, tap) returns
    the contribution of tap k; out-of-image (and cross-image) taps are zeroed by masks."""
    left, right, top, bot = masks
    acc = None
    for dy in (-1, 0, 1):
        for dx in (-1, 0, 1):
            tap = _shift_tokens(xT, dy * W + dx)
            m = None
            if dy == -1:
                m = top
            elif dy == 1:
                m = bot
            if dx == -1:
                m = left if m is None else m * left
            elif dx == 1:
                m = right if m is None else m * right
            if m is not None:
                tap = tap * m
            term = tap_term((dy + 1) * 3 + (dx + 1), tap)
            acc = term if acc is None else acc + term
    return acc


def _window_max(xT, W):
    """Max over the 2x2 window anchored at every token.  Only even-row/even-col anchors
    are kept by the pooling selection matmul, so wrapped / cross-image values at other
    anchors are discarded there."""
    return jnp.maximum(jnp.maximum(xT, _shift_tokens(xT, 1)),
                       jnp.maximum(_shift_tokens(xT, W), _shift_tokens(xT, W + 1)))


def _per_image_matmul(xT, sel_ref, n_img, lin):
    """Apply a per-image (lin, lout) 0/1 selection matrix (pool corner pick / nearest
    upsample) to a channel-major (C, n_img*lin) activation -> (C, n_img*lout)."""
    sel = sel_ref[...]
    pieces = [jnp.dot(xT[:, b * lin:(b + 1) * lin], sel,
                      preferred_element_type=jnp.float32) for b in range(n_img)]
    return jnp.concatenate(pieces, axis=1) if n_img > 1 else pieces[0]


# ----------------------------------------------------------------------------
# The fused kernel (one grid step == Bt images)
# ----------------------------------------------------------------------------
def _fused_vqae_kernel(Bt, H, W,
                       x_ref, w1_ref, b1_ref, w2_ref, b2_ref, w3_ref, b3_ref,
                       w4_ref, b4_ref, cb_ref, cbt_ref, cbsq_ref,
                       p1t_ref, p2t_ref, u1t_ref, u2t_ref,
                       out_ref, idx_ref, loss_ref):
    f32 = jnp.float32
    H2, W2, H4, W4 = H // 2, W // 2, H // 4, W // 4
    N1, N2, N4 = Bt * H * W, Bt * H2 * W2, Bt * H4 * W4
    masks1 = _edge_masks(N1, H, W)
    masks2 = _edge_masks(N2, H2, W2)

    # ------------------------------- encoder -------------------------------
    x0 = x_ref[0]                                                     # (1, N1), single channel
    # Conv2d(1, 16): 9 broadcast FMAs (VPU) -- no MXU underfill for Cin=1
    y = _conv3x3(x0, W, masks1,
                 lambda k, tap: w1_ref[:, k:k + 1] * tap) + b1_ref[...]       # (16, N1)
    y = _window_max(y, W)                                             # MaxPool2d(2) windows
    y = _per_image_matmul(y, p1t_ref, Bt, H * W)                      # keep even corners (16, N2)
    y = _gelu(y)                                                      # GELU
    # Conv2d(16, 32): 9 accumulated tap matmuls (no im2col packing)
    y = _conv3x3(y, W2, masks2,
                 lambda k, tap: jnp.dot(w2_ref[k], tap,
                                        preferred_element_type=f32)) + b2_ref[...]  # (32, N2)
    y = _window_max(y, W2)                                            # MaxPool2d(2)
    xq = _per_image_matmul(y, p2t_ref, Bt, H2 * W2)                   # (32, N4)

    # ---------------------------- VectorQuantize ----------------------------
    K = cb_ref.shape[0]
    dots = jnp.dot(cb_ref[...], xq, preferred_element_type=f32)       # e . x       (K, N4)
    score = cbsq_ref[...] - 2.0 * dots                                # ||x-e||^2 - ||x||^2
    smin = jnp.min(score, axis=0, keepdims=True)                      # (1, N4)
    riter = jax.lax.broadcasted_iota(jnp.int32, (K, N4), 0).astype(f32)
    idx = jnp.min(jnp.where(score <= smin, riter, float(K)),
                  axis=0, keepdims=True)                              # first argmin, (1, N4)
    idx_ref[0] = idx.astype(jnp.int32)                                # lane-dense index row
    onehot = (riter == idx).astype(f32)                               # (K, N4)
    q = jnp.dot(cbt_ref[...], onehot, preferred_element_type=f32)     # codebook gather (32, N4)
    diff = q - xq                                   # commit loss: mse(quantize.detach(), x)
    loss_ref[0] = jnp.sum(jnp.sum(diff * diff, axis=0, keepdims=True),
                          axis=1, keepdims=True)                      # per-step sum

    # ------------------------------- decoder -------------------------------
    y = _per_image_matmul(q, u1t_ref, Bt, H4 * W4)                    # Upsample x2 -> (32, N2)
    y = _gelu(_conv3x3(y, W2, masks2,
                       lambda k, tap: jnp.dot(w3_ref[k], tap,
                                              preferred_element_type=f32)) + b3_ref[...])  # (16, N2)
    y = _per_image_matmul(y, u2t_ref, Bt, H2 * W2)                    # Upsample x2 -> (16, N1)
    # Conv2d(16, 1): per-channel FMAs then a single sublane reduction
    y = _conv3x3(y, W, masks1, lambda k, tap: w4_ref[:, k:k + 1] * tap)       # (16, N1)
    y = jnp.sum(y, axis=0, keepdims=True) + b4_ref[...]               # (1, N1)
    out_ref[0] = jnp.clip(y, -1.0, 1.0)                               # clamp(-1, 1)


# ----------------------------------------------------------------------------
# Parameter preparation (runs once, OUTSIDE the jitted forward)
# ----------------------------------------------------------------------------
def _pool_select_t(h, w):
    """Transposed 0/1 selection keeping the 2x2 window max anchored at even (row, col):
    shape (h*w, (h//2)*(w//2)), applied as  x_T @ P_T  in channel-major layout."""
    ho, wo = h // 2, w // 2
    P = np.zeros((h * w, ho * wo), np.float32)
    for ph in range(ho):
        for pw in range(wo):
            P[(2 * ph) * w + 2 * pw, ph * wo + pw] = 1.0
    return P


def _up_select_t(h, w):
    """Transposed nearest-neighbour x2 upsample selection: shape (h*w, 4*h*w)."""
    ho, wo = 2 * h, 2 * w
    U = np.zeros((h * w, ho * wo), np.float32)
    for oh in range(ho):
        for ow in range(wo):
            U[(oh // 2) * w + (ow // 2), oh * wo + ow] = 1.0
    return U


def init_params(key, codebook_size=64, dim=32):
    ks = jax.random.split(key, 5)

    def conv_init(k, cin, cout):
        bound = 1.0 / math.sqrt(cin * 9)
        kw, kb = jax.random.split(k)
        w = jax.random.uniform(kw, (3, 3, cin, cout), jnp.float32, -bound, bound)  # HWIO
        b = jax.random.uniform(kb, (cout,), jnp.float32, -bound, bound)
        return w, b

    w1, b1 = conv_init(ks[0], 1, 16)
    w2, b2 = conv_init(ks[1], 16, 32)
    w3, b3 = conv_init(ks[2], 32, 16)
    w4, b4 = conv_init(ks[3], 16, 1)
    codebook = jax.random.normal(ks[4], (codebook_size, dim), jnp.float32)
    return dict(w1=w1, b1=b1, w2=w2, b2=b2, w3=w3, b3=b3, w4=w4, b4=b4,
                codebook=codebook)


def prepare_params(params, H=16, W=16):
    """Pre-transpose conv weights to channel-major matmul layout, pre-compute codebook
    norms and the constant pool/upsample selection matrices (once, outside the jit)."""
    cb = params["codebook"].astype(jnp.float32)
    c1 = params["w1"].shape[-1]
    c2 = params["w2"].shape[-1]
    c3 = params["w3"].shape[-1]
    return dict(
        w1=params["w1"].reshape(9, c1).T.astype(jnp.float32),                       # (16, 9)
        b1=params["b1"].reshape(-1, 1).astype(jnp.float32),                         # (16, 1)
        w2=params["w2"].reshape(9, params["w2"].shape[2], c2)
                       .transpose(0, 2, 1).astype(jnp.float32),                     # (9, 32, 16)
        b2=params["b2"].reshape(-1, 1).astype(jnp.float32),                         # (32, 1)
        w3=params["w3"].reshape(9, params["w3"].shape[2], c3)
                       .transpose(0, 2, 1).astype(jnp.float32),                     # (9, 16, 32)
        b3=params["b3"].reshape(-1, 1).astype(jnp.float32),                         # (16, 1)
        w4=params["w4"].reshape(9, params["w4"].shape[2]).T.astype(jnp.float32),    # (16, 9)
        b4=params["b4"].reshape(1, 1).astype(jnp.float32),                          # (1, 1)
        codebook=cb,                                                                # (K, 32)
        codebook_t=cb.T,                                                            # (32, K)
        cb_sq=jnp.sum(cb * cb, axis=1, keepdims=True),                              # (K, 1)
        pool1_t=jnp.asarray(_pool_select_t(H, W)),                                  # (HW, HW/4)
        pool2_t=jnp.asarray(_pool_select_t(H // 2, W // 2)),
        up1_t=jnp.asarray(_up_select_t(H // 4, W // 4)),
        up2_t=jnp.asarray(_up_select_t(H // 2, W // 2)),
    )


# ----------------------------------------------------------------------------
# Forward: mirrors SimpleVQAutoEncoder.forward -> (x.clamp(-1,1), indices, commit_loss)
# ----------------------------------------------------------------------------
def simple_vq_autoencoder_forward(x_nchw, prep, images_per_step=4):
    B, C, H, W = x_nchw.shape
    assert C == 1
    assert H % 4 == 0 and W % 4 == 0
    assert (H & (H - 1)) == 0 and (W & (W - 1)) == 0      # masks use power-of-two H, W
    Bt = min(images_per_step, B)
    assert B % Bt == 0
    G = B // Bt
    HW = H * W
    HW4 = (H // 4) * (W // 4)
    N1, N4 = Bt * HW, Bt * HW4
    Cd = prep["codebook"].shape[1]

    # NCHW (C=1) -> (grid step, 1, Bt*H*W): lane-dense token rows, pure reshape.
    x_rows = x_nchw.reshape(G, 1, N1).astype(jnp.float32)

    kernel = functools.partial(_fused_vqae_kernel, Bt, H, W)

    def _full(shape):
        return pl.BlockSpec(shape, lambda g, _s=len(shape): (0,) * _s)

    out, idx, loss_part = pl.pallas_call(
        kernel,
        out_shape=(
            jax.ShapeDtypeStruct((G, 1, N1), jnp.float32),
            jax.ShapeDtypeStruct((G, 1, N4), jnp.int32),
            jax.ShapeDtypeStruct((G, 1, 1), jnp.float32),
        ),
        grid=(G,),
        in_specs=[
            pl.BlockSpec((1, 1, N1), lambda g: (g, 0, 0)),
            _full(prep["w1"].shape), _full(prep["b1"].shape),
            _full(prep["w2"].shape), _full(prep["b2"].shape),
            _full(prep["w3"].shape), _full(prep["b3"].shape),
            _full(prep["w4"].shape), _full(prep["b4"].shape),
            _full(prep["codebook"].shape), _full(prep["codebook_t"].shape),
            _full(prep["cb_sq"].shape),
            _full(prep["pool1_t"].shape), _full(prep["pool2_t"].shape),
            _full(prep["up1_t"].shape), _full(prep["up2_t"].shape),
        ],
        out_specs=(
            pl.BlockSpec((1, 1, N1), lambda g: (g, 0, 0)),
            pl.BlockSpec((1, 1, N4), lambda g: (g, 0, 0)),
            pl.BlockSpec((1, 1, 1), lambda g: (g, 0, 0)),
        ),
        compiler_params=pltpu.CompilerParams(
            dimension_semantics=("parallel",),
            vmem_limit_bytes=32 * 1024 * 1024),
    )(x_rows, prep["w1"], prep["b1"], prep["w2"], prep["b2"],
      prep["w3"], prep["b3"], prep["w4"], prep["b4"],
      prep["codebook"], prep["codebook_t"], prep["cb_sq"],
      prep["pool1_t"], prep["pool2_t"], prep["up1_t"], prep["up2_t"])

    recon = out.reshape(B, 1, H, W)                                   # token rows -> NCHW (C=1)
    indices = idx.reshape(B, HW4)                                     # 'b (h w)'
    commit_loss = (jnp.sum(loss_part) / (B * HW4 * Cd)).reshape(1)    # mse * commitment_weight(=1)
    return recon, indices, commit_loss


# TODO(synk): training-time VQ state mutation (EMA codebook update, code expiry, kmeans
# init) has no place in a pure forward kernel and is not implemented.

if __name__ == "__main__":
    key = jax.random.PRNGKey(0)
    k_in, k_par = jax.random.split(key)
    B, H, W = 8, 16, 16                                               # MNIST-style, 2 grid steps
    x = jax.random.normal(k_in, (B, 1, H, W), jnp.float32)            # NCHW
    params = init_params(k_par, codebook_size=64, dim=32)
    prep = prepare_params(params, H=H, W=W)                           # outside the jit

    fwd = jax.jit(simple_vq_autoencoder_forward)
    out, indices, commit_loss = fwd(x, prep)
    jax.block_until_ready((out, indices, commit_loss))

    assert out.shape == (B, 1, H, W) and out.dtype == jnp.float32
    assert indices.shape == (B, 16) and indices.dtype == jnp.int32
    assert commit_loss.shape == (1,)
    assert float(jnp.max(jnp.abs(out))) <= 1.0 + 1e-6
    assert int(jnp.min(indices)) >= 0 and int(jnp.max(indices)) < 64
    print("KERNEL_OK")
</pallas_src>

<mosaic_0001>
module attributes {stable_mosaic.version = 11 : i64} {
  func.func @_fused_vqae_kernel(%arg0: i32, %arg1: memref<1x1x1024xf32, #tpu.memory_space<vmem>>, %arg2: memref<16x9xf32, #tpu.memory_space<vmem>>, %arg3: memref<16x1xf32, #tpu.memory_space<vmem>>, %arg4: memref<9x32x16xf32, #tpu.memory_space<vmem>>, %arg5: memref<32x1xf32, #tpu.memory_space<vmem>>, %arg6: memref<9x16x32xf32, #tpu.memory_space<vmem>>, %arg7: memref<16x1xf32, #tpu.memory_space<vmem>>, %arg8: memref<16x9xf32, #tpu.memory_space<vmem>>, %arg9: memref<1x1xf32, #tpu.memory_space<vmem>>, %arg10: memref<64x32xf32, #tpu.memory_space<vmem>>, %arg11: memref<32x64xf32, #tpu.memory_space<vmem>>, %arg12: memref<64x1xf32, #tpu.memory_space<vmem>>, %arg13: memref<256x64xf32, #tpu.memory_space<vmem>>, %arg14: memref<64x16xf32, #tpu.memory_space<vmem>>, %arg15: memref<16x64xf32, #tpu.memory_space<vmem>>, %arg16: memref<64x256xf32, #tpu.memory_space<vmem>>, %arg17: memref<1x1x1024xf32, #tpu.memory_space<vmem>>, %arg18: memref<1x1x64xi32, #tpu.memory_space<vmem>>, %arg19: memref<1x1x1xf32, #tpu.memory_space<vmem>>) attributes {dimension_semantics = [#tpu.dimension_semantics<parallel>], iteration_bounds = array<i64: 2>, scalar_prefetch = 0 : i64, scratch_operands = 0 : i64, tpu.core_type = #tpu.core_type<tc>, window_params = [{transform_indices = @transform_0, window_bounds = array<i64: 1, 1, 1024>}, {pipeline_mode = #tpu.pipeline_mode<synchronous>, transform_indices = @transform_1, window_bounds = array<i64: 16, 9>}, {pipeline_mode = #tpu.pipeline_mode<synchronous>, transform_indices = @transform_2, window_bounds = array<i64: 16, 1>}, {pipeline_mode = #tpu.pipeline_mode<synchronous>, transform_indices = @transform_3, window_bounds = array<i64: 9, 32, 16>}, {pipeline_mode = #tpu.pipeline_mode<synchronous>, transform_indices = @transform_4, window_bounds = array<i64: 32, 1>}, {pipeline_mode = #tpu.pipeline_mode<synchronous>, transform_indices = @transform_5, window_bounds = array<i64: 9, 16, 32>}, {pipeline_mode = #tpu.pipeline_mode<synchronous>, transform_indices = @transform_6, window_bounds = array<i64: 16, 1>}, {pipeline_mode = #tpu.pipeline_mode<synchronous>, transform_indices = @transform_7, window_bounds = array<i64: 16, 9>}, {pipeline_mode = #tpu.pipeline_mode<synchronous>, transform_indices = @transform_8, window_bounds = array<i64: 1, 1>}, {pipeline_mode = #tpu.pipeline_mode<synchronous>, transform_indices = @transform_9, window_bounds = array<i64: 64, 32>}, {pipeline_mode = #tpu.pipeline_mode<synchronous>, transform_indices = @transform_10, window_bounds = array<i64: 32, 64>}, {pipeline_mode = #tpu.pipeline_mode<synchronous>, transform_indices = @transform_11, window_bounds = array<i64: 64, 1>}, {pipeline_mode = #tpu.pipeline_mode<synchronous>, transform_indices = @transform_12, window_bounds = array<i64: 256, 64>}, {pipeline_mode = #tpu.pipeline_mode<synchronous>, transform_indices = @transform_13, window_bounds = array<i64: 64, 16>}, {pipeline_mode = #tpu.pipeline_mode<synchronous>, transform_indices = @transform_14, window_bounds = array<i64: 16, 64>}, {pipeline_mode = #tpu.pipeline_mode<synchronous>, transform_indices = @transform_15, window_bounds = array<i64: 64, 256>}, {transform_indices = @transform_16, window_bounds = array<i64: 1, 1, 1024>}, {transform_indices = @transform_17, window_bounds = array<i64: 1, 1, 64>}, {transform_indices = @transform_18, window_bounds = array<i64: 1, 1, 1>}]} {
    %0 = tpu.iota {dimensions = array<i32: 1>} : vector<1x1024xi32>
    %c255_i32 = arith.constant 255 : i32
    %1 = vector.broadcast %c255_i32 : i32 to vector<1x1024xi32>
    %2 = arith.andi %0, %1 : vector<1x1024xi32>
    %c15_i32 = arith.constant 15 : i32
    %3 = vector.broadcast %c15_i32 : i32 to vector<1x1024xi32>
    %4 = arith.andi %2, %3 : vector<1x1024xi32>
    %c1_i32 = arith.constant 1 : i32
    %5 = vector.broadcast %c1_i32 : i32 to vector<1x1024xi32>
    %6 = arith.cmpi sge, %4, %5 : vector<1x1024xi32>
    %7 = arith.extui %6 : vector<1x1024xi1> to vector<1x1024xi32>
    %8 = arith.sitofp %7 : vector<1x1024xi32> to vector<1x1024xf32>
    %c14_i32 = arith.constant 14 : i32
    %9 = vector.broadcast %c14_i32 : i32 to vector<1x1024xi32>
    %10 = arith.cmpi sle, %4, %9 : vector<1x1024xi32>
    %11 = arith.extui %10 : vector<1x1024xi1> to vector<1x1024xi32>
    %12 = arith.sitofp %11 : vector<1x1024xi32> to vector<1x1024xf32>
    %c16_i32 = arith.constant 16 : i32
    %13 = vector.broadcast %c16_i32 : i32 to vector<1x1024xi32>
    %14 = arith.cmpi sge, %2, %13 : vector<1x1024xi32>
    %15 = arith.extui %14 : vector<1x1024xi1> to vector<1x1024xi32>
    %16 = arith.sitofp %15 : vector<1x1024xi32> to vector<1x1024xf32>
    %c240_i32 = arith.constant 240 : i32
    %17 = vector.broadcast %c240_i32 : i32 to vector<1x1024xi32>
    %18 = arith.cmpi slt, %2, %17 : vector<1x1024xi32>
    %19 = arith.extui %18 : vector<1x1024xi1> to vector<1x1024xi32>
    %20 = arith.sitofp %19 : vector<1x1024xi32> to vector<1x1024xf32>
    %21 = tpu.iota {dimensions = array<i32: 1>} : vector<1x256xi32>
    %c63_i32 = arith.constant 63 : i32
    %22 = vector.broadcast %c63_i32 : i32 to vector<1x256xi32>
    %23 = arith.andi %21, %22 : vector<1x256xi32>
    %c7_i32 = arith.constant 7 : i32
    %24 = vector.broadcast %c7_i32 : i32 to vector<1x256xi32>
    %25 = arith.andi %23, %24 : vector<1x256xi32>
    %c1_i32_0 = arith.constant 1 : i32
    %26 = vector.broadcast %c1_i32_0 : i32 to vector<1x256xi32>
    %27 = arith.cmpi sge, %25, %26 : vector<1x256xi32>
    %28 = arith.extui %27 : vector<1x256xi1> to vector<1x256xi32>
    %29 = arith.sitofp %28 : vector<1x256xi32> to vector<1x256xf32>
    %c6_i32 = arith.constant 6 : i32
    %30 = vector.broadcast %c6_i32 : i32 to vector<1x256xi32>
    %31 = arith.cmpi sle, %25, %30 : vector<1x256xi32>
    %32 = arith.extui %31 : vector<1x256xi1> to vector<1x256xi32>
    %33 = arith.sitofp %32 : vector<1x256xi32> to vector<1x256xf32>
    %c8_i32 = arith.constant 8 : i32
    %34 = vector.broadcast %c8_i32 : i32 to vector<1x256xi32>
    %35 = arith.cmpi sge, %23, %34 : vector<1x256xi32>
    %36 = arith.extui %35 : vector<1x256xi1> to vector<1x256xi32>
    %37 = arith.sitofp %36 : vector<1x256xi32> to vector<1x256xf32>
    %c56_i32 = arith.constant 56 : i32
    %38 = vector.broadcast %c56_i32 : i32 to vector<1x256xi32>
    %39 = arith.cmpi slt, %23, %38 : vector<1x256xi32>
    %40 = arith.extui %39 : vector<1x256xi1> to vector<1x256xi32>
    %41 = arith.sitofp %40 : vector<1x256xi32> to vector<1x256xf32>
    %c0 = arith.constant 0 : index
    %c0_1 = arith.constant 0 : index
    %c0_2 = arith.constant 0 : index
    %42 = vector.load %arg1[%c0, %c0_1, %c0_2] : memref<1x1x1024xf32, #tpu.memory_space<vmem>>, vector<1x1x1024xf32>
    %43 = vector.shape_cast %42 : vector<1x1x1024xf32> to vector<1x1024xf32>
    %c17_i32 = arith.constant 17 : i32
    %44 = tpu.dynamic_rotate %43 by %c17_i32 dim 1 : vector<1x1024xf32>, i32 -> vector<1x1024xf32>
    %45 = arith.mulf %16, %8 : vector<1x1024xf32>
    %46 = arith.mulf %44, %45 : vector<1x1024xf32>
    %c0_3 = arith.constant 0 : index
    %c0_4 = arith.constant 0 : index
    %47 = vector.load %arg2[%c0_3, %c0_4] : memref<16x9xf32, #tpu.memory_space<vmem>>, vector<16x1xf32>
    %48 = vector.broadcast %47 : vector<16x1xf32> to vector<16x1024xf32>
    %49 = vector.broadcast %46 : vector<1x1024xf32> to vector<16x1024xf32>
    %50 = arith.mulf %48, %49 : vector<16x1024xf32>
    %c16_i32_5 = arith.constant 16 : i32
    %51 = tpu.dynamic_rotate %43 by %c16_i32_5 dim 1 : vector<1x1024xf32>, i32 -> vector<1x1024xf32>
    %52 = arith.mulf %51, %16 : vector<1x1024xf32>
    %c0_6 = arith.constant 0 : index
    %c1 = arith.constant 1 : index
    %53 = vector.load %arg2[%c0_6, %c1] : memref<16x9xf32, #tpu.memory_space<vmem>>, vector<16x1xf32>
    %54 = vector.broadcast %53 : vector<16x1xf32> to vector<16x1024xf32>
    %55 = vector.broadcast %52 : vector<1x1024xf32> to vector<16x1024xf32>
    %56 = arith.mulf %54, %55 : vector<16x1024xf32>
    %57 = arith.addf %50, %56 : vector<16x1024xf32>
    %c15_i32_7 = arith.constant 15 : i32
    %58 = tpu.dynamic_rotate %43 by %c15_i32_7 dim 1 : vector<1x1024xf32>, i32 -> vector<1x1024xf32>
    %59 = arith.mulf %16, %12 : vector<1x1024xf32>
    %60 = arith.mulf %58, %59 : vector<1x1024xf32>
    %c0_8 = arith.constant 0 : index
    %c2 = arith.constant 2 : index
    %61 = vector.load %arg2[%c0_8, %c2] : memref<16x9xf32, #tpu.memory_space<vmem>>, vector<16x1xf32>
    %62 = vector.broadcast %61 : vector<16x1xf32> to vector<16x1024xf32>
    %63 = vector.broadcast %60 : vector<1x1024xf32> to vector<16x1024xf32>
    %64 = arith.mulf %62, %63 : vector<16x1024xf32>
    %65 = arith.addf %57, %64 : vector<16x1024xf32>
    %c1_i32_9 = arith.constant 1 : i32
    %66 = tpu.dynamic_rotate %43 by %c1_i32_9 dim 1 : vector<1x1024xf32>, i32 -> vector<1x1024xf32>
    %67 = arith.mulf %66, %8 : vector<1x1024xf32>
    %c0_10 = arith.constant 0 : index
    %c3 = arith.constant 3 : index
    %68 = vector.load %arg2[%c0_10, %c3] : memref<16x9xf32, #tpu.memory_space<vmem>>, vector<16x1xf32>
    %69 = vector.broadcast %68 : vector<16x1xf32> to vector<16x1024xf32>
    %70 = vector.broadcast %67 : vector<1x1024xf32> to vector<16x1024xf32>
    %71 = arith.mulf %69, %70 : vector<16x1024xf32>
    %72 = arith.addf %65, %71 : vector<16x1024xf32>
    %c0_11 = arith.constant 0 : index
    %c4 = arith.constant 4 : index
    %73 = vector.load %arg2[%c0_11, %c4] : memref<16x9xf32, #tpu.memory_space<vmem>>, vector<16x1xf32>
    %74 = vector.broadcast %73 : vector<16x1xf32> to vector<16x1024xf32>
    %75 = vector.broadcast %43 : vector<1x1024xf32> to vector<16x1024xf32>
    %76 = arith.mulf %74, %75 : vector<16x1024xf32>
    %77 = arith.addf %72, %76 : vector<16x1024xf32>
    %c1023_i32 = arith.constant 1023 : i32
    %78 = tpu.dynamic_rotate %43 by %c1023_i32 dim 1 : vector<1x1024xf32>, i32 -> vector<1x1024xf32>
    %79 = arith.mulf %78, %12 : vector<1x1024xf32>
    %c0_12 = arith.constant 0 : index
    %c5 = arith.constant 5 : index
    %80 = vector.load %arg2[%c0_12, %c5] : memref<16x9xf32, #tpu.memory_space<vmem>>, vector<16x1xf32>
    %81 = vector.broadcast %80 : vector<16x1xf32> to vector<16x1024xf32>
    %82 = vector.broadcast %79 : vector<1x1024xf32> to vector<16x1024xf32>
    %83 = arith.mulf %81, %82 : vector<16x1024xf32>
    %84 = arith.addf %77, %83 : vector<16x1024xf32>
    %c1009_i32 = arith.constant 1009 : i32
    %85 = tpu.dynamic_rotate %43 by %c1009_i32 dim 1 : vector<1x1024xf32>, i32 -> vector<1x1024xf32>
    %86 = arith.mulf %20, %8 : vector<1x1024xf32>
    %87 = arith.mulf %85, %86 : vector<1x1024xf32>
    %c0_13 = arith.constant 0 : index
    %c6 = arith.constant 6 : index
    %88 = vector.load %arg2[%c0_13, %c6] : memref<16x9xf32, #tpu.memory_space<vmem>>, vector<16x1xf32>
    %89 = vector.broadcast %88 : vector<16x1xf32> to vector<16x1024xf32>
    %90 = vector.broadcast %87 : vector<1x1024xf32> to vector<16x1024xf32>
    %91 = arith.mulf %89, %90 : vector<16x1024xf32>
    %92 = arith.addf %84, %91 : vector<16x1024xf32>
    %c1008_i32 = arith.constant 1008 : i32
    %93 = tpu.dynamic_rotate %43 by %c1008_i32 dim 1 : vector<1x1024xf32>, i32 -> vector<1x1024xf32>
    %94 = arith.mulf %93, %20 : vector<1x1024xf32>
    %c0_14 = arith.constant 0 : index
    %c7 = arith.constant 7 : index
    %95 = vector.load %arg2[%c0_14, %c7] : memref<16x9xf32, #tpu.memory_space<vmem>>, vector<16x1xf32>
    %96 = vector.broadcast %95 : vector<16x1xf32> to vector<16x1024xf32>
    %97 = vector.broadcast %94 : vector<1x1024xf32> to vector<16x1024xf32>
    %98 = arith.mulf %96, %97 : vector<16x1024xf32>
    %99 = arith.addf %92, %98 : vector<16x1024xf32>
    %c1007_i32 = arith.constant 1007 : i32
    %100 = tpu.dynamic_rotate %43 by %c1007_i32 dim 1 : vector<1x1024xf32>, i32 -> vector<1x1024xf32>
    %101 = arith.mulf %20, %12 : vector<1x1024xf32>
    %102 = arith.mulf %100, %101 : vector<1x1024xf32>
    %c0_15 = arith.constant 0 : index
    %c8 = arith.constant 8 : index
    %103 = vector.load %arg2[%c0_15, %c8] : memref<16x9xf32, #tpu.memory_space<vmem>>, vector<16x1xf32>
    %104 = vector.broadcast %103 : vector<16x1xf32> to vector<16x1024xf32>
    %105 = vector.broadcast %102 : vector<1x1024xf32> to vector<16x1024xf32>
    %106 = arith.mulf %104, %105 : vector<16x1024xf32>
    %107 = arith.addf %99, %106 : vector<16x1024xf32>
    %c0_16 = arith.constant 0 : index
    %c0_17 = arith.constant 0 : index
    %108 = vector.load %arg3[%c0_16, %c0_17] : memref<16x1xf32, #tpu.memory_space<vmem>>, vector<16x1xf32>
    %109 = vector.broadcast %108 : vector<16x1xf32> to vector<16x1024xf32>
    %110 = arith.addf %107, %109 : vector<16x1024xf32>
    %c1023_i32_18 = arith.constant 1023 : i32
    %111 = tpu.dynamic_rotate %110 by %c1023_i32_18 dim 1 : vector<16x1024xf32>, i32 -> vector<16x1024xf32>
    %112 = arith.maximumf %110, %111 : vector<16x1024xf32>
    %c1008_i32_19 = arith.constant 1008 : i32
    %113 = tpu.dynamic_rotate %110 by %c1008_i32_19 dim 1 : vector<16x1024xf32>, i32 -> vector<16x1024xf32>
    %c1007_i32_20 = arith.constant 1007 : i32
    %114 = tpu.dynamic_rotate %110 by %c1007_i32_20 dim 1 : vector<16x1024xf32>, i32 -> vector<16x1024xf32>
    %115 = arith.maximumf %113, %114 : vector<16x1024xf32>
    %116 = arith.maximumf %112, %115 : vector<16x1024xf32>
    %c0_21 = arith.constant 0 : index
    %c0_22 = arith.constant 0 : index
    %117 = vector.load %arg13[%c0_21, %c0_22] : memref<256x64xf32, #tpu.memory_space<vmem>>, vector<256x64xf32>
    %118 = vector.extract_strided_slice %116 {offsets = [0, 0], sizes = [16, 256], strides = [1, 1]} : vector<16x1024xf32> to vector<16x256xf32>
    %cst = arith.constant dense<0.000000e+00> : vector<16x64xf32>
    %119 = tpu.matmul %118, %117, %cst {dimension_numbers = #tpu.dot_dimension_numbers<[1], [0], [0], [1], [0, 0, 1, 1], [], []>} : vector<16x256xf32>, vector<256x64xf32>, vector<16x64xf32> -> vector<16x64xf32>
    %120 = vector.extract_strided_slice %116 {offsets = [0, 256], sizes = [16, 256], strides = [1, 1]} : vector<16x1024xf32> to vector<16x256xf32>
    %cst_23 = arith.constant dense<0.000000e+00> : vector<16x64xf32>
    %121 = tpu.matmul %120, %117, %cst_23 {dimension_numbers = #tpu.dot_dimension_numbers<[1], [0], [0], [1], [0, 0, 1, 1], [], []>} : vector<16x256xf32>, vector<256x64xf32>, vector<16x64xf32> -> vector<16x64xf32>
    %122 = vector.extract_strided_slice %116 {offsets = [0, 512], sizes = [16, 256], strides = [1, 1]} : vector<16x1024xf32> to vector<16x256xf32>
    %cst_24 = arith.constant dense<0.000000e+00> : vector<16x64xf32>
    %123 = tpu.matmul %122, %117, %cst_24 {dimension_numbers = #tpu.dot_dimension_numbers<[1], [0], [0], [1], [0, 0, 1, 1], [], []>} : vector<16x256xf32>, vector<256x64xf32>, vector<16x64xf32> -> vector<16x64xf32>
    %124 = vector.extract_strided_slice %116 {offsets = [0, 768], sizes = [16, 256], strides = [1, 1]} : vector<16x1024xf32> to vector<16x256xf32>
    %cst_25 = arith.constant dense<0.000000e+00> : vector<16x64xf32>
    %125 = tpu.matmul %124, %117, %cst_25 {dimension_numbers = #tpu.dot_dimension_numbers<[1], [0], [0], [1], [0, 0, 1, 1], [], []>} : vector<16x256xf32>, vector<256x64xf32>, vector<16x64xf32> -> vector<16x64xf32>
    %126 = tpu.concatenate %119, %121, %123, %125 in 1 : vector<16x64xf32>, vector<16x64xf32>, vector<16x64xf32>, vector<16x64xf32> -> vector<16x256xf32>
    %cst_26 = arith.constant 5.000000e-01 : f32
    %127 = vector.broadcast %cst_26 : f32 to vector<16x256xf32>
    %128 = arith.mulf %127, %126 : vector<16x256xf32>
    %cst_27 = arith.constant 0.707106769 : f32
    %129 = vector.broadcast %cst_27 : f32 to vector<16x256xf32>
    %130 = arith.mulf %126, %129 : vector<16x256xf32>
    %cst_28 = arith.constant 0.000000e+00 : f32
    %131 = vector.broadcast %cst_28 : f32 to vector<16x256xf32>
    %132 = arith.cmpf oge, %130, %131 : vector<16x256xf32>
    %cst_29 = arith.constant 1.000000e+00 : f32
    %cst_30 = arith.constant -1.000000e+00 : f32
    %133 = vector.broadcast %cst_29 : f32 to vector<16x256xf32>
    %134 = vector.broadcast %cst_30 : f32 to vector<16x256xf32>
    %135 = arith.select %132, %133, %134 : vector<16x256xi1>, vector<16x256xf32>
    %136 = math.absf %130 : vector<16x256xf32>
    %cst_31 = arith.constant 0.327591091 : f32
    %137 = vector.broadcast %cst_31 : f32 to vector<16x256xf32>
    %138 = arith.mulf %137, %136 : vector<16x256xf32>
    %cst_32 = arith.constant 1.000000e+00 : f32
    %139 = vector.broadcast %cst_32 : f32 to vector<16x256xf32>
    %140 = arith.addf %139, %138 : vector<16x256xf32>
    %cst_33 = arith.constant 1.000000e+00 : f32
    %141 = vector.broadcast %cst_33 : f32 to vector<16x256xf32>
    %142 = arith.divf %141, %140 : vector<16x256xf32>
    %cst_34 = arith.constant 1.06140542 : f32
    %143 = vector.broadcast %cst_34 : f32 to vector<16x256xf32>
    %144 = arith.mulf %143, %142 : vector<16x256xf32>
    %cst_35 = arith.constant -1.45315206 : f32
    %145 = vector.broadcast %cst_35 : f32 to vector<16x256xf32>
    %146 = arith.addf %144, %145 : vector<16x256xf32>
    %147 = arith.mulf %146, %142 : vector<16x256xf32>
    %cst_36 = arith.constant 1.42141378 : f32
    %148 = vector.broadcast %cst_36 : f32 to vector<16x256xf32>
    %149 = arith.addf %147, %148 : vector<16x256xf32>
    %150 = arith.mulf %149, %142 : vector<16x256xf32>
    %cst_37 = arith.constant -0.284496725 : f32
    %151 = vector.broadcast %cst_37 : f32 to vector<16x256xf32>
    %152 = arith.addf %150, %151 : vector<16x256xf32>
    %153 = arith.mulf %152, %142 : vector<16x256xf32>
    %cst_38 = arith.constant 0.254829586 : f32
    %154 = vector.broadcast %cst_38 : f32 to vector<16x256xf32>
    %155 = arith.addf %153, %154 : vector<16x256xf32>
    %156 = arith.mulf %155, %142 : vector<16x256xf32>
    %cst_39 = arith.constant 0.000000e+00 : f32
    %157 = vector.broadcast %cst_39 : f32 to vector<16x256xf32>
    %158 = arith.subf %157, %136 : vector<16x256xf32>
    %159 = arith.mulf %158, %136 : vector<16x256xf32>
    %160 = math.exp %159 : vector<16x256xf32>
    %161 = arith.mulf %156, %160 : vector<16x256xf32>
    %cst_40 = arith.constant 1.000000e+00 : f32
    %162 = vector.broadcast %cst_40 : f32 to vector<16x256xf32>
    %163 = arith.subf %162, %161 : vector<16x256xf32>
    %164 = arith.mulf %135, %163 : vector<16x256xf32>
    %cst_41 = arith.constant 1.000000e+00 : f32
    %165 = vector.broadcast %cst_41 : f32 to vector<16x256xf32>
    %166 = arith.addf %165, %164 : vector<16x256xf32>
    %167 = arith.mulf %128, %166 : vector<16x256xf32>
    %c9_i32 = arith.constant 9 : i32
    %168 = tpu.dynamic_rotate %167 by %c9_i32 dim 1 : vector<16x256xf32>, i32 -> vector<16x256xf32>
    %169 = arith.mulf %37, %29 : vector<1x256xf32>
    %170 = vector.broadcast %169 : vector<1x256xf32> to vector<16x256xf32>
    %171 = arith.mulf %168, %170 : vector<16x256xf32>
    %c0_42 = arith.constant 0 : index
    %c0_43 = arith.constant 0 : index
    %c0_44 = arith.constant 0 : index
    %172 = vector.load %arg4[%c0_42, %c0_43, %c0_44] : memref<9x32x16xf32, #tpu.memory_space<vmem>>, vector<1x32x16xf32>
    %173 = vector.shape_cast %172 : vector<1x32x16xf32> to vector<32x16xf32>
    %cst_45 = arith.constant dense<0.000000e+00> : vector<32x256xf32>
    %174 = tpu.matmul %173, %171, %cst_45 {dimension_numbers = #tpu.dot_dimension_numbers<[1], [0], [0], [1], [0, 0, 1, 1], [], []>} : vector<32x16xf32>, vector<16x256xf32>, vector<32x256xf32> -> vector<32x256xf32>
    %c8_i32_46 = arith.constant 8 : i32
    %175 = tpu.dynamic_rotate %167 by %c8_i32_46 dim 1 : vector<16x256xf32>, i32 -> vector<16x256xf32>
    %176 = vector.broadcast %37 : vector<1x256xf32> to vector<16x256xf32>
    %177 = arith.mulf %175, %176 : vector<16x256xf32>
    %c1_47 = arith.constant 1 : index
    %c0_48 = arith.constant 0 : index
    %c0_49 = arith.constant 0 : index
    %178 = vector.load %arg4[%c1_47, %c0_48, %c0_49] : memref<9x32x16xf32, #tpu.memory_space<vmem>>, vector<1x32x16xf32>
    %179 = vector.shape_cast %178 : vector<1x32x16xf32> to vector<32x16xf32>
    %cst_50 = arith.constant dense<0.000000e+00> : vector<32x256xf32>
    %180 = tpu.matmul %179, %177, %cst_50 {dimension_numbers = #tpu.dot_dimension_numbers<[1], [0], [0], [1], [0, 0, 1, 1], [], []>} : vector<32x16xf32>, vector<16x256xf32>, vector<32x256xf32> -> vector<32x256xf32>
    %181 = arith.addf %174, %180 : vector<32x256xf32>
    %c7_i32_51 = arith.constant 7 : i32
    %182 = tpu.dynamic_rotate %167 by %c7_i32_51 dim 1 : vector<16x256xf32>, i32 -> vector<16x256xf32>
    %183 = arith.mulf %37, %33 : vector<1x256xf32>
    %184 = vector.broadcast %183 : vector<1x256xf32> to vector<16x256xf32>
    %185 = arith.mulf %182, %184 : vector<16x256xf32>
    %c2_52 = arith.constant 2 : index
    %c0_53 = arith.constant 0 : index
    %c0_54 = arith.constant 0 : index
    %186 = vector.load %arg4[%c2_52, %c0_53, %c0_54] : memref<9x32x16xf32, #tpu.memory_space<vmem>>, vector<1x32x16xf32>
    %187 = vector.shape_cast %186 : vector<1x32x16xf32> to vector<32x16xf32>
    %cst_55 = arith.constant dense<0.000000e+00> : vector<32x256xf32>
    %188 = tpu.matmul %187, %185, %cst_55 {dimension_numbers = #tpu.dot_dimension_numbers<[1], [0], [0], [1], [0, 0, 1, 1], [], []>} : vector<32x16xf32>, vector<16x256xf32>, vector<32x256xf32> -> vector<32x256xf32>
    %189 = arith.addf %181, %188 : vector<32x256xf32>
    %c1_i32_56 = arith.constant 1 : i32
    %190 = tpu.dynamic_rotate %167 by %c1_i32_56 dim 1 : vector<16x256xf32>, i32 -> vector<16x256xf32>
    %191 = vector.broadcast %29 : vector<1x256xf32> to vector<16x256xf32>
    %192 = arith.mulf %190, %191 : vector<16x256xf32>
    %c3_57 = arith.constant 3 : index
    %c0_58 = arith.constant 0 : index
    %c0_59 = arith.constant 0 : index
    %193 = vector.load %arg4[%c3_57, %c0_58, %c0_59] : memref<9x32x16xf32, #tpu.memory_space<vmem>>, vector<1x32x16xf32>
    %194 = vector.shape_cast %193 : vector<1x32x16xf32> to vector<32x16xf32>
    %cst_60 = arith.constant dense<0.000000e+00> : vector<32x256xf32>
    %195 = tpu.matmul %194, %192, %cst_60 {dimension_numbers = #tpu.dot_dimension_numbers<[1], [0], [0], [1], [0, 0, 1, 1], [], []>} : vector<32x16xf32>, vector<16x256xf32>, vector<32x256xf32> -> vector<32x256xf32>
    %196 = arith.addf %189, %195 : vector<32x256xf32>
    %c4_61 = arith.constant 4 : index
    %c0_62 = arith.constant 0 : index
    %c0_63 = arith.constant 0 : index
    %197 = vector.load %arg4[%c4_61, %c0_62, %c0_63] : memref<9x32x16xf32, #tpu.memory_space<vmem>>, vector<1x32x16xf32>
    %198 = vector.shape_cast %197 : vector<1x32x16xf32> to vector<32x16xf32>
    %cst_64 = arith.constant dense<0.000000e+00> : vector<32x256xf32>
    %199 = tpu.matmul %198, %167, %cst_64 {dimension_numbers = #tpu.dot_dimension_numbers<[1], [0], [0], [1], [0, 0, 1, 1], [], []>} : vector<32x16xf32>, vector<16x256xf32>, vector<32x256xf32> -> vector<32x256xf32>
    %200 = arith.addf %196, %199 : vector<32x256xf32>
    %c255_i32_65 = arith.constant 255 : i32
    %201 = tpu.dynamic_rotate %167 by %c255_i32_65 dim 1 : vector<16x256xf32>, i32 -> vector<16x256xf32>
    %202 = vector.broadcast %33 : vector<1x256xf32> to vector<16x256xf32>
    %203 = arith.mulf %201, %202 : vector<16x256xf32>
    %c5_66 = arith.constant 5 : index
    %c0_67 = arith.constant 0 : index
    %c0_68 = arith.constant 0 : index
    %204 = vector.load %arg4[%c5_66, %c0_67, %c0_68] : memref<9x32x16xf32, #tpu.memory_space<vmem>>, vector<1x32x16xf32>
    %205 = vector.shape_cast %204 : vector<1x32x16xf32> to vector<32x16xf32>
    %cst_69 = arith.constant dense<0.000000e+00> : vector<32x256xf32>
    %206 = tpu.matmul %205, %203, %cst_69 {dimension_numbers = #tpu.dot_dimension_numbers<[1], [0], [0], [1], [0, 0, 1, 1], [], []>} : vector<32x16xf32>, vector<16x256xf32>, vector<32x256xf32> -> vector<32x256xf32>
    %207 = arith.addf %200, %206 : vector<32x256xf32>
    %c249_i32 = arith.constant 249 : i32
    %208 = tpu.dynamic_rotate %167 by %c249_i32 dim 1 : vector<16x256xf32>, i32 -> vector<16x256xf32>
    %209 = arith.mulf %41, %29 : vector<1x256xf32>
    %210 = vector.broadcast %209 : vector<1x256xf32> to vector<16x256xf32>
    %211 = arith.mulf %208, %210 : vector<16x256xf32>
    %c6_70 = arith.constant 6 : index
    %c0_71 = arith.constant 0 : index
    %c0_72 = arith.constant 0 : index
    %212 = vector.load %arg4[%c6_70, %c0_71, %c0_72] : memref<9x32x16xf32, #tpu.memory_space<vmem>>, vector<1x32x16xf32>
    %213 = vector.shape_cast %212 : vector<1x32x16xf32> to vector<32x16xf32>
    %cst_73 = arith.constant dense<0.000000e+00> : vector<32x256xf32>
    %214 = tpu.matmul %213, %211, %cst_73 {dimension_numbers = #tpu.dot_dimension_numbers<[1], [0], [0], [1], [0, 0, 1, 1], [], []>} : vector<32x16xf32>, vector<16x256xf32>, vector<32x256xf32> -> vector<32x256xf32>
    %215 = arith.addf %207, %214 : vector<32x256xf32>
    %c248_i32 = arith.constant 248 : i32
    %216 = tpu.dynamic_rotate %167 by %c248_i32 dim 1 : vector<16x256xf32>, i32 -> vector<16x256xf32>
    %217 = vector.broadcast %41 : vector<1x256xf32> to vector<16x256xf32>
    %218 = arith.mulf %216, %217 : vector<16x256xf32>
    %c7_74 = arith.constant 7 : index
    %c0_75 = arith.constant 0 : index
    %c0_76 = arith.constant 0 : index
    %219 = vector.load %arg4[%c7_74, %c0_75, %c0_76] : memref<9x32x16xf32, #tpu.memory_space<vmem>>, vector<1x32x16xf32>
    %220 = vector.shape_cast %219 : vector<1x32x16xf32> to vector<32x16xf32>
    %cst_77 = arith.constant dense<0.000000e+00> : vector<32x256xf32>
    %221 = tpu.matmul %220, %218, %cst_77 {dimension_numbers = #tpu.dot_dimension_numbers<[1], [0], [0], [1], [0, 0, 1, 1], [], []>} : vector<32x16xf32>, vector<16x256xf32>, vector<32x256xf32> -> vector<32x256xf32>
    %222 = arith.addf %215, %221 : vector<32x256xf32>
    %c247_i32 = arith.constant 247 : i32
    %223 = tpu.dynamic_rotate %167 by %c247_i32 dim 1 : vector<16x256xf32>, i32 -> vector<16x256xf32>
    %224 = arith.mulf %41, %33 : vector<1x256xf32>
    %225 = vector.broadcast %224 : vector<1x256xf32> to vector<16x256xf32>
    %226 = arith.mulf %223, %225 : vector<16x256xf32>
    %c8_78 = arith.constant 8 : index
    %c0_79 = arith.constant 0 : index
    %c0_80 = arith.constant 0 : index
    %227 = vector.load %arg4[%c8_78, %c0_79, %c0_80] : memref<9x32x16xf32, #tpu.memory_space<vmem>>, vector<1x32x16xf32>
    %228 = vector.shape_cast %227 : vector<1x32x16xf32> to vector<32x16xf32>
    %cst_81 = arith.constant dense<0.000000e+00> : vector<32x256xf32>
    %229 = tpu.matmul %228, %226, %cst_81 {dimension_numbers = #tpu.dot_dimension_numbers<[1], [0], [0], [1], [0, 0, 1, 1], [], []>} : vector<32x16xf32>, vector<16x256xf32>, vector<32x256xf32> -> vector<32x256xf32>
    %230 = arith.addf %222, %229 : vector<32x256xf32>
    %c0_82 = arith.constant 0 : index
    %c0_83 = arith.constant 0 : index
    %231 = vector.load %arg5[%c0_82, %c0_83] : memref<32x1xf32, #tpu.memory_space<vmem>>, vector<32x1xf32>
    %232 = vector.broadcast %231 : vector<32x1xf32> to vector<32x256xf32>
    %233 = arith.addf %230, %232 : vector<32x256xf32>
    %c255_i32_84 = arith.constant 255 : i32
    %234 = tpu.dynamic_rotate %233 by %c255_i32_84 dim 1 : vector<32x256xf32>, i32 -> vector<32x256xf32>
    %235 = arith.maximumf %233, %234 : vector<32x256xf32>
    %c248_i32_85 = arith.constant 248 : i32
    %236 = tpu.dynamic_rotate %233 by %c248_i32_85 dim 1 : vector<32x256xf32>, i32 -> vector<32x256xf32>
    %c247_i32_86 = arith.constant 247 : i32
    %237 = tpu.dynamic_rotate %233 by %c247_i32_86 dim 1 : vector<32x256xf32>, i32 -> vector<32x256xf32>
    %238 = arith.maximumf %236, %237 : vector<32x256xf32>
    %239 = arith.maximumf %235, %238 : vector<32x256xf32>
    %c0_87 = arith.constant 0 : index
    %c0_88 = arith.constant 0 : index
    %240 = vector.load %arg14[%c0_87, %c0_88] : memref<64x16xf32, #tpu.memory_space<vmem>>, vector<64x16xf32>
    %241 = vector.extract_strided_slice %239 {offsets = [0, 0], sizes = [32, 64], strides = [1, 1]} : vector<32x256xf32> to vector<32x64xf32>
    %cst_89 = arith.constant dense<0.000000e+00> : vector<32x16xf32>
    %242 = tpu.matmul %241, %240, %cst_89 {dimension_numbers = #tpu.dot_dimension_numbers<[1], [0], [0], [1], [0, 0, 1, 1], [], []>} : vector<32x64xf32>, vector<64x16xf32>, vector<32x16xf32> -> vector<32x16xf32>
    %243 = vector.extract_strided_slice %239 {offsets = [0, 64], sizes = [32, 64], strides = [1, 1]} : vector<32x256xf32> to vector<32x64xf32>
    %cst_90 = arith.constant dense<0.000000e+00> : vector<32x16xf32>
    %244 = tpu.matmul %243, %240, %cst_90 {dimension_numbers = #tpu.dot_dimension_numbers<[1], [0], [0], [1], [0, 0, 1, 1], [], []>} : vector<32x64xf32>, vector<64x16xf32>, vector<32x16xf32> -> vector<32x16xf32>
    %245 = vector.extract_strided_slice %239 {offsets = [0, 128], sizes = [32, 64], strides = [1, 1]} : vector<32x256xf32> to vector<32x64xf32>
    %cst_91 = arith.constant dense<0.000000e+00> : vector<32x16xf32>
    %246 = tpu.matmul %245, %240, %cst_91 {dimension_numbers = #tpu.dot_dimension_numbers<[1], [0], [0], [1], [0, 0, 1, 1], [], []>} : vector<32x64xf32>, vector<64x16xf32>, vector<32x16xf32> -> vector<32x16xf32>
    %247 = vector.extract_strided_slice %239 {offsets = [0, 192], sizes = [32, 64], strides = [1, 1]} : vector<32x256xf32> to vector<32x64xf32>
    %cst_92 = arith.constant dense<0.000000e+00> : vector<32x16xf32>
    %248 = tpu.matmul %247, %240, %cst_92 {dimension_numbers = #tpu.dot_dimension_numbers<[1], [0], [0], [1], [0, 0, 1, 1], [], []>} : vector<32x64xf32>, vector<64x16xf32>, vector<32x16xf32> -> vector<32x16xf32>
    %249 = tpu.concatenate %242, %244, %246, %248 in 1 : vector<32x16xf32>, vector<32x16xf32>, vector<32x16xf32>, vector<32x16xf32> -> vector<32x64xf32>
    %c0_93 = arith.constant 0 : index
    %c0_94 = arith.constant 0 : index
    %250 = vector.load %arg10[%c0_93, %c0_94] : memref<64x32xf32, #tpu.memory_space<vmem>>, vector<64x32xf32>
    %cst_95 = arith.constant dense<0.000000e+00> : vector<64x64xf32>
    %251 = tpu.matmul %250, %249, %cst_95 {dimension_numbers = #tpu.dot_dimension_numbers<[1], [0], [0], [1], [0, 0, 1, 1], [], []>} : vector<64x32xf32>, vector<32x64xf32>, vector<64x64xf32> -> vector<64x64xf32>
    %c0_96 = arith.constant 0 : index
    %c0_97 = arith.constant 0 : index
    %252 = vector.load %arg12[%c0_96, %c0_97] : memref<64x1xf32, #tpu.memory_space<vmem>>, vector<64x1xf32>
    %cst_98 = arith.constant 2.000000e+00 : f32
    %253 = vector.broadcast %cst_98 : f32 to vector<64x64xf32>
    %254 = arith.mulf %253, %251 : vector<64x64xf32>
    %255 = vector.broadcast %252 : vector<64x1xf32> to vector<64x64xf32>
    %256 = arith.subf %255, %254 : vector<64x64xf32>
    %cst_99 = arith.constant dense<0x7F800000> : vector<64xf32>
    %257 = vector.multi_reduction <minimumf>, %256, %cst_99 [0] : vector<64x64xf32> to vector<64xf32>
    %258 = vector.shape_cast %257 : vector<64xf32> to vector<1x64xf32>
    %259 = tpu.iota {dimensions = array<i32: 0>} : vector<64x64xi32>
    %260 = arith.sitofp %259 : vector<64x64xi32> to vector<64x64xf32>
    %261 = vector.broadcast %258 : vector<1x64xf32> to vector<64x64xf32>
    %262 = arith.cmpf ole, %256, %261 : vector<64x64xf32>
    %cst_100 = arith.constant 6.400000e+01 : f32
    %263 = vector.broadcast %cst_100 : f32 to vector<64x64xf32>
    %264 = arith.select %262, %260, %263 : vector<64x64xi1>, vector<64x64xf32>
    %cst_101 = arith.constant dense<0x7F800000> : vector<64xf32>
    %265 = vector.multi_reduction <minimumf>, %264, %cst_101 [0] : vector<64x64xf32> to vector<64xf32>
    %266 = vector.shape_cast %265 : vector<64xf32> to vector<1x64xf32>
    %267 = arith.fptosi %266 : vector<1x64xf32> to vector<1x64xi32>
    %c0_102 = arith.constant 0 : index
    %c0_103 = arith.constant 0 : index
    %c0_104 = arith.constant 0 : index
    %268 = vector.load %arg18[%c0_102, %c0_103, %c0_104] : memref<1x1x64xi32, #tpu.memory_space<vmem>>, vector<1x1x64xi32>
    %269 = vector.shape_cast %268 : vector<1x1x64xi32> to vector<1x64xi32>
    %270 = vector.shape_cast %267 : vector<1x64xi32> to vector<1x1x64xi32>
    tpu.vector_store %arg18[%c0_102, %c0_103, %c0_104], %270 {strides = array<i32>} : memref<1x1x64xi32, #tpu.memory_space<vmem>>, vector<1x1x64xi32>,
    %271 = vector.broadcast %266 : vector<1x64xf32> to vector<64x64xf32>
    %272 = arith.cmpf oeq, %260, %271 : vector<64x64xf32>
    %273 = arith.extui %272 : vector<64x64xi1> to vector<64x64xi32>
    %274 = arith.sitofp %273 : vector<64x64xi32> to vector<64x64xf32>
    %c0_105 = arith.constant 0 : index
    %c0_106 = arith.constant 0 : index
    %275 = vector.load %arg11[%c0_105, %c0_106] : memref<32x64xf32, #tpu.memory_space<vmem>>, vector<32x64xf32>
    %cst_107 = arith.constant dense<0.000000e+00> : vector<32x64xf32>
    %276 = tpu.matmul %275, %274, %cst_107 {dimension_numbers = #tpu.dot_dimension_numbers<[1], [0], [0], [1], [0, 0, 1, 1], [], []>} : vector<32x64xf32>, vector<64x64xf32>, vector<32x64xf32> -> vector<32x64xf32>
    %277 = arith.subf %276, %249 : vector<32x64xf32>
    %278 = arith.mulf %277, %277 : vector<32x64xf32>
    %cst_108 = arith.constant dense<0.000000e+00> : vector<64xf32>
    %279 = vector.multi_reduction <add>, %278, %cst_108 [0] : vector<32x64xf32> to vector<64xf32>
    %280 = vector.shape_cast %279 : vector<64xf32> to vector<1x64xf32>
    %cst_109 = arith.constant dense<0.000000e+00> : vector<1xf32>
    %281 = vector.multi_reduction <add>, %280, %cst_109 [1] : vector<1x64xf32> to vector<1xf32>
    %282 = vector.shape_cast %281 : vector<1xf32> to vector<1x1xf32>
    %c0_110 = arith.constant 0 : index
    %c0_111 = arith.constant 0 : index
    %c0_112 = arith.constant 0 : index
    %283 = vector.load %arg19[%c0_110, %c0_111, %c0_112] : memref<1x1x1xf32, #tpu.memory_space<vmem>>, vector<1x1x1xf32>
    %284 = vector.shape_cast %283 : vector<1x1x1xf32> to vector<1x1xf32>
    %285 = vector.shape_cast %282 : vector<1x1xf32> to vector<1x1x1xf32>
    tpu.vector_store %arg19[%c0_110, %c0_111, %c0_112], %285 {strides = array<i32>} : memref<1x1x1xf32, #tpu.memory_space<vmem>>, vector<1x1x1xf32>,
    %c0_113 = arith.constant 0 : index
    %c0_114 = arith.constant 0 : index
    %286 = vector.load %arg15[%c0_113, %c0_114] : memref<16x64xf32, #tpu.memory_space<vmem>>, vector<16x64xf32>
    %287 = vector.extract_strided_slice %276 {offsets = [0, 0], sizes = [32, 16], strides = [1, 1]} : vector<32x64xf32> to vector<32x16xf32>
    %cst_115 = arith.constant dense<0.000000e+00> : vector<32x64xf32>
    %288 = tpu.matmul %287, %286, %cst_115 {dimension_numbers = #tpu.dot_dimension_numbers<[1], [0], [0], [1], [0, 0, 1, 1], [], []>} : vector<32x16xf32>, vector<16x64xf32>, vector<32x64xf32> -> vector<32x64xf32>
    %289 = vector.extract_strided_slice %276 {offsets = [0, 16], sizes = [32, 16], strides = [1, 1]} : vector<32x64xf32> to vector<32x16xf32>
    %cst_116 = arith.constant dense<0.000000e+00> : vector<32x64xf32>
    %290 = tpu.matmul %289, %286, %cst_116 {dimension_numbers = #tpu.dot_dimension_numbers<[1], [0], [0], [1], [0, 0, 1, 1], [], []>} : vector<32x16xf32>, vector<16x64xf32>, vector<32x64xf32> -> vector<32x64xf32>
    %291 = vector.extract_strided_slice %276 {offsets = [0, 32], sizes = [32, 16], strides = [1, 1]} : vector<32x64xf32> to vector<32x16xf32>
    %cst_117 = arith.constant dense<0.000000e+00> : vector<32x64xf32>
    %292 = tpu.matmul %291, %286, %cst_117 {dimension_numbers = #tpu.dot_dimension_numbers<[1], [0], [0], [1], [0, 0, 1, 1], [], []>} : vector<32x16xf32>, vector<16x64xf32>, vector<32x64xf32> -> vector<32x64xf32>
    %293 = vector.extract_strided_slice %276 {offsets = [0, 48], sizes = [32, 16], strides = [1, 1]} : vector<32x64xf32> to vector<32x16xf32>
    %cst_118 = arith.constant dense<0.000000e+00> : vector<32x64xf32>
    %294 = tpu.matmul %293, %286, %cst_118 {dimension_numbers = #tpu.dot_dimension_numbers<[1], [0], [0], [1], [0, 0, 1, 1], [], []>} : vector<32x16xf32>, vector<16x64xf32>, vector<32x64xf32> -> vector<32x64xf32>
    %295 = tpu.concatenate %288, %290, %292, %294 in 1 : vector<32x64xf32>, vector<32x64xf32>, vector<32x64xf32>, vector<32x64xf32> -> vector<32x256xf32>
    %c9_i32_119 = arith.constant 9 : i32
    %296 = tpu.dynamic_rotate %295 by %c9_i32_119 dim 1 : vector<32x256xf32>, i32 -> vector<32x256xf32>
    %297 = arith.mulf %37, %29 : vector<1x256xf32>
    %298 = vector.broadcast %297 : vector<1x256xf32> to vector<32x256xf32>
    %299 = arith.mulf %296, %298 : vector<32x256xf32>
    %c0_120 = arith.constant 0 : index
    %c0_121 = arith.constant 0 : index
    %c0_122 = arith.constant 0 : index
    %300 = vector.load %arg6[%c0_120, %c0_121, %c0_122] : memref<9x16x32xf32, #tpu.memory_space<vmem>>, vector<1x16x32xf32>
    %301 = vector.shape_cast %300 : vector<1x16x32xf32> to vector<16x32xf32>
    %cst_123 = arith.constant dense<0.000000e+00> : vector<16x256xf32>
    %302 = tpu.matmul %301, %299, %cst_123 {dimension_numbers = #tpu.dot_dimension_numbers<[1], [0], [0], [1], [0, 0, 1, 1], [], []>} : vector<16x32xf32>, vector<32x256xf32>, vector<16x256xf32> -> vector<16x256xf32>
    %c8_i32_124 = arith.constant 8 : i32
    %303 = tpu.dynamic_rotate %295 by %c8_i32_124 dim 1 : vector<32x256xf32>, i32 -> vector<32x256xf32>
    %304 = vector.broadcast %37 : vector<1x256xf32> to vector<32x256xf32>
    %305 = arith.mulf %303, %304 : vector<32x256xf32>
    %c1_125 = arith.constant 1 : index
    %c0_126 = arith.constant 0 : index
    %c0_127 = arith.constant 0 : index
    %306 = vector.load %arg6[%c1_125, %c0_126, %c0_127] : memref<9x16x32xf32, #tpu.memory_space<vmem>>, vector<1x16x32xf32>
    %307 = vector.shape_cast %306 : vector<1x16x32xf32> to vector<16x32xf32>
    %cst_128 = arith.constant dense<0.000000e+00> : vector<16x256xf32>
    %308 = tpu.matmul %307, %305, %cst_128 {dimension_numbers = #tpu.dot_dimension_numbers<[1], [0], [0], [1], [0, 0, 1, 1], [], []>} : vector<16x32xf32>, vector<32x256xf32>, vector<16x256xf32> -> vector<16x256xf32>
    %309 = arith.addf %302, %308 : vector<16x256xf32>
    %c7_i32_129 = arith.constant 7 : i32
    %310 = tpu.dynamic_rotate %295 by %c7_i32_129 dim 1 : vector<32x256xf32>, i32 -> vector<32x256xf32>
    %311 = arith.mulf %37, %33 : vector<1x256xf32>
    %312 = vector.broadcast %311 : vector<1x256xf32> to vector<32x256xf32>
    %313 = arith.mulf %310, %312 : vector<32x256xf32>
    %c2_130 = arith.constant 2 : index
    %c0_131 = arith.constant 0 : index
    %c0_132 = arith.constant 0 : index
    %314 = vector.load %arg6[%c2_130, %c0_131, %c0_132] : memref<9x16x32xf32, #tpu.memory_space<vmem>>, vector<1x16x32xf32>
    %315 = vector.shape_cast %314 : vector<1x16x32xf32> to vector<16x32xf32>
    %cst_133 = arith.constant dense<0.000000e+00> : vector<16x256xf32>
    %316 = tpu.matmul %315, %313, %cst_133 {dimension_numbers = #tpu.dot_dimension_numbers<[1], [0], [0], [1], [0, 0, 1, 1], [], []>} : vector<16x32xf32>, vector<32x256xf32>, vector<16x256xf32> -> vector<16x256xf32>
    %317 = arith.addf %309, %316 : vector<16x256xf32>
    %c1_i32_134 = arith.constant 1 : i32
    %318 = tpu.dynamic_rotate %295 by %c1_i32_134 dim 1 : vector<32x256xf32>, i32 -> vector<32x256xf32>
    %319 = vector.broadcast %29 : vector<1x256xf32> to vector<32x256xf32>
    %320 = arith.mulf %318, %319 : vector<32x256xf32>
    %c3_135 = arith.constant 3 : index
    %c0_136 = arith.constant 0 : index
    %c0_137 = arith.constant 0 : index
    %321 = vector.load %arg6[%c3_135, %c0_136, %c0_137] : memref<9x16x32xf32, #tpu.memory_space<vmem>>, vector<1x16x32xf32>
    %322 = vector.shape_cast %321 : vector<1x16x32xf32> to vector<16x32xf32>
    %cst_138 = arith.constant dense<0.000000e+00> : vector<16x256xf32>
    %323 = tpu.matmul %322, %320, %cst_138 {dimension_numbers = #tpu.dot_dimension_numbers<[1], [0], [0], [1], [0, 0, 1, 1], [], []>} : vector<16x32xf32>, vector<32x256xf32>, vector<16x256xf32> -> vector<16x256xf32>
    %324 = arith.addf %317, %323 : vector<16x256xf32>
    %c4_139 = arith.constant 4 : index
    %c0_140 = arith.constant 0 : index
    %c0_141 = arith.constant 0 : index
    %325 = vector.load %arg6[%c4_139, %c0_140, %c0_141] : memref<9x16x32xf32, #tpu.memory_space<vmem>>, vector<1x16x32xf32>
    %326 = vector.shape_cast %325 : vector<1x16x32xf32> to vector<16x32xf32>
    %cst_142 = arith.constant dense<0.000000e+00> : vector<16x256xf32>
    %327 = tpu.matmul %326, %295, %cst_142 {dimension_numbers = #tpu.dot_dimension_numbers<[1], [0], [0], [1], [0, 0, 1, 1], [], []>} : vector<16x32xf32>, vector<32x256xf32>, vector<16x256xf32> -> vector<16x256xf32>
    %328 = arith.addf %324, %327 : vector<16x256xf32>
    %c255_i32_143 = arith.constant 255 : i32
    %329 = tpu.dynamic_rotate %295 by %c255_i32_143 dim 1 : vector<32x256xf32>, i32 -> vector<32x256xf32>
    %330 = vector.broadcast %33 : vector<1x256xf32> to vector<32x256xf32>
    %331 = arith.mulf %329, %330 : vector<32x256xf32>
    %c5_144 = arith.constant 5 : index
    %c0_145 = arith.constant 0 : index
    %c0_146 = arith.constant 0 : index
    %332 = vector.load %arg6[%c5_144, %c0_145, %c0_146] : memref<9x16x32xf32, #tpu.memory_space<vmem>>, vector<1x16x32xf32>
    %333 = vector.shape_cast %332 : vector<1x16x32xf32> to vector<16x32xf32>
    %cst_147 = arith.constant dense<0.000000e+00> : vector<16x256xf32>
    %334 = tpu.matmul %333, %331, %cst_147 {dimension_numbers = #tpu.dot_dimension_numbers<[1], [0], [0], [1], [0, 0, 1, 1], [], []>} : vector<16x32xf32>, vector<32x256xf32>, vector<16x256xf32> -> vector<16x256xf32>
    %335 = arith.addf %328, %334 : vector<16x256xf32>
    %c249_i32_148 = arith.constant 249 : i32
    %336 = tpu.dynamic_rotate %295 by %c249_i32_148 dim 1 : vector<32x256xf32>, i32 -> vector<32x256xf32>
    %337 = arith.mulf %41, %29 : vector<1x256xf32>
    %338 = vector.broadcast %337 : vector<1x256xf32> to vector<32x256xf32>
    %339 = arith.mulf %336, %338 : vector<32x256xf32>
    %c6_149 = arith.constant 6 : index
    %c0_150 = arith.constant 0 : index
    %c0_151 = arith.constant 0 : index
    %340 = vector.load %arg6[%c6_149, %c0_150, %c0_151] : memref<9x16x32xf32, #tpu.memory_space<vmem>>, vector<1x16x32xf32>
    %341 = vector.shape_cast %340 : vector<1x16x32xf32> to vector<16x32xf32>
    %cst_152 = arith.constant dense<0.000000e+00> : vector<16x256xf32>
    %342 = tpu.matmul %341, %339, %cst_152 {dimension_numbers = #tpu.dot_dimension_numbers<[1], [0], [0], [1], [0, 0, 1, 1], [], []>} : vector<16x32xf32>, vector<32x256xf32>, vector<16x256xf32> -> vector<16x256xf32>
    %343 = arith.addf %335, %342 : vector<16x256xf32>
    %c248_i32_153 = arith.constant 248 : i32
    %344 = tpu.dynamic_rotate %295 by %c248_i32_153 dim 1 : vector<32x256xf32>, i32 -> vector<32x256xf32>
    %345 = vector.broadcast %41 : vector<1x256xf32> to vector<32x256xf32>
    %346 = arith.mulf %344, %345 : vector<32x256xf32>
    %c7_154 = arith.constant 7 : index
    %c0_155 = arith.constant 0 : index
    %c0_156 = arith.constant 0 : index
    %347 = vector.load %arg6[%c7_154, %c0_155, %c0_156] : memref<9x16x32xf32, #tpu.memory_space<vmem>>, vector<1x16x32xf32>
    %348 = vector.shape_cast %347 : vector<1x16x32xf32> to vector<16x32xf32>
    %cst_157 = arith.constant dense<0.000000e+00> : vector<16x256xf32>
    %349 = tpu.matmul %348, %346, %cst_157 {dimension_numbers = #tpu.dot_dimension_numbers<[1], [0], [0], [1], [0, 0, 1, 1], [], []>} : vector<16x32xf32>, vector<32x256xf32>, vector<16x256xf32> -> vector<16x256xf32>
    %350 = arith.addf %343, %349 : vector<16x256xf32>
    %c247_i32_158 = arith.constant 247 : i32
    %351 = tpu.dynamic_rotate %295 by %c247_i32_158 dim 1 : vector<32x256xf32>, i32 -> vector<32x256xf32>
    %352 = arith.mulf %41, %33 : vector<1x256xf32>
    %353 = vector.broadcast %352 : vector<1x256xf32> to vector<32x256xf32>
    %354 = arith.mulf %351, %353 : vector<32x256xf32>
    %c8_159 = arith.constant 8 : index
    %c0_160 = arith.constant 0 : index
    %c0_161 = arith.constant 0 : index
    %355 = vector.load %arg6[%c8_159, %c0_160, %c0_161] : memref<9x16x32xf32, #tpu.memory_space<vmem>>, vector<1x16x32xf32>
    %356 = vector.shape_cast %355 : vector<1x16x32xf32> to vector<16x32xf32>
    %cst_162 = arith.constant dense<0.000000e+00> : vector<16x256xf32>
    %357 = tpu.matmul %356, %354, %cst_162 {dimension_numbers = #tpu.dot_dimension_numbers<[1], [0], [0], [1], [0, 0, 1, 1], [], []>} : vector<16x32xf32>, vector<32x256xf32>, vector<16x256xf32> -> vector<16x256xf32>
    %358 = arith.addf %350, %357 : vector<16x256xf32>
    %c0_163 = arith.constant 0 : index
    %c0_164 = arith.constant 0 : index
    %359 = vector.load %arg7[%c0_163, %c0_164] : memref<16x1xf32, #tpu.memory_space<vmem>>, vector<16x1xf32>
    %360 = vector.broadcast %359 : vector<16x1xf32> to vector<16x256xf32>
    %361 = arith.addf %358, %360 : vector<16x256xf32>
    %cst_165 = arith.constant 5.000000e-01 : f32
    %362 = vector.broadcast %cst_165 : f32 to vector<16x256xf32>
    %363 = arith.mulf %362, %361 : vector<16x256xf32>
    %cst_166 = arith.constant 0.707106769 : f32
    %364 = vector.broadcast %cst_166 : f32 to vector<16x256xf32>
    %365 = arith.mulf %361, %364 : vector<16x256xf32>
    %cst_167 = arith.constant 0.000000e+00 : f32
    %366 = vector.broadcast %cst_167 : f32 to vector<16x256xf32>
    %367 = arith.cmpf oge, %365, %366 : vector<16x256xf32>
    %cst_168 = arith.constant 1.000000e+00 : f32
    %cst_169 = arith.constant -1.000000e+00 : f32
    %368 = vector.broadcast %cst_168 : f32 to vector<16x256xf32>
    %369 = vector.broadcast %cst_169 : f32 to vector<16x256xf32>
    %370 = arith.select %367, %368, %369 : vector<16x256xi1>, vector<16x256xf32>
    %371 = math.absf %365 : vector<16x256xf32>
    %cst_170 = arith.constant 0.327591091 : f32
    %372 = vector.broadcast %cst_170 : f32 to vector<16x256xf32>
    %373 = arith.mulf %372, %371 : vector<16x256xf32>
    %cst_171 = arith.constant 1.000000e+00 : f32
    %374 = vector.broadcast %cst_171 : f32 to vector<16x256xf32>
    %375 = arith.addf %374, %373 : vector<16x256xf32>
    %cst_172 = arith.constant 1.000000e+00 : f32
    %376 = vector.broadcast %cst_172 : f32 to vector<16x256xf32>
    %377 = arith.divf %376, %375 : vector<16x256xf32>
    %cst_173 = arith.constant 1.06140542 : f32
    %378 = vector.broadcast %cst_173 : f32 to vector<16x256xf32>
    %379 = arith.mulf %378, %377 : vector<16x256xf32>
    %cst_174 = arith.constant -1.45315206 : f32
    %380 = vector.broadcast %cst_174 : f32 to vector<16x256xf32>
    %381 = arith.addf %379, %380 : vector<16x256xf32>
    %382 = arith.mulf %381, %377 : vector<16x256xf32>
    %cst_175 = arith.constant 1.42141378 : f32
    %383 = vector.broadcast %cst_175 : f32 to vector<16x256xf32>
    %384 = arith.addf %382, %383 : vector<16x256xf32>
    %385 = arith.mulf %384, %377 : vector<16x256xf32>
    %cst_176 = arith.constant -0.284496725 : f32
    %386 = vector.broadcast %cst_176 : f32 to vector<16x256xf32>
    %387 = arith.addf %385, %386 : vector<16x256xf32>
    %388 = arith.mulf %387, %377 : vector<16x256xf32>
    %cst_177 = arith.constant 0.254829586 : f32
    %389 = vector.broadcast %cst_177 : f32 to vector<16x256xf32>
    %390 = arith.addf %388, %389 : vector<16x256xf32>
    %391 = arith.mulf %390, %377 : vector<16x256xf32>
    %cst_178 = arith.constant 0.000000e+00 : f32
    %392 = vector.broadcast %cst_178 : f32 to vector<16x256xf32>
    %393 = arith.subf %392, %371 : vector<16x256xf32>
    %394 = arith.mulf %393, %371 : vector<16x256xf32>
    %395 = math.exp %394 : vector<16x256xf32>
    %396 = arith.mulf %391, %395 : vector<16x256xf32>
    %cst_179 = arith.constant 1.000000e+00 : f32
    %397 = vector.broadcast %cst_179 : f32 to vector<16x256xf32>
    %398 = arith.subf %397, %396 : vector<16x256xf32>
    %399 = arith.mulf %370, %398 : vector<16x256xf32>
    %cst_180 = arith.constant 1.000000e+00 : f32
    %400 = vector.broadcast %cst_180 : f32 to vector<16x256xf32>
    %401 = arith.addf %400, %399 : vector<16x256xf32>
    %402 = arith.mulf %363, %401 : vector<16x256xf32>
    %c0_181 = arith.constant 0 : index
    %c0_182 = arith.constant 0 : index
    %403 = vector.load %arg16[%c0_181, %c0_182] : memref<64x256xf32, #tpu.memory_space<vmem>>, vector<64x256xf32>
    %404 = vector.extract_strided_slice %402 {offsets = [0, 0], sizes = [16, 64], strides = [1, 1]} : vector<16x256xf32> to vector<16x64xf32>
    %cst_183 = arith.constant dense<0.000000e+00> : vector<16x256xf32>
    %405 = tpu.matmul %404, %403, %cst_183 {dimension_numbers = #tpu.dot_dimension_numbers<[1], [0], [0], [1], [0, 0, 1, 1], [], []>} : vector<16x64xf32>, vector<64x256xf32>, vector<16x256xf32> -> vector<16x256xf32>
    %406 = vector.extract_strided_slice %402 {offsets = [0, 64], sizes = [16, 64], strides = [1, 1]} : vector<16x256xf32> to vector<16x64xf32>
    %cst_184 = arith.constant dense<0.000000e+00> : vector<16x256xf32>
    %407 = tpu.matmul %406, %403, %cst_184 {dimension_numbers = #tpu.dot_dimension_numbers<[1], [0], [0], [1], [0, 0, 1, 1], [], []>} : vector<16x64xf32>, vector<64x256xf32>, vector<16x256xf32> -> vector<16x256xf32>
    %408 = vector.extract_strided_slice %402 {offsets = [0, 128], sizes = [16, 64], strides = [1, 1]} : vector<16x256xf32> to vector<16x64xf32>
    %cst_185 = arith.constant dense<0.000000e+00> : vector<16x256xf32>
    %409 = tpu.matmul %408, %403, %cst_185 {dimension_numbers = #tpu.dot_dimension_numbers<[1], [0], [0], [1], [0, 0, 1, 1], [], []>} : vector<16x64xf32>, vector<64x256xf32>, vector<16x256xf32> -> vector<16x256xf32>
    %410 = vector.extract_strided_slice %402 {offsets = [0, 192], sizes = [16, 64], strides = [1, 1]} : vector<16x256xf32> to vector<16x64xf32>
    %cst_186 = arith.constant dense<0.000000e+00> : vector<16x256xf32>
    %411 = tpu.matmul %410, %403, %cst_186 {dimension_numbers = #tpu.dot_dimension_numbers<[1], [0], [0], [1], [0, 0, 1, 1], [], []>} : vector<16x64xf32>, vector<64x256xf32>, vector<16x256xf32> -> vector<16x256xf32>
    %412 = tpu.concatenate %405, %407, %409, %411 in 1 : vector<16x256xf32>, vector<16x256xf32>, vector<16x256xf32>, vector<16x256xf32> -> vector<16x1024xf32>
    %c17_i32_187 = arith.constant 17 : i32
    %413 = tpu.dynamic_rotate %412 by %c17_i32_187 dim 1 : vector<16x1024xf32>, i32 -> vector<16x1024xf32>
    %414 = arith.mulf %16, %8 : vector<1x1024xf32>
    %415 = vector.broadcast %414 : vector<1x1024xf32> to vector<16x1024xf32>
    %416 = arith.mulf %413, %415 : vector<16x1024xf32>
    %c0_188 = arith.constant 0 : index
    %c0_189 = arith.constant 0 : index
    %417 = vector.load %arg8[%c0_188, %c0_189] : memref<16x9xf32, #tpu.memory_space<vmem>>, vector<16x1xf32>
    %418 = vector.broadcast %417 : vector<16x1xf32> to vector<16x1024xf32>
    %419 = arith.mulf %418, %416 : vector<16x1024xf32>
    %c16_i32_190 = arith.constant 16 : i32
    %420 = tpu.dynamic_rotate %412 by %c16_i32_190 dim 1 : vector<16x1024xf32>, i32 -> vector<16x1024xf32>
    %421 = vector.broadcast %16 : vector<1x1024xf32> to vector<16x1024xf32>
    %422 = arith.mulf %420, %421 : vector<16x1024xf32>
    %c0_191 = arith.constant 0 : index
    %c1_192 = arith.constant 1 : index
    %423 = vector.load %arg8[%c0_191, %c1_192] : memref<16x9xf32, #tpu.memory_space<vmem>>, vector<16x1xf32>
    %424 = vector.broadcast %423 : vector<16x1xf32> to vector<16x1024xf32>
    %425 = arith.mulf %424, %422 : vector<16x1024xf32>
    %426 = arith.addf %419, %425 : vector<16x1024xf32>
    %c15_i32_193 = arith.constant 15 : i32
    %427 = tpu.dynamic_rotate %412 by %c15_i32_193 dim 1 : vector<16x1024xf32>, i32 -> vector<16x1024xf32>
    %428 = arith.mulf %16, %12 : vector<1x1024xf32>
    %429 = vector.broadcast %428 : vector<1x1024xf32> to vector<16x1024xf32>
    %430 = arith.mulf %427, %429 : vector<16x1024xf32>
    %c0_194 = arith.constant 0 : index
    %c2_195 = arith.constant 2 : index
    %431 = vector.load %arg8[%c0_194, %c2_195] : memref<16x9xf32, #tpu.memory_space<vmem>>, vector<16x1xf32>
    %432 = vector.broadcast %431 : vector<16x1xf32> to vector<16x1024xf32>
    %433 = arith.mulf %432, %430 : vector<16x1024xf32>
    %434 = arith.addf %426, %433 : vector<16x1024xf32>
    %c1_i32_196 = arith.constant 1 : i32
    %435 = tpu.dynamic_rotate %412 by %c1_i32_196 dim 1 : vector<16x1024xf32>, i32 -> vector<16x1024xf32>
    %436 = vector.broadcast %8 : vector<1x1024xf32> to vector<16x1024xf32>
    %437 = arith.mulf %435, %436 : vector<16x1024xf32>
    %c0_197 = arith.constant 0 : index
    %c3_198 = arith.constant 3 : index
    %438 = vector.load %arg8[%c0_197, %c3_198] : memref<16x9xf32, #tpu.memory_space<vmem>>, vector<16x1xf32>
    %439 = vector.broadcast %438 : vector<16x1xf32> to vector<16x1024xf32>
    %440 = arith.mulf %439, %437 : vector<16x1024xf32>
    %441 = arith.addf %434, %440 : vector<16x1024xf32>
    %c0_199 = arith.constant 0 : index
    %c4_200 = arith.constant 4 : index
    %442 = vector.load %arg8[%c0_199, %c4_200] : memref<16x9xf32, #tpu.memory_space<vmem>>, vector<16x1xf32>
    %443 = vector.broadcast %442 : vector<16x1xf32> to vector<16x1024xf32>
    %444 = arith.mulf %443, %412 : vector<16x1024xf32>
    %445 = arith.addf %441, %444 : vector<16x1024xf32>
    %c1023_i32_201 = arith.constant 1023 : i32
    %446 = tpu.dynamic_rotate %412 by %c1023_i32_201 dim 1 : vector<16x1024xf32>, i32 -> vector<16x1024xf32>
    %447 = vector.broadcast %12 : vector<1x1024xf32> to vector<16x1024xf32>
    %448 = arith.mulf %446, %447 : vector<16x1024xf32>
    %c0_202 = arith.constant 0 : index
    %c5_203 = arith.constant 5 : index
    %449 = vector.load %arg8[%c0_202, %c5_203] : memref<16x9xf32, #tpu.memory_space<vmem>>, vector<16x1xf32>
    %450 = vector.broadcast %449 : vector<16x1xf32> to vector<16x1024xf32>
    %451 = arith.mulf %450, %448 : vector<16x1024xf32>
    %452 = arith.addf %445, %451 : vector<16x1024xf32>
    %c1009_i32_204 = arith.constant 1009 : i32
    %453 = tpu.dynamic_rotate %412 by %c1009_i32_204 dim 1 : vector<16x1024xf32>, i32 -> vector<16x1024xf32>
    %454 = arith.mulf %20, %8 : vector<1x1024xf32>
    %455 = vector.broadcast %454 : vector<1x1024xf32> to vector<16x1024xf32>
    %456 = arith.mulf %453, %455 : vector<16x1024xf32>
    %c0_205 = arith.constant 0 : index
    %c6_206 = arith.constant 6 : index
    %457 = vector.load %arg8[%c0_205, %c6_206] : memref<16x9xf32, #tpu.memory_space<vmem>>, vector<16x1xf32>
    %458 = vector.broadcast %457 : vector<16x1xf32> to vector<16x1024xf32>
    %459 = arith.mulf %458, %456 : vector<16x1024xf32>
    %460 = arith.addf %452, %459 : vector<16x1024xf32>
    %c1008_i32_207 = arith.constant 1008 : i32
    %461 = tpu.dynamic_rotate %412 by %c1008_i32_207 dim 1 : vector<16x1024xf32>, i32 -> vector<16x1024xf32>
    %462 = vector.broadcast %20 : vector<1x1024xf32> to vector<16x1024xf32>
    %463 = arith.mulf %461, %462 : vector<16x1024xf32>
    %c0_208 = arith.constant 0 : index
    %c7_209 = arith.constant 7 : index
    %464 = vector.load %arg8[%c0_208, %c7_209] : memref<16x9xf32, #tpu.memory_space<vmem>>, vector<16x1xf32>
    %465 = vector.broadcast %464 : vector<16x1xf32> to vector<16x1024xf32>
    %466 = arith.mulf %465, %463 : vector<16x1024xf32>
    %467 = arith.addf %460, %466 : vector<16x1024xf32>
    %c1007_i32_210 = arith.constant 1007 : i32
    %468 = tpu.dynamic_rotate %412 by %c1007_i32_210 dim 1 : vector<16x1024xf32>, i32 -> vector<16x1024xf32>
    %469 = arith.mulf %20, %12 : vector<1x1024xf32>
    %470 = vector.broadcast %469 : vector<1x1024xf32> to vector<16x1024xf32>
    %471 = arith.mulf %468, %470 : vector<16x1024xf32>
    %c0_211 = arith.constant 0 : index
    %c8_212 = arith.constant 8 : index
    %472 = vector.load %arg8[%c0_211, %c8_212] : memref<16x9xf32, #tpu.memory_space<vmem>>, vector<16x1xf32>
    %473 = vector.broadcast %472 : vector<16x1xf32> to vector<16x1024xf32>
    %474 = arith.mulf %473, %471 : vector<16x1024xf32>
    %475 = arith.addf %467, %474 : vector<16x1024xf32>
    %cst_213 = arith.constant dense<0.000000e+00> : vector<1024xf32>
    %476 = vector.multi_reduction <add>, %475, %cst_213 [0] : vector<16x1024xf32> to vector<1024xf32>
    %477 = vector.shape_cast %476 : vector<1024xf32> to vector<1x1024xf32>
    %c0_214 = arith.constant 0 : index
    %c0_215 = arith.constant 0 : index
    %478 = vector.load %arg9[%c0_214, %c0_215] : memref<1x1xf32, #tpu.memory_space<vmem>>, vector<1x1xf32>
    %479 = vector.broadcast %478 : vector<1x1xf32> to vector<1x1024xf32>
    %480 = arith.addf %477, %479 : vector<1x1024xf32>
    %cst_216 = arith.constant -1.000000e+00 : f32
    %cst_217 = arith.constant 1.000000e+00 : f32
    %481 = vector.broadcast %cst_216 : f32 to vector<1x1024xf32>
    %482 = arith.maximumf %481, %480 : vector<1x1024xf32>
    %483 = vector.broadcast %cst_217 : f32 to vector<1x1024xf32>
    %484 = arith.minimumf %483, %482 : vector<1x1024xf32>
    %c0_218 = arith.constant 0 : index
    %c0_219 = arith.constant 0 : index
    %c0_220 = arith.constant 0 : index
    %485 = vector.load %arg17[%c0_218, %c0_219, %c0_220] : memref<1x1x1024xf32, #tpu.memory_space<vmem>>, vector<1x1x1024xf32>
    %486 = vector.shape_cast %485 : vector<1x1x1024xf32> to vector<1x1024xf32>
    %487 = vector.shape_cast %484 : vector<1x1024xf32> to vector<1x1x1024xf32>
    tpu.vector_store %arg17[%c0_218, %c0_219, %c0_220], %487 {strides = array<i32>} : memref<1x1x1024xf32, #tpu.memory_space<vmem>>, vector<1x1x1024xf32>,
    return
  }
  func.func @transform_0(%arg0: i32) -> (i32, i32, i32) {
    %c0_i32 = arith.constant 0 : i32
    %c0_i32_0 = arith.constant 0 : i32
    %c0_i32_1 = arith.constant 0 : i32
    return %arg0, %c0_i32, %c0_i32_0 : i32, i32, i32
  }
  func.func @transform_1(%arg0: i32) -> (i32, i32) {
    %c0_i32 = arith.constant 0 : i32
    %c0_i32_0 = arith.constant 0 : i32
    %c0_i32_1 = arith.constant 0 : i32
    return %c0_i32, %c0_i32_0 : i32, i32
  }
  func.func @transform_2(%arg0: i32) -> (i32, i32) {
    %c0_i32 = arith.constant 0 : i32
    %c0_i32_0 = arith.constant 0 : i32
    %c0_i32_1 = arith.constant 0 : i32
    return %c0_i32, %c0_i32_0 : i32, i32
  }
  func.func @transform_3(%arg0: i32) -> (i32, i32, i32) {
    %c0_i32 = arith.constant 0 : i32
    %c0_i32_0 = arith.constant 0 : i32
    %c0_i32_1 = arith.constant 0 : i32
    %c0_i32_2 = arith.constant 0 : i32
    return %c0_i32, %c0_i32_0, %c0_i32_1 : i32, i32, i32
  }
  func.func @transform_4(%arg0: i32) -> (i32, i32) {
    %c0_i32 = arith.constant 0 : i32
    %c0_i32_0 = arith.constant 0 : i32
    %c0_i32_1 = arith.constant 0 : i32
    return %c0_i32, %c0_i32_0 : i32, i32
  }
  func.func @transform_5(%arg0: i32) -> (i32, i32, i32) {
    %c0_i32 = arith.constant 0 : i32
    %c0_i32_0 = arith.constant 0 : i32
    %c0_i32_1 = arith.constant 0 : i32
    %c0_i32_2 = arith.constant 0 : i32
    return %c0_i32, %c0_i32_0, %c0_i32_1 : i32, i32, i32
  }
  func.func @transform_6(%arg0: i32) -> (i32, i32) {
    %c0_i32 = arith.constant 0 : i32
    %c0_i32_0 = arith.constant 0 : i32
    %c0_i32_1 = arith.constant 0 : i32
    return %c0_i32, %c0_i32_0 : i32, i32
  }
  func.func @transform_7(%arg0: i32) -> (i32, i32) {
    %c0_i32 = arith.constant 0 : i32
    %c0_i32_0 = arith.constant 0 : i32
    %c0_i32_1 = arith.constant 0 : i32
    return %c0_i32, %c0_i32_0 : i32, i32
  }
  func.func @transform_8(%arg0: i32) -> (i32, i32) {
    %c0_i32 = arith.constant 0 : i32
    %c0_i32_0 = arith.constant 0 : i32
    %c0_i32_1 = arith.constant 0 : i32
    return %c0_i32, %c0_i32_0 : i32, i32
  }
  func.func @transform_9(%arg0: i32) -> (i32, i32) {
    %c0_i32 = arith.constant 0 : i32
    %c0_i32_0 = arith.constant 0 : i32
    %c0_i32_1 = arith.constant 0 : i32
    return %c0_i32, %c0_i32_0 : i32, i32
  }
  func.func @transform_10(%arg0: i32) -> (i32, i32) {
    %c0_i32 = arith.constant 0 : i32
    %c0_i32_0 = arith.constant 0 : i32
    %c0_i32_1 = arith.constant 0 : i32
    return %c0_i32, %c0_i32_0 : i32, i32
  }
  func.func @transform_11(%arg0: i32) -> (i32, i32) {
    %c0_i32 = arith.constant 0 : i32
    %c0_i32_0 = arith.constant 0 : i32
    %c0_i32_1 = arith.constant 0 : i32
    return %c0_i32, %c0_i32_0 : i32, i32
  }
  func.func @transform_12(%arg0: i32) -> (i32, i32) {
    %c0_i32 = arith.constant 0 : i32
    %c0_i32_0 = arith.constant 0 : i32
    %c0_i32_1 = arith.constant 0 : i32
    return %c0_i32, %c0_i32_0 : i32, i32
  }
  func.func @transform_13(%arg0: i32) -> (i32, i32) {
    %c0_i32 = arith.constant 0 : i32
    %c0_i32_0 = arith.constant 0 : i32
    %c0_i32_1 = arith.constant 0 : i32
    return %c0_i32, %c0_i32_0 : i32, i32
  }
  func.func @transform_14(%arg0: i32) -> (i32, i32) {
    %c0_i32 = arith.constant 0 : i32
    %c0_i32_0 = arith.constant 0 : i32
    %c0_i32_1 = arith.constant 0 : i32
    return %c0_i32, %c0_i32_0 : i32, i32
  }
  func.func @transform_15(%arg0: i32) -> (i32, i32) {
    %c0_i32 = arith.constant 0 : i32
    %c0_i32_0 = arith.constant 0 : i32
    %c0_i32_1 = arith.constant 0 : i32
    return %c0_i32, %c0_i32_0 : i32, i32
  }
  func.func @transform_16(%arg0: i32) -> (i32, i32, i32) {
    %c0_i32 = arith.constant 0 : i32
    %c0_i32_0 = arith.constant 0 : i32
    %c0_i32_1 = arith.constant 0 : i32
    return %arg0, %c0_i32, %c0_i32_0 : i32, i32, i32
  }
  func.func @transform_17(%arg0: i32) -> (i32, i32, i32) {
    %c0_i32 = arith.constant 0 : i32
    %c0_i32_0 = arith.constant 0 : i32
    %c0_i32_1 = arith.constant 0 : i32
    return %arg0, %c0_i32, %c0_i32_0 : i32, i32, i32
  }
  func.func @transform_18(%arg0: i32) -> (i32, i32, i32) {
    %c0_i32 = arith.constant 0 : i32
    %c0_i32_0 = arith.constant 0 : i32
    %c0_i32_1 = arith.constant 0 : i32
    return %arg0, %c0_i32, %c0_i32_0 : i32, i32, i32
  }
}

</mosaic_0001>

<llo_original>
// kernel: simple_vq_autoencoder_forward.1
$region0: #{simple_vq_autoencoder_forward.1}
  #allocation0 [shape = 'u32[]', space=smem, size = 0x4, offset = 0x4, fixed_abs, tag = 'smem constant byte address 0x4 - core index']
  #allocation1 [shape = 'u32[144,128]{1,0:T(1,128)}', space=vmem, size = 0x12000, scoped, tag = 'internal scratch']
  #allocation2 [shape = 'f32[1,1]{1,0:T(1,128)S(1)}', space=vmem, size = 0x200, scoped, tag = 'scoped memory for simple_vq_autoencoder_forward.1']
  %s0 = inlined_call_operand.vmem [shape: f32[2,1,1024], index: 0, kind: input, shape index: {}]
  %s1 = inlined_call_operand.vmem [shape: f32[16,9], index: 1, kind: input, shape index: {}]
  %s2 = inlined_call_operand.vmem [shape: f32[16,1], index: 2, kind: input, shape index: {}]
  %s3 = inlined_call_operand.vmem [shape: f32[9,32,16], index: 3, kind: input, shape index: {}]
  %s4 = inlined_call_operand.vmem [shape: f32[32,1], index: 4, kind: input, shape index: {}]
  %s5 = inlined_call_operand.vmem [shape: f32[9,16,32], index: 5, kind: input, shape index: {}]
  %s6 = inlined_call_operand.vmem [shape: f32[16,1], index: 6, kind: input, shape index: {}]
  %s7 = inlined_call_operand.vmem [shape: f32[16,9], index: 7, kind: input, shape index: {}]
  %s8 = inlined_call_operand.<no memory space> [shape: f32[1,1], index: 8, kind: input, shape index: {}]
  %s9 = inlined_call_operand.vmem [shape: f32[64,32], index: 9, kind: input, shape index: {}]
  %s10 = inlined_call_operand.vmem [shape: f32[32,64], index: 10, kind: input, shape index: {}]
  %s11 = inlined_call_operand.vmem [shape: f32[64,1], index: 11, kind: input, shape index: {}]
  %s12 = inlined_call_operand.vmem [shape: f32[256,64], index: 12, kind: input, shape index: {}]
  %s13 = inlined_call_operand.vmem [shape: f32[64,16], index: 13, kind: input, shape index: {}]
  %s14 = inlined_call_operand.vmem [shape: f32[16,64], index: 14, kind: input, shape index: {}]
  %s15 = inlined_call_operand.vmem [shape: f32[64,256], index: 15, kind: input, shape index: {}]
  %s16 = inlined_call_operand.vmem [shape: f32[2,1,1024], index: 16, kind: output, shape index: {0}]
  %s17 = inlined_call_operand.vmem [shape: s32[2,1,64], index: 17, kind: output, shape index: {1}]
  %s18 = inlined_call_operand.vmem [shape: f32[2,1,1], index: 18, kind: output, shape index: {2}]
  %19 = xla_tuple %s16, %s17, %s18
  %s20 = sld [smem:[#allocation0]]
  $region113: #{simple_vq_autoencoder_forward.1} parent=0
    _
  %s22 = ssub.s32 1, %s20
  %s23 = scalar_select 0, %s22, %s20
  %v24 = vstv %s8
  %25 = vst [vmem:[#allocation2] sm:$0x1] %v24
  loop: start=0, step=1, limit=4
  $region2: #{simple_vq_autoencoder_forward.1} parent=0 // loop_pre_header
    _
  $region3: #{simple_vq_autoencoder_forward.1} parent=0 // loop_header
    %s27 = sphi 0, %s31
    %p28 = scmp.ge.s32.totalorder %s27, 4
    %s37 = sphi 0, %s39
    %s40 = sphi 0, %s37
    %s41 = sphi 0, %s40
    %s57 = sphi 0, %s41
    %s61 = sphi 0, %s61
    %s63 = sphi 0, %s61
    %s64 = sphi 0, %s63
    %s78 = sphi 0, %s64
    %s82 = sphi 0, %s82
    %s84 = sphi 0, %s82
    %s85 = sphi 0, %s84
    %s99 = sphi 0, %s85
    %s103 = sphi 0, %s103
    %s105 = sphi 0, %s103
    %s106 = sphi 0, %s105
    %s120 = sphi 0, %s106
    %s124 = sphi 0, %s124
    %s126 = sphi 0, %s124
    %s127 = sphi 0, %s126
    %s141 = sphi 0, %s127
    %s145 = sphi 0, %s145
    %s147 = sphi 0, %s145
    %s148 = sphi 0, %s147
    %s162 = sphi 0, %s148
    %s166 = sphi 0, %s166
    %s168 = sphi 0, %s166
    %s169 = sphi 0, %s168
    %s183 = sphi 0, %s169
    %s187 = sphi 0, %s187
    %s189 = sphi 0, %s187
    %s190 = sphi 0, %s189
    %s204 = sphi 0, %s190
    %s208 = sphi 0, %s208
    %s210 = sphi 0, %s208
    %s211 = sphi 0, %s210
    %s225 = sphi 0, %s211
    %s229 = sphi 0, %s229
    %s231 = sphi 0, %s229
    %s232 = sphi 0, %s231
    %s246 = sphi 0, %s232
    %s250 = sphi 0, %s250
    %s252 = sphi 0, %s250
    %s253 = sphi 0, %s252
    %s267 = sphi 0, %s253
    %s271 = sphi 0, %s271
    %s273 = sphi 0, %s271
    %s274 = sphi 0, %s273
    %s288 = sphi 0, %s274
    %s292 = sphi 0, %s292
    %s294 = sphi 0, %s292
    %s295 = sphi 0, %s294
    %s309 = sphi 0, %s295
    %s313 = sphi 0, %s313
    %s315 = sphi 0, %s313
    %s316 = sphi 0, %s315
    %s330 = sphi 0, %s316
    %s334 = sphi 0, %s334
    %s336 = sphi 0, %s334
    %s337 = sphi 0, %s336
    %s351 = sphi 0, %s337
    %s355 = sphi 0, %s355
    %s357 = sphi 0, %s355
    %s358 = sphi 0, %s357
    %s372 = sphi 0, %s358
    %s378 = sphi 0, %s380
    %s381 = sphi 0, %s378
    %s382 = sphi 0, %s381
    %s398 = sphi 0, %s382
    %s404 = sphi 0, %s406
    %s407 = sphi 0, %s404
    %s408 = sphi 0, %s407
    %s424 = sphi 0, %s408
    %s430 = sphi 0, %s432
    %s433 = sphi 0, %s430
    %s434 = sphi 0, %s433
    %s450 = sphi 0, %s434
  $region4: #{simple_vq_autoencoder_forward.1} parent=0 // loop_header_branch
    %30 = sbr.rel (%p28) target = $region8
  $region5: #{simple_vq_autoencoder_forward.1} parent=0 // loop_body
    %s32 = ssub.s32 %s27, 1
    %s33 = ssub.s32 %s27, 2
    %s34 = sadd.s32 %s27, 1
    %s35 = ssub.s32 %s27, %s34
    %p36 = scmp.eq.s32.totalorder %s35, 0
    %s38 = sadd.s32 %s37, 1
    %s39 = scalar_select %p36, %s37, %s38
    %p42 = pneg %p36
    %p43 = scmp.eq.s32.totalorder %s27, 1
    %p44 = por %p42, %p43
    %p45 = scmp.ne.s32.totalorder %s37, %s40
    %p46 = scmp.eq.s32.totalorder %s27, 0
    %p47 = por %p45, %p46
    %p48 = scmp.ne.s32.totalorder %s37, %s40
    %p49 = scmp.eq.s32.totalorder %s32, 1
    %p50 = por %p48, %p49
    %p51 = scmp.ne.s32.totalorder %s40, %s41
    %p52 = scmp.eq.s32.totalorder %s32, 0
    %p53 = por %p51, %p52
    %p54 = scmp.ne.s32.totalorder %s40, %s41
    %p55 = scmp.eq.s32.totalorder %s33, 1
    %p56 = por %p54, %p55
    %p58 = scmp.ne.s32.totalorder %s41, %s57
    %p59 = scmp.eq.s32.totalorder %s33, 0
    %p60 = por %p58, %p59
    %s62 = sadd.s32 %s61, 1
    %p65 = scmp.eq.s32.totalorder %s27, 1
    %p66 = scmp.ne.s32.totalorder %s61, %s63
    %p67 = scmp.eq.s32.totalorder %s27, 0
    %p68 = por %p66, %p67
    %p69 = scmp.ne.s32.totalorder %s61, %s63
    %p70 = scmp.eq.s32.totalorder %s32, 1
    %p71 = por %p69, %p70
    %p72 = scmp.ne.s32.totalorder %s63, %s64
    %p73 = scmp.eq.s32.totalorder %s32, 0
    %p74 = por %p72, %p73
    %p75 = scmp.ne.s32.totalorder %s63, %s64
    %p76 = scmp.eq.s32.totalorder %s33, 1
    %p77 = por %p75, %p76
    %p79 = scmp.ne.s32.totalorder %s64, %s78
    %p80 = scmp.eq.s32.totalorder %s33, 0
    %p81 = por %p79, %p80
    %s83 = sadd.s32 %s82, 1
    %p86 = scmp.eq.s32.totalorder %s27, 1
    %p87 = scmp.ne.s32.totalorder %s82, %s84
    %p88 = scmp.eq.s32.totalorder %s27, 0
    %p89 = por %p87, %p88
    %p90 = scmp.ne.s32.totalorder %s82, %s84
    %p91 = scmp.eq.s32.totalorder %s32, 1
    %p92 = por %p90, %p91
    %p93 = scmp.ne.s32.totalorder %s84, %s85
    %p94 = scmp.eq.s32.totalorder %s32, 0
    %p95 = por %p93, %p94
    %p96 = scmp.ne.s32.totalorder %s84, %s85
    %p97 = scmp.eq.s32.totalorder %s33, 1
    %p98 = por %p96, %p97
    %p100 = scmp.ne.s32.totalorder %s85, %s99
    %p101 = scmp.eq.s32.totalorder %s33, 0
    %p102 = por %p100, %p101
    %s104 = sadd.s32 %s103, 1
    %p107 = scmp.eq.s32.totalorder %s27, 1
    %p108 = scmp.ne.s32.totalorder %s103, %s105
    %p109 = scmp.eq.s32.totalorder %s27, 0
    %p110 = por %p108, %p109
    %p111 = scmp.ne.s32.totalorder %s103, %s105
    %p112 = scmp.eq.s32.totalorder %s32, 1
    %p113 = por %p111, %p112
    %p114 = scmp.ne.s32.totalorder %s105, %s106
    %p115 = scmp.eq.s32.totalorder %s32, 0
    %p116 = por %p114, %p115
    %p117 = scmp.ne.s32.totalorder %s105, %s106
    %p118 = scmp.eq.s32.totalorder %s33, 1
    %p119 = por %p117, %p118
    %p121 = scmp.ne.s32.totalorder %s106, %s120
    %p122 = scmp.eq.s32.totalorder %s33, 0
    %p123 = por %p121, %p122
    %s125 = sadd.s32 %s124, 1
    %p128 = scmp.eq.s32.totalorder %s27, 1
    %p129 = scmp.ne.s32.totalorder %s124, %s126
    %p130 = scmp.eq.s32.totalorder %s27, 0
    %p131 = por %p129, %p130
    %p132 = scmp.ne.s32.totalorder %s124, %s126
    %p133 = scmp.eq.s32.totalorder %s32, 1
    %p134 = por %p132, %p133
    %p135 = scmp.ne.s32.totalorder %s126, %s127
    %p136 = scmp.eq.s32.totalorder %s32, 0
    %p137 = por %p135, %p136
    %p138 = scmp.ne.s32.totalorder %s126, %s127
    %p139 = scmp.eq.s32.totalorder %s33, 1
    %p140 = por %p138, %p139
    %p142 = scmp.ne.s32.totalorder %s127, %s141
    %p143 = scmp.eq.s32.totalorder %s33, 0
    %p144 = por %p142, %p143
    %s146 = sadd.s32 %s145, 1
    %p149 = scmp.eq.s32.totalorder %s27, 1
    %p150 = scmp.ne.s32.totalorder %s145, %s147
    %p151 = scmp.eq.s32.totalorder %s27, 0
    %p152 = por %p150, %p151
    %p153 = scmp.ne.s32.totalorder %s145, %s147
    %p154 = scmp.eq.s32.totalorder %s32, 1
    %p155 = por %p153, %p154
    %p156 = scmp.ne.s32.totalorder %s147, %s148
    %p157 = scmp.eq.s32.totalorder %s32, 0
    %p158 = por %p156, %p157
    %p159 = scmp.ne.s32.totalorder %s147, %s148
    %p160 = scmp.eq.s32.totalorder %s33, 1
    %p161 = por %p159, %p160
    %p163 = scmp.ne.s32.totalorder %s148, %s162
    %p164 = scmp.eq.s32.totalorder %s33, 0
    %p165 = por %p163, %p164
    %s167 = sadd.s32 %s166, 1
    %p170 = scmp.eq.s32.totalorder %s27, 1
    %p171 = scmp.ne.s32.totalorder %s166, %s168
    %p172 = scmp.eq.s32.totalorder %s27, 0
    %p173 = por %p171, %p172
    %p174 = scmp.ne.s32.totalorder %s166, %s168
    %p175 = scmp.eq.s32.totalorder %s32, 1
    %p176 = por %p174, %p175
    %p177 = scmp.ne.s32.totalorder %s168, %s169
    %p178 = scmp.eq.s32.totalorder %s32, 0
    %p179 = por %p177, %p178
    %p180 = scmp.ne.s32.totalorder %s168, %s169
    %p181 = scmp.eq.s32.totalorder %s33, 1
    %p182 = por %p180, %p181
    %p184 = scmp.ne.s32.totalorder %s169, %s183
    %p185 = scmp.eq.s32.totalorder %s33, 0
    %p186 = por %p184, %p185
    %s188 = sadd.s32 %s187, 1
    %p191 = scmp.eq.s32.totalorder %s27, 1
    %p192 = scmp.ne.s32.totalorder %s187, %s189
    %p193 = scmp.eq.s32.totalorder %s27, 0
    %p194 = por %p192, %p193
    %p195 = scmp.ne.s32.totalorder %s187, %s189
    %p196 = scmp.eq.s32.totalorder %s32, 1
    %p197 = por %p195, %p196
    %p198 = scmp.ne.s32.totalorder %s189, %s190
    %p199 = scmp.eq.s32.totalorder %s32, 0
    %p200 = por %p198, %p199
    %p201 = scmp.ne.s32.totalorder %s189, %s190
    %p202 = scmp.eq.s32.totalorder %s33, 1
    %p203 = por %p201, %p202
    %p205 = scmp.ne.s32.totalorder %s190, %s204
    %p206 = scmp.eq.s32.totalorder %s33, 0
    %p207 = por %p205, %p206
    %s209 = sadd.s32 %s208, 1
    %p212 = scmp.eq.s32.totalorder %s27, 1
    %p213 = scmp.ne.s32.totalorder %s208, %s210
    %p214 = scmp.eq.s32.totalorder %s27, 0
    %p215 = por %p213, %p214
    %p216 = scmp.ne.s32.totalorder %s208, %s210
    %p217 = scmp.eq.s32.totalorder %s32, 1
    %p218 = por %p216, %p217
    %p219 = scmp.ne.s32.totalorder %s210, %s211
    %p220 = scmp.eq.s32.totalorder %s32, 0
    %p221 = por %p219, %p220
    %p222 = scmp.ne.s32.totalorder %s210, %s211
    %p223 = scmp.eq.s32.totalorder %s33, 1
    %p224 = por %p222, %p223
    %p226 = scmp.ne.s32.totalorder %s211, %s225
    %p227 = scmp.eq.s32.totalorder %s33, 0
    %p228 = por %p226, %p227
    %s230 = sadd.s32 %s229, 1
    %p233 = scmp.eq.s32.totalorder %s27, 1
    %p234 = scmp.ne.s32.totalorder %s229, %s231
    %p235 = scmp.eq.s32.totalorder %s27, 0
    %p236 = por %p234, %p235
    %p237 = scmp.ne.s32.totalorder %s229, %s231
    %p238 = scmp.eq.s32.totalorder %s32, 1
    %p239 = por %p237, %p238
    %p240 = scmp.ne.s32.totalorder %s231, %s232
    %p241 = scmp.eq.s32.totalorder %s32, 0
    %p242 = por %p240, %p241
    %p243 = scmp.ne.s32.totalorder %s231, %s232
    %p244 = scmp.eq.s32.totalorder %s33, 1
    %p245 = por %p243, %p244
    %p247 = scmp.ne.s32.totalorder %s232, %s246
    %p248 = scmp.eq.s32.totalorder %s33, 0
    %p249 = por %p247, %p248
    %s251 = sadd.s32 %s250, 1
    %p254 = scmp.eq.s32.totalorder %s27, 1
    %p255 = scmp.ne.s32.totalorder %s250, %s252
    %p256 = scmp.eq.s32.totalorder %s27, 0
    %p257 = por %p255, %p256
    %p258 = scmp.ne.s32.totalorder %s250, %s252
    %p259 = scmp.eq.s32.totalorder %s32, 1
    %p260 = por %p258, %p259
    %p261 = scmp.ne.s32.totalorder %s252, %s253
    %p262 = scmp.eq.s32.totalorder %s32, 0
    %p263 = por %p261, %p262
    %p264 = scmp.ne.s32.totalorder %s252, %s253
    %p265 = scmp.eq.s32.totalorder %s33, 1
    %p266 = por %p264, %p265
    %p268 = scmp.ne.s32.totalorder %s253, %s267
    %p269 = scmp.eq.s32.totalorder %s33, 0
    %p270 = por %p268, %p269
    %s272 = sadd.s32 %s271, 1
    %p275 = scmp.eq.s32.totalorder %s27, 1
    %p276 = scmp.ne.s32.totalorder %s271, %s273
    %p277 = scmp.eq.s32.totalorder %s27, 0
    %p278 = por %p276, %p277
    %p279 = scmp.ne.s32.totalorder %s271, %s273
    %p280 = scmp.eq.s32.totalorder %s32, 1
    %p281 = por %p279, %p280
    %p282 = scmp.ne.s32.totalorder %s273, %s274
    %p283 = scmp.eq.s32.totalorder %s32, 0
    %p284 = por %p282, %p283
    %p285 = scmp.ne.s32.totalorder %s273, %s274
    %p286 = scmp.eq.s32.totalorder %s33, 1
    %p287 = por %p285, %p286
    %p289 = scmp.ne.s32.totalorder %s274, %s288
    %p290 = scmp.eq.s32.totalorder %s33, 0
    %p291 = por %p289, %p290
    %s293 = sadd.s32 %s292, 1
    %p296 = scmp.eq.s32.totalorder %s27, 1
    %p297 = scmp.ne.s32.totalorder %s292, %s294
    %p298 = scmp.eq.s32.totalorder %s27, 0
    %p299 = por %p297, %p298
    %p300 = scmp.ne.s32.totalorder %s292, %s294
    %p301 = scmp.eq.s32.totalorder %s32, 1
    %p302 = por %p300, %p301
    %p303 = scmp.ne.s32.totalorder %s294, %s295
    %p304 = scmp.eq.s32.totalorder %s32, 0
    %p305 = por %p303, %p304
    %p306 = scmp.ne.s32.totalorder %s294, %s295
    %p307 = scmp.eq.s32.totalorder %s33, 1
    %p308 = por %p306, %p307
    %p310 = scmp.ne.s32.totalorder %s295, %s309
    %p311 = scmp.eq.s32.totalorder %s33, 0
    %p312 = por %p310, %p311
    %s314 = sadd.s32 %s313, 1
    %p317 = scmp.eq.s32.totalorder %s27, 1
    %p318 = scmp.ne.s32.totalorder %s313, %s315
    %p319 = scmp.eq.s32.totalorder %s27, 0
    %p320 = por %p318, %p319
    %p321 = scmp.ne.s32.totalorder %s313, %s315
    %p322 = scmp.eq.s32.totalorder %s32, 1
    %p323 = por %p321, %p322
    %p324 = scmp.ne.s32.totalorder %s315, %s316
    %p325 = scmp.eq.s32.totalorder %s32, 0
    %p326 = por %p324, %p325
    %p327 = scmp.ne.s32.totalorder %s315, %s316
    %p328 = scmp.eq.s32.totalorder %s33, 1
    %p329 = por %p327, %p328
    %p331 = scmp.ne.s32.totalorder %s316, %s330
    %p332 = scmp.eq.s32.totalorder %s33, 0
    %p333 = por %p331, %p332
    %s335 = sadd.s32 %s334, 1
    %p338 = scmp.eq.s32.totalorder %s27, 1
    %p339 = scmp.ne.s32.totalorder %s334, %s336
    %p340 = scmp.eq.s32.totalorder %s27, 0
    %p341 = por %p339, %p340
    %p342 = scmp.ne.s32.totalorder %s334, %s336
    %p343 = scmp.eq.s32.totalorder %s32, 1
    %p344 = por %p342, %p343
    %p345 = scmp.ne.s32.totalorder %s336, %s337
    %p346 = scmp.eq.s32.totalorder %s32, 0
    %p347 = por %p345, %p346
    %p348 = scmp.ne.s32.totalorder %s336, %s337
    %p349 = scmp.eq.s32.totalorder %s33, 1
    %p350 = por %p348, %p349
    %p352 = scmp.ne.s32.totalorder %s337, %s351
    %p353 = scmp.eq.s32.totalorder %s33, 0
    %p354 = por %p352, %p353
    %s356 = sadd.s32 %s355, 1
    %p359 = scmp.eq.s32.totalorder %s27, 1
    %p360 = scmp.ne.s32.totalorder %s355, %s357
    %p361 = scmp.eq.s32.totalorder %s27, 0
    %p362 = por %p360, %p361
    %p363 = scmp.ne.s32.totalorder %s355, %s357
    %p364 = scmp.eq.s32.totalorder %s32, 1
    %p365 = por %p363, %p364
    %p366 = scmp.ne.s32.totalorder %s357, %s358
    %p367 = scmp.eq.s32.totalorder %s32, 0
    %p368 = por %p366, %p367
    %p369 = scmp.ne.s32.totalorder %s357, %s358
    %p370 = scmp.eq.s32.totalorder %s33, 1
    %p371 = por %p369, %p370
    %p373 = scmp.ne.s32.totalorder %s358, %s372
    %p374 = scmp.eq.s32.totalorder %s33, 0
    %p375 = por %p373, %p374
    %s376 = ssub.s32 %s27, %s34
    %p377 = scmp.eq.s32.totalorder %s376, 0
    %s379 = sadd.s32 %s378, 1
    %s380 = scalar_select %p377, %s378, %s379
    %p383 = pneg %p377
    %p384 = scmp.eq.s32.totalorder %s27, 1
    %p385 = por %p383, %p384
    %p386 = scmp.ne.s32.totalorder %s378, %s381
    %p387 = scmp.eq.s32.totalorder %s27, 0
    %p388 = por %p386, %p387
    %p389 = scmp.ne.s32.totalorder %s378, %s381
    %p390 = scmp.eq.s32.totalorder %s32, 1
    %p391 = por %p389, %p390
    %p392 = scmp.ne.s32.totalorder %s381, %s382
    %p393 = scmp.eq.s32.totalorder %s32, 0
    %p394 = por %p392, %p393
    %p395 = scmp.ne.s32.totalorder %s381, %s382
    %p396 = scmp.eq.s32.totalorder %s33, 1
    %p397 = por %p395, %p396
    %p399 = scmp.ne.s32.totalorder %s382, %s398
    %p400 = scmp.eq.s32.totalorder %s33, 0
    %p401 = por %p399, %p400
    %s402 = ssub.s32 %s27, %s34
    %p403 = scmp.eq.s32.totalorder %s402, 0
    %s405 = sadd.s32 %s404, 1
    %s406 = scalar_select %p403, %s404, %s405
    %p409 = pneg %p403
    %p410 = scmp.eq.s32.totalorder %s27, 1
    %p411 = por %p409, %p410
    %p412 = scmp.ne.s32.totalorder %s404, %s407
    %p413 = scmp.eq.s32.totalorder %s27, 0
    %p414 = por %p412, %p413
    %p415 = scmp.ne.s32.totalorder %s404, %s407
    %p416 = scmp.eq.s32.totalorder %s32, 1
    %p417 = por %p415, %p416
    %p418 = scmp.ne.s32.totalorder %s407, %s408
    %p419 = scmp.eq.s32.totalorder %s32, 0
    %p420 = por %p418, %p419
    %p421 = scmp.ne.s32.totalorder %s407, %s408
    %p422 = scmp.eq.s32.totalorder %s33, 1
    %p423 = por %p421, %p422
    %p425 = scmp.ne.s32.totalorder %s408, %s424
    %p426 = scmp.eq.s32.totalorder %s33, 0
    %p427 = por %p425, %p426
    %s428 = ssub.s32 %s27, %s34
    %p429 = scmp.eq.s32.totalorder %s428, 0
    %s431 = sadd.s32 %s430, 1
    %s432 = scalar_select %p429, %s430, %s431
    %p435 = pneg %p429
    %p436 = scmp.eq.s32.totalorder %s27, 1
    %p437 = por %p435, %p436
    %p438 = scmp.ne.s32.totalorder %s430, %s433
    %p439 = scmp.eq.s32.totalorder %s27, 0
    %p440 = por %p438, %p439
    %p441 = scmp.ne.s32.totalorder %s430, %s433
    %p442 = scmp.eq.s32.totalorder %s32, 1
    %p443 = por %p441, %p442
    %p444 = scmp.ne.s32.totalorder %s433, %s434
    %p445 = scmp.eq.s32.totalorder %s32, 0
    %p446 = por %p444, %p445
    %p447 = scmp.ne.s32.totalorder %s433, %s434
    %p448 = scmp.eq.s32.totalorder %s33, 1
    %p449 = por %p447, %p448
    %p451 = scmp.ne.s32.totalorder %s434, %s450
    %p452 = scmp.eq.s32.totalorder %s33, 0
    %p453 = por %p451, %p452
    %p454 = scmp.le.s32.totalorder 1, %s27
    %p455 = scmp.lt.s32.totalorder %s27, 3
    %p456 = pnand %p454, %p455
    %p457 = pneg %p456
    // Predicated region
    $region9: #{simple_vq_autoencoder_forward.1} parent=5 // pred_check
      _
    $region10: #{simple_vq_autoencoder_forward.1} parent=5 // pred_check_branch
      %459 = sbr.rel (%p456) target = $region12
    $region11: #{simple_vq_autoencoder_forward.1} parent=5 // pred_region
      %s460 = ssub.s32 %s27, 1
      // Predicated region
      $region13: #{simple_vq_autoencoder_forward.1} parent=11 // pred_check
        %p461 = pneg %p74
      $region14: #{simple_vq_autoencoder_forward.1} parent=11 // pred_check_branch
        %463 = sbr.rel (%p461) target = $region16
      $region15: #{simple_vq_autoencoder_forward.1} parent=11 // pred_region
        _
      $region16: #{simple_vq_autoencoder_forward.1} parent=11 // pred_fallthru
        _
      // Predicated region
      $region17: #{simple_vq_autoencoder_forward.1} parent=11 // pred_check
        %p464 = pneg %p95
      $region18: #{simple_vq_autoencoder_forward.1} parent=11 // pred_check_branch
        %466 = sbr.rel (%p464) target = $region20
      $region19: #{simple_vq_autoencoder_forward.1} parent=11 // pred_region
        _
      $region20: #{simple_vq_autoencoder_forward.1} parent=11 // pred_fallthru
        _
      // Predicated region
      $region21: #{simple_vq_autoencoder_forward.1} parent=11 // pred_check
        %p467 = pneg %p116
      $region22: #{simple_vq_autoencoder_forward.1} parent=11 // pred_check_branch
        %469 = sbr.rel (%p467) target = $region24
      $region23: #{simple_vq_autoencoder_forward.1} parent=11 // pred_region
        _
      $region24: #{simple_vq_autoencoder_forward.1} parent=11 // pred_fallthru
        _
      // Predicated region
      $region25: #{simple_vq_autoencoder_forward.1} parent=11 // pred_check
        %p470 = pneg %p137
      $region26: #{simple_vq_autoencoder_forward.1} parent=11 // pred_check_branch
        %472 = sbr.rel (%p470) target = $region28
      $region27: #{simple_vq_autoencoder_forward.1} parent=11 // pred_region
        _
      $region28: #{simple_vq_autoencoder_forward.1} parent=11 // pred_fallthru
        _
      // Predicated region
      $region29: #{simple_vq_autoencoder_forward.1} parent=11 // pred_check
        %p473 = pneg %p158
      $region30: #{simple_vq_autoencoder_forward.1} parent=11 // pred_check_branch
        %475 = sbr.rel (%p473) target = $region32
      $region31: #{simple_vq_autoencoder_forward.1} parent=11 // pred_region
        _
      $region32: #{simple_vq_autoencoder_forward.1} parent=11 // pred_fallthru
        _
      // Predicated region
      $region33: #{simple_vq_autoencoder_forward.1} parent=11 // pred_check
        %p476 = pneg %p179
      $region34: #{simple_vq_autoencoder_forward.1} parent=11 // pred_check_branch
        %478 = sbr.rel (%p476) target = $region36
      $region35: #{simple_vq_autoencoder_forward.1} parent=11 // pred_region
        _
      $region36: #{simple_vq_autoencoder_forward.1} parent=11 // pred_fallthru
        _
      // Predicated region
      $region37: #{simple_vq_autoencoder_forward.1} parent=11 // pred_check
        %p479 = pneg %p200
      $region38: #{simple_vq_autoencoder_forward.1} parent=11 // pred_check_branch
        %481 = sbr.rel (%p479) target = $region40
      $region39: #{simple_vq_autoencoder_forward.1} parent=11 // pred_region
        _
      $region40: #{simple_vq_autoencoder_forward.1} parent=11 // pred_fallthru
        _
      // Predicated region
      $region41: #{simple_vq_autoencoder_forward.1} parent=11 // pred_check
        %p482 = pneg %p221
      $region42: #{simple_vq_autoencoder_forward.1} parent=11 // pred_check_branch
        %484 = sbr.rel (%p482) target = $region44
      $region43: #{simple_vq_autoencoder_forward.1} parent=11 // pred_region
        _
      $region44: #{simple_vq_autoencoder_forward.1} parent=11 // pred_fallthru
        _
      // Predicated region
      $region45: #{simple_vq_autoencoder_forward.1} parent=11 // pred_check
        %p485 = pneg %p242
      $region46: #{simple_vq_autoencoder_forward.1} parent=11 // pred_check_branch
        %487 = sbr.rel (%p485) target = $region48
      $region47: #{simple_vq_autoencoder_forward.1} parent=11 // pred_region
        _
      $region48: #{simple_vq_autoencoder_forward.1} parent=11 // pred_fallthru
        _
      // Predicated region
      $region49: #{simple_vq_autoencoder_forward.1} parent=11 // pred_check
        %p488 = pneg %p263
      $region50: #{simple_vq_autoencoder_forward.1} parent=11 // pred_check_branch
        %490 = sbr.rel (%p488) target = $region52
      $region51: #{simple_vq_autoencoder_forward.1} parent=11 // pred_region
        _
      $region52: #{simple_vq_autoencoder_forward.1} parent=11 // pred_fallthru
        _
      // Predicated region
      $region53: #{simple_vq_autoencoder_forward.1} parent=11 // pred_check
        %p491 = pneg %p284
      $region54: #{simple_vq_autoencoder_forward.1} parent=11 // pred_check_branch
        %493 = sbr.rel (%p491) target = $region56
      $region55: #{simple_vq_autoencoder_forward.1} parent=11 // pred_region
        _
      $region56: #{simple_vq_autoencoder_forward.1} parent=11 // pred_fallthru
        _
      // Predicated region
      $region57: #{simple_vq_autoencoder_forward.1} parent=11 // pred_check
        %p494 = pneg %p305
      $region58: #{simple_vq_autoencoder_forward.1} parent=11 // pred_check_branch
        %496 = sbr.rel (%p494) target = $region60
      $region59: #{simple_vq_autoencoder_forward.1} parent=11 // pred_region
        _
      $region60: #{simple_vq_autoencoder_forward.1} parent=11 // pred_fallthru
        _
      // Predicated region
      $region61: #{simple_vq_autoencoder_forward.1} parent=11 // pred_check
        %p497 = pneg %p326
      $region62: #{simple_vq_autoencoder_forward.1} parent=11 // pred_check_branch
        %499 = sbr.rel (%p497) target = $region64
      $region63: #{simple_vq_autoencoder_forward.1} parent=11 // pred_region
        _
      $region64: #{simple_vq_autoencoder_forward.1} parent=11 // pred_fallthru
        _
      // Predicated region
      $region65: #{simple_vq_autoencoder_forward.1} parent=11 // pred_check
        %p500 = pneg %p347
      $region66: #{simple_vq_autoencoder_forward.1} parent=11 // pred_check_branch
        %502 = sbr.rel (%p500) target = $region68
      $region67: #{simple_vq_autoencoder_forward.1} parent=11 // pred_region
        _
      $region68: #{simple_vq_autoencoder_forward.1} parent=11 // pred_fallthru
        _
      // Predicated region
      $region69: #{simple_vq_autoencoder_forward.1} parent=11 // pred_check
        %p503 = pneg %p368
      $region70: #{simple_vq_autoencoder_forward.1} parent=11 // pred_check_branch
        %505 = sbr.rel (%p503) target = $region72
      $region71: #{simple_vq_autoencoder_forward.1} parent=11 // pred_region
        _
      $region72: #{simple_vq_autoencoder_forward.1} parent=11 // pred_fallthru
        _
    $region12: #{simple_vq_autoencoder_forward.1} parent=5 // pred_fallthru
      _
    %p506 = scmp.lt.s32.totalorder %s27, 2
    // Predicated region
    $region73: #{simple_vq_autoencoder_forward.1} parent=5 // pred_check
      %p507 = pneg %p506
    $region74: #{simple_vq_autoencoder_forward.1} parent=5 // pred_check_branch
      %509 = sbr.rel (%p507) target = $region76
    $region75: #{simple_vq_autoencoder_forward.1} parent=5 // pred_region
      // Predicated region
      $region77: #{simple_vq_autoencoder_forward.1} parent=75 // pred_check
        %p510 = pneg %p47
      $region78: #{simple_vq_autoencoder_forward.1} parent=75 // pred_check_branch
        %512 = sbr.rel (%p510) target = $region80
      $region79: #{simple_vq_autoencoder_forward.1} parent=75 // pred_region
        %p513 = scmp.lt.s32.totalorder %s27, 1
        %s514 = scalar_select %p513, %s27, 1
        %s515 = smul.addr %s514, 8
        %s516 = scalar_lea.vmem %s0, %s515
      $region80: #{simple_vq_autoencoder_forward.1} parent=75 // pred_fallthru
        _
    $region76: #{simple_vq_autoencoder_forward.1} parent=5 // pred_fallthru
      _
    %p517 = scmp.le.s32.totalorder 1, %s27
    %p518 = scmp.lt.s32.totalorder %s27, 3
    %p519 = pnand %p517, %p518
    %p520 = pneg %p519
    // Predicated region
    $region81: #{simple_vq_autoencoder_forward.1} parent=5 // pred_check
      _
    $region82: #{simple_vq_autoencoder_forward.1} parent=5 // pred_check_branch
      %522 = sbr.rel (%p519) target = $region84
    $region83: #{simple_vq_autoencoder_forward.1} parent=5 // pred_region
      %s523 = ssub.s32 %s27, 1
      %p524 = scmp.lt.s32.totalorder %s32, 1
      %s525 = scalar_select %p524, %s32, 1
      %s526 = smul.addr %s525, 8
      %s527 = scalar_lea.vmem %s0, %s526
      %p528 = pneg %p53
      %p529 = pneg %p50
      %p530 = pneg %p74
      %p531 = pneg %p71
      %p532 = pneg %p95
      %p533 = pneg %p92
      %p534 = pneg %p116
      %p535 = pneg %p113
      %p536 = pneg %p137
      %p537 = pneg %p134
      %p538 = pneg %p158
      %p539 = pneg %p155
      %p540 = pneg %p179
      %p541 = pneg %p176
      %p542 = pneg %p200
      %p543 = pneg %p197
      %p544 = pneg %p221
      %p545 = pneg %p218
      %p546 = pneg %p242
      %p547 = pneg %p239
      %p548 = pneg %p263
      %p549 = pneg %p260
      %p550 = pneg %p284
      %p551 = pneg %p281
      %p552 = pneg %p305
      %p553 = pneg %p302
      %p554 = pneg %p326
      %p555 = pneg %p323
      %p556 = pneg %p347
      %p557 = pneg %p344
      %p558 = pneg %p368
      %p559 = pneg %p365
      %p560 = pneg %p394
      %p561 = pneg %p391
      %p562 = scmp.lt.s32.totalorder %s32, 1
      %s563 = scalar_select %p562, %s32, 1
      %s564 = smul.addr %s563, 8
      %s565 = scalar_lea.vmem %s16, %s564
      %p566 = pneg %p420
      %p567 = pneg %p417
      %p568 = scmp.lt.s32.totalorder %s32, 1
      %s569 = scalar_select %p568, %s32, 1
      %s570 = scalar_lea.vmem %s17, %s569
      %p571 = pneg %p446
      %p572 = pneg %p443
      %p573 = scmp.lt.s32.totalorder %s32, 1
      %s574 = scalar_select %p573, %s32, 1
      %s575 = scalar_lea.vmem %s18, %s574
      %p576 = scmp.lt.s32.totalorder %s32, 1
      %s577 = scalar_select %p576, %s32, 1
      %s578 = smul.addr %s577, 8
      %s579 = scalar_lea.vmem %s0, %s578
      %p580 = scmp.lt.s32.totalorder %s32, 1
      %s581 = scalar_select %p580, %s32, 1
      %s582 = smul.addr %s581, 8
      %s583 = scalar_lea.vmem %s16, %s582
      %p584 = scmp.lt.s32.totalorder %s32, 1
      %s585 = scalar_select %p584, %s32, 1
      %s586 = scalar_lea.vmem %s17, %s585
      %p587 = scmp.lt.s32.totalorder %s32, 1
      %s588 = scalar_select %p587, %s32, 1
      %s589 = scalar_lea.vmem %s18, %s588
      %v590 = vlaneseq
      %v591 = vand.u32 %v590, 127
      %v592 = vadd.s32 %v591, 128
      %v593 = vadd.s32 %v591, 256
      %v594 = vadd.s32 %v591, 384
      %v595 = vadd.s32 %v591, 512
      %v596 = vadd.s32 %v591, 640
      %v597 = vadd.s32 %v591, 768
      %v598 = vadd.s32 %v591, 896
      %v599 = vand.u32 %v591, 255
      %v600 = vand.u32 %v592, 255
      %v601 = vand.u32 %v593, 255
      %v602 = vand.u32 %v594, 255
      %v603 = vand.u32 %v595, 255
      %v604 = vand.u32 %v596, 255
      %v605 = vand.u32 %v597, 255
      %v606 = vand.u32 %v598, 255
      %v607 = vand.u32 %v599, 15
      %v608 = vand.u32 %v600, 15
      %v609 = vand.u32 %v601, 15
      %v610 = vand.u32 %v602, 15
      %v611 = vand.u32 %v603, 15
      %v612 = vand.u32 %v604, 15
      %v613 = vand.u32 %v605, 15
      %v614 = vand.u32 %v606, 15
      %vm615 = vcmp.ge.s32.totalorder %v607, 1
      %vm616 = vcmp.ge.s32.totalorder %v608, 1
      %vm617 = vcmp.ge.s32.totalorder %v609, 1
      %vm618 = vcmp.ge.s32.totalorder %v610, 1
      %vm619 = vcmp.ge.s32.totalorder %v611, 1
      %vm620 = vcmp.ge.s32.totalorder %v612, 1
      %vm621 = vcmp.ge.s32.totalorder %v613, 1
      %vm622 = vcmp.ge.s32.totalorder %v614, 1
      %v623 = vsel %vm615, 1, 0
      %v624 = vsel %vm616, 1, 0
      %v625 = vsel %vm617, 1, 0
      %v626 = vsel %vm618, 1, 0
      %v627 = vsel %vm619, 1, 0
      %v628 = vsel %vm620, 1, 0
      %v629 = vsel %vm621, 1, 0
      %v630 = vsel %vm622, 1, 0
      %v631 = vcvt.s32.f32 %v623
      %v632 = vcvt.s32.f32 %v624
      %v633 = vcvt.s32.f32 %v625
      %v634 = vcvt.s32.f32 %v626
      %v635 = vcvt.s32.f32 %v627
      %v636 = vcvt.s32.f32 %v628
      %v637 = vcvt.s32.f32 %v629
      %v638 = vcvt.s32.f32 %v630
      %vm639 = vcmp.le.s32.totalorder %v607, 14
      %vm640 = vcmp.le.s32.totalorder %v608, 14
      %vm641 = vcmp.le.s32.totalorder %v609, 14
      %vm642 = vcmp.le.s32.totalorder %v610, 14
      %vm643 = vcmp.le.s32.totalorder %v611, 14
      %vm644 = vcmp.le.s32.totalorder %v612, 14
      %vm645 = vcmp.le.s32.totalorder %v613, 14
      %vm646 = vcmp.le.s32.totalorder %v614, 14
      %v647 = vsel %vm639, 1, 0
      %v648 = vsel %vm640, 1, 0
      %v649 = vsel %vm641, 1, 0
      %v650 = vsel %vm642, 1, 0
      %v651 = vsel %vm643, 1, 0
      %v652 = vsel %vm644, 1, 0
      %v653 = vsel %vm645, 1, 0
      %v654 = vsel %vm646, 1, 0
      %v655 = vcvt.s32.f32 %v647
      %v656 = vcvt.s32.f32 %v648
      %v657 = vcvt.s32.f32 %v649
      %v658 = vcvt.s32.f32 %v650
      %v659 = vcvt.s32.f32 %v651
      %v660 = vcvt.s32.f32 %v652
      %v661 = vcvt.s32.f32 %v653
      %v662 = vcvt.s32.f32 %v654
      %vm663 = vcmp.ge.s32.totalorder %v599, 16
      %vm664 = vcmp.ge.s32.totalorder %v600, 16
      %vm665 = vcmp.ge.s32.totalorder %v601, 16
      %vm666 = vcmp.ge.s32.totalorder %v602, 16
      %vm667 = vcmp.ge.s32.totalorder %v603, 16
      %vm668 = vcmp.ge.s32.totalorder %v604, 16
      %vm669 = vcmp.ge.s32.totalorder %v605, 16
      %vm670 = vcmp.ge.s32.totalorder %v606, 16
      %v671 = vsel %vm663, 1, 0
      %v672 = vsel %vm664, 1, 0
      %v673 = vsel %vm665, 1, 0
      %v674 = vsel %vm666, 1, 0
      %v675 = vsel %vm667, 1, 0
      %v676 = vsel %vm668, 1, 0
      %v677 = vsel %vm669, 1, 0
      %v678 = vsel %vm670, 1, 0
      %v679 = vcvt.s32.f32 %v671
      %v680 = vcvt.s32.f32 %v672
      %v681 = vcvt.s32.f32 %v673
      %v682 = vcvt.s32.f32 %v674
      %v683 = vcvt.s32.f32 %v675
      %v684 = vcvt.s32.f32 %v676
      %v685 = vcvt.s32.f32 %v677
      %v686 = vcvt.s32.f32 %v678
      %vm687 = vcmp.lt.s32.totalorder %v599, 240
      %vm688 = vcmp.lt.s32.totalorder %v600, 240
      %vm689 = vcmp.lt.s32.totalorder %v601, 240
      %vm690 = vcmp.lt.s32.totalorder %v602, 240
      %vm691 = vcmp.lt.s32.totalorder %v603, 240
      %vm692 = vcmp.lt.s32.totalorder %v604, 240
      %vm693 = vcmp.lt.s32.totalorder %v605, 240
      %vm694 = vcmp.lt.s32.totalorder %v606, 240
      %v695 = vsel %vm687, 1, 0
      %v696 = vsel %vm688, 1, 0
      %v697 = vsel %vm689, 1, 0
      %v698 = vsel %vm690, 1, 0
      %v699 = vsel %vm691, 1, 0
      %v700 = vsel %vm692, 1, 0
      %v701 = vsel %vm693, 1, 0
      %v702 = vsel %vm694, 1, 0
      %v703 = vcvt.s32.f32 %v695
      %v704 = vcvt.s32.f32 %v696
      %v705 = vcvt.s32.f32 %v697
      %v706 = vcvt.s32.f32 %v698
      %v707 = vcvt.s32.f32 %v699
      %v708 = vcvt.s32.f32 %v700
      %v709 = vcvt.s32.f32 %v701
      %v710 = vcvt.s32.f32 %v702
      %v711 = vand.u32 %v591, 63
      %v712 = vand.u32 %v592, 63
      %v713 = vand.u32 %v711, 7
      %v714 = vand.u32 %v712, 7
      %vm715 = vcmp.ge.s32.totalorder %v713, 1
      %vm716 = vcmp.ge.s32.totalorder %v714, 1
      %v717 = vsel %vm715, 1, 0
      %v718 = vsel %vm716, 1, 0
      %v719 = vcvt.s32.f32 %v717
      %v720 = vcvt.s32.f32 %v718
      %vm721 = vcmp.le.s32.totalorder %v713, 6
      %vm722 = vcmp.le.s32.totalorder %v714, 6
      %v723 = vsel %vm721, 1, 0
      %v724 = vsel %vm722, 1, 0
      %v725 = vcvt.s32.f32 %v723
      %v726 = vcvt.s32.f32 %v724
      %vm727 = vcmp.ge.s32.totalorder %v711, 8
      %vm728 = vcmp.ge.s32.totalorder %v712, 8
      %v729 = vsel %vm727, 1, 0
      %v730 = vsel %vm728, 1, 0
      %v731 = vcvt.s32.f32 %v729
      %v732 = vcvt.s32.f32 %v730
      %vm733 = vcmp.lt.s32.totalorder %v711, 56
      %vm734 = vcmp.lt.s32.totalorder %v712, 56
      %v735 = vsel %vm733, 1, 0
      %v736 = vsel %vm734, 1, 0
      %v737 = vcvt.s32.f32 %v735
      %v738 = vcvt.s32.f32 %v736
      %v739 = vld [vmem:[%s579] sm:$0xff]
      %v741 = vlaneseq
      %v742 = vshrl.u32 %v741, 7
      %v743 = vsub.s32 0, %v742
      %v744 = vrot.slane %v739, %v743
      %v745 = vlaneseq
      %v746 = vshrl.u32 %v745, 7
      %v747 = vsub.s32 1, %v746
      %v748 = vrot.slane %v739, %v747
      %v749 = vlaneseq
      %v750 = vshrl.u32 %v749, 7
      %v751 = vsub.s32 2, %v750
      %v752 = vrot.slane %v739, %v751
      %v753 = vlaneseq
      %v754 = vshrl.u32 %v753, 7
      %v755 = vsub.s32 3, %v754
      %v756 = vrot.slane %v739, %v755
      %v757 = vlaneseq
      %v758 = vshrl.u32 %v757, 7
      %v759 = vsub.s32 4, %v758
      %v760 = vrot.slane %v739, %v759
      %v761 = vlaneseq
      %v762 = vshrl.u32 %v761, 7
      %v763 = vsub.s32 5, %v762
      %v764 = vrot.slane %v739, %v763
      %v765 = vlaneseq
      %v766 = vshrl.u32 %v765, 7
      %v767 = vsub.s32 6, %v766
      %v768 = vrot.slane %v739, %v767
      %v769 = vlaneseq
      %v770 = vshrl.u32 %v769, 7
      %v771 = vsub.s32 7, %v770
      %v772 = vrot.slane %v739, %v771
      %781 = vrot.lane.b32.xlu0 %v744, 17
      %v782 = vpop.permute.xlu0 %781
      %783 = vrot.lane.b32.xlu0 %v748, 17
      %v784 = vpop.permute.xlu0 %783
      %785 = vrot.lane.b32.xlu0 %v752, 17
      %v786 = vpop.permute.xlu0 %785
      %787 = vrot.lane.b32.xlu0 %v756, 17
      %v788 = vpop.permute.xlu0 %787
      %789 = vrot.lane.b32.xlu0 %v760, 17
      %v790 = vpop.permute.xlu0 %789
      %791 = vrot.lane.b32.xlu0 %v764, 17
      %v792 = vpop.permute.xlu0 %791
      %793 = vrot.lane.b32.xlu0 %v768, 17
      %v794 = vpop.permute.xlu0 %793
      %795 = vrot.lane.b32.xlu0 %v772, 17
      %v796 = vpop.permute.xlu0 %795
      %vm797 = vcmp.lt.s32.totalorder %v591, 17
      %v798 = vsel %vm797, %v794, %v796
      %v799 = vsel %vm797, %v792, %v794
      %v800 = vsel %vm797, %v790, %v792
      %v801 = vsel %vm797, %v788, %v790
      %v802 = vsel %vm797, %v786, %v788
      %v803 = vsel %vm797, %v784, %v786
      %v804 = vsel %vm797, %v782, %v784
      %v805 = vsel %vm797, %v796, %v782
      %v806 = vmul.f32 %v679, %v631
      %v807 = vmul.f32 %v680, %v632
      %v808 = vmul.f32 %v681, %v633
      %v809 = vmul.f32 %v682, %v634
      %v810 = vmul.f32 %v683, %v635
      %v811 = vmul.f32 %v684, %v636
      %v812 = vmul.f32 %v685, %v637
      %v813 = vmul.f32 %v686, %v638
      %v814 = vmul.f32 %v805, %v806
      %v815 = vmul.f32 %v804, %v807
      %v816 = vmul.f32 %v803, %v808
      %v817 = vmul.f32 %v802, %v809
      %v818 = vmul.f32 %v801, %v810
      %v819 = vmul.f32 %v800, %v811
      %v820 = vmul.f32 %v799, %v812
      %v821 = vmul.f32 %v798, %v813
      %v822 = vld [vmem:[%s1] sm:$0xff]
      %v823 = vld [vmem:[%s1 + $0x8] sm:$0xff]
      %825 = vset.pattern.permute.xlu0 0
      %826 = vperm.xlu0 %825, %v822
      %v827 = vpop.permute.xlu0 %826
      %830 = vset.pattern.permute.xlu0 0
      %831 = vperm.xlu0 %830, %v823
      %v832 = vpop.permute.xlu0 %831
      %v834 = vlaneseq
      %v835 = vshrl.u32 %v834, 7
      %v836 = vsub.s32 0, %v835
      %v837 = vrot.slane %v814, %v836
      %v838 = vlaneseq
      %v839 = vshrl.u32 %v838, 7
      %v840 = vsub.s32 0, %v839
      %v841 = vrot.slane %v815, %v840
      %v842 = vlaneseq
      %v843 = vshrl.u32 %v842, 7
      %v844 = vsub.s32 0, %v843
      %v845 = vrot.slane %v816, %v844
      %v846 = vlaneseq
      %v847 = vshrl.u32 %v846, 7
      %v848 = vsub.s32 0, %v847
      %v849 = vrot.slane %v817, %v848
      %v850 = vlaneseq
      %v851 = vshrl.u32 %v850, 7
      %v852 = vsub.s32 0, %v851
      %v853 = vrot.slane %v818, %v852
      %v854 = vlaneseq
      %v855 = vshrl.u32 %v854, 7
      %v856 = vsub.s32 0, %v855
      %v857 = vrot.slane %v819, %v856
      %v858 = vlaneseq
      %v859 = vshrl.u32 %v858, 7
      %v860 = vsub.s32 0, %v859
      %v861 = vrot.slane %v820, %v860
      %v862 = vlaneseq
      %v863 = vshrl.u32 %v862, 7
      %v864 = vsub.s32 0, %v863
      %v865 = vrot.slane %v821, %v864
      %v866 = vmul.f32 %v827, %v837
      %v867 = vmul.f32 %v827, %v841
      %v868 = vmul.f32 %v827, %v845
      %v869 = vmul.f32 %v827, %v849
      %v870 = vmul.f32 %v827, %v853
      %v871 = vmul.f32 %v827, %v857
      %v872 = vmul.f32 %v827, %v861
      %v873 = vmul.f32 %v827, %v865
      %v874 = vmul.f32 %v832, %v837
      %v875 = vmul.f32 %v832, %v841
      %v876 = vmul.f32 %v832, %v845
      %v877 = vmul.f32 %v832, %v849
      %v878 = vmul.f32 %v832, %v853
      %v879 = vmul.f32 %v832, %v857
      %v880 = vmul.f32 %v832, %v861
      %v881 = vmul.f32 %v832, %v865
      %882 = vrot.lane.b32.xlu0 %v744, 16
      %v883 = vpop.permute.xlu0 %882
      %884 = vrot.lane.b32.xlu0 %v748, 16
      %v885 = vpop.permute.xlu0 %884
      %886 = vrot.lane.b32.xlu0 %v752, 16
      %v887 = vpop.permute.xlu0 %886
      %888 = vrot.lane.b32.xlu0 %v756, 16
      %v889 = vpop.permute.xlu0 %888
      %890 = vrot.lane.b32.xlu0 %v760, 16
      %v891 = vpop.permute.xlu0 %890
      %892 = vrot.lane.b32.xlu0 %v764, 16
      %v893 = vpop.permute.xlu0 %892
      %894 = vrot.lane.b32.xlu0 %v768, 16
      %v895 = vpop.permute.xlu0 %894
      %896 = vrot.lane.b32.xlu0 %v772, 16
      %v897 = vpop.permute.xlu0 %896
      %vm898 = vcmp.lt.s32.totalorder %v591, 16
      %v899 = vsel %vm898, %v895, %v897
      %v900 = vsel %vm898, %v893, %v895
      %v901 = vsel %vm898, %v891, %v893
      %v902 = vsel %vm898, %v889, %v891
      %v903 = vsel %vm898, %v887, %v889
      %v904 = vsel %vm898, %v885, %v887
      %v905 = vsel %vm898, %v883, %v885
      %v906 = vsel %vm898, %v897, %v883
      %v907 = vmul.f32 %v906, %v679
      %v908 = vmul.f32 %v905, %v680
      %v909 = vmul.f32 %v904, %v681
      %v910 = vmul.f32 %v903, %v682
      %v911 = vmul.f32 %v902, %v683
      %v912 = vmul.f32 %v901, %v684
      %v913 = vmul.f32 %v900, %v685
      %v914 = vmul.f32 %v899, %v686
      %915 = vset.pattern.permute.xlu0 1
      %916 = vperm.xlu0 %915, %v822
      %v917 = vpop.permute.xlu0 %916
      %919 = vset.pattern.permute.xlu0 1
      %920 = vperm.xlu0 %919, %v823
      %v921 = vpop.permute.xlu0 %920
      %v923 = vlaneseq
      %v924 = vshrl.u32 %v923, 7
      %v925 = vsub.s32 0, %v924
      %v926 = vrot.slane %v907, %v925
      %v927 = vlaneseq
      %v928 = vshrl.u32 %v927, 7
      %v929 = vsub.s32 0, %v928
      %v930 = vrot.slane %v908, %v929
      %v931 = vlaneseq
      %v932 = vshrl.u32 %v931, 7
      %v933 = vsub.s32 0, %v932
      %v934 = vrot.slane %v909, %v933
      %v935 = vlaneseq
      %v936 = vshrl.u32 %v935, 7
      %v937 = vsub.s32 0, %v936
      %v938 = vrot.slane %v910, %v937
      %v939 = vlaneseq
      %v940 = vshrl.u32 %v939, 7
      %v941 = vsub.s32 0, %v940
      %v942 = vrot.slane %v911, %v941
      %v943 = vlaneseq
      %v944 = vshrl.u32 %v943, 7
      %v945 = vsub.s32 0, %v944
      %v946 = vrot.slane %v912, %v945
      %v947 = vlaneseq
      %v948 = vshrl.u32 %v947, 7
      %v949 = vsub.s32 0, %v948
      %v950 = vrot.slane %v913, %v949
      %v951 = vlaneseq
      %v952 = vshrl.u32 %v951, 7
      %v953 = vsub.s32 0, %v952
      %v954 = vrot.slane %v914, %v953
      %v955 = vmul.f32 %v917, %v926
      %v956 = vmul.f32 %v917, %v930
      %v957 = vmul.f32 %v917, %v934
      %v958 = vmul.f32 %v917, %v938
      %v959 = vmul.f32 %v917, %v942
      %v960 = vmul.f32 %v917, %v946
      %v961 = vmul.f32 %v917, %v950
      %v962 = vmul.f32 %v917, %v954
      %v963 = vmul.f32 %v921, %v926
      %v964 = vmul.f32 %v921, %v930
      %v965 = vmul.f32 %v921, %v934
      %v966 = vmul.f32 %v921, %v938
      %v967 = vmul.f32 %v921, %v942
      %v968 = vmul.f32 %v921, %v946
      %v969 = vmul.f32 %v921, %v950
      %v970 = vmul.f32 %v921, %v954
      %v971 = vadd.f32 %v866, %v955
      %v972 = vadd.f32 %v867, %v956
      %v973 = vadd.f32 %v868, %v957
      %v974 = vadd.f32 %v869, %v958
      %v975 = vadd.f32 %v870, %v959
      %v976 = vadd.f32 %v871, %v960
      %v977 = vadd.f32 %v872, %v961
      %v978 = vadd.f32 %v873, %v962
      %v979 = vadd.f32 %v874, %v963
      %v980 = vadd.f32 %v875, %v964
      %v981 = vadd.f32 %v876, %v965
      %v982 = vadd.f32 %v877, %v966
      %v983 = vadd.f32 %v878, %v967
      %v984 = vadd.f32 %v879, %v968
      %v985 = vadd.f32 %v880, %v969
      %v986 = vadd.f32 %v881, %v970
      %987 = vrot.lane.b32.xlu0 %v744, 15
      %v988 = vpop.permute.xlu0 %987
      %989 = vrot.lane.b32.xlu0 %v748, 15
      %v990 = vpop.permute.xlu0 %989
      %991 = vrot.lane.b32.xlu0 %v752, 15
      %v992 = vpop.permute.xlu0 %991
      %993 = vrot.lane.b32.xlu0 %v756, 15
      %v994 = vpop.permute.xlu0 %993
      %995 = vrot.lane.b32.xlu0 %v760, 15
      %v996 = vpop.permute.xlu0 %995
      %997 = vrot.lane.b32.xlu0 %v764, 15
      %v998 = vpop.permute.xlu0 %997
      %999 = vrot.lane.b32.xlu0 %v768, 15
      %v1000 = vpop.permute.xlu0 %999
      %1001 = vrot.lane.b32.xlu0 %v772, 15
      %v1002 = vpop.permute.xlu0 %1001
      %vm1003 = vcmp.lt.s32.totalorder %v591, 15
      %v1004 = vsel %vm1003, %v1000, %v1002
      %v1005 = vsel %vm1003, %v998, %v1000
      %v1006 = vsel %vm1003, %v996, %v998
      %v1007 = vsel %vm1003, %v994, %v996
      %v1008 = vsel %vm1003, %v992, %v994
      %v1009 = vsel %vm1003, %v990, %v992
      %v1010 = vsel %vm1003, %v988, %v990
      %v1011 = vsel %vm1003, %v1002, %v988
      %v1012 = vmul.f32 %v679, %v655
      %v1013 = vmul.f32 %v680, %v656
      %v1014 = vmul.f32 %v681, %v657
      %v1015 = vmul.f32 %v682, %v658
      %v1016 = vmul.f32 %v683, %v659
      %v1017 = vmul.f32 %v684, %v660
      %v1018 = vmul.f32 %v685, %v661
      %v1019 = vmul.f32 %v686, %v662
      %v1020 = vmul.f32 %v1011, %v1012
      %v1021 = vmul.f32 %v1010, %v1013
      %v1022 = vmul.f32 %v1009, %v1014
      %v1023 = vmul.f32 %v1008, %v1015
      %v1024 = vmul.f32 %v1007, %v1016
      %v1025 = vmul.f32 %v1006, %v1017
      %v1026 = vmul.f32 %v1005, %v1018
      %v1027 = vmul.f32 %v1004, %v1019
      %1028 = vset.pattern.permute.xlu0 2
      %1029 = vperm.xlu0 %1028, %v822
      %v1030 = vpop.permute.xlu0 %1029
      %1032 = vset.pattern.permute.xlu0 2
      %1033 = vperm.xlu0 %1032, %v823
      %v1034 = vpop.permute.xlu0 %1033
      %v1036 = vlaneseq
      %v1037 = vshrl.u32 %v1036, 7
      %v1038 = vsub.s32 0, %v1037
      %v1039 = vrot.slane %v1020, %v1038
      %v1040 = vlaneseq
      %v1041 = vshrl.u32 %v1040, 7
      %v1042 = vsub.s32 0, %v1041
      %v1043 = vrot.slane %v1021, %v1042
      %v1044 = vlaneseq
      %v1045 = vshrl.u32 %v1044, 7
      %v1046 = vsub.s32 0, %v1045
      %v1047 = vrot.slane %v1022, %v1046
      %v1048 = vlaneseq
      %v1049 = vshrl.u32 %v1048, 7
      %v1050 = vsub.s32 0, %v1049
      %v1051 = vrot.slane %v1023, %v1050
      %v1052 = vlaneseq
      %v1053 = vshrl.u32 %v1052, 7
      %v1054 = vsub.s32 0, %v1053
      %v1055 = vrot.slane %v1024, %v1054
      %v1056 = vlaneseq
      %v1057 = vshrl.u32 %v1056, 7
      %v1058 = vsub.s32 0, %v1057
      %v1059 = vrot.slane %v1025, %v1058
      %v1060 = vlaneseq
      %v1061 = vshrl.u32 %v1060, 7
      %v1062 = vsub.s32 0, %v1061
      %v1063 = vrot.slane %v1026, %v1062
      %v1064 = vlaneseq
      %v1065 = vshrl.u32 %v1064, 7
      %v1066 = vsub.s32 0, %v1065
      %v1067 = vrot.slane %v1027, %v1066
      %v1068 = vmul.f32 %v1030, %v1039
      %v1069 = vmul.f32 %v1030, %v1043
      %v1070 = vmul.f32 %v1030, %v1047
      %v1071 = vmul.f32 %v1030, %v1051
      %v1072 = vmul.f32 %v1030, %v1055
      %v1073 = vmul.f32 %v1030, %v1059
      %v1074 = vmul.f32 %v1030, %v1063
      %v1075 = vmul.f32 %v1030, %v1067
      %v1076 = vmul.f32 %v1034, %v1039
      %v1077 = vmul.f32 %v1034, %v1043
      %v1078 = vmul.f32 %v1034, %v1047
      %v1079 = vmul.f32 %v1034, %v1051
      %v1080 = vmul.f32 %v1034, %v1055
      %v1081 = vmul.f32 %v1034, %v1059
      %v1082 = vmul.f32 %v1034, %v1063
      %v1083 = vmul.f32 %v1034, %v1067
      %v1084 = vadd.f32 %v971, %v1068
      %v1085 = vadd.f32 %v972, %v1069
      %v1086 = vadd.f32 %v973, %v1070
      %v1087 = vadd.f32 %v974, %v1071
      %v1088 = vadd.f32 %v975, %v1072
      %v1089 = vadd.f32 %v976, %v1073
      %v1090 = vadd.f32 %v977, %v1074
      %v1091 = vadd.f32 %v978, %v1075
      %v1092 = vadd.f32 %v979, %v1076
      %v1093 = vadd.f32 %v980, %v1077
      %v1094 = vadd.f32 %v981, %v1078
      %v1095 = vadd.f32 %v982, %v1079
      %v1096 = vadd.f32 %v983, %v1080
      %v1097 = vadd.f32 %v984, %v1081
      %v1098 = vadd.f32 %v985, %v1082
      %v1099 = vadd.f32 %v986, %v1083
      %1100 = vrot.lane.b32.xlu0 %v744, 1
      %v1101 = vpop.permute.xlu0 %1100
      %1102 = vrot.lane.b32.xlu0 %v748, 1
      %v1103 = vpop.permute.xlu0 %1102
      %1104 = vrot.lane.b32.xlu0 %v752, 1
      %v1105 = vpop.permute.xlu0 %1104
      %1106 = vrot.lane.b32.xlu0 %v756, 1
      %v1107 = vpop.permute.xlu0 %1106
      %1108 = vrot.lane.b32.xlu0 %v760, 1
      %v1109 = vpop.permute.xlu0 %1108
      %1110 = vrot.lane.b32.xlu0 %v764, 1
      %v1111 = vpop.permute.xlu0 %1110
      %1112 = vrot.lane.b32.xlu0 %v768, 1
      %v1113 = vpop.permute.xlu0 %1112
      %1114 = vrot.lane.b32.xlu0 %v772, 1
      %v1115 = vpop.permute.xlu0 %1114
      %vm1116 = vcmp.lt.s32.totalorder %v591, 1
      %v1117 = vsel %vm1116, %v1113, %v1115
      %v1118 = vsel %vm1116, %v1111, %v1113
      %v1119 = vsel %vm1116, %v1109, %v1111
      %v1120 = vsel %vm1116, %v1107, %v1109
      %v1121 = vsel %vm1116, %v1105, %v1107
      %v1122 = vsel %vm1116, %v1103, %v1105
      %v1123 = vsel %vm1116, %v1101, %v1103
      %v1124 = vsel %vm1116, %v1115, %v1101
      %v1125 = vmul.f32 %v1124, %v631
      %v1126 = vmul.f32 %v1123, %v632
      %v1127 = vmul.f32 %v1122, %v633
      %v1128 = vmul.f32 %v1121, %v634
      %v1129 = vmul.f32 %v1120, %v635
      %v1130 = vmul.f32 %v1119, %v636
      %v1131 = vmul.f32 %v1118, %v637
      %v1132 = vmul.f32 %v1117, %v638
      %1133 = vset.pattern.permute.xlu0 3
      %1134 = vperm.xlu0 %1133, %v822
      %v1135 = vpop.permute.xlu0 %1134
      %1137 = vset.pattern.permute.xlu0 3
      %1138 = vperm.xlu0 %1137, %v823
      %v1139 = vpop.permute.xlu0 %1138
      %v1141 = vlaneseq
      %v1142 = vshrl.u32 %v1141, 7
      %v1143 = vsub.s32 0, %v1142
      %v1144 = vrot.slane %v1125, %v1143
      %v1145 = vlaneseq
      %v1146 = vshrl.u32 %v1145, 7
      %v1147 = vsub.s32 0, %v1146
      %v1148 = vrot.slane %v1126, %v1147
      %v1149 = vlaneseq
      %v1150 = vshrl.u32 %v1149, 7
      %v1151 = vsub.s32 0, %v1150
      %v1152 = vrot.slane %v1127, %v1151
      %v1153 = vlaneseq
      %v1154 = vshrl.u32 %v1153, 7
      %v1155 = vsub.s32 0, %v1154
      %v1156 = vrot.slane %v1128, %v1155
      %v1157 = vlaneseq
      %v1158 = vshrl.u32 %v1157, 7
      %v1159 = vsub.s32 0, %v1158
      %v1160 = vrot.slane %v1129, %v1159
      %v1161 = vlaneseq
      %v1162 = vshrl.u32 %v1161, 7
      %v1163 = vsub.s32 0, %v1162
      %v1164 = vrot.slane %v1130, %v1163
      %v1165 = vlaneseq
      %v1166 = vshrl.u32 %v1165, 7
      %v1167 = vsub.s32 0, %v1166
      %v1168 = vrot.slane %v1131, %v1167
      %v1169 = vlaneseq
      %v1170 = vshrl.u32 %v1169, 7
      %v1171 = vsub.s32 0, %v1170
      %v1172 = vrot.slane %v1132, %v1171
      %v1173 = vmul.f32 %v1135, %v1144
      %v1174 = vmul.f32 %v1135, %v1148
      %v1175 = vmul.f32 %v1135, %v1152
      %v1176 = vmul.f32 %v1135, %v1156
      %v1177 = vmul.f32 %v1135, %v1160
      %v1178 = vmul.f32 %v1135, %v1164
      %v1179 = vmul.f32 %v1135, %v1168
      %v1180 = vmul.f32 %v1135, %v1172
      %v1181 = vmul.f32 %v1139, %v1144
      %v1182 = vmul.f32 %v1139, %v1148
      %v1183 = vmul.f32 %v1139, %v1152
      %v1184 = vmul.f32 %v1139, %v1156
      %v1185 = vmul.f32 %v1139, %v1160
      %v1186 = vmul.f32 %v1139, %v1164
      %v1187 = vmul.f32 %v1139, %v1168
      %v1188 = vmul.f32 %v1139, %v1172
      %v1189 = vadd.f32 %v1084, %v1173
      %v1190 = vadd.f32 %v1085, %v1174
      %v1191 = vadd.f32 %v1086, %v1175
      %v1192 = vadd.f32 %v1087, %v1176
      %v1193 = vadd.f32 %v1088, %v1177
      %v1194 = vadd.f32 %v1089, %v1178
      %v1195 = vadd.f32 %v1090, %v1179
      %v1196 = vadd.f32 %v1091, %v1180
      %v1197 = vadd.f32 %v1092, %v1181
      %v1198 = vadd.f32 %v1093, %v1182
      %v1199 = vadd.f32 %v1094, %v1183
      %v1200 = vadd.f32 %v1095, %v1184
      %v1201 = vadd.f32 %v1096, %v1185
      %v1202 = vadd.f32 %v1097, %v1186
      %v1203 = vadd.f32 %v1098, %v1187
      %v1204 = vadd.f32 %v1099, %v1188
      %1205 = vset.pattern.permute.xlu0 4
      %1206 = vperm.xlu0 %1205, %v822
      %v1207 = vpop.permute.xlu0 %1206
      %1209 = vset.pattern.permute.xlu0 4
      %1210 = vperm.xlu0 %1209, %v823
      %v1211 = vpop.permute.xlu0 %1210
      %v1213 = vmul.f32 %v1207, %v744
      %v1214 = vmul.f32 %v1207, %v748
      %v1215 = vmul.f32 %v1207, %v752
      %v1216 = vmul.f32 %v1207, %v756
      %v1217 = vmul.f32 %v1207, %v760
      %v1218 = vmul.f32 %v1207, %v764
      %v1219 = vmul.f32 %v1207, %v768
      %v1220 = vmul.f32 %v1207, %v772
      %v1221 = vmul.f32 %v1211, %v744
      %v1222 = vmul.f32 %v1211, %v748
      %v1223 = vmul.f32 %v1211, %v752
      %v1224 = vmul.f32 %v1211, %v756
      %v1225 = vmul.f32 %v1211, %v760
      %v1226 = vmul.f32 %v1211, %v764
      %v1227 = vmul.f32 %v1211, %v768
      %v1228 = vmul.f32 %v1211, %v772
      %v1229 = vadd.f32 %v1189, %v1213
      %v1230 = vadd.f32 %v1190, %v1214
      %v1231 = vadd.f32 %v1191, %v1215
      %v1232 = vadd.f32 %v1192, %v1216
      %v1233 = vadd.f32 %v1193, %v1217
      %v1234 = vadd.f32 %v1194, %v1218
      %v1235 = vadd.f32 %v1195, %v1219
      %v1236 = vadd.f32 %v1196, %v1220
      %v1237 = vadd.f32 %v1197, %v1221
      %v1238 = vadd.f32 %v1198, %v1222
      %v1239 = vadd.f32 %v1199, %v1223
      %v1240 = vadd.f32 %v1200, %v1224
      %v1241 = vadd.f32 %v1201, %v1225
      %v1242 = vadd.f32 %v1202, %v1226
      %v1243 = vadd.f32 %v1203, %v1227
      %v1244 = vadd.f32 %v1204, %v1228
      %1245 = vrot.lane.b32.xlu0 %v744, 127
      %v1246 = vpop.permute.xlu0 %1245
      %1247 = vrot.lane.b32.xlu0 %v748, 127
      %v1248 = vpop.permute.xlu0 %1247
      %1249 = vrot.lane.b32.xlu0 %v752, 127
      %v1250 = vpop.permute.xlu0 %1249
      %1251 = vrot.lane.b32.xlu0 %v756, 127
      %v1252 = vpop.permute.xlu0 %1251
      %1253 = vrot.lane.b32.xlu0 %v760, 127
      %v1254 = vpop.permute.xlu0 %1253
      %1255 = vrot.lane.b32.xlu0 %v764, 127
      %v1256 = vpop.permute.xlu0 %1255
      %1257 = vrot.lane.b32.xlu0 %v768, 127
      %v1258 = vpop.permute.xlu0 %1257
      %1259 = vrot.lane.b32.xlu0 %v772, 127
      %v1260 = vpop.permute.xlu0 %1259
      %vm1261 = vcmp.lt.s32.totalorder %v591, 127
      %v1262 = vsel %vm1261, %v1258, %v1260
      %v1263 = vsel %vm1261, %v1256, %v1258
      %v1264 = vsel %vm1261, %v1254, %v1256
      %v1265 = vsel %vm1261, %v1252, %v1254
      %v1266 = vsel %vm1261, %v1250, %v1252
      %v1267 = vsel %vm1261, %v1248, %v1250
      %v1268 = vsel %vm1261, %v1246, %v1248
      %v1269 = vsel %vm1261, %v1260, %v1246
      %v1270 = vmul.f32 %v1268, %v655
      %v1271 = vmul.f32 %v1267, %v656
      %v1272 = vmul.f32 %v1266, %v657
      %v1273 = vmul.f32 %v1265, %v658
      %v1274 = vmul.f32 %v1264, %v659
      %v1275 = vmul.f32 %v1263, %v660
      %v1276 = vmul.f32 %v1262, %v661
      %v1277 = vmul.f32 %v1269, %v662
      %1278 = vset.pattern.permute.xlu0 5
      %1279 = vperm.xlu0 %1278, %v822
      %v1280 = vpop.permute.xlu0 %1279
      %1282 = vset.pattern.permute.xlu0 5
      %1283 = vperm.xlu0 %1282, %v823
      %v1284 = vpop.permute.xlu0 %1283
      %v1286 = vlaneseq
      %v1287 = vshrl.u32 %v1286, 7
      %v1288 = vsub.s32 0, %v1287
      %v1289 = vrot.slane %v1270, %v1288
      %v1290 = vlaneseq
      %v1291 = vshrl.u32 %v1290, 7
      %v1292 = vsub.s32 0, %v1291
      %v1293 = vrot.slane %v1271, %v1292
      %v1294 = vlaneseq
      %v1295 = vshrl.u32 %v1294, 7
      %v1296 = vsub.s32 0, %v1295
      %v1297 = vrot.slane %v1272, %v1296
      %v1298 = vlaneseq
      %v1299 = vshrl.u32 %v1298, 7
      %v1300 = vsub.s32 0, %v1299
      %v1301 = vrot.slane %v1273, %v1300
      %v1302 = vlaneseq
      %v1303 = vshrl.u32 %v1302, 7
      %v1304 = vsub.s32 0, %v1303
      %v1305 = vrot.slane %v1274, %v1304
      %v1306 = vlaneseq
      %v1307 = vshrl.u32 %v1306, 7
      %v1308 = vsub.s32 0, %v1307
      %v1309 = vrot.slane %v1275, %v1308
      %v1310 = vlaneseq
      %v1311 = vshrl.u32 %v1310, 7
      %v1312 = vsub.s32 0, %v1311
      %v1313 = vrot.slane %v1276, %v1312
      %v1314 = vlaneseq
      %v1315 = vshrl.u32 %v1314, 7
      %v1316 = vsub.s32 0, %v1315
      %v1317 = vrot.slane %v1277, %v1316
      %v1318 = vmul.f32 %v1280, %v1289
      %v1319 = vmul.f32 %v1280, %v1293
      %v1320 = vmul.f32 %v1280, %v1297
      %v1321 = vmul.f32 %v1280, %v1301
      %v1322 = vmul.f32 %v1280, %v1305
      %v1323 = vmul.f32 %v1280, %v1309
      %v1324 = vmul.f32 %v1280, %v1313
      %v1325 = vmul.f32 %v1280, %v1317
      %v1326 = vmul.f32 %v1284, %v1289
      %v1327 = vmul.f32 %v1284, %v1293
      %v1328 = vmul.f32 %v1284, %v1297
      %v1329 = vmul.f32 %v1284, %v1301
      %v1330 = vmul.f32 %v1284, %v1305
      %v1331 = vmul.f32 %v1284, %v1309
      %v1332 = vmul.f32 %v1284, %v1313
      %v1333 = vmul.f32 %v1284, %v1317
      %v1334 = vadd.f32 %v1229, %v1318
      %v1335 = vadd.f32 %v1230, %v1319
      %v1336 = vadd.f32 %v1231, %v1320
      %v1337 = vadd.f32 %v1232, %v1321
      %v1338 = vadd.f32 %v1233, %v1322
      %v1339 = vadd.f32 %v1234, %v1323
      %v1340 = vadd.f32 %v1235, %v1324
      %v1341 = vadd.f32 %v1236, %v1325
      %v1342 = vadd.f32 %v1237, %v1326
      %v1343 = vadd.f32 %v1238, %v1327
      %v1344 = vadd.f32 %v1239, %v1328
      %v1345 = vadd.f32 %v1240, %v1329
      %v1346 = vadd.f32 %v1241, %v1330
      %v1347 = vadd.f32 %v1242, %v1331
      %v1348 = vadd.f32 %v1243, %v1332
      %v1349 = vadd.f32 %v1244, %v1333
      %1350 = vrot.lane.b32.xlu0 %v744, 113
      %v1351 = vpop.permute.xlu0 %1350
      %1352 = vrot.lane.b32.xlu0 %v748, 113
      %v1353 = vpop.permute.xlu0 %1352
      %1354 = vrot.lane.b32.xlu0 %v752, 113
      %v1355 = vpop.permute.xlu0 %1354
      %1356 = vrot.lane.b32.xlu0 %v756, 113
      %v1357 = vpop.permute.xlu0 %1356
      %1358 = vrot.lane.b32.xlu0 %v760, 113
      %v1359 = vpop.permute.xlu0 %1358
      %1360 = vrot.lane.b32.xlu0 %v764, 113
      %v1361 = vpop.permute.xlu0 %1360
      %1362 = vrot.lane.b32.xlu0 %v768, 113
      %v1363 = vpop.permute.xlu0 %1362
      %1364 = vrot.lane.b32.xlu0 %v772, 113
      %v1365 = vpop.permute.xlu0 %1364
      %vm1366 = vcmp.lt.s32.totalorder %v591, 113
      %v1367 = vsel %vm1366, %v1363, %v1365
      %v1368 = vsel %vm1366, %v1361, %v1363
      %v1369 = vsel %vm1366, %v1359, %v1361
      %v1370 = vsel %vm1366, %v1357, %v1359
      %v1371 = vsel %vm1366, %v1355, %v1357
      %v1372 = vsel %vm1366, %v1353, %v1355
      %v1373 = vsel %vm1366, %v1351, %v1353
      %v1374 = vsel %vm1366, %v1365, %v1351
      %v1375 = vmul.f32 %v703, %v631
      %v1376 = vmul.f32 %v704, %v632
      %v1377 = vmul.f32 %v705, %v633
      %v1378 = vmul.f32 %v706, %v634
      %v1379 = vmul.f32 %v707, %v635
      %v1380 = vmul.f32 %v708, %v636
      %v1381 = vmul.f32 %v709, %v637
      %v1382 = vmul.f32 %v710, %v638
      %v1383 = vmul.f32 %v1373, %v1375
      %v1384 = vmul.f32 %v1372, %v1376
      %v1385 = vmul.f32 %v1371, %v1377
      %v1386 = vmul.f32 %v1370, %v1378
      %v1387 = vmul.f32 %v1369, %v1379
      %v1388 = vmul.f32 %v1368, %v1380
      %v1389 = vmul.f32 %v1367, %v1381
      %v1390 = vmul.f32 %v1374, %v1382
      %1391 = vset.pattern.permute.xlu0 6
      %1392 = vperm.xlu0 %1391, %v822
      %v1393 = vpop.permute.xlu0 %1392
      %1395 = vset.pattern.permute.xlu0 6
      %1396 = vperm.xlu0 %1395, %v823
      %v1397 = vpop.permute.xlu0 %1396
      %v1399 = vlaneseq
      %v1400 = vshrl.u32 %v1399, 7
      %v1401 = vsub.s32 0, %v1400
      %v1402 = vrot.slane %v1383, %v1401
      %v1403 = vlaneseq
      %v1404 = vshrl.u32 %v1403, 7
      %v1405 = vsub.s32 0, %v1404
      %v1406 = vrot.slane %v1384, %v1405
      %v1407 = vlaneseq
      %v1408 = vshrl.u32 %v1407, 7
      %v1409 = vsub.s32 0, %v1408
      %v1410 = vrot.slane %v1385, %v1409
      %v1411 = vlaneseq
      %v1412 = vshrl.u32 %v1411, 7
      %v1413 = vsub.s32 0, %v1412
      %v1414 = vrot.slane %v1386, %v1413
      %v1415 = vlaneseq
      %v1416 = vshrl.u32 %v1415, 7
      %v1417 = vsub.s32 0, %v1416
      %v1418 = vrot.slane %v1387, %v1417
      %v1419 = vlaneseq
      %v1420 = vshrl.u32 %v1419, 7
      %v1421 = vsub.s32 0, %v1420
      %v1422 = vrot.slane %v1388, %v1421
      %v1423 = vlaneseq
      %v1424 = vshrl.u32 %v1423, 7
      %v1425 = vsub.s32 0, %v1424
      %v1426 = vrot.slane %v1389, %v1425
      %v1427 = vlaneseq
      %v1428 = vshrl.u32 %v1427, 7
      %v1429 = vsub.s32 0, %v1428
      %v1430 = vrot.slane %v1390, %v1429
      %v1431 = vmul.f32 %v1393, %v1402
      %v1432 = vmul.f32 %v1393, %v1406
      %v1433 = vmul.f32 %v1393, %v1410
      %v1434 = vmul.f32 %v1393, %v1414
      %v1435 = vmul.f32 %v1393, %v1418
      %v1436 = vmul.f32 %v1393, %v1422
      %v1437 = vmul.f32 %v1393, %v1426
      %v1438 = vmul.f32 %v1393, %v1430
      %v1439 = vmul.f32 %v1397, %v1402
      %v1440 = vmul.f32 %v1397, %v1406
      %v1441 = vmul.f32 %v1397, %v1410
      %v1442 = vmul.f32 %v1397, %v1414
      %v1443 = vmul.f32 %v1397, %v1418
      %v1444 = vmul.f32 %v1397, %v1422
      %v1445 = vmul.f32 %v1397, %v1426
      %v1446 = vmul.f32 %v1397, %v1430
      %v1447 = vadd.f32 %v1334, %v1431
      %v1448 = vadd.f32 %v1335, %v1432
      %v1449 = vadd.f32 %v1336, %v1433
      %v1450 = vadd.f32 %v1337, %v1434
      %v1451 = vadd.f32 %v1338, %v1435
      %v1452 = vadd.f32 %v1339, %v1436
      %v1453 = vadd.f32 %v1340, %v1437
      %v1454 = vadd.f32 %v1341, %v1438
      %v1455 = vadd.f32 %v1342, %v1439
      %v1456 = vadd.f32 %v1343, %v1440
      %v1457 = vadd.f32 %v1344, %v1441
      %v1458 = vadd.f32 %v1345, %v1442
      %v1459 = vadd.f32 %v1346, %v1443
      %v1460 = vadd.f32 %v1347, %v1444
      %v1461 = vadd.f32 %v1348, %v1445
      %v1462 = vadd.f32 %v1349, %v1446
      %1463 = vrot.lane.b32.xlu0 %v744, 112
      %v1464 = vpop.permute.xlu0 %1463
      %1465 = vrot.lane.b32.xlu0 %v748, 112
      %v1466 = vpop.permute.xlu0 %1465
      %1467 = vrot.lane.b32.xlu0 %v752, 112
      %v1468 = vpop.permute.xlu0 %1467
      %1469 = vrot.lane.b32.xlu0 %v756, 112
      %v1470 = vpop.permute.xlu0 %1469
      %1471 = vrot.lane.b32.xlu0 %v760, 112
      %v1472 = vpop.permute.xlu0 %1471
      %1473 = vrot.lane.b32.xlu0 %v764, 112
      %v1474 = vpop.permute.xlu0 %1473
      %1475 = vrot.lane.b32.xlu0 %v768, 112
      %v1476 = vpop.permute.xlu0 %1475
      %1477 = vrot.lane.b32.xlu0 %v772, 112
      %v1478 = vpop.permute.xlu0 %1477
      %vm1479 = vcmp.lt.s32.totalorder %v591, 112
      %v1480 = vsel %vm1479, %v1476, %v1478
      %v1481 = vsel %vm1479, %v1474, %v1476
      %v1482 = vsel %vm1479, %v1472, %v1474
      %v1483 = vsel %vm1479, %v1470, %v1472
      %v1484 = vsel %vm1479, %v1468, %v1470
      %v1485 = vsel %vm1479, %v1466, %v1468
      %v1486 = vsel %vm1479, %v1464, %v1466
      %v1487 = vsel %vm1479, %v1478, %v1464
      %v1488 = vmul.f32 %v1486, %v703
      %v1489 = vmul.f32 %v1485, %v704
      %v1490 = vmul.f32 %v1484, %v705
      %v1491 = vmul.f32 %v1483, %v706
      %v1492 = vmul.f32 %v1482, %v707
      %v1493 = vmul.f32 %v1481, %v708
      %v1494 = vmul.f32 %v1480, %v709
      %v1495 = vmul.f32 %v1487, %v710
      %1496 = vset.pattern.permute.xlu0 7
      %1497 = vperm.xlu0 %1496, %v822
      %v1498 = vpop.permute.xlu0 %1497
      %1500 = vset.pattern.permute.xlu0 7
      %1501 = vperm.xlu0 %1500, %v823
      %v1502 = vpop.permute.xlu0 %1501
      %v1504 = vlaneseq
      %v1505 = vshrl.u32 %v1504, 7
      %v1506 = vsub.s32 0, %v1505
      %v1507 = vrot.slane %v1488, %v1506
      %v1508 = vlaneseq
      %v1509 = vshrl.u32 %v1508, 7
      %v1510 = vsub.s32 0, %v1509
      %v1511 = vrot.slane %v1489, %v1510
      %v1512 = vlaneseq
      %v1513 = vshrl.u32 %v1512, 7
      %v1514 = vsub.s32 0, %v1513
      %v1515 = vrot.slane %v1490, %v1514
      %v1516 = vlaneseq
      %v1517 = vshrl.u32 %v1516, 7
      %v1518 = vsub.s32 0, %v1517
      %v1519 = vrot.slane %v1491, %v1518
      %v1520 = vlaneseq
      %v1521 = vshrl.u32 %v1520, 7
      %v1522 = vsub.s32 0, %v1521
      %v1523 = vrot.slane %v1492, %v1522
      %v1524 = vlaneseq
      %v1525 = vshrl.u32 %v1524, 7
      %v1526 = vsub.s32 0, %v1525
      %v1527 = vrot.slane %v1493, %v1526
      %v1528 = vlaneseq
      %v1529 = vshrl.u32 %v1528, 7
      %v1530 = vsub.s32 0, %v1529
      %v1531 = vrot.slane %v1494, %v1530
      %v1532 = vlaneseq
      %v1533 = vshrl.u32 %v1532, 7
      %v1534 = vsub.s32 0, %v1533
      %v1535 = vrot.slane %v1495, %v1534
      %v1536 = vmul.f32 %v1498, %v1507
      %v1537 = vmul.f32 %v1498, %v1511
      %v1538 = vmul.f32 %v1498, %v1515
      %v1539 = vmul.f32 %v1498, %v1519
      %v1540 = vmul.f32 %v1498, %v1523
      %v1541 = vmul.f32 %v1498, %v1527
      %v1542 = vmul.f32 %v1498, %v1531
      %v1543 = vmul.f32 %v1498, %v1535
      %v1544 = vmul.f32 %v1502, %v1507
      %v1545 = vmul.f32 %v1502, %v1511
      %v1546 = vmul.f32 %v1502, %v1515
      %v1547 = vmul.f32 %v1502, %v1519
      %v1548 = vmul.f32 %v1502, %v1523
      %v1549 = vmul.f32 %v1502, %v1527
      %v1550 = vmul.f32 %v1502, %v1531
      %v1551 = vmul.f32 %v1502, %v1535
      %v1552 = vadd.f32 %v1447, %v1536
      %v1553 = vadd.f32 %v1448, %v1537
      %v1554 = vadd.f32 %v1449, %v1538
      %v1555 = vadd.f32 %v1450, %v1539
      %v1556 = vadd.f32 %v1451, %v1540
      %v1557 = vadd.f32 %v1452, %v1541
      %v1558 = vadd.f32 %v1453, %v1542
      %v1559 = vadd.f32 %v1454, %v1543
      %v1560 = vadd.f32 %v1455, %v1544
      %v1561 = vadd.f32 %v1456, %v1545
      %v1562 = vadd.f32 %v1457, %v1546
      %v1563 = vadd.f32 %v1458, %v1547
      %v1564 = vadd.f32 %v1459, %v1548
      %v1565 = vadd.f32 %v1460, %v1549
      %v1566 = vadd.f32 %v1461, %v1550
      %v1567 = vadd.f32 %v1462, %v1551
      %1568 = vrot.lane.b32.xlu0 %v744, 111
      %v1569 = vpop.permute.xlu0 %1568
      %1570 = vrot.lane.b32.xlu0 %v748, 111
      %v1571 = vpop.permute.xlu0 %1570
      %1572 = vrot.lane.b32.xlu0 %v752, 111
      %v1573 = vpop.permute.xlu0 %1572
      %1574 = vrot.lane.b32.xlu0 %v756, 111
      %v1575 = vpop.permute.xlu0 %1574
      %1576 = vrot.lane.b32.xlu0 %v760, 111
      %v1577 = vpop.permute.xlu0 %1576
      %1578 = vrot.lane.b32.xlu0 %v764, 111
      %v1579 = vpop.permute.xlu0 %1578
      %1580 = vrot.lane.b32.xlu0 %v768, 111
      %v1581 = vpop.permute.xlu0 %1580
      %1582 = vrot.lane.b32.xlu0 %v772, 111
      %v1583 = vpop.permute.xlu0 %1582
      %vm1584 = vcmp.lt.s32.totalorder %v591, 111
      %v1585 = vsel %vm1584, %v1581, %v1583
      %v1586 = vsel %vm1584, %v1579, %v1581
      %v1587 = vsel %vm1584, %v1577, %v1579
      %v1588 = vsel %vm1584, %v1575, %v1577
      %v1589 = vsel %vm1584, %v1573, %v1575
      %v1590 = vsel %vm1584, %v1571, %v1573
      %v1591 = vsel %vm1584, %v1569, %v1571
      %v1592 = vsel %vm1584, %v1583, %v1569
      %v1593 = vmul.f32 %v703, %v655
      %v1594 = vmul.f32 %v704, %v656
      %v1595 = vmul.f32 %v705, %v657
      %v1596 = vmul.f32 %v706, %v658
      %v1597 = vmul.f32 %v707, %v659
      %v1598 = vmul.f32 %v708, %v660
      %v1599 = vmul.f32 %v709, %v661
      %v1600 = vmul.f32 %v710, %v662
      %v1601 = vmul.f32 %v1591, %v1593
      %v1602 = vmul.f32 %v1590, %v1594
      %v1603 = vmul.f32 %v1589, %v1595
      %v1604 = vmul.f32 %v1588, %v1596
      %v1605 = vmul.f32 %v1587, %v1597
      %v1606 = vmul.f32 %v1586, %v1598
      %v1607 = vmul.f32 %v1585, %v1599
      %v1608 = vmul.f32 %v1592, %v1600
      %1609 = vset.pattern.permute.xlu0 8
      %1610 = vperm.xlu0 %1609, %v822
      %v1611 = vpop.permute.xlu0 %1610
      %1613 = vset.pattern.permute.xlu0 8
      %1614 = vperm.xlu0 %1613, %v823
      %v1615 = vpop.permute.xlu0 %1614
      %v1617 = vlaneseq
      %v1618 = vshrl.u32 %v1617, 7
      %v1619 = vsub.s32 0, %v1618
      %v1620 = vrot.slane %v1601, %v1619
      %v1621 = vlaneseq
      %v1622 = vshrl.u32 %v1621, 7
      %v1623 = vsub.s32 0, %v1622
      %v1624 = vrot.slane %v1602, %v1623
      %v1625 = vlaneseq
      %v1626 = vshrl.u32 %v1625, 7
      %v1627 = vsub.s32 0, %v1626
      %v1628 = vrot.slane %v1603, %v1627
      %v1629 = vlaneseq
      %v1630 = vshrl.u32 %v1629, 7
      %v1631 = vsub.s32 0, %v1630
      %v1632 = vrot.slane %v1604, %v1631
      %v1633 = vlaneseq
      %v1634 = vshrl.u32 %v1633, 7
      %v1635 = vsub.s32 0, %v1634
      %v1636 = vrot.slane %v1605, %v1635
      %v1637 = vlaneseq
      %v1638 = vshrl.u32 %v1637, 7
      %v1639 = vsub.s32 0, %v1638
      %v1640 = vrot.slane %v1606, %v1639
      %v1641 = vlaneseq
      %v1642 = vshrl.u32 %v1641, 7
      %v1643 = vsub.s32 0, %v1642
      %v1644 = vrot.slane %v1607, %v1643
      %v1645 = vlaneseq
      %v1646 = vshrl.u32 %v1645, 7
      %v1647 = vsub.s32 0, %v1646
      %v1648 = vrot.slane %v1608, %v1647
      %v1649 = vmul.f32 %v1611, %v1620
      %v1650 = vmul.f32 %v1611, %v1624
      %v1651 = vmul.f32 %v1611, %v1628
      %v1652 = vmul.f32 %v1611, %v1632
      %v1653 = vmul.f32 %v1611, %v1636
      %v1654 = vmul.f32 %v1611, %v1640
      %v1655 = vmul.f32 %v1611, %v1644
      %v1656 = vmul.f32 %v1611, %v1648
      %v1657 = vmul.f32 %v1615, %v1620
      %v1658 = vmul.f32 %v1615, %v1624
      %v1659 = vmul.f32 %v1615, %v1628
      %v1660 = vmul.f32 %v1615, %v1632
      %v1661 = vmul.f32 %v1615, %v1636
      %v1662 = vmul.f32 %v1615, %v1640
      %v1663 = vmul.f32 %v1615, %v1644
      %v1664 = vmul.f32 %v1615, %v1648
      %v1665 = vadd.f32 %v1552, %v1649
      %v1666 = vadd.f32 %v1553, %v1650
      %v1667 = vadd.f32 %v1554, %v1651
      %v1668 = vadd.f32 %v1555, %v1652
      %v1669 = vadd.f32 %v1556, %v1653
      %v1670 = vadd.f32 %v1557, %v1654
      %v1671 = vadd.f32 %v1558, %v1655
      %v1672 = vadd.f32 %v1559, %v1656
      %v1673 = vadd.f32 %v1560, %v1657
      %v1674 = vadd.f32 %v1561, %v1658
      %v1675 = vadd.f32 %v1562, %v1659
      %v1676 = vadd.f32 %v1563, %v1660
      %v1677 = vadd.f32 %v1564, %v1661
      %v1678 = vadd.f32 %v1565, %v1662
      %v1679 = vadd.f32 %v1566, %v1663
      %v1680 = vadd.f32 %v1567, %v1664
      %v1681 = vld [vmem:[%s2] sm:$0xff]
      %v1682 = vld [vmem:[%s2 + $0x8] sm:$0xff]
      %1684 = vset.pattern.permute.xlu0 0
      %1685 = vperm.xlu0 %1684, %v1681
      %v1686 = vpop.permute.xlu0 %1685
      %1689 = vset.pattern.permute.xlu0 0
      %1690 = vperm.xlu0 %1689, %v1682
      %v1691 = vpop.permute.xlu0 %1690
      %v1693 = vadd.f32 %v1665, %v1686
      %v1694 = vadd.f32 %v1666, %v1686
      %v1695 = vadd.f32 %v1667, %v1686
      %v1696 = vadd.f32 %v1668, %v1686
      %v1697 = vadd.f32 %v1669, %v1686
      %v1698 = vadd.f32 %v1670, %v1686
      %v1699 = vadd.f32 %v1671, %v1686
      %v1700 = vadd.f32 %v1672, %v1686
      %v1701 = vadd.f32 %v1673, %v1691
      %v1702 = vadd.f32 %v1674, %v1691
      %v1703 = vadd.f32 %v1675, %v1691
      %v1704 = vadd.f32 %v1676, %v1691
      %v1705 = vadd.f32 %v1677, %v1691
      %v1706 = vadd.f32 %v1678, %v1691
      %v1707 = vadd.f32 %v1679, %v1691
      %v1708 = vadd.f32 %v1680, %v1691
      %1709 = vrot.lane.b32.xlu0 %v1693, 127
      %v1710 = vpop.permute.xlu0 %1709
      %1711 = vrot.lane.b32.xlu0 %v1701, 127
      %v1712 = vpop.permute.xlu0 %1711
      %1713 = vrot.lane.b32.xlu0 %v1694, 127
      %v1714 = vpop.permute.xlu0 %1713
      %1715 = vrot.lane.b32.xlu0 %v1702, 127
      %v1716 = vpop.permute.xlu0 %1715
      %1717 = vrot.lane.b32.xlu0 %v1695, 127
      %v1718 = vpop.permute.xlu0 %1717
      %1719 = vrot.lane.b32.xlu0 %v1703, 127
      %v1720 = vpop.permute.xlu0 %1719
      %1721 = vrot.lane.b32.xlu0 %v1696, 127
      %v1722 = vpop.permute.xlu0 %1721
      %1723 = vrot.lane.b32.xlu0 %v1704, 127
      %v1724 = vpop.permute.xlu0 %1723
      %1725 = vrot.lane.b32.xlu0 %v1697, 127
      %v1726 = vpop.permute.xlu0 %1725
      %1727 = vrot.lane.b32.xlu0 %v1705, 127
      %v1728 = vpop.permute.xlu0 %1727
      %1729 = vrot.lane.b32.xlu0 %v1698, 127
      %v1730 = vpop.permute.xlu0 %1729
      %1731 = vrot.lane.b32.xlu0 %v1706, 127
      %v1732 = vpop.permute.xlu0 %1731
      %1733 = vrot.lane.b32.xlu0 %v1699, 127
      %v1734 = vpop.permute.xlu0 %1733
      %1735 = vrot.lane.b32.xlu0 %v1707, 127
      %v1736 = vpop.permute.xlu0 %1735
      %1737 = vrot.lane.b32.xlu0 %v1700, 127
      %v1738 = vpop.permute.xlu0 %1737
      %1739 = vrot.lane.b32.xlu0 %v1708, 127
      %v1740 = vpop.permute.xlu0 %1739
      %v1741 = vsel %vm1261, %v1734, %v1738
      %v1742 = vsel %vm1261, %v1736, %v1740
      %v1743 = vsel %vm1261, %v1730, %v1734
      %v1744 = vsel %vm1261, %v1732, %v1736
      %v1745 = vsel %vm1261, %v1726, %v1730
      %v1746 = vsel %vm1261, %v1728, %v1732
      %v1747 = vsel %vm1261, %v1722, %v1726
      %v1748 = vsel %vm1261, %v1724, %v1728
      %v1749 = vsel %vm1261, %v1718, %v1722
      %v1750 = vsel %vm1261, %v1720, %v1724
      %v1751 = vsel %vm1261, %v1714, %v1718
      %v1752 = vsel %vm1261, %v1716, %v1720
      %v1753 = vsel %vm1261, %v1710, %v1714
      %v1754 = vsel %vm1261, %v1712, %v1716
      %v1755 = vsel %vm1261, %v1738, %v1710
      %v1756 = vsel %vm1261, %v1740, %v1712
      %v1757 = vmax.f32 %v1693, %v1753
      %v1758 = vmax.f32 %v1694, %v1751
      %v1759 = vmax.f32 %v1695, %v1749
      %v1760 = vmax.f32 %v1696, %v1747
      %v1761 = vmax.f32 %v1697, %v1745
      %v1762 = vmax.f32 %v1698, %v1743
      %v1763 = vmax.f32 %v1699, %v1741
      %v1764 = vmax.f32 %v1700, %v1755
      %v1765 = vmax.f32 %v1701, %v1754
      %v1766 = vmax.f32 %v1702, %v1752
      %v1767 = vmax.f32 %v1703, %v1750
      %v1768 = vmax.f32 %v1704, %v1748
      %v1769 = vmax.f32 %v1705, %v1746
      %v1770 = vmax.f32 %v1706, %v1744
      %v1771 = vmax.f32 %v1707, %v1742
      %v1772 = vmax.f32 %v1708, %v1756
      %1773 = vrot.lane.b32.xlu0 %v1693, 112
      %v1774 = vpop.permute.xlu0 %1773
      %1775 = vrot.lane.b32.xlu0 %v1701, 112
      %v1776 = vpop.permute.xlu0 %1775
      %1777 = vrot.lane.b32.xlu0 %v1694, 112
      %v1778 = vpop.permute.xlu0 %1777
      %1779 = vrot.lane.b32.xlu0 %v1702, 112
      %v1780 = vpop.permute.xlu0 %1779
      %1781 = vrot.lane.b32.xlu0 %v1695, 112
      %v1782 = vpop.permute.xlu0 %1781
      %1783 = vrot.lane.b32.xlu0 %v1703, 112
      %v1784 = vpop.permute.xlu0 %1783
      %1785 = vrot.lane.b32.xlu0 %v1696, 112
      %v1786 = vpop.permute.xlu0 %1785
      %1787 = vrot.lane.b32.xlu0 %v1704, 112
      %v1788 = vpop.permute.xlu0 %1787
      %1789 = vrot.lane.b32.xlu0 %v1697, 112
      %v1790 = vpop.permute.xlu0 %1789
      %1791 = vrot.lane.b32.xlu0 %v1705, 112
      %v1792 = vpop.permute.xlu0 %1791
      %1793 = vrot.lane.b32.xlu0 %v1698, 112
      %v1794 = vpop.permute.xlu0 %1793
      %1795 = vrot.lane.b32.xlu0 %v1706, 112
      %v1796 = vpop.permute.xlu0 %1795
      %1797 = vrot.lane.b32.xlu0 %v1699, 112
      %v1798 = vpop.permute.xlu0 %1797
      %1799 = vrot.lane.b32.xlu0 %v1707, 112
      %v1800 = vpop.permute.xlu0 %1799
      %1801 = vrot.lane.b32.xlu0 %v1700, 112
      %v1802 = vpop.permute.xlu0 %1801
      %1803 = vrot.lane.b32.xlu0 %v1708, 112
      %v1804 = vpop.permute.xlu0 %1803
      %v1805 = vsel %vm1479, %v1798, %v1802
      %v1806 = vsel %vm1479, %v1800, %v1804
      %v1807 = vsel %vm1479, %v1794, %v1798
      %v1808 = vsel %vm1479, %v1796, %v1800
      %v1809 = vsel %vm1479, %v1790, %v1794
      %v1810 = vsel %vm1479, %v1792, %v1796
      %v1811 = vsel %vm1479, %v1786, %v1790
      %v1812 = vsel %vm1479, %v1788, %v1792
      %v1813 = vsel %vm1479, %v1782, %v1786
      %v1814 = vsel %vm1479, %v1784, %v1788
      %v1815 = vsel %vm1479, %v1778, %v1782
      %v1816 = vsel %vm1479, %v1780, %v1784
      %v1817 = vsel %vm1479, %v1774, %v1778
      %v1818 = vsel %vm1479, %v1776, %v1780
      %v1819 = vsel %vm1479, %v1802, %v1774
      %v1820 = vsel %vm1479, %v1804, %v1776
      %1821 = vrot.lane.b32.xlu0 %v1693, 111
      %v1822 = vpop.permute.xlu0 %1821
      %1823 = vrot.lane.b32.xlu0 %v1701, 111
      %v1824 = vpop.permute.xlu0 %1823
      %1825 = vrot.lane.b32.xlu0 %v1694, 111
      %v1826 = vpop.permute.xlu0 %1825
      %1827 = vrot.lane.b32.xlu0 %v1702, 111
      %v1828 = vpop.permute.xlu0 %1827
      %1829 = vrot.lane.b32.xlu0 %v1695, 111
      %v1830 = vpop.permute.xlu0 %1829
      %1831 = vrot.lane.b32.xlu0 %v1703, 111
      %v1832 = vpop.permute.xlu0 %1831
      %1833 = vrot.lane.b32.xlu0 %v1696, 111
      %v1834 = vpop.permute.xlu0 %1833
      %1835 = vrot.lane.b32.xlu0 %v1704, 111
      %v1836 = vpop.permute.xlu0 %1835
      %1837 = vrot.lane.b32.xlu0 %v1697, 111
      %v1838 = vpop.permute.xlu0 %1837
      %1839 = vrot.lane.b32.xlu0 %v1705, 111
      %v1840 = vpop.permute.xlu0 %1839
      %1841 = vrot.lane.b32.xlu0 %v1698, 111
      %v1842 = vpop.permute.xlu0 %1841
      %1843 = vrot.lane.b32.xlu0 %v1706, 111
      %v1844 = vpop.permute.xlu0 %1843
      %1845 = vrot.lane.b32.xlu0 %v1699, 111
      %v1846 = vpop.permute.xlu0 %1845
      %1847 = vrot.lane.b32.xlu0 %v1707, 111
      %v1848 = vpop.permute.xlu0 %1847
      %1849 = vrot.lane.b32.xlu0 %v1700, 111
      %v1850 = vpop.permute.xlu0 %1849
      %1851 = vrot.lane.b32.xlu0 %v1708, 111
      %v1852 = vpop.permute.xlu0 %1851
      %v1853 = vsel %vm1584, %v1846, %v1850
      %v1854 = vsel %vm1584, %v1848, %v1852
      %v1855 = vsel %vm1584, %v1842, %v1846
      %v1856 = vsel %vm1584, %v1844, %v1848
      %v1857 = vsel %vm1584, %v1838, %v1842
      %v1858 = vsel %vm1584, %v1840, %v1844
      %v1859 = vsel %vm1584, %v1834, %v1838
      %v1860 = vsel %vm1584, %v1836, %v1840
      %v1861 = vsel %vm1584, %v1830, %v1834
      %v1862 = vsel %vm1584, %v1832, %v1836
      %v1863 = vsel %vm1584, %v1826, %v1830
      %v1864 = vsel %vm1584, %v1828, %v1832
      %v1865 = vsel %vm1584, %v1822, %v1826
      %v1866 = vsel %vm1584, %v1824, %v1828
      %v1867 = vsel %vm1584, %v1850, %v1822
      %v1868 = vsel %vm1584, %v1852, %v1824
      %v1869 = vmax.f32 %v1817, %v1865
      %v1870 = vmax.f32 %v1815, %v1863
      %v1871 = vmax.f32 %v1813, %v1861
      %v1872 = vmax.f32 %v1811, %v1859
      %v1873 = vmax.f32 %v1809, %v1857
      %v1874 = vmax.f32 %v1807, %v1855
      %v1875 = vmax.f32 %v1805, %v1853
      %v1876 = vmax.f32 %v1819, %v1867
      %v1877 = vmax.f32 %v1818, %v1866
      %v1878 = vmax.f32 %v1816, %v1864
      %v1879 = vmax.f32 %v1814, %v1862
      %v1880 = vmax.f32 %v1812, %v1860
      %v1881 = vmax.f32 %v1810, %v1858
      %v1882 = vmax.f32 %v1808, %v1856
      %v1883 = vmax.f32 %v1806, %v1854
      %v1884 = vmax.f32 %v1820, %v1868
      %v1885 = vmax.f32 %v1757, %v1869
      %v1886 = vmax.f32 %v1758, %v1870
      %v1887 = vmax.f32 %v1759, %v1871
      %v1888 = vmax.f32 %v1760, %v1872
      %v1889 = vmax.f32 %v1761, %v1873
      %v1890 = vmax.f32 %v1762, %v1874
      %v1891 = vmax.f32 %v1763, %v1875
      %v1892 = vmax.f32 %v1764, %v1876
      %v1893 = vmax.f32 %v1765, %v1877
      %v1894 = vmax.f32 %v1766, %v1878
      %v1895 = vmax.f32 %v1767, %v1879
      %v1896 = vmax.f32 %v1768, %v1880
      %v1897 = vmax.f32 %v1769, %v1881
      %v1898 = vmax.f32 %v1770, %v1882
      %v1899 = vmax.f32 %v1771, %v1883
      %v1900 = vmax.f32 %v1772, %v1884
      %v1901 = vld [vmem:[%s12] sm:$0xff]
      %v1902 = vld [vmem:[%s12 + $0x8] sm:$0xff]
      %v1903 = vld [vmem:[%s12 + $0x10] sm:$0xff]
      %v1904 = vld [vmem:[%s12 + $0x18] sm:$0xff]
      %v1905 = vld [vmem:[%s12 + $0x20] sm:$0xff]
      %v1906 = vld [vmem:[%s12 + $0x28] sm:$0xff]
      %v1907 = vld [vmem:[%s12 + $0x30] sm:$0xff]
      %v1908 = vld [vmem:[%s12 + $0x38] sm:$0xff]
      %v1909 = vld [vmem:[%s12 + $0x40] sm:$0xff]
      %v1910 = vld [vmem:[%s12 + $0x48] sm:$0xff]
      %v1911 = vld [vmem:[%s12 + $0x50] sm:$0xff]
      %v1912 = vld [vmem:[%s12 + $0x58] sm:$0xff]
      %v1913 = vld [vmem:[%s12 + $0x60] sm:$0xff]
      %v1914 = vld [vmem:[%s12 + $0x68] sm:$0xff]
      %v1915 = vld [vmem:[%s12 + $0x70] sm:$0xff]
      %v1916 = vld [vmem:[%s12 + $0x78] sm:$0xff]
      %v1917 = vld [vmem:[%s12 + $0x80] sm:$0xff]
      %v1918 = vld [vmem:[%s12 + $0x88] sm:$0xff]
      %v1919 = vld [vmem:[%s12 + $0x90] sm:$0xff]
      %v1920 = vld [vmem:[%s12 + $0x98] sm:$0xff]
      %v1921 = vld [vmem:[%s12 + $0xa0] sm:$0xff]
      %v1922 = vld [vmem:[%s12 + $0xa8] sm:$0xff]
      %v1923 = vld [vmem:[%s12 + $0xb0] sm:$0xff]
      %v1924 = vld [vmem:[%s12 + $0xb8] sm:$0xff]
      %v1925 = vld [vmem:[%s12 + $0xc0] sm:$0xff]
      %v1926 = vld [vmem:[%s12 + $0xc8] sm:$0xff]
      %v1927 = vld [vmem:[%s12 + $0xd0] sm:$0xff]
      %v1928 = vld [vmem:[%s12 + $0xd8] sm:$0xff]
      %v1929 = vld [vmem:[%s12 + $0xe0] sm:$0xff]
      %v1930 = vld [vmem:[%s12 + $0xe8] sm:$0xff]
      %v1931 = vld [vmem:[%s12 + $0xf0] sm:$0xff]
      %v1932 = vld [vmem:[%s12 + $0xf8] sm:$0xff]
      %1933 = vmatprep.subr.mxu0 0.0
      %1934 = vmatpush1.msra.mxu0 %v1901
      %1935 = vmatprep.subr.mxu0 0.0
      %1936 = vmatpush1.msra.mxu0 %v1902
      %1937 = vmatprep.subr.mxu0 0.0
      %1938 = vmatpush1.msra.mxu0 %v1903
      %1939 = vmatprep.subr.mxu0 0.0
      %1940 = vmatpush1.msra.mxu0 %v1904
      %1941 = vmatprep.subr.mxu0 0.0
      %1942 = vmatpush1.msra.mxu0 %v1905
      %1943 = vmatprep.subr.mxu0 0.0
      %1944 = vmatpush1.msra.mxu0 %v1906
      %1945 = vmatprep.subr.mxu0 0.0
      %1946 = vmatpush1.msra.mxu0 %v1907
      %1947 = vmatprep.subr.mxu0 0.0
      %1948 = vmatpush1.msra.mxu0 %v1908
      %1949 = vmatprep.subr.mxu0 0.0
      %1950 = vmatpush1.msra.mxu0 %v1909
      %1951 = vmatprep.subr.mxu0 0.0
      %1952 = vmatpush1.msra.mxu0 %v1910
      %1953 = vmatprep.subr.mxu0 0.0
      %1954 = vmatpush1.msra.mxu0 %v1911
      %1955 = vmatprep.subr.mxu0 0.0
      %1956 = vmatpush1.msra.mxu0 %v1912
      %1957 = vmatprep.subr.mxu0 0.0
      %1958 = vmatpush1.msra.mxu0 %v1913
      %1959 = vmatprep.subr.mxu0 0.0
      %1960 = vmatpush1.msra.mxu0 %v1914
      %1961 = vmatprep.subr.mxu0 0.0
      %1962 = vmatpush1.msra.mxu0 %v1915
      %1963 = vmatprep.subr.mxu0 0.0
      %1964 = vmatpush1.msra.mxu0 %v1916
      %1965 = vmatprep.subr.mxu0 0.0
      %1966 = vmatpush1.msra.mxu0 %v1917
      %1967 = vmatprep.subr.mxu0 0.0
      %1968 = vmatpush1.msra.mxu0 %v1918
      %1969 = vmatprep.subr.mxu0 0.0
      %1970 = vmatpush1.msra.mxu0 %v1919
      %1971 = vmatprep.subr.mxu0 0.0
      %1972 = vmatpush1.msra.mxu0 %v1920
      %1973 = vmatprep.subr.mxu0 0.0
      %1974 = vmatpush1.msra.mxu0 %v1921
      %1975 = vmatprep.subr.mxu0 0.0
      %1976 = vmatpush1.msra.mxu0 %v1922
      %1977 = vmatprep.subr.mxu0 0.0
      %1978 = vmatpush1.msra.mxu0 %v1923
      %1979 = vmatprep.subr.mxu0 0.0
      %1980 = vmatpush1.msra.mxu0 %v1924
      %1981 = vmatprep.subr.mxu0 0.0
      %1982 = vmatpush1.msra.mxu0 %v1925
      %1983 = vmatprep.subr.mxu0 0.0
      %1984 = vmatpush1.msra.mxu0 %v1926
      %1985 = vmatprep.subr.mxu0 0.0
      %1986 = vmatpush1.msra.mxu0 %v1927
      %1987 = vmatprep.subr.mxu0 0.0
      %1988 = vmatpush1.msra.mxu0 %v1928
      %1989 = vmatprep.subr.mxu0 0.0
      %1990 = vmatpush1.msra.mxu0 %v1929
      %1991 = vmatprep.subr.mxu0 0.0
      %1992 = vmatpush1.msra.mxu0 %v1930
      %1993 = vmatprep.subr.mxu0 0.0
      %1994 = vmatpush1.msra.mxu0 %v1931
      %1995 = vmatprep.subr.mxu0 0.0
      %1996 = vmatpush1.msra.mxu0 %v1932
      %1997 = vmatprep.mubr.f32.mxu0 %v1886
      %1998 = vmatmul.mubr.f32.gmra.mrb[0].mxu0 %v1885
      %v1999 = vpop.f32.mrb[0].mxu0
      %v2000 = vadd.f32 0.0, %v1999
      %v2001 = vpop.f32.mrb[0].mxu0
      %2002 = vmatprep.mubr.f32.mxu0 %v1894
      %2003 = vmatmul.mubr.f32.gmra.mrb[0].mxu0 %v1893
      %v2004 = vpop.f32.mrb[0].mxu0
      %v2005 = vadd.f32 0.0, %v2004
      %v2006 = vpop.f32.mrb[0].mxu0
      %2007 = vdwg.mxu0
      %2008 = vmatprep.subr.mxu0 0.0
      %2009 = vmatpush1.msra.mxu0 %v1901
      %2010 = vmatprep.subr.mxu0 0.0
      %2011 = vmatpush1.msra.mxu0 %v1902
      %2012 = vmatprep.subr.mxu0 0.0
      %2013 = vmatpush1.msra.mxu0 %v1903
      %2014 = vmatprep.subr.mxu0 0.0
      %2015 = vmatpush1.msra.mxu0 %v1904
      %2016 = vmatprep.subr.mxu0 0.0
      %2017 = vmatpush1.msra.mxu0 %v1905
      %2018 = vmatprep.subr.mxu0 0.0
      %2019 = vmatpush1.msra.mxu0 %v1906
      %2020 = vmatprep.subr.mxu0 0.0
      %2021 = vmatpush1.msra.mxu0 %v1907
      %2022 = vmatprep.subr.mxu0 0.0
      %2023 = vmatpush1.msra.mxu0 %v1908
      %2024 = vmatprep.subr.mxu0 0.0
      %2025 = vmatpush1.msra.mxu0 %v1909
      %2026 = vmatprep.subr.mxu0 0.0
      %2027 = vmatpush1.msra.mxu0 %v1910
      %2028 = vmatprep.subr.mxu0 0.0
      %2029 = vmatpush1.msra.mxu0 %v1911
      %2030 = vmatprep.subr.mxu0 0.0
      %2031 = vmatpush1.msra.mxu0 %v1912
      %2032 = vmatprep.subr.mxu0 0.0
      %2033 = vmatpush1.msra.mxu0 %v1913
      %2034 = vmatprep.subr.mxu0 0.0
      %2035 = vmatpush1.msra.mxu0 %v1914
      %2036 = vmatprep.subr.mxu0 0.0
      %2037 = vmatpush1.msra.mxu0 %v1915
      %2038 = vmatprep.subr.mxu0 0.0
      %2039 = vmatpush1.msra.mxu0 %v1916
      %2040 = vmatprep.subr.mxu0 0.0
      %2041 = vmatpush1.msra.mxu0 %v1917
      %2042 = vmatprep.subr.mxu0 0.0
      %2043 = vmatpush1.msra.mxu0 %v1918
      %2044 = vmatprep.subr.mxu0 0.0
      %2045 = vmatpush1.msra.mxu0 %v1919
      %2046 = vmatprep.subr.mxu0 0.0
      %2047 = vmatpush1.msra.mxu0 %v1920
      %2048 = vmatprep.subr.mxu0 0.0
      %2049 = vmatpush1.msra.mxu0 %v1921
      %2050 = vmatprep.subr.mxu0 0.0
      %2051 = vmatpush1.msra.mxu0 %v1922
      %2052 = vmatprep.subr.mxu0 0.0
      %2053 = vmatpush1.msra.mxu0 %v1923
      %2054 = vmatprep.subr.mxu0 0.0
      %2055 = vmatpush1.msra.mxu0 %v1924
      %2056 = vmatprep.subr.mxu0 0.0
      %2057 = vmatpush1.msra.mxu0 %v1925
      %2058 = vmatprep.subr.mxu0 0.0
      %2059 = vmatpush1.msra.mxu0 %v1926
      %2060 = vmatprep.subr.mxu0 0.0
      %2061 = vmatpush1.msra.mxu0 %v1927
      %2062 = vmatprep.subr.mxu0 0.0
      %2063 = vmatpush1.msra.mxu0 %v1928
      %2064 = vmatprep.subr.mxu0 0.0
      %2065 = vmatpush1.msra.mxu0 %v1929
      %2066 = vmatprep.subr.mxu0 0.0
      %2067 = vmatpush1.msra.mxu0 %v1930
      %2068 = vmatprep.subr.mxu0 0.0
      %2069 = vmatpush1.msra.mxu0 %v1931
      %2070 = vmatprep.subr.mxu0 0.0
      %2071 = vmatpush1.msra.mxu0 %v1932
      %2072 = vmatprep.mubr.f32.mxu0 %v1888
      %2073 = vmatmul.mubr.f32.gmra.mrb[0].mxu0 %v1887
      %v2074 = vpop.f32.mrb[0].mxu0
      %v2075 = vadd.f32 0.0, %v2074
      %v2076 = vpop.f32.mrb[0].mxu0
      %2077 = vmatprep.mubr.f32.mxu0 %v1896
      %2078 = vmatmul.mubr.f32.gmra.mrb[0].mxu0 %v1895
      %v2079 = vpop.f32.mrb[0].mxu0
      %v2080 = vadd.f32 0.0, %v2079
      %v2081 = vpop.f32.mrb[0].mxu0
      %2082 = vdwg.mxu0
      %2083 = vmatprep.subr.mxu0 0.0
      %2084 = vmatpush1.msra.mxu0 %v1901
      %2085 = vmatprep.subr.mxu0 0.0
      %2086 = vmatpush1.msra.mxu0 %v1902
      %2087 = vmatprep.subr.mxu0 0.0
      %2088 = vmatpush1.msra.mxu0 %v1903
      %2089 = vmatprep.subr.mxu0 0.0
      %2090 = vmatpush1.msra.mxu0 %v1904
      %2091 = vmatprep.subr.mxu0 0.0
      %2092 = vmatpush1.msra.mxu0 %v1905
      %2093 = vmatprep.subr.mxu0 0.0
      %2094 = vmatpush1.msra.mxu0 %v1906
      %2095 = vmatprep.subr.mxu0 0.0
      %2096 = vmatpush1.msra.mxu0 %v1907
      %2097 = vmatprep.subr.mxu0 0.0
      %2098 = vmatpush1.msra.mxu0 %v1908
      %2099 = vmatprep.subr.mxu0 0.0
      %2100 = vmatpush1.msra.mxu0 %v1909
      %2101 = vmatprep.subr.mxu0 0.0
      %2102 = vmatpush1.msra.mxu0 %v1910
      %2103 = vmatprep.subr.mxu0 0.0
      %2104 = vmatpush1.msra.mxu0 %v1911
      %2105 = vmatprep.subr.mxu0 0.0
      %2106 = vmatpush1.msra.mxu0 %v1912
      %2107 = vmatprep.subr.mxu0 0.0
      %2108 = vmatpush1.msra.mxu0 %v1913
      %2109 = vmatprep.subr.mxu0 0.0
      %2110 = vmatpush1.msra.mxu0 %v1914
      %2111 = vmatprep.subr.mxu0 0.0
      %2112 = vmatpush1.msra.mxu0 %v1915
      %2113 = vmatprep.subr.mxu0 0.0
      %2114 = vmatpush1.msra.mxu0 %v1916
      %2115 = vmatprep.subr.mxu0 0.0
      %2116 = vmatpush1.msra.mxu0 %v1917
      %2117 = vmatprep.subr.mxu0 0.0
      %2118 = vmatpush1.msra.mxu0 %v1918
      %2119 = vmatprep.subr.mxu0 0.0
      %2120 = vmatpush1.msra.mxu0 %v1919
      %2121 = vmatprep.subr.mxu0 0.0
      %2122 = vmatpush1.msra.mxu0 %v1920
      %2123 = vmatprep.subr.mxu0 0.0
      %2124 = vmatpush1.msra.mxu0 %v1921
      %2125 = vmatprep.subr.mxu0 0.0
      %2126 = vmatpush1.msra.mxu0 %v1922
      %2127 = vmatprep.subr.mxu0 0.0
      %2128 = vmatpush1.msra.mxu0 %v1923
      %2129 = vmatprep.subr.mxu0 0.0
      %2130 = vmatpush1.msra.mxu0 %v1924
      %2131 = vmatprep.subr.mxu0 0.0
      %2132 = vmatpush1.msra.mxu0 %v1925
      %2133 = vmatprep.subr.mxu0 0.0
      %2134 = vmatpush1.msra.mxu0 %v1926
      %2135 = vmatprep.subr.mxu0 0.0
      %2136 = vmatpush1.msra.mxu0 %v1927
      %2137 = vmatprep.subr.mxu0 0.0
      %2138 = vmatpush1.msra.mxu0 %v1928
      %2139 = vmatprep.subr.mxu0 0.0
      %2140 = vmatpush1.msra.mxu0 %v1929
      %2141 = vmatprep.subr.mxu0 0.0
      %2142 = vmatpush1.msra.mxu0 %v1930
      %2143 = vmatprep.subr.mxu0 0.0
      %2144 = vmatpush1.msra.mxu0 %v1931
      %2145 = vmatprep.subr.mxu0 0.0
      %2146 = vmatpush1.msra.mxu0 %v1932
      %2147 = vmatprep.mubr.f32.mxu0 %v1890
      %2148 = vmatmul.mubr.f32.gmra.mrb[0].mxu0 %v1889
      %v2149 = vpop.f32.mrb[0].mxu0
      %v2150 = vadd.f32 0.0, %v2149
      %v2151 = vpop.f32.mrb[0].mxu0
      %2152 = vmatprep.mubr.f32.mxu0 %v1898
      %2153 = vmatmul.mubr.f32.gmra.mrb[0].mxu0 %v1897
      %v2154 = vpop.f32.mrb[0].mxu0
      %v2155 = vadd.f32 0.0, %v2154
      %v2156 = vpop.f32.mrb[0].mxu0
      %2157 = vdwg.mxu0
      %2158 = vmatprep.subr.mxu0 0.0
      %2159 = vmatpush1.msra.mxu0 %v1901
      %2160 = vmatprep.subr.mxu0 0.0
      %2161 = vmatpush1.msra.mxu0 %v1902
      %2162 = vmatprep.subr.mxu0 0.0
      %2163 = vmatpush1.msra.mxu0 %v1903
      %2164 = vmatprep.subr.mxu0 0.0
      %2165 = vmatpush1.msra.mxu0 %v1904
      %2166 = vmatprep.subr.mxu0 0.0
      %2167 = vmatpush1.msra.mxu0 %v1905
      %2168 = vmatprep.subr.mxu0 0.0
      %2169 = vmatpush1.msra.mxu0 %v1906
      %2170 = vmatprep.subr.mxu0 0.0
      %2171 = vmatpush1.msra.mxu0 %v1907
      %2172 = vmatprep.subr.mxu0 0.0
      %2173 = vmatpush1.msra.mxu0 %v1908
      %2174 = vmatprep.subr.mxu0 0.0
      %2175 = vmatpush1.msra.mxu0 %v1909
      %2176 = vmatprep.subr.mxu0 0.0
      %2177 = vmatpush1.msra.mxu0 %v1910
      %2178 = vmatprep.subr.mxu0 0.0
      %2179 = vmatpush1.msra.mxu0 %v1911
      %2180 = vmatprep.subr.mxu0 0.0
      %2181 = vmatpush1.msra.mxu0 %v1912
      %2182 = vmatprep.subr.mxu0 0.0
      %2183 = vmatpush1.msra.mxu0 %v1913
      %2184 = vmatprep.subr.mxu0 0.0
      %2185 = vmatpush1.msra.mxu0 %v1914
      %2186 = vmatprep.subr.mxu0 0.0
      %2187 = vmatpush1.msra.mxu0 %v1915
      %2188 = vmatprep.subr.mxu0 0.0
      %2189 = vmatpush1.msra.mxu0 %v1916
      %2190 = vmatprep.subr.mxu0 0.0
      %2191 = vmatpush1.msra.mxu0 %v1917
      %2192 = vmatprep.subr.mxu0 0.0
      %2193 = vmatpush1.msra.mxu0 %v1918
      %2194 = vmatprep.subr.mxu0 0.0
      %2195 = vmatpush1.msra.mxu0 %v1919
      %2196 = vmatprep.subr.mxu0 0.0
      %2197 = vmatpush1.msra.mxu0 %v1920
      %2198 = vmatprep.subr.mxu0 0.0
      %2199 = vmatpush1.msra.mxu0 %v1921
      %2200 = vmatprep.subr.mxu0 0.0
      %2201 = vmatpush1.msra.mxu0 %v1922
      %2202 = vmatprep.subr.mxu0 0.0
      %2203 = vmatpush1.msra.mxu0 %v1923
      %2204 = vmatprep.subr.mxu0 0.0
      %2205 = vmatpush1.msra.mxu0 %v1924
      %2206 = vmatprep.subr.mxu0 0.0
      %2207 = vmatpush1.msra.mxu0 %v1925
      %2208 = vmatprep.subr.mxu0 0.0
      %2209 = vmatpush1.msra.mxu0 %v1926
      %2210 = vmatprep.subr.mxu0 0.0
      %2211 = vmatpush1.msra.mxu0 %v1927
      %2212 = vmatprep.subr.mxu0 0.0
      %2213 = vmatpush1.msra.mxu0 %v1928
      %2214 = vmatprep.subr.mxu0 0.0
      %2215 = vmatpush1.msra.mxu0 %v1929
      %2216 = vmatprep.subr.mxu0 0.0
      %2217 = vmatpush1.msra.mxu0 %v1930
      %2218 = vmatprep.subr.mxu0 0.0
      %2219 = vmatpush1.msra.mxu0 %v1931
      %2220 = vmatprep.subr.mxu0 0.0
      %2221 = vmatpush1.msra.mxu0 %v1932
      %2222 = vmatprep.mubr.f32.mxu0 %v1892
      %2223 = vmatmul.mubr.f32.gmra.mrb[0].mxu0 %v1891
      %v2224 = vpop.f32.mrb[0].mxu0
      %v2225 = vadd.f32 0.0, %v2224
      %v2226 = vpop.f32.mrb[0].mxu0
      %2227 = vmatprep.mubr.f32.mxu0 %v1900
      %2228 = vmatmul.mubr.f32.gmra.mrb[0].mxu0 %v1899
      %v2229 = vpop.f32.mrb[0].mxu0
      %v2230 = vadd.f32 0.0, %v2229
      %v2231 = vpop.f32.mrb[0].mxu0
      %2232 = vdwg.mxu0
      %2235 = vrot.lane.b32.xlu0 %v2075, 64
      %v2236 = vpop.permute.xlu0 %2235
      %2237 = vrot.lane.b32.xlu0 %v2080, 64
      %v2238 = vpop.permute.xlu0 %2237
      %2243 = vrot.lane.b32.xlu0 %v2225, 64
      %v2244 = vpop.permute.xlu0 %2243
      %2245 = vrot.lane.b32.xlu0 %v2230, 64
      %v2246 = vpop.permute.xlu0 %2245
      %vm2249 = vcmask 523264
      %v2250 = vsel %vm2249, %v2000, %v2236
      %v2251 = vsel %vm2249, %v2005, %v2238
      %v2252 = vsel %vm2249, %v2150, %v2244
      %v2253 = vsel %vm2249, %v2155, %v2246
      %v2254 = vmul.f32 %v2250, 0.5
      %v2255 = vmul.f32 %v2252, 0.5
      %v2256 = vmul.f32 %v2251, 0.5
      %v2257 = vmul.f32 %v2253, 0.5
      %v2258 = vmul.f32 %v2250, 0.70710677
      %v2259 = vmul.f32 %v2252, 0.70710677
      %v2260 = vmul.f32 %v2251, 0.70710677
      %v2261 = vmul.f32 %v2253, 0.70710677
      %vm2262 = vcmp.ge.f32.partialorder %v2258, 0.0
      %vm2263 = vcmp.ge.f32.partialorder %v2259, 0.0
      %vm2264 = vcmp.ge.f32.partialorder %v2260, 0.0
      %vm2265 = vcmp.ge.f32.partialorder %v2261, 0.0
      %v2266 = vsel %vm2262, 1.0, -1.0
      %v2267 = vsel %vm2263, 1.0, -1.0
      %v2268 = vsel %vm2264, 1.0, -1.0
      %v2269 = vsel %vm2265, 1.0, -1.0
      %v2270 = vand.u32 2147483647, %v2258
      %v2271 = vand.u32 2147483647, %v2259
      %v2272 = vand.u32 2147483647, %v2260
      %v2273 = vand.u32 2147483647, %v2261
      %v2274 = vmul.f32 %v2270, 0.3275911
      %v2275 = vmul.f32 %v2271, 0.3275911
      %v2276 = vmul.f32 %v2272, 0.3275911
      %v2277 = vmul.f32 %v2273, 0.3275911
      %v2278 = vadd.f32 %v2274, 1.0
      %v2279 = vadd.f32 %v2275, 1.0
      %v2280 = vadd.f32 %v2276, 1.0
      %v2281 = vadd.f32 %v2277, 1.0
      %v2282 = vrcp.pop %v2278
      %v2283 = vmul.f32 1.0, %v2282
      %v2284 = vrcp.pop %v2279
      %v2285 = vmul.f32 1.0, %v2284
      %v2286 = vrcp.pop %v2280
      %v2287 = vmul.f32 1.0, %v2286
      %v2288 = vrcp.pop %v2281
      %v2289 = vmul.f32 1.0, %v2288
      %v2290 = vmul.f32 %v2283, 1.0614054
      %v2291 = vmul.f32 %v2285, 1.0614054
      %v2292 = vmul.f32 %v2287, 1.0614054
      %v2293 = vmul.f32 %v2289, 1.0614054
      %v2294 = vadd.f32 %v2290, -1.4531521
      %v2295 = vadd.f32 %v2291, -1.4531521
      %v2296 = vadd.f32 %v2292, -1.4531521
      %v2297 = vadd.f32 %v2293, -1.4531521
      %v2298 = vmul.f32 %v2294, %v2283
      %v2299 = vmul.f32 %v2295, %v2285
      %v2300 = vmul.f32 %v2296, %v2287
      %v2301 = vmul.f32 %v2297, %v2289
      %v2302 = vadd.f32 %v2298, 1.4214138
      %v2303 = vadd.f32 %v2299, 1.4214138
      %v2304 = vadd.f32 %v2300, 1.4214138
      %v2305 = vadd.f32 %v2301, 1.4214138
      %v2306 = vmul.f32 %v2302, %v2283
      %v2307 = vmul.f32 %v2303, %v2285
      %v2308 = vmul.f32 %v2304, %v2287
      %v2309 = vmul.f32 %v2305, %v2289
      %v2310 = vadd.f32 %v2306, -0.28449672
      %v2311 = vadd.f32 %v2307, -0.28449672
      %v2312 = vadd.f32 %v2308, -0.28449672
      %v2313 = vadd.f32 %v2309, -0.28449672
      %v2314 = vmul.f32 %v2310, %v2283
      %v2315 = vmul.f32 %v2311, %v2285
      %v2316 = vmul.f32 %v2312, %v2287
      %v2317 = vmul.f32 %v2313, %v2289
      %v2318 = vadd.f32 %v2314, 0.2548296
      %v2319 = vadd.f32 %v2315, 0.2548296
      %v2320 = vadd.f32 %v2316, 0.2548296
      %v2321 = vadd.f32 %v2317, 0.2548296
      %v2322 = vmul.f32 %v2318, %v2283
      %v2323 = vmul.f32 %v2319, %v2285
      %v2324 = vmul.f32 %v2320, %v2287
      %v2325 = vmul.f32 %v2321, %v2289
      %v2326 = vsub.f32 0.0, %v2270
      %v2327 = vsub.f32 0.0, %v2271
      %v2328 = vsub.f32 0.0, %v2272
      %v2329 = vsub.f32 0.0, %v2273
      %v2330 = vmul.f32 %v2326, %v2270
      %v2331 = vmul.f32 %v2327, %v2271
      %v2332 = vmul.f32 %v2328, %v2272
      %v2333 = vmul.f32 %v2329, %v2273
      %v2334 = vmul.f32 %v2330, 1.442695
      %v2335 = vpow.pop %v2334
      %v2336 = vmul.f32 %v2331, 1.442695
      %v2337 = vpow.pop %v2336
      %v2338 = vmul.f32 %v2332, 1.442695
      %v2339 = vpow.pop %v2338
      %v2340 = vmul.f32 %v2333, 1.442695
      %v2341 = vpow.pop %v2340
      %v2342 = vmul.f32 %v2322, %v2335
      %v2343 = vmul.f32 %v2323, %v2337
      %v2344 = vmul.f32 %v2324, %v2339
      %v2345 = vmul.f32 %v2325, %v2341
      %v2346 = vsub.f32 1.0, %v2342
      %v2347 = vsub.f32 1.0, %v2343
      %v2348 = vsub.f32 1.0, %v2344
      %v2349 = vsub.f32 1.0, %v2345
      %v2350 = vmul.f32 %v2266, %v2346
      %v2351 = vmul.f32 %v2267, %v2347
      %v2352 = vmul.f32 %v2268, %v2348
      %v2353 = vmul.f32 %v2269, %v2349
      %v2354 = vadd.f32 %v2350, 1.0
      %v2355 = vadd.f32 %v2351, 1.0
      %v2356 = vadd.f32 %v2352, 1.0
      %v2357 = vadd.f32 %v2353, 1.0
      %v2358 = vmul.f32 %v2254, %v2354
      %v2359 = vmul.f32 %v2255, %v2355
      %v2360 = vmul.f32 %v2256, %v2356
      %v2361 = vmul.f32 %v2257, %v2357
      %2362 = vrot.lane.b32.xlu0 %v2358, 9
      %v2363 = vpop.permute.xlu0 %2362
      %2364 = vrot.lane.b32.xlu0 %v2360, 9
      %v2365 = vpop.permute.xlu0 %2364
      %2366 = vrot.lane.b32.xlu0 %v2359, 9
      %v2367 = vpop.permute.xlu0 %2366
      %2368 = vrot.lane.b32.xlu0 %v2361, 9
      %v2369 = vpop.permute.xlu0 %2368
      %vm2370 = vcmp.lt.s32.totalorder %v591, 9
      %v2371 = vsel %vm2370, %v2363, %v2367
      %v2372 = vsel %vm2370, %v2365, %v2369
      %v2373 = vsel %vm2370, %v2367, %v2363
      %v2374 = vsel %vm2370, %v2369, %v2365
      %v2375 = vmul.f32 %v731, %v719
      %v2376 = vmul.f32 %v732, %v720
      %v2377 = vmul.f32 %v2373, %v2375
      %v2378 = vmul.f32 %v2371, %v2376
      %v2379 = vmul.f32 %v2374, %v2375
      %v2380 = vmul.f32 %v2372, %v2376
      %v2381 = vld [vmem:[%s3] sm:$0xff]
      %v2382 = vld [vmem:[%s3 + $0x8] sm:$0xff]
      %v2383 = vld [vmem:[%s3 + $0x10] sm:$0xff]
      %v2384 = vld [vmem:[%s3 + $0x18] sm:$0xff]
      %2385 = vrot.lane.b32.xlu0 %v2358, 8
      %v2386 = vpop.permute.xlu0 %2385
      %2387 = vrot.lane.b32.xlu0 %v2360, 8
      %v2388 = vpop.permute.xlu0 %2387
      %2389 = vrot.lane.b32.xlu0 %v2359, 8
      %v2390 = vpop.permute.xlu0 %2389
      %2391 = vrot.lane.b32.xlu0 %v2361, 8
      %v2392 = vpop.permute.xlu0 %2391
      %vm2393 = vcmp.lt.s32.totalorder %v591, 8
      %v2394 = vsel %vm2393, %v2386, %v2390
      %v2395 = vsel %vm2393, %v2388, %v2392
      %v2396 = vsel %vm2393, %v2390, %v2386
      %v2397 = vsel %vm2393, %v2392, %v2388
      %v2398 = vmul.f32 %v2396, %v731
      %v2399 = vmul.f32 %v2394, %v732
      %v2400 = vmul.f32 %v2397, %v731
      %v2401 = vmul.f32 %v2395, %v732
      %s2402 = scalar_lea.vmem %s3, 32
      %v2403 = vld [vmem:[%s2402] sm:$0xff]
      %v2404 = vld [vmem:[%s2402 + $0x8] sm:$0xff]
      %v2405 = vld [vmem:[%s2402 + $0x10] sm:$0xff]
      %v2406 = vld [vmem:[%s2402 + $0x18] sm:$0xff]
      %vm2407 = vcmask 130048
      %v2409 = vsel %vm2407, %v2403, 0
      %v2412 = vsel %vm2407, %v2404, 0
      %v2415 = vsel %vm2407, %v2405, 0
      %v2418 = vsel %vm2407, %v2406, 0
      %2420 = vmatprep.subr.mxu0 %v2399
      %2421 = vmatpush1.msra.mxu0 %v2398
      %2422 = vmatprep.subr.mxu0 %v2401
      %2423 = vmatpush1.msra.mxu0 %v2400
      %2424 = vmatprep.subr.mxu0 0.0
      %2425 = vmatpush1.msra.mxu0 0.0
      %2426 = vmatprep.subr.mxu0 0.0
      %2427 = vmatpush1.msra.mxu0 0.0
      %2428 = vmatprep.subr.mxu0 0.0
      %2429 = vmatpush1.msra.mxu0 0.0
      %2430 = vmatprep.subr.mxu0 0.0
      %2431 = vmatpush1.msra.mxu0 0.0
      %2432 = vmatprep.subr.mxu0 0.0
      %2433 = vmatpush1.msra.mxu0 0.0
      %2434 = vmatprep.subr.mxu0 0.0
      %2435 = vmatpush1.msra.mxu0 0.0
      %2436 = vmatprep.subr.mxu0 0.0
      %2437 = vmatpush1.msra.mxu0 0.0
      %2438 = vmatprep.subr.mxu0 0.0
      %2439 = vmatpush1.msra.mxu0 0.0
      %2440 = vmatprep.subr.mxu0 0.0
      %2441 = vmatpush1.msra.mxu0 0.0
      %2442 = vmatprep.subr.mxu0 0.0
      %2443 = vmatpush1.msra.mxu0 0.0
      %2444 = vmatprep.subr.mxu0 0.0
      %2445 = vmatpush1.msra.mxu0 0.0
      %2446 = vmatprep.subr.mxu0 0.0
      %2447 = vmatpush1.msra.mxu0 0.0
      %2448 = vmatprep.subr.mxu0 0.0
      %2449 = vmatpush1.msra.mxu0 0.0
      %2450 = vmatprep.subr.mxu0 0.0
      %2451 = vmatpush1.msra.mxu0 0.0
      %2452 = vmatprep.subr.mxu0 0.0
      %2453 = vmatpush1.msra.mxu0 0.0
      %2454 = vmatprep.subr.mxu0 0.0
      %2455 = vmatpush1.msra.mxu0 0.0
      %2456 = vmatprep.subr.mxu0 0.0
      %2457 = vmatpush1.msra.mxu0 0.0
      %2458 = vmatprep.subr.mxu0 0.0
      %2459 = vmatpush1.msra.mxu0 0.0
      %2460 = vmatprep.subr.mxu0 0.0
      %2461 = vmatpush1.msra.mxu0 0.0
      %2462 = vmatprep.subr.mxu0 0.0
      %2463 = vmatpush1.msra.mxu0 0.0
      %2464 = vmatprep.subr.mxu0 0.0
      %2465 = vmatpush1.msra.mxu0 0.0
      %2466 = vmatprep.subr.mxu0 0.0
      %2467 = vmatpush1.msra.mxu0 0.0
      %2468 = vmatprep.subr.mxu0 0.0
      %2469 = vmatpush1.msra.mxu0 0.0
      %2470 = vmatprep.subr.mxu0 0.0
      %2471 = vmatpush1.msra.mxu0 0.0
      %2472 = vmatprep.subr.mxu0 0.0
      %2473 = vmatpush1.msra.mxu0 0.0
      %2474 = vmatprep.subr.mxu0 0.0
      %2475 = vmatpush1.msra.mxu0 0.0
      %2476 = vmatprep.subr.mxu0 0.0
      %2477 = vmatpush1.msra.mxu0 0.0
      %2478 = vmatprep.subr.mxu0 0.0
      %2479 = vmatpush1.msra.mxu0 0.0
      %2480 = vmatprep.subr.mxu0 0.0
      %2481 = vmatpush1.msra.mxu0 0.0
      %2482 = vmatprep.subr.mxu0 0.0
      %2483 = vmatpush1.msra.mxu0 0.0
      %2484 = vmatprep.mubr.f32.mxu0 0.0
      %2485 = vmatmul.mubr.f32.gmra.mrb[0].mxu0 %v2409
      %v2486 = vpop.f32.mrb[0].mxu0
      %v2487 = vadd.f32 0.0, %v2486
      %v2488 = vpop.f32.mrb[0].mxu0
      %v2489 = vadd.f32 0.0, %v2488
      %2490 = vmatprep.mubr.f32.mxu0 0.0
      %2491 = vmatmul.mubr.f32.gmra.mrb[0].mxu0 %v2412
      %v2492 = vpop.f32.mrb[0].mxu0
      %v2493 = vadd.f32 0.0, %v2492
      %v2494 = vpop.f32.mrb[0].mxu0
      %v2495 = vadd.f32 0.0, %v2494
      %2496 = vmatprep.mubr.f32.mxu0 0.0
      %2497 = vmatmul.mubr.f32.gmra.mrb[0].mxu0 %v2415
      %v2498 = vpop.f32.mrb[0].mxu0
      %v2499 = vadd.f32 0.0, %v2498
      %v2500 = vpop.f32.mrb[0].mxu0
      %v2501 = vadd.f32 0.0, %v2500
      %2502 = vmatprep.mubr.f32.mxu0 0.0
      %2503 = vmatmul.mubr.f32.gmra.mrb[0].mxu0 %v2418
      %v2504 = vpop.f32.mrb[0].mxu0
      %v2505 = vadd.f32 0.0, %v2504
      %v2506 = vpop.f32.mrb[0].mxu0
      %v2507 = vadd.f32 0.0, %v2506
      %2508 = vdwg.mxu0
      %v2510 = vsel %vm2407, %v2381, 0
      %v2513 = vsel %vm2407, %v2382, 0
      %v2516 = vsel %vm2407, %v2383, 0
      %v2519 = vsel %vm2407, %v2384, 0
      %2521 = vmatprep.subr.mxu0 %v2378
      %2522 = vmatpush1.msra.mxu0 %v2377
      %2523 = vmatprep.subr.mxu0 %v2380
      %2524 = vmatpush1.msra.mxu0 %v2379
      %2525 = vmatprep.subr.mxu0 0.0
      %2526 = vmatpush1.msra.mxu0 0.0
      %2527 = vmatprep.subr.mxu0 0.0
      %2528 = vmatpush1.msra.mxu0 0.0
      %2529 = vmatprep.subr.mxu0 0.0
      %2530 = vmatpush1.msra.mxu0 0.0
      %2531 = vmatprep.subr.mxu0 0.0
      %2532 = vmatpush1.msra.mxu0 0.0
      %2533 = vmatprep.subr.mxu0 0.0
      %2534 = vmatpush1.msra.mxu0 0.0
      %2535 = vmatprep.subr.mxu0 0.0
      %2536 = vmatpush1.msra.mxu0 0.0
      %2537 = vmatprep.subr.mxu0 0.0
      %2538 = vmatpush1.msra.mxu0 0.0
      %2539 = vmatprep.subr.mxu0 0.0
      %2540 = vmatpush1.msra.mxu0 0.0
      %2541 = vmatprep.subr.mxu0 0.0
      %2542 = vmatpush1.msra.mxu0 0.0
      %2543 = vmatprep.subr.mxu0 0.0
      %2544 = vmatpush1.msra.mxu0 0.0
      %2545 = vmatprep.subr.mxu0 0.0
      %2546 = vmatpush1.msra.mxu0 0.0
      %2547 = vmatprep.subr.mxu0 0.0
      %2548 = vmatpush1.msra.mxu0 0.0
      %2549 = vmatprep.subr.mxu0 0.0
      %2550 = vmatpush1.msra.mxu0 0.0
      %2551 = vmatprep.subr.mxu0 0.0
      %2552 = vmatpush1.msra.mxu0 0.0
      %2553 = vmatprep.subr.mxu0 0.0
      %2554 = vmatpush1.msra.mxu0 0.0
      %2555 = vmatprep.subr.mxu0 0.0
      %2556 = vmatpush1.msra.mxu0 0.0
      %2557 = vmatprep.subr.mxu0 0.0
      %2558 = vmatpush1.msra.mxu0 0.0
      %2559 = vmatprep.subr.mxu0 0.0
      %2560 = vmatpush1.msra.mxu0 0.0
      %2561 = vmatprep.subr.mxu0 0.0
      %2562 = vmatpush1.msra.mxu0 0.0
      %2563 = vmatprep.subr.mxu0 0.0
      %2564 = vmatpush1.msra.mxu0 0.0
      %2565 = vmatprep.subr.mxu0 0.0
      %2566 = vmatpush1.msra.mxu0 0.0
      %2567 = vmatprep.subr.mxu0 0.0
      %2568 = vmatpush1.msra.mxu0 0.0
      %2569 = vmatprep.subr.mxu0 0.0
      %2570 = vmatpush1.msra.mxu0 0.0
      %2571 = vmatprep.subr.mxu0 0.0
      %2572 = vmatpush1.msra.mxu0 0.0
      %2573 = vmatprep.subr.mxu0 0.0
      %2574 = vmatpush1.msra.mxu0 0.0
      %2575 = vmatprep.subr.mxu0 0.0
      %2576 = vmatpush1.msra.mxu0 0.0
      %2577 = vmatprep.subr.mxu0 0.0
      %2578 = vmatpush1.msra.mxu0 0.0
      %2579 = vmatprep.subr.mxu0 0.0
      %2580 = vmatpush1.msra.mxu0 0.0
      %2581 = vmatprep.subr.mxu0 0.0
      %2582 = vmatpush1.msra.mxu0 0.0
      %2583 = vmatprep.subr.mxu0 0.0
      %2584 = vmatpush1.msra.mxu0 0.0
      %2585 = vmatprep.mubr.f32.mxu0 0.0
      %2586 = vmatmul.mubr.f32.gmra.mrb[0].mxu0 %v2510
      %v2587 = vpop.f32.mrb[0].mxu0
      %v2588 = vadd.f32 %v2487, %v2587
      %v2589 = vpop.f32.mrb[0].mxu0
      %v2590 = vadd.f32 %v2489, %v2589
      %2591 = vmatprep.mubr.f32.mxu0 0.0
      %2592 = vmatmul.mubr.f32.gmra.mrb[0].mxu0 %v2513
      %v2593 = vpop.f32.mrb[0].mxu0
      %v2594 = vadd.f32 %v2493, %v2593
      %v2595 = vpop.f32.mrb[0].mxu0
      %v2596 = vadd.f32 %v2495, %v2595
      %2597 = vmatprep.mubr.f32.mxu0 0.0
      %2598 = vmatmul.mubr.f32.gmra.mrb[0].mxu0 %v2516
      %v2599 = vpop.f32.mrb[0].mxu0
      %v2600 = vadd.f32 %v2499, %v2599
      %v2601 = vpop.f32.mrb[0].mxu0
      %v2602 = vadd.f32 %v2501, %v2601
      %2603 = vmatprep.mubr.f32.mxu0 0.0
      %2604 = vmatmul.mubr.f32.gmra.mrb[0].mxu0 %v2519
      %v2605 = vpop.f32.mrb[0].mxu0
      %v2606 = vadd.f32 %v2505, %v2605
      %v2607 = vpop.f32.mrb[0].mxu0
      %v2608 = vadd.f32 %v2507, %v2607
      %2609 = vdwg.mxu0
      %2610 = vrot.lane.b32.xlu0 %v2358, 7
      %v2611 = vpop.permute.xlu0 %2610
      %2612 = vrot.lane.b32.xlu0 %v2360, 7
      %v2613 = vpop.permute.xlu0 %2612
      %2614 = vrot.lane.b32.xlu0 %v2359, 7
      %v2615 = vpop.permute.xlu0 %2614
      %2616 = vrot.lane.b32.xlu0 %v2361, 7
      %v2617 = vpop.permute.xlu0 %2616
      %vm2618 = vcmp.lt.s32.totalorder %v591, 7
      %v2619 = vsel %vm2618, %v2611, %v2615
      %v2620 = vsel %vm2618, %v2613, %v2617
      %v2621 = vsel %vm2618, %v2615, %v2611
      %v2622 = vsel %vm2618, %v2617, %v2613
      %v2623 = vmul.f32 %v731, %v725
      %v2624 = vmul.f32 %v732, %v726
      %v2625 = vmul.f32 %v2621, %v2623
      %v2626 = vmul.f32 %v2619, %v2624
      %v2627 = vmul.f32 %v2622, %v2623
      %v2628 = vmul.f32 %v2620, %v2624
      %s2629 = scalar_lea.vmem %s3, 64
      %v2630 = vld [vmem:[%s2629] sm:$0xff]
      %v2631 = vld [vmem:[%s2629 + $0x8] sm:$0xff]
      %v2632 = vld [vmem:[%s2629 + $0x10] sm:$0xff]
      %v2633 = vld [vmem:[%s2629 + $0x18] sm:$0xff]
      %v2635 = vsel %vm2407, %v2630, 0
      %v2638 = vsel %vm2407, %v2631, 0
      %v2641 = vsel %vm2407, %v2632, 0
      %v2644 = vsel %vm2407, %v2633, 0
      %2646 = vmatprep.subr.mxu0 %v2626
      %2647 = vmatpush1.msra.mxu0 %v2625
      %2648 = vmatprep.subr.mxu0 %v2628
      %2649 = vmatpush1.msra.mxu0 %v2627
      %2650 = vmatprep.subr.mxu0 0.0
      %2651 = vmatpush1.msra.mxu0 0.0
      %2652 = vmatprep.subr.mxu0 0.0
      %2653 = vmatpush1.msra.mxu0 0.0
      %2654 = vmatprep.subr.mxu0 0.0
      %2655 = vmatpush1.msra.mxu0 0.0
      %2656 = vmatprep.subr.mxu0 0.0
      %2657 = vmatpush1.msra.mxu0 0.0
      %2658 = vmatprep.subr.mxu0 0.0
      %2659 = vmatpush1.msra.mxu0 0.0
      %2660 = vmatprep.subr.mxu0 0.0
      %2661 = vmatpush1.msra.mxu0 0.0
      %2662 = vmatprep.subr.mxu0 0.0
      %2663 = vmatpush1.msra.mxu0 0.0
      %2664 = vmatprep.subr.mxu0 0.0
      %2665 = vmatpush1.msra.mxu0 0.0
      %2666 = vmatprep.subr.mxu0 0.0
      %2667 = vmatpush1.msra.mxu0 0.0
      %2668 = vmatprep.subr.mxu0 0.0
      %2669 = vmatpush1.msra.mxu0 0.0
      %2670 = vmatprep.subr.mxu0 0.0
      %2671 = vmatpush1.msra.mxu0 0.0
      %2672 = vmatprep.subr.mxu0 0.0
      %2673 = vmatpush1.msra.mxu0 0.0
      %2674 = vmatprep.subr.mxu0 0.0
      %2675 = vmatpush1.msra.mxu0 0.0
      %2676 = vmatprep.subr.mxu0 0.0
      %2677 = vmatpush1.msra.mxu0 0.0
      %2678 = vmatprep.subr.mxu0 0.0
      %2679 = vmatpush1.msra.mxu0 0.0
      %2680 = vmatprep.subr.mxu0 0.0
      %2681 = vmatpush1.msra.mxu0 0.0
      %2682 = vmatprep.subr.mxu0 0.0
      %2683 = vmatpush1.msra.mxu0 0.0
      %2684 = vmatprep.subr.mxu0 0.0
      %2685 = vmatpush1.msra.mxu0 0.0
      %2686 = vmatprep.subr.mxu0 0.0
      %2687 = vmatpush1.msra.mxu0 0.0
      %2688 = vmatprep.subr.mxu0 0.0
      %2689 = vmatpush1.msra.mxu0 0.0
      %2690 = vmatprep.subr.mxu0 0.0
      %2691 = vmatpush1.msra.mxu0 0.0
      %2692 = vmatprep.subr.mxu0 0.0
      %2693 = vmatpush1.msra.mxu0 0.0
      %2694 = vmatprep.subr.mxu0 0.0
      %2695 = vmatpush1.msra.mxu0 0.0
      %2696 = vmatprep.subr.mxu0 0.0
      %2697 = vmatpush1.msra.mxu0 0.0
      %2698 = vmatprep.subr.mxu0 0.0
      %2699 = vmatpush1.msra.mxu0 0.0
      %2700 = vmatprep.subr.mxu0 0.0
      %2701 = vmatpush1.msra.mxu0 0.0
      %2702 = vmatprep.subr.mxu0 0.0
      %2703 = vmatpush1.msra.mxu0 0.0
      %2704 = vmatprep.subr.mxu0 0.0
      %2705 = vmatpush1.msra.mxu0 0.0
      %2706 = vmatprep.subr.mxu0 0.0
      %2707 = vmatpush1.msra.mxu0 0.0
      %2708 = vmatprep.subr.mxu0 0.0
      %2709 = vmatpush1.msra.mxu0 0.0
      %2710 = vmatprep.mubr.f32.mxu0 0.0
      %2711 = vmatmul.mubr.f32.gmra.mrb[0].mxu0 %v2635
      %v2712 = vpop.f32.mrb[0].mxu0
      %v2713 = vadd.f32 0.0, %v2712
      %v2714 = vpop.f32.mrb[0].mxu0
      %v2715 = vadd.f32 0.0, %v2714
      %2716 = vmatprep.mubr.f32.mxu0 0.0
      %2717 = vmatmul.mubr.f32.gmra.mrb[0].mxu0 %v2638
      %v2718 = vpop.f32.mrb[0].mxu0
      %v2719 = vadd.f32 0.0, %v2718
      %v2720 = vpop.f32.mrb[0].mxu0
      %v2721 = vadd.f32 0.0, %v2720
      %2722 = vmatprep.mubr.f32.mxu0 0.0
      %2723 = vmatmul.mubr.f32.gmra.mrb[0].mxu0 %v2641
      %v2724 = vpop.f32.mrb[0].mxu0
      %v2725 = vadd.f32 0.0, %v2724
      %v2726 = vpop.f32.mrb[0].mxu0
      %v2727 = vadd.f32 0.0, %v2726
      %2728 = vmatprep.mubr.f32.mxu0 0.0
      %2729 = vmatmul.mubr.f32.gmra.mrb[0].mxu0 %v2644
      %v2730 = vpop.f32.mrb[0].mxu0
      %v2731 = vadd.f32 0.0, %v2730
      %v2732 = vpop.f32.mrb[0].mxu0
      %v2733 = vadd.f32 0.0, %v2732
      %2734 = vdwg.mxu0
      %v2735 = vadd.f32 %v2588, %v2713
      %v2736 = vadd.f32 %v2590, %v2715
      %v2737 = vadd.f32 %v2594, %v2719
      %v2738 = vadd.f32 %v2596, %v2721
      %v2739 = vadd.f32 %v2600, %v2725
      %v2740 = vadd.f32 %v2602, %v2727
      %v2741 = vadd.f32 %v2606, %v2731
      %v2742 = vadd.f32 %v2608, %v2733
      %2743 = vrot.lane.b32.xlu0 %v2358, 1
      %v2744 = vpop.permute.xlu0 %2743
      %2745 = vrot.lane.b32.xlu0 %v2360, 1
      %v2746 = vpop.permute.xlu0 %2745
      %2747 = vrot.lane.b32.xlu0 %v2359, 1
      %v2748 = vpop.permute.xlu0 %2747
      %2749 = vrot.lane.b32.xlu0 %v2361, 1
      %v2750 = vpop.permute.xlu0 %2749
      %v2751 = vsel %vm1116, %v2744, %v2748
      %v2752 = vsel %vm1116, %v2746, %v2750
      %v2753 = vsel %vm1116, %v2748, %v2744
      %v2754 = vsel %vm1116, %v2750, %v2746
      %v2755 = vmul.f32 %v2753, %v719
      %v2756 = vmul.f32 %v2751, %v720
      %v2757 = vmul.f32 %v2754, %v719
      %v2758 = vmul.f32 %v2752, %v720
      %s2759 = scalar_lea.vmem %s3, 96
      %v2760 = vld [vmem:[%s2759] sm:$0xff]
      %v2761 = vld [vmem:[%s2759 + $0x8] sm:$0xff]
      %v2762 = vld [vmem:[%s2759 + $0x10] sm:$0xff]
      %v2763 = vld [vmem:[%s2759 + $0x18] sm:$0xff]
      %v2765 = vsel %vm2407, %v2760, 0
      %v2768 = vsel %vm2407, %v2761, 0
      %v2771 = vsel %vm2407, %v2762, 0
      %v2774 = vsel %vm2407, %v2763, 0
      %2776 = vmatprep.subr.mxu0 %v2756
      %2777 = vmatpush1.msra.mxu0 %v2755
      %2778 = vmatprep.subr.mxu0 %v2758
      %2779 = vmatpush1.msra.mxu0 %v2757
      %2780 = vmatprep.subr.mxu0 0.0
      %2781 = vmatpush1.msra.mxu0 0.0
      %2782 = vmatprep.subr.mxu0 0.0
      %2783 = vmatpush1.msra.mxu0 0.0
      %2784 = vmatprep.subr.mxu0 0.0
      %2785 = vmatpush1.msra.mxu0 0.0
      %2786 = vmatprep.subr.mxu0 0.0
      %2787 = vmatpush1.msra.mxu0 0.0
      %2788 = vmatprep.subr.mxu0 0.0
      %2789 = vmatpush1.msra.mxu0 0.0
      %2790 = vmatprep.subr.mxu0 0.0
      %2791 = vmatpush1.msra.mxu0 0.0
      %2792 = vmatprep.subr.mxu0 0.0
      %2793 = vmatpush1.msra.mxu0 0.0
      %2794 = vmatprep.subr.mxu0 0.0
      %2795 = vmatpush1.msra.mxu0 0.0
      %2796 = vmatprep.subr.mxu0 0.0
      %2797 = vmatpush1.msra.mxu0 0.0
      %2798 = vmatprep.subr.mxu0 0.0
      %2799 = vmatpush1.msra.mxu0 0.0
      %2800 = vmatprep.subr.mxu0 0.0
      %2801 = vmatpush1.msra.mxu0 0.0
      %2802 = vmatprep.subr.mxu0 0.0
      %2803 = vmatpush1.msra.mxu0 0.0
      %2804 = vmatprep.subr.mxu0 0.0
      %2805 = vmatpush1.msra.mxu0 0.0
      %2806 = vmatprep.subr.mxu0 0.0
      %2807 = vmatpush1.msra.mxu0 0.0
      %2808 = vmatprep.subr.mxu0 0.0
      %2809 = vmatpush1.msra.mxu0 0.0
      %2810 = vmatprep.subr.mxu0 0.0
      %2811 = vmatpush1.msra.mxu0 0.0
      %2812 = vmatprep.subr.mxu0 0.0
      %2813 = vmatpush1.msra.mxu0 0.0
      %2814 = vmatprep.subr.mxu0 0.0
      %2815 = vmatpush1.msra.mxu0 0.0
      %2816 = vmatprep.subr.mxu0 0.0
      %2817 = vmatpush1.msra.mxu0 0.0
      %2818 = vmatprep.subr.mxu0 0.0
      %2819 = vmatpush1.msra.mxu0 0.0
      %2820 = vmatprep.subr.mxu0 0.0
      %2821 = vmatpush1.msra.mxu0 0.0
      %2822 = vmatprep.subr.mxu0 0.0
      %2823 = vmatpush1.msra.mxu0 0.0
      %2824 = vmatprep.subr.mxu0 0.0
      %2825 = vmatpush1.msra.mxu0 0.0
      %2826 = vmatprep.subr.mxu0 0.0
      %2827 = vmatpush1.msra.mxu0 0.0
      %2828 = vmatprep.subr.mxu0 0.0
      %2829 = vmatpush1.msra.mxu0 0.0
      %2830 = vmatprep.subr.mxu0 0.0
      %2831 = vmatpush1.msra.mxu0 0.0
      %2832 = vmatprep.subr.mxu0 0.0
      %2833 = vmatpush1.msra.mxu0 0.0
      %2834 = vmatprep.subr.mxu0 0.0
      %2835 = vmatpush1.msra.mxu0 0.0
      %2836 = vmatprep.subr.mxu0 0.0
      %2837 = vmatpush1.msra.mxu0 0.0
      %2838 = vmatprep.subr.mxu0 0.0
      %2839 = vmatpush1.msra.mxu0 0.0
      %2840 = vmatprep.mubr.f32.mxu0 0.0
      %2841 = vmatmul.mubr.f32.gmra.mrb[0].mxu0 %v2765
      %v2842 = vpop.f32.mrb[0].mxu0
      %v2843 = vadd.f32 0.0, %v2842
      %v2844 = vpop.f32.mrb[0].mxu0
      %v2845 = vadd.f32 0.0, %v2844
      %2846 = vmatprep.mubr.f32.mxu0 0.0
      %2847 = vmatmul.mubr.f32.gmra.mrb[0].mxu0 %v2768
      %v2848 = vpop.f32.mrb[0].mxu0
      %v2849 = vadd.f32 0.0, %v2848
      %v2850 = vpop.f32.mrb[0].mxu0
      %v2851 = vadd.f32 0.0, %v2850
      %2852 = vmatprep.mubr.f32.mxu0 0.0
      %2853 = vmatmul.mubr.f32.gmra.mrb[0].mxu0 %v2771
      %v2854 = vpop.f32.mrb[0].mxu0
      %v2855 = vadd.f32 0.0, %v2854
      %v2856 = vpop.f32.mrb[0].mxu0
      %v2857 = vadd.f32 0.0, %v2856
      %2858 = vmatprep.mubr.f32.mxu0 0.0
      %2859 = vmatmul.mubr.f32.gmra.mrb[0].mxu0 %v2774
      %v2860 = vpop.f32.mrb[0].mxu0
      %v2861 = vadd.f32 0.0, %v2860
      %v2862 = vpop.f32.mrb[0].mxu0
      %v2863 = vadd.f32 0.0, %v2862
      %2864 = vdwg.mxu0
      %v2865 = vadd.f32 %v2735, %v2843
      %v2866 = vadd.f32 %v2736, %v2845
      %v2867 = vadd.f32 %v2737, %v2849
      %v2868 = vadd.f32 %v2738, %v2851
      %v2869 = vadd.f32 %v2739, %v2855
      %v2870 = vadd.f32 %v2740, %v2857
      %v2871 = vadd.f32 %v2741, %v2861
      %v2872 = vadd.f32 %v2742, %v2863
      %s2873 = scalar_lea.vmem %s3, 128
      %v2874 = vld [vmem:[%s2873] sm:$0xff]
      %v2875 = vld [vmem:[%s2873 + $0x8] sm:$0xff]
      %v2876 = vld [vmem:[%s2873 + $0x10] sm:$0xff]
      %v2877 = vld [vmem:[%s2873 + $0x18] sm:$0xff]
      %v2879 = vsel %vm2407, %v2874, 0
      %v2882 = vsel %vm2407, %v2875, 0
      %v2885 = vsel %vm2407, %v2876, 0
      %v2888 = vsel %vm2407, %v2877, 0
      %2890 = vmatprep.subr.mxu0 %v2359
      %2891 = vmatpush1.msra.mxu0 %v2358
      %2892 = vmatprep.subr.mxu0 %v2361
      %2893 = vmatpush1.msra.mxu0 %v2360
      %2894 = vmatprep.subr.mxu0 0.0
      %2895 = vmatpush1.msra.mxu0 0.0
      %2896 = vmatprep.subr.mxu0 0.0
      %2897 = vmatpush1.msra.mxu0 0.0
      %2898 = vmatprep.subr.mxu0 0.0
      %2899 = vmatpush1.msra.mxu0 0.0
      %2900 = vmatprep.subr.mxu0 0.0
      %2901 = vmatpush1.msra.mxu0 0.0
      %2902 = vmatprep.subr.mxu0 0.0
      %2903 = vmatpush1.msra.mxu0 0.0
      %2904 = vmatprep.subr.mxu0 0.0
      %2905 = vmatpush1.msra.mxu0 0.0
      %2906 = vmatprep.subr.mxu0 0.0
      %2907 = vmatpush1.msra.mxu0 0.0
      %2908 = vmatprep.subr.mxu0 0.0
      %2909 = vmatpush1.msra.mxu0 0.0
      %2910 = vmatprep.subr.mxu0 0.0
      %2911 = vmatpush1.msra.mxu0 0.0
      %2912 = vmatprep.subr.mxu0 0.0
      %2913 = vmatpush1.msra.mxu0 0.0
      %2914 = vmatprep.subr.mxu0 0.0
      %2915 = vmatpush1.msra.mxu0 0.0
      %2916 = vmatprep.subr.mxu0 0.0
      %2917 = vmatpush1.msra.mxu0 0.0
      %2918 = vmatprep.subr.mxu0 0.0
      %2919 = vmatpush1.msra.mxu0 0.0
      %2920 = vmatprep.subr.mxu0 0.0
      %2921 = vmatpush1.msra.mxu0 0.0
      %2922 = vmatprep.subr.mxu0 0.0
      %2923 = vmatpush1.msra.mxu0 0.0
      %2924 = vmatprep.subr.mxu0 0.0
      %2925 = vmatpush1.msra.mxu0 0.0
      %2926 = vmatprep.subr.mxu0 0.0
      %2927 = vmatpush1.msra.mxu0 0.0
      %2928 = vmatprep.subr.mxu0 0.0
      %2929 = vmatpush1.msra.mxu0 0.0
      %2930 = vmatprep.subr.mxu0 0.0
      %2931 = vmatpush1.msra.mxu0 0.0
      %2932 = vmatprep.subr.mxu0 0.0
      %2933 = vmatpush1.msra.mxu0 0.0
      %2934 = vmatprep.subr.mxu0 0.0
      %2935 = vmatpush1.msra.mxu0 0.0
      %2936 = vmatprep.subr.mxu0 0.0
      %2937 = vmatpush1.msra.mxu0 0.0
      %2938 = vmatprep.subr.mxu0 0.0
      %2939 = vmatpush1.msra.mxu0 0.0
      %2940 = vmatprep.subr.mxu0 0.0
      %2941 = vmatpush1.msra.mxu0 0.0
      %2942 = vmatprep.subr.mxu0 0.0
      %2943 = vmatpush1.msra.mxu0 0.0
      %2944 = vmatprep.subr.mxu0 0.0
      %2945 = vmatpush1.msra.mxu0 0.0
      %2946 = vmatprep.subr.mxu0 0.0
      %2947 = vmatpush1.msra.mxu0 0.0
      %2948 = vmatprep.subr.mxu0 0.0
      %2949 = vmatpush1.msra.mxu0 0.0
      %2950 = vmatprep.subr.mxu0 0.0
      %2951 = vmatpush1.msra.mxu0 0.0
      %2952 = vmatprep.subr.mxu0 0.0
      %2953 = vmatpush1.msra.mxu0 0.0
      %2954 = vmatprep.mubr.f32.mxu0 0.0
      %2955 = vmatmul.mubr.f32.gmra.mrb[0].mxu0 %v2879
      %v2956 = vpop.f32.mrb[0].mxu0
      %v2957 = vadd.f32 0.0, %v2956
      %v2958 = vpop.f32.mrb[0].mxu0
      %v2959 = vadd.f32 0.0, %v2958
      %2960 = vmatprep.mubr.f32.mxu0 0.0
      %2961 = vmatmul.mubr.f32.gmra.mrb[0].mxu0 %v2882
      %v2962 = vpop.f32.mrb[0].mxu0
      %v2963 = vadd.f32 0.0, %v2962
      %v2964 = vpop.f32.mrb[0].mxu0
      %v2965 = vadd.f32 0.0, %v2964
      %2966 = vmatprep.mubr.f32.mxu0 0.0
      %2967 = vmatmul.mubr.f32.gmra.mrb[0].mxu0 %v2885
      %v2968 = vpop.f32.mrb[0].mxu0
      %v2969 = vadd.f32 0.0, %v2968
      %v2970 = vpop.f32.mrb[0].mxu0
      %v2971 = vadd.f32 0.0, %v2970
      %2972 = vmatprep.mubr.f32.mxu0 0.0
      %2973 = vmatmul.mubr.f32.gmra.mrb[0].mxu0 %v2888
      %v2974 = vpop.f32.mrb[0].mxu0
      %v2975 = vadd.f32 0.0, %v2974
      %v2976 = vpop.f32.mrb[0].mxu0
      %v2977 = vadd.f32 0.0, %v2976
      %2978 = vdwg.mxu0
      %v2979 = vadd.f32 %v2865, %v2957
      %v2980 = vadd.f32 %v2866, %v2959
      %v2981 = vadd.f32 %v2867, %v2963
      %v2982 = vadd.f32 %v2868, %v2965
      %v2983 = vadd.f32 %v2869, %v2969
      %v2984 = vadd.f32 %v2870, %v2971
      %v2985 = vadd.f32 %v2871, %v2975
      %v2986 = vadd.f32 %v2872, %v2977
      %2987 = vrot.lane.b32.xlu0 %v2358, 127
      %v2988 = vpop.permute.xlu0 %2987
      %2989 = vrot.lane.b32.xlu0 %v2360, 127
      %v2990 = vpop.permute.xlu0 %2989
      %2991 = vrot.lane.b32.xlu0 %v2359, 127
      %v2992 = vpop.permute.xlu0 %2991
      %2993 = vrot.lane.b32.xlu0 %v2361, 127
      %v2994 = vpop.permute.xlu0 %2993
      %v2995 = vsel %vm1261, %v2988, %v2992
      %v2996 = vsel %vm1261, %v2990, %v2994
      %v2997 = vsel %vm1261, %v2992, %v2988
      %v2998 = vsel %vm1261, %v2994, %v2990
      %v2999 = vmul.f32 %v2995, %v725
      %v3000 = vmul.f32 %v2997, %v726
      %v3001 = vmul.f32 %v2996, %v725
      %v3002 = vmul.f32 %v2998, %v726
      %s3003 = scalar_lea.vmem %s3, 160
      %v3004 = vld [vmem:[%s3003] sm:$0xff]
      %v3005 = vld [vmem:[%s3003 + $0x8] sm:$0xff]
      %v3006 = vld [vmem:[%s3003 + $0x10] sm:$0xff]
      %v3007 = vld [vmem:[%s3003 + $0x18] sm:$0xff]
      %v3009 = vsel %vm2407, %v3004, 0
      %v3012 = vsel %vm2407, %v3005, 0
      %v3015 = vsel %vm2407, %v3006, 0
      %v3018 = vsel %vm2407, %v3007, 0
      %3020 = vmatprep.subr.mxu0 %v3000
      %3021 = vmatpush1.msra.mxu0 %v2999
      %3022 = vmatprep.subr.mxu0 %v3002
      %3023 = vmatpush1.msra.mxu0 %v3001
      %3024 = vmatprep.subr.mxu0 0.0
      %3025 = vmatpush1.msra.mxu0 0.0
      %3026 = vmatprep.subr.mxu0 0.0
      %3027 = vmatpush1.msra.mxu0 0.0
      %3028 = vmatprep.subr.mxu0 0.0
      %3029 = vmatpush1.msra.mxu0 0.0
      %3030 = vmatprep.subr.mxu0 0.0
      %3031 = vmatpush1.msra.mxu0 0.0
      %3032 = vmatprep.subr.mxu0 0.0
      %3033 = vmatpush1.msra.mxu0 0.0
      %3034 = vmatprep.subr.mxu0 0.0
      %3035 = vmatpush1.msra.mxu0 0.0
      %3036 = vmatprep.subr.mxu0 0.0
      %3037 = vmatpush1.msra.mxu0 0.0
      %3038 = vmatprep.subr.mxu0 0.0
      %3039 = vmatpush1.msra.mxu0 0.0
      %3040 = vmatprep.subr.mxu0 0.0
      %3041 = vmatpush1.msra.mxu0 0.0
      %3042 = vmatprep.subr.mxu0 0.0
      %3043 = vmatpush1.msra.mxu0 0.0
      %3044 = vmatprep.subr.mxu0 0.0
      %3045 = vmatpush1.msra.mxu0 0.0
      %3046 = vmatprep.subr.mxu0 0.0
      %3047 = vmatpush1.msra.mxu0 0.0
      %3048 = vmatprep.subr.mxu0 0.0
      %3049 = vmatpush1.msra.mxu0 0.0
      %3050 = vmatprep.subr.mxu0 0.0
      %3051 = vmatpush1.msra.mxu0 0.0
      %3052 = vmatprep.subr.mxu0 0.0
      %3053 = vmatpush1.msra.mxu0 0.0
      %3054 = vmatprep.subr.mxu0 0.0
      %3055 = vmatpush1.msra.mxu0 0.0
      %3056 = vmatprep.subr.mxu0 0.0
      %3057 = vmatpush1.msra.mxu0 0.0
      %3058 = vmatprep.subr.mxu0 0.0
      %3059 = vmatpush1.msra.mxu0 0.0
      %3060 = vmatprep.subr.mxu0 0.0
      %3061 = vmatpush1.msra.mxu0 0.0
      %3062 = vmatprep.subr.mxu0 0.0
      %3063 = vmatpush1.msra.mxu0 0.0
      %3064 = vmatprep.subr.mxu0 0.0
      %3065 = vmatpush1.msra.mxu0 0.0
      %3066 = vmatprep.subr.mxu0 0.0
      %3067 = vmatpush1.msra.mxu0 0.0
      %3068 = vmatprep.subr.mxu0 0.0
      %3069 = vmatpush1.msra.mxu0 0.0
      %3070 = vmatprep.subr.mxu0 0.0
      %3071 = vmatpush1.msra.mxu0 0.0
      %3072 = vmatprep.subr.mxu0 0.0
      %3073 = vmatpush1.msra.mxu0 0.0
      %3074 = vmatprep.subr.mxu0 0.0
      %3075 = vmatpush1.msra.mxu0 0.0
      %3076 = vmatprep.subr.mxu0 0.0
      %3077 = vmatpush1.msra.mxu0 0.0
      %3078 = vmatprep.subr.mxu0 0.0
      %3079 = vmatpush1.msra.mxu0 0.0
      %3080 = vmatprep.subr.mxu0 0.0
      %3081 = vmatpush1.msra.mxu0 0.0
      %3082 = vmatprep.subr.mxu0 0.0
      %3083 = vmatpush1.msra.mxu0 0.0
      %3084 = vmatprep.mubr.f32.mxu0 0.0
      %3085 = vmatmul.mubr.f32.gmra.mrb[0].mxu0 %v3009
      %v3086 = vpop.f32.mrb[0].mxu0
      %v3087 = vadd.f32 0.0, %v3086
      %v3088 = vpop.f32.mrb[0].mxu0
      %v3089 = vadd.f32 0.0, %v3088
      %3090 = vmatprep.mubr.f32.mxu0 0.0
      %3091 = vmatmul.mubr.f32.gmra.mrb[0].mxu0 %v3012
      %v3092 = vpop.f32.mrb[0].mxu0
      %v3093 = vadd.f32 0.0, %v3092
      %v3094 = vpop.f32.mrb[0].mxu0
      %v3095 = vadd.f32 0.0, %v3094
      %3096 = vmatprep.mubr.f32.mxu0 0.0
      %3097 = vmatmul.mubr.f32.gmra.mrb[0].mxu0 %v3015
      %v3098 = vpop.f32.mrb[0].mxu0
      %v3099 = vadd.f32 0.0, %v3098
      %v3100 = vpop.f32.mrb[0].mxu0
      %v3101 = vadd.f32 0.0, %v3100
      %3102 = vmatprep.mubr.f32.mxu0 0.0
      %3103 = vmatmul.mubr.f32.gmra.mrb[0].mxu0 %v3018
      %v3104 = vpop.f32.mrb[0].mxu0
      %v3105 = vadd.f32 0.0, %v3104
      %v3106 = vpop.f32.mrb[0].mxu0
      %v3107 = vadd.f32 0.0, %v3106
      %3108 = vdwg.mxu0
      %v3109 = vadd.f32 %v2979, %v3087
      %v3110 = vadd.f32 %v2980, %v3089
      %v3111 = vadd.f32 %v2981, %v3093
      %v3112 = vadd.f32 %v2982, %v3095
      %v3113 = vadd.f32 %v2983, %v3099
      %v3114 = vadd.f32 %v2984, %v3101
      %v3115 = vadd.f32 %v2985, %v3105
      %v3116 = vadd.f32 %v2986, %v3107
      %3117 = vrot.lane.b32.xlu0 %v2358, 121
      %v3118 = vpop.permute.xlu0 %3117
      %3119 = vrot.lane.b32.xlu0 %v2360, 121
      %v3120 = vpop.permute.xlu0 %3119
      %3121 = vrot.lane.b32.xlu0 %v2359, 121
      %v3122 = vpop.permute.xlu0 %3121
      %3123 = vrot.lane.b32.xlu0 %v2361, 121
      %v3124 = vpop.permute.xlu0 %3123
      %vm3125 = vcmp.lt.s32.totalorder %v591, 121
      %v3126 = vsel %vm3125, %v3118, %v3122
      %v3127 = vsel %vm3125, %v3120, %v3124
      %v3128 = vsel %vm3125, %v3122, %v3118
      %v3129 = vsel %vm3125, %v3124, %v3120
      %v3130 = vmul.f32 %v737, %v719
      %v3131 = vmul.f32 %v738, %v720
      %v3132 = vmul.f32 %v3126, %v3130
      %v3133 = vmul.f32 %v3128, %v3131
      %v3134 = vmul.f32 %v3127, %v3130
      %v3135 = vmul.f32 %v3129, %v3131
      %s3136 = scalar_lea.vmem %s3, 192
      %v3137 = vld [vmem:[%s3136] sm:$0xff]
      %v3138 = vld [vmem:[%s3136 + $0x8] sm:$0xff]
      %v3139 = vld [vmem:[%s3136 + $0x10] sm:$0xff]
      %v3140 = vld [vmem:[%s3136 + $0x18] sm:$0xff]
      %v3142 = vsel %vm2407, %v3137, 0
      %v3145 = vsel %vm2407, %v3138, 0
      %v3148 = vsel %vm2407, %v3139, 0
      %v3151 = vsel %vm2407, %v3140, 0
      %3153 = vmatprep.subr.mxu0 %v3133
      %3154 = vmatpush1.msra.mxu0 %v3132
      %3155 = vmatprep.subr.mxu0 %v3135
      %3156 = vmatpush1.msra.mxu0 %v3134
      %3157 = vmatprep.subr.mxu0 0.0
      %3158 = vmatpush1.msra.mxu0 0.0
      %3159 = vmatprep.subr.mxu0 0.0
      %3160 = vmatpush1.msra.mxu0 0.0
      %3161 = vmatprep.subr.mxu0 0.0
      %3162 = vmatpush1.msra.mxu0 0.0
      %3163 = vmatprep.subr.mxu0 0.0
      %3164 = vmatpush1.msra.mxu0 0.0
      %3165 = vmatprep.subr.mxu0 0.0
      %3166 = vmatpush1.msra.mxu0 0.0
      %3167 = vmatprep.subr.mxu0 0.0
      %3168 = vmatpush1.msra.mxu0 0.0
      %3169 = vmatprep.subr.mxu0 0.0
      %3170 = vmatpush1.msra.mxu0 0.0
      %3171 = vmatprep.subr.mxu0 0.0
      %3172 = vmatpush1.msra.mxu0 0.0
      %3173 = vmatprep.subr.mxu0 0.0
      %3174 = vmatpush1.msra.mxu0 0.0
      %3175 = vmatprep.subr.mxu0 0.0
      %3176 = vmatpush1.msra.mxu0 0.0
      %3177 = vmatprep.subr.mxu0 0.0
      %3178 = vmatpush1.msra.mxu0 0.0
      %3179 = vmatprep.subr.mxu0 0.0
      %3180 = vmatpush1.msra.mxu0 0.0
      %3181 = vmatprep.subr.mxu0 0.0
      %3182 = vmatpush1.msra.mxu0 0.0
      %3183 = vmatprep.subr.mxu0 0.0
      %3184 = vmatpush1.msra.mxu0 0.0
      %3185 = vmatprep.subr.mxu0 0.0
      %3186 = vmatpush1.msra.mxu0 0.0
      %3187 = vmatprep.subr.mxu0 0.0
      %3188 = vmatpush1.msra.mxu0 0.0
      %3189 = vmatprep.subr.mxu0 0.0
      %3190 = vmatpush1.msra.mxu0 0.0
      %3191 = vmatprep.subr.mxu0 0.0
      %3192 = vmatpush1.msra.mxu0 0.0
      %3193 = vmatprep.subr.mxu0 0.0
      %3194 = vmatpush1.msra.mxu0 0.0
      %3195 = vmatprep.subr.mxu0 0.0
      %3196 = vmatpush1.msra.mxu0 0.0
      %3197 = vmatprep.subr.mxu0 0.0
      %3198 = vmatpush1.msra.mxu0 0.0
      %3199 = vmatprep.subr.mxu0 0.0
      %3200 = vmatpush1.msra.mxu0 0.0
      %3201 = vmatprep.subr.mxu0 0.0
      %3202 = vmatpush1.msra.mxu0 0.0
      %3203 = vmatprep.subr.mxu0 0.0
      %3204 = vmatpush1.msra.mxu0 0.0
      %3205 = vmatprep.subr.mxu0 0.0
      %3206 = vmatpush1.msra.mxu0 0.0
      %3207 = vmatprep.subr.mxu0 0.0
      %3208 = vmatpush1.msra.mxu0 0.0
      %3209 = vmatprep.subr.mxu0 0.0
      %3210 = vmatpush1.msra.mxu0 0.0
      %3211 = vmatprep.subr.mxu0 0.0
      %3212 = vmatpush1.msra.mxu0 0.0
      %3213 = vmatprep.subr.mxu0 0.0
      %3214 = vmatpush1.msra.mxu0 0.0
      %3215 = vmatprep.subr.mxu0 0.0
      %3216 = vmatpush1.msra.mxu0 0.0
      %3217 = vmatprep.mubr.f32.mxu0 0.0
      %3218 = vmatmul.mubr.f32.gmra.mrb[0].mxu0 %v3142
      %v3219 = vpop.f32.mrb[0].mxu0
      %v3220 = vadd.f32 0.0, %v3219
      %v3221 = vpop.f32.mrb[0].mxu0
      %v3222 = vadd.f32 0.0, %v3221
      %3223 = vmatprep.mubr.f32.mxu0 0.0
      %3224 = vmatmul.mubr.f32.gmra.mrb[0].mxu0 %v3145
      %v3225 = vpop.f32.mrb[0].mxu0
      %v3226 = vadd.f32 0.0, %v3225
      %v3227 = vpop.f32.mrb[0].mxu0
      %v3228 = vadd.f32 0.0, %v3227
      %3229 = vmatprep.mubr.f32.mxu0 0.0
      %3230 = vmatmul.mubr.f32.gmra.mrb[0].mxu0 %v3148
      %v3231 = vpop.f32.mrb[0].mxu0
      %v3232 = vadd.f32 0.0, %v3231
      %v3233 = vpop.f32.mrb[0].mxu0
      %v3234 = vadd.f32 0.0, %v3233
      %3235 = vmatprep.mubr.f32.mxu0 0.0
      %3236 = vmatmul.mubr.f32.gmra.mrb[0].mxu0 %v3151
      %v3237 = vpop.f32.mrb[0].mxu0
      %v3238 = vadd.f32 0.0, %v3237
      %v3239 = vpop.f32.mrb[0].mxu0
      %v3240 = vadd.f32 0.0, %v3239
      %3241 = vdwg.mxu0
      %v3242 = vadd.f32 %v3109, %v3220
      %v3243 = vadd.f32 %v3110, %v3222
      %v3244 = vadd.f32 %v3111, %v3226
      %v3245 = vadd.f32 %v3112, %v3228
      %v3246 = vadd.f32 %v3113, %v3232
      %v3247 = vadd.f32 %v3114, %v3234
      %v3248 = vadd.f32 %v3115, %v3238
      %v3249 = vadd.f32 %v3116, %v3240
      %3250 = vrot.lane.b32.xlu0 %v2358, 120
      %v3251 = vpop.permute.xlu0 %3250
      %3252 = vrot.lane.b32.xlu0 %v2360, 120
      %v3253 = vpop.permute.xlu0 %3252
      %3254 = vrot.lane.b32.xlu0 %v2359, 120
      %v3255 = vpop.permute.xlu0 %3254
      %3256 = vrot.lane.b32.xlu0 %v2361, 120
      %v3257 = vpop.permute.xlu0 %3256
      %vm3258 = vcmp.lt.s32.totalorder %v591, 120
      %v3259 = vsel %vm3258, %v3251, %v3255
      %v3260 = vsel %vm3258, %v3253, %v3257
      %v3261 = vsel %vm3258, %v3255, %v3251
      %v3262 = vsel %vm3258, %v3257, %v3253
      %v3263 = vmul.f32 %v3259, %v737
      %v3264 = vmul.f32 %v3261, %v738
      %v3265 = vmul.f32 %v3260, %v737
      %v3266 = vmul.f32 %v3262, %v738
      %s3267 = scalar_lea.vmem %s3, 224
      %v3268 = vld [vmem:[%s3267] sm:$0xff]
      %v3269 = vld [vmem:[%s3267 + $0x8] sm:$0xff]
      %v3270 = vld [vmem:[%s3267 + $0x10] sm:$0xff]
      %v3271 = vld [vmem:[%s3267 + $0x18] sm:$0xff]
      %v3273 = vsel %vm2407, %v3268, 0
      %v3276 = vsel %vm2407, %v3269, 0
      %v3279 = vsel %vm2407, %v3270, 0
      %v3282 = vsel %vm2407, %v3271, 0
      %3284 = vmatprep.subr.mxu0 %v3264
      %3285 = vmatpush1.msra.mxu0 %v3263
      %3286 = vmatprep.subr.mxu0 %v3266
      %3287 = vmatpush1.msra.mxu0 %v3265
      %3288 = vmatprep.subr.mxu0 0.0
      %3289 = vmatpush1.msra.mxu0 0.0
      %3290 = vmatprep.subr.mxu0 0.0
      %3291 = vmatpush1.msra.mxu0 0.0
      %3292 = vmatprep.subr.mxu0 0.0
      %3293 = vmatpush1.msra.mxu0 0.0
      %3294 = vmatprep.subr.mxu0 0.0
      %3295 = vmatpush1.msra.mxu0 0.0
      %3296 = vmatprep.subr.mxu0 0.0
      %3297 = vmatpush1.msra.mxu0 0.0
      %3298 = vmatprep.subr.mxu0 0.0
      %3299 = vmatpush1.msra.mxu0 0.0
      %3300 = vmatprep.subr.mxu0 0.0
      %3301 = vmatpush1.msra.mxu0 0.0
      %3302 = vmatprep.subr.mxu0 0.0
      %3303 = vmatpush1.msra.mxu0 0.0
      %3304 = vmatprep.subr.mxu0 0.0
      %3305 = vmatpush1.msra.mxu0 0.0
      %3306 = vmatprep.subr.mxu0 0.0
      %3307 = vmatpush1.msra.mxu0 0.0
      %3308 = vmatprep.subr.mxu0 0.0
      %3309 = vmatpush1.msra.mxu0 0.0
      %3310 = vmatprep.subr.mxu0 0.0
      %3311 = vmatpush1.msra.mxu0 0.0
      %3312 = vmatprep.subr.mxu0 0.0
      %3313 = vmatpush1.msra.mxu0 0.0
      %3314 = vmatprep.subr.mxu0 0.0
      %3315 = vmatpush1.msra.mxu0 0.0
      %3316 = vmatprep.subr.mxu0 0.0
      %3317 = vmatpush1.msra.mxu0 0.0
      %3318 = vmatprep.subr.mxu0 0.0
      %3319 = vmatpush1.msra.mxu0 0.0
      %3320 = vmatprep.subr.mxu0 0.0
      %3321 = vmatpush1.msra.mxu0 0.0
      %3322 = vmatprep.subr.mxu0 0.0
      %3323 = vmatpush1.msra.mxu0 0.0
      %3324 = vmatprep.subr.mxu0 0.0
      %3325 = vmatpush1.msra.mxu0 0.0
      %3326 = vmatprep.subr.mxu0 0.0
      %3327 = vmatpush1.msra.mxu0 0.0
      %3328 = vmatprep.subr.mxu0 0.0
      %3329 = vmatpush1.msra.mxu0 0.0
      %3330 = vmatprep.subr.mxu0 0.0
      %3331 = vmatpush1.msra.mxu0 0.0
      %3332 = vmatprep.subr.mxu0 0.0
      %3333 = vmatpush1.msra.mxu0 0.0
      %3334 = vmatprep.subr.mxu0 0.0
      %3335 = vmatpush1.msra.mxu0 0.0
      %3336 = vmatprep.subr.mxu0 0.0
      %3337 = vmatpush1.msra.mxu0 0.0
      %3338 = vmatprep.subr.mxu0 0.0
      %3339 = vmatpush1.msra.mxu0 0.0
      %3340 = vmatprep.subr.mxu0 0.0
      %3341 = vmatpush1.msra.mxu0 0.0
      %3342 = vmatprep.subr.mxu0 0.0
      %3343 = vmatpush1.msra.mxu0 0.0
      %3344 = vmatprep.subr.mxu0 0.0
      %3345 = vmatpush1.msra.mxu0 0.0
      %3346 = vmatprep.subr.mxu0 0.0
      %3347 = vmatpush1.msra.mxu0 0.0
      %3348 = vmatprep.mubr.f32.mxu0 0.0
      %3349 = vmatmul.mubr.f32.gmra.mrb[0].mxu0 %v3273
      %v3350 = vpop.f32.mrb[0].mxu0
      %v3351 = vadd.f32 0.0, %v3350
      %v3352 = vpop.f32.mrb[0].mxu0
      %v3353 = vadd.f32 0.0, %v3352
      %3354 = vmatprep.mubr.f32.mxu0 0.0
      %3355 = vmatmul.mubr.f32.gmra.mrb[0].mxu0 %v3276
      %v3356 = vpop.f32.mrb[0].mxu0
      %v3357 = vadd.f32 0.0, %v3356
      %v3358 = vpop.f32.mrb[0].mxu0
      %v3359 = vadd.f32 0.0, %v3358
      %3360 = vmatprep.mubr.f32.mxu0 0.0
      %3361 = vmatmul.mubr.f32.gmra.mrb[0].mxu0 %v3279
      %v3362 = vpop.f32.mrb[0].mxu0
      %v3363 = vadd.f32 0.0, %v3362
      %v3364 = vpop.f32.mrb[0].mxu0
      %v3365 = vadd.f32 0.0, %v3364
      %3366 = vmatprep.mubr.f32.mxu0 0.0
      %3367 = vmatmul.mubr.f32.gmra.mrb[0].mxu0 %v3282
      %v3368 = vpop.f32.mrb[0].mxu0
      %v3369 = vadd.f32 0.0, %v3368
      %v3370 = vpop.f32.mrb[0].mxu0
      %v3371 = vadd.f32 0.0, %v3370
      %3372 = vdwg.mxu0
      %v3373 = vadd.f32 %v3242, %v3351
      %v3374 = vadd.f32 %v3243, %v3353
      %v3375 = vadd.f32 %v3244, %v3357
      %v3376 = vadd.f32 %v3245, %v3359
      %v3377 = vadd.f32 %v3246, %v3363
      %v3378 = vadd.f32 %v3247, %v3365
      %v3379 = vadd.f32 %v3248, %v3369
      %v3380 = vadd.f32 %v3249, %v3371
      %3381 = vrot.lane.b32.xlu0 %v2358, 119
      %v3382 = vpop.permute.xlu0 %3381
      %3383 = vrot.lane.b32.xlu0 %v2360, 119
      %v3384 = vpop.permute.xlu0 %3383
      %3385 = vrot.lane.b32.xlu0 %v2359, 119
      %v3386 = vpop.permute.xlu0 %3385
      %3387 = vrot.lane.b32.xlu0 %v2361, 119
      %v3388 = vpop.permute.xlu0 %3387
      %vm3389 = vcmp.lt.s32.totalorder %v591, 119
      %v3390 = vsel %vm3389, %v3382, %v3386
      %v3391 = vsel %vm3389, %v3384, %v3388
      %v3392 = vsel %vm3389, %v3386, %v3382
      %v3393 = vsel %vm3389, %v3388, %v3384
      %v3394 = vmul.f32 %v737, %v725
      %v3395 = vmul.f32 %v738, %v726
      %v3396 = vmul.f32 %v3390, %v3394
      %v3397 = vmul.f32 %v3392, %v3395
      %v3398 = vmul.f32 %v3391, %v3394
      %v3399 = vmul.f32 %v3393, %v3395
      %s3400 = scalar_lea.vmem %s3, 256
      %v3401 = vld [vmem:[%s3400] sm:$0xff]
      %v3402 = vld [vmem:[%s3400 + $0x8] sm:$0xff]
      %v3403 = vld [vmem:[%s3400 + $0x10] sm:$0xff]
      %v3404 = vld [vmem:[%s3400 + $0x18] sm:$0xff]
      %v3406 = vsel %vm2407, %v3401, 0
      %v3409 = vsel %vm2407, %v3402, 0
      %v3412 = vsel %vm2407, %v3403, 0
      %v3415 = vsel %vm2407, %v3404, 0
      %3417 = vmatprep.subr.mxu0 %v3397
      %3418 = vmatpush1.msra.mxu0 %v3396
      %3419 = vmatprep.subr.mxu0 %v3399
      %3420 = vmatpush1.msra.mxu0 %v3398
      %3421 = vmatprep.subr.mxu0 0.0
      %3422 = vmatpush1.msra.mxu0 0.0
      %3423 = vmatprep.subr.mxu0 0.0
      %3424 = vmatpush1.msra.mxu0 0.0
      %3425 = vmatprep.subr.mxu0 0.0
      %3426 = vmatpush1.msra.mxu0 0.0
      %3427 = vmatprep.subr.mxu0 0.0
      %3428 = vmatpush1.msra.mxu0 0.0
      %3429 = vmatprep.subr.mxu0 0.0
      %3430 = vmatpush1.msra.mxu0 0.0
      %3431 = vmatprep.subr.mxu0 0.0
      %3432 = vmatpush1.msra.mxu0 0.0
      %3433 = vmatprep.subr.mxu0 0.0
      %3434 = vmatpush1.msra.mxu0 0.0
      %3435 = vmatprep.subr.mxu0 0.0
      %3436 = vmatpush1.msra.mxu0 0.0
      %3437 = vmatprep.subr.mxu0 0.0
      %3438 = vmatpush1.msra.mxu0 0.0
      %3439 = vmatprep.subr.mxu0 0.0
      %3440 = vmatpush1.msra.mxu0 0.0
      %3441 = vmatprep.subr.mxu0 0.0
      %3442 = vmatpush1.msra.mxu0 0.0
      %3443 = vmatprep.subr.mxu0 0.0
      %3444 = vmatpush1.msra.mxu0 0.0
      %3445 = vmatprep.subr.mxu0 0.0
      %3446 = vmatpush1.msra.mxu0 0.0
      %3447 = vmatprep.subr.mxu0 0.0
      %3448 = vmatpush1.msra.mxu0 0.0
      %3449 = vmatprep.subr.mxu0 0.0
      %3450 = vmatpush1.msra.mxu0 0.0
      %3451 = vmatprep.subr.mxu0 0.0
      %3452 = vmatpush1.msra.mxu0 0.0
      %3453 = vmatprep.subr.mxu0 0.0
      %3454 = vmatpush1.msra.mxu0 0.0
      %3455 = vmatprep.subr.mxu0 0.0
      %3456 = vmatpush1.msra.mxu0 0.0
      %3457 = vmatprep.subr.mxu0 0.0
      %3458 = vmatpush1.msra.mxu0 0.0
      %3459 = vmatprep.subr.mxu0 0.0
      %3460 = vmatpush1.msra.mxu0 0.0
      %3461 = vmatprep.subr.mxu0 0.0
      %3462 = vmatpush1.msra.mxu0 0.0
      %3463 = vmatprep.subr.mxu0 0.0
      %3464 = vmatpush1.msra.mxu0 0.0
      %3465 = vmatprep.subr.mxu0 0.0
      %3466 = vmatpush1.msra.mxu0 0.0
      %3467 = vmatprep.subr.mxu0 0.0
      %3468 = vmatpush1.msra.mxu0 0.0
      %3469 = vmatprep.subr.mxu0 0.0
      %3470 = vmatpush1.msra.mxu0 0.0
      %3471 = vmatprep.subr.mxu0 0.0
      %3472 = vmatpush1.msra.mxu0 0.0
      %3473 = vmatprep.subr.mxu0 0.0
      %3474 = vmatpush1.msra.mxu0 0.0
      %3475 = vmatprep.subr.mxu0 0.0
      %3476 = vmatpush1.msra.mxu0 0.0
      %3477 = vmatprep.subr.mxu0 0.0
      %3478 = vmatpush1.msra.mxu0 0.0
      %3479 = vmatprep.subr.mxu0 0.0
      %3480 = vmatpush1.msra.mxu0 0.0
      %3481 = vmatprep.mubr.f32.mxu0 0.0
      %3482 = vmatmul.mubr.f32.gmra.mrb[0].mxu0 %v3406
      %v3483 = vpop.f32.mrb[0].mxu0
      %v3484 = vadd.f32 0.0, %v3483
      %v3485 = vpop.f32.mrb[0].mxu0
      %v3486 = vadd.f32 0.0, %v3485
      %3487 = vmatprep.mubr.f32.mxu0 0.0
      %3488 = vmatmul.mubr.f32.gmra.mrb[0].mxu0 %v3409
      %v3489 = vpop.f32.mrb[0].mxu0
      %v3490 = vadd.f32 0.0, %v3489
      %v3491 = vpop.f32.mrb[0].mxu0
      %v3492 = vadd.f32 0.0, %v3491
      %3493 = vmatprep.mubr.f32.mxu0 0.0
      %3494 = vmatmul.mubr.f32.gmra.mrb[0].mxu0 %v3412
      %v3495 = vpop.f32.mrb[0].mxu0
      %v3496 = vadd.f32 0.0, %v3495
      %v3497 = vpop.f32.mrb[0].mxu0
      %v3498 = vadd.f32 0.0, %v3497
      %3499 = vmatprep.mubr.f32.mxu0 0.0
      %3500 = vmatmul.mubr.f32.gmra.mrb[0].mxu0 %v3415
      %v3501 = vpop.f32.mrb[0].mxu0
      %v3502 = vadd.f32 0.0, %v3501
      %v3503 = vpop.f32.mrb[0].mxu0
      %v3504 = vadd.f32 0.0, %v3503
      %3505 = vdwg.mxu0
      %v3506 = vadd.f32 %v3373, %v3484
      %v3507 = vadd.f32 %v3374, %v3486
      %v3508 = vadd.f32 %v3375, %v3490
      %v3509 = vadd.f32 %v3376, %v3492
      %v3510 = vadd.f32 %v3377, %v3496
      %v3511 = vadd.f32 %v3378, %v3498
      %v3512 = vadd.f32 %v3379, %v3502
      %v3513 = vadd.f32 %v3380, %v3504
      %v3514 = vld [vmem:[%s4] sm:$0xff]
      %v3515 = vld [vmem:[%s4 + $0x8] sm:$0xff]
      %v3516 = vld [vmem:[%s4 + $0x10] sm:$0xff]
      %v3517 = vld [vmem:[%s4 + $0x18] sm:$0xff]
      %3519 = vset.pattern.permute.xlu0 0
      %3520 = vperm.xlu0 %3519, %v3514
      %v3521 = vpop.permute.xlu0 %3520
      %3524 = vset.pattern.permute.xlu0 0
      %3525 = vperm.xlu0 %3524, %v3515
      %v3526 = vpop.permute.xlu0 %3525
      %3529 = vset.pattern.permute.xlu0 0
      %3530 = vperm.xlu0 %3529, %v3516
      %v3531 = vpop.permute.xlu0 %3530
      %3534 = vset.pattern.permute.xlu0 0
      %3535 = vperm.xlu0 %3534, %v3517
      %v3536 = vpop.permute.xlu0 %3535
      %v3538 = vadd.f32 %v3506, %v3521
      %v3539 = vadd.f32 %v3507, %v3521
      %v3540 = vadd.f32 %v3508, %v3526
      %v3541 = vadd.f32 %v3509, %v3526
      %v3542 = vadd.f32 %v3510, %v3531
      %v3543 = vadd.f32 %v3511, %v3531
      %v3544 = vadd.f32 %v3512, %v3536
      %v3545 = vadd.f32 %v3513, %v3536
      %3546 = vrot.lane.b32.xlu0 %v3538, 127
      %v3547 = vpop.permute.xlu0 %3546
      %3548 = vrot.lane.b32.xlu0 %v3540, 127
      %v3549 = vpop.permute.xlu0 %3548
      %3550 = vrot.lane.b32.xlu0 %v3542, 127
      %v3551 = vpop.permute.xlu0 %3550
      %3552 = vrot.lane.b32.xlu0 %v3544, 127
      %v3553 = vpop.permute.xlu0 %3552
      %3554 = vrot.lane.b32.xlu0 %v3539, 127
      %v3555 = vpop.permute.xlu0 %3554
      %3556 = vrot.lane.b32.xlu0 %v3541, 127
      %v3557 = vpop.permute.xlu0 %3556
      %3558 = vrot.lane.b32.xlu0 %v3543, 127
      %v3559 = vpop.permute.xlu0 %3558
      %3560 = vrot.lane.b32.xlu0 %v3545, 127
      %v3561 = vpop.permute.xlu0 %3560
      %v3562 = vsel %vm1261, %v3547, %v3555
      %v3563 = vsel %vm1261, %v3549, %v3557
      %v3564 = vsel %vm1261, %v3551, %v3559
      %v3565 = vsel %vm1261, %v3553, %v3561
      %v3566 = vsel %vm1261, %v3555, %v3547
      %v3567 = vsel %vm1261, %v3557, %v3549
      %v3568 = vsel %vm1261, %v3559, %v3551
      %v3569 = vsel %vm1261, %v3561, %v3553
      %v3570 = vmax.f32 %v3538, %v3562
      %v3571 = vmax.f32 %v3539, %v3566
      %v3572 = vmax.f32 %v3540, %v3563
      %v3573 = vmax.f32 %v3541, %v3567
      %v3574 = vmax.f32 %v3542, %v3564
      %v3575 = vmax.f32 %v3543, %v3568
      %v3576 = vmax.f32 %v3544, %v3565
      %v3577 = vmax.f32 %v3545, %v3569
      %3578 = vrot.lane.b32.xlu0 %v3538, 120
      %v3579 = vpop.permute.xlu0 %3578
      %3580 = vrot.lane.b32.xlu0 %v3540, 120
      %v3581 = vpop.permute.xlu0 %3580
      %3582 = vrot.lane.b32.xlu0 %v3542, 120
      %v3583 = vpop.permute.xlu0 %3582
      %3584 = vrot.lane.b32.xlu0 %v3544, 120
      %v3585 = vpop.permute.xlu0 %3584
      %3586 = vrot.lane.b32.xlu0 %v3539, 120
      %v3587 = vpop.permute.xlu0 %3586
      %3588 = vrot.lane.b32.xlu0 %v3541, 120
      %v3589 = vpop.permute.xlu0 %3588
      %3590 = vrot.lane.b32.xlu0 %v3543, 120
      %v3591 = vpop.permute.xlu0 %3590
      %3592 = vrot.lane.b32.xlu0 %v3545, 120
      %v3593 = vpop.permute.xlu0 %3592
      %v3594 = vsel %vm3258, %v3579, %v3587
      %v3595 = vsel %vm3258, %v3581, %v3589
      %v3596 = vsel %vm3258, %v3583, %v3591
      %v3597 = vsel %vm3258, %v3585, %v3593
      %v3598 = vsel %vm3258, %v3587, %v3579
      %v3599 = vsel %vm3258, %v3589, %v3581
      %v3600 = vsel %vm3258, %v3591, %v3583
      %v3601 = vsel %vm3258, %v3593, %v3585
      %3602 = vrot.lane.b32.xlu0 %v3538, 119
      %v3603 = vpop.permute.xlu0 %3602
      %3604 = vrot.lane.b32.xlu0 %v3540, 119
      %v3605 = vpop.permute.xlu0 %3604
      %3606 = vrot.lane.b32.xlu0 %v3542, 119
      %v3607 = vpop.permute.xlu0 %3606
      %3608 = vrot.lane.b32.xlu0 %v3544, 119
      %v3609 = vpop.permute.xlu0 %3608
      %3610 = vrot.lane.b32.xlu0 %v3539, 119
      %v3611 = vpop.permute.xlu0 %3610
      %3612 = vrot.lane.b32.xlu0 %v3541, 119
      %v3613 = vpop.permute.xlu0 %3612
      %3614 = vrot.lane.b32.xlu0 %v3543, 119
      %v3615 = vpop.permute.xlu0 %3614
      %3616 = vrot.lane.b32.xlu0 %v3545, 119
      %v3617 = vpop.permute.xlu0 %3616
      %v3618 = vsel %vm3389, %v3603, %v3611
      %v3619 = vsel %vm3389, %v3605, %v3613
      %v3620 = vsel %vm3389, %v3607, %v3615
      %v3621 = vsel %vm3389, %v3609, %v3617
      %v3622 = vsel %vm3389, %v3611, %v3603
      %v3623 = vsel %vm3389, %v3613, %v3605
      %v3624 = vsel %vm3389, %v3615, %v3607
      %v3625 = vsel %vm3389, %v3617, %v3609
      %v3626 = vmax.f32 %v3594, %v3618
      %v3627 = vmax.f32 %v3598, %v3622
      %v3628 = vmax.f32 %v3595, %v3619
      %v3629 = vmax.f32 %v3599, %v3623
      %v3630 = vmax.f32 %v3596, %v3620
      %v3631 = vmax.f32 %v3600, %v3624
      %v3632 = vmax.f32 %v3597, %v3621
      %v3633 = vmax.f32 %v3601, %v3625
      %v3634 = vmax.f32 %v3570, %v3626
      %v3635 = vmax.f32 %v3571, %v3627
      %v3636 = vmax.f32 %v3572, %v3628
      %v3637 = vmax.f32 %v3573, %v3629
      %v3638 = vmax.f32 %v3574, %v3630
      %v3639 = vmax.f32 %v3575, %v3631
      %v3640 = vmax.f32 %v3576, %v3632
      %v3641 = vmax.f32 %v3577, %v3633
      %v3642 = vld [vmem:[%s13] sm:$0xff]
      %v3643 = vld [vmem:[%s13 + $0x8] sm:$0xff]
      %v3644 = vld [vmem:[%s13 + $0x10] sm:$0xff]
      %v3645 = vld [vmem:[%s13 + $0x18] sm:$0xff]
      %v3646 = vld [vmem:[%s13 + $0x20] sm:$0xff]
      %v3647 = vld [vmem:[%s13 + $0x28] sm:$0xff]
      %v3648 = vld [vmem:[%s13 + $0x30] sm:$0xff]
      %v3649 = vld [vmem:[%s13 + $0x38] sm:$0xff]
      %v3651 = vsel %vm2249, %v3634, 0
      %v3654 = vsel %vm2249, %v3636, 0
      %v3657 = vsel %vm2249, %v3638, 0
      %v3660 = vsel %vm2249, %v3640, 0
      %3662 = vmatprep.subr.mxu0 0.0
      %3663 = vmatpush1.msra.mxu0 %v3642
      %3664 = vmatprep.subr.mxu0 0.0
      %3665 = vmatpush1.msra.mxu0 %v3643
      %3666 = vmatprep.subr.mxu0 0.0
      %3667 = vmatpush1.msra.mxu0 %v3644
      %3668 = vmatprep.subr.mxu0 0.0
      %3669 = vmatpush1.msra.mxu0 %v3645
      %3670 = vmatprep.subr.mxu0 0.0
      %3671 = vmatpush1.msra.mxu0 %v3646
      %3672 = vmatprep.subr.mxu0 0.0
      %3673 = vmatpush1.msra.mxu0 %v3647
      %3674 = vmatprep.subr.mxu0 0.0
      %3675 = vmatpush1.msra.mxu0 %v3648
      %3676 = vmatprep.subr.mxu0 0.0
      %3677 = vmatpush1.msra.mxu0 %v3649
      %3678 = vmatprep.subr.mxu0 0.0
      %3679 = vmatpush1.msra.mxu0 0.0
      %3680 = vmatprep.subr.mxu0 0.0
      %3681 = vmatpush1.msra.mxu0 0.0
      %3682 = vmatprep.subr.mxu0 0.0
      %3683 = vmatpush1.msra.mxu0 0.0
      %3684 = vmatprep.subr.mxu0 0.0
      %3685 = vmatpush1.msra.mxu0 0.0
      %3686 = vmatprep.subr.mxu0 0.0
      %3687 = vmatpush1.msra.mxu0 0.0
      %3688 = vmatprep.subr.mxu0 0.0
      %3689 = vmatpush1.msra.mxu0 0.0
      %3690 = vmatprep.subr.mxu0 0.0
      %3691 = vmatpush1.msra.mxu0 0.0
      %3692 = vmatprep.subr.mxu0 0.0
      %3693 = vmatpush1.msra.mxu0 0.0
      %3694 = vmatprep.subr.mxu0 0.0
      %3695 = vmatpush1.msra.mxu0 0.0
      %3696 = vmatprep.subr.mxu0 0.0
      %3697 = vmatpush1.msra.mxu0 0.0
      %3698 = vmatprep.subr.mxu0 0.0
      %3699 = vmatpush1.msra.mxu0 0.0
      %3700 = vmatprep.subr.mxu0 0.0
      %3701 = vmatpush1.msra.mxu0 0.0
      %3702 = vmatprep.subr.mxu0 0.0
      %3703 = vmatpush1.msra.mxu0 0.0
      %3704 = vmatprep.subr.mxu0 0.0
      %3705 = vmatpush1.msra.mxu0 0.0
      %3706 = vmatprep.subr.mxu0 0.0
      %3707 = vmatpush1.msra.mxu0 0.0
      %3708 = vmatprep.subr.mxu0 0.0
      %3709 = vmatpush1.msra.mxu0 0.0
      %3710 = vmatprep.subr.mxu0 0.0
      %3711 = vmatpush1.msra.mxu0 0.0
      %3712 = vmatprep.subr.mxu0 0.0
      %3713 = vmatpush1.msra.mxu0 0.0
      %3714 = vmatprep.subr.mxu0 0.0
      %3715 = vmatpush1.msra.mxu0 0.0
      %3716 = vmatprep.subr.mxu0 0.0
      %3717 = vmatpush1.msra.mxu0 0.0
      %3718 = vmatprep.subr.mxu0 0.0
      %3719 = vmatpush1.msra.mxu0 0.0
      %3720 = vmatprep.subr.mxu0 0.0
      %3721 = vmatpush1.msra.mxu0 0.0
      %3722 = vmatprep.subr.mxu0 0.0
      %3723 = vmatpush1.msra.mxu0 0.0
      %3724 = vmatprep.subr.mxu0 0.0
      %3725 = vmatpush1.msra.mxu0 0.0
      %3726 = vmatprep.mubr.f32.mxu0 0.0
      %3727 = vmatmul.mubr.f32.gmra.mrb[0].mxu0 %v3651
      %v3728 = vpop.f32.mrb[0].mxu0
      %v3729 = vadd.f32 0.0, %v3728
      %v3730 = vpop.f32.mrb[0].mxu0
      %3731 = vmatprep.mubr.f32.mxu0 0.0
      %3732 = vmatmul.mubr.f32.gmra.mrb[0].mxu0 %v3654
      %v3733 = vpop.f32.mrb[0].mxu0
      %v3734 = vadd.f32 0.0, %v3733
      %v3735 = vpop.f32.mrb[0].mxu0
      %3736 = vmatprep.mubr.f32.mxu0 0.0
      %3737 = vmatmul.mubr.f32.gmra.mrb[0].mxu0 %v3657
      %v3738 = vpop.f32.mrb[0].mxu0
      %v3739 = vadd.f32 0.0, %v3738
      %v3740 = vpop.f32.mrb[0].mxu0
      %3741 = vmatprep.mubr.f32.mxu0 0.0
      %3742 = vmatmul.mubr.f32.gmra.mrb[0].mxu0 %v3660
      %v3743 = vpop.f32.mrb[0].mxu0
      %v3744 = vadd.f32 0.0, %v3743
      %v3745 = vpop.f32.mrb[0].mxu0
      %3746 = vdwg.mxu0
      %3747 = vrot.lane.b32.xlu0 %v3634, 64
      %v3748 = vpop.permute.xlu0 %3747
      %3749 = vrot.lane.b32.xlu0 %v3636, 64
      %v3750 = vpop.permute.xlu0 %3749
      %3751 = vrot.lane.b32.xlu0 %v3638, 64
      %v3752 = vpop.permute.xlu0 %3751
      %3753 = vrot.lane.b32.xlu0 %v3640, 64
      %v3754 = vpop.permute.xlu0 %3753
      %v3755 = vsel %vm2249, %v3748, 0
      %v3757 = vsel %vm2249, %v3750, 0
      %v3759 = vsel %vm2249, %v3752, 0
      %v3761 = vsel %vm2249, %v3754, 0
      %3763 = vmatprep.subr.mxu0 0.0
      %3764 = vmatpush1.msra.mxu0 %v3642
      %3765 = vmatprep.subr.mxu0 0.0
      %3766 = vmatpush1.msra.mxu0 %v3643
      %3767 = vmatprep.subr.mxu0 0.0
      %3768 = vmatpush1.msra.mxu0 %v3644
      %3769 = vmatprep.subr.mxu0 0.0
      %3770 = vmatpush1.msra.mxu0 %v3645
      %3771 = vmatprep.subr.mxu0 0.0
      %3772 = vmatpush1.msra.mxu0 %v3646
      %3773 = vmatprep.subr.mxu0 0.0
      %3774 = vmatpush1.msra.mxu0 %v3647
      %3775 = vmatprep.subr.mxu0 0.0
      %3776 = vmatpush1.msra.mxu0 %v3648
      %3777 = vmatprep.subr.mxu0 0.0
      %3778 = vmatpush1.msra.mxu0 %v3649
      %3779 = vmatprep.subr.mxu0 0.0
      %3780 = vmatpush1.msra.mxu0 0.0
      %3781 = vmatprep.subr.mxu0 0.0
      %3782 = vmatpush1.msra.mxu0 0.0
      %3783 = vmatprep.subr.mxu0 0.0
      %3784 = vmatpush1.msra.mxu0 0.0
      %3785 = vmatprep.subr.mxu0 0.0
      %3786 = vmatpush1.msra.mxu0 0.0
      %3787 = vmatprep.subr.mxu0 0.0
      %3788 = vmatpush1.msra.mxu0 0.0
      %3789 = vmatprep.subr.mxu0 0.0
      %3790 = vmatpush1.msra.mxu0 0.0
      %3791 = vmatprep.subr.mxu0 0.0
      %3792 = vmatpush1.msra.mxu0 0.0
      %3793 = vmatprep.subr.mxu0 0.0
      %3794 = vmatpush1.msra.mxu0 0.0
      %3795 = vmatprep.subr.mxu0 0.0
      %3796 = vmatpush1.msra.mxu0 0.0
      %3797 = vmatprep.subr.mxu0 0.0
      %3798 = vmatpush1.msra.mxu0 0.0
      %3799 = vmatprep.subr.mxu0 0.0
      %3800 = vmatpush1.msra.mxu0 0.0
      %3801 = vmatprep.subr.mxu0 0.0
      %3802 = vmatpush1.msra.mxu0 0.0
      %3803 = vmatprep.subr.mxu0 0.0
      %3804 = vmatpush1.msra.mxu0 0.0
      %3805 = vmatprep.subr.mxu0 0.0
      %3806 = vmatpush1.msra.mxu0 0.0
      %3807 = vmatprep.subr.mxu0 0.0
      %3808 = vmatpush1.msra.mxu0 0.0
      %3809 = vmatprep.subr.mxu0 0.0
      %3810 = vmatpush1.msra.mxu0 0.0
      %3811 = vmatprep.subr.mxu0 0.0
      %3812 = vmatpush1.msra.mxu0 0.0
      %3813 = vmatprep.subr.mxu0 0.0
      %3814 = vmatpush1.msra.mxu0 0.0
      %3815 = vmatprep.subr.mxu0 0.0
      %3816 = vmatpush1.msra.mxu0 0.0
      %3817 = vmatprep.subr.mxu0 0.0
      %3818 = vmatpush1.msra.mxu0 0.0
      %3819 = vmatprep.subr.mxu0 0.0
      %3820 = vmatpush1.msra.mxu0 0.0
      %3821 = vmatprep.subr.mxu0 0.0
      %3822 = vmatpush1.msra.mxu0 0.0
      %3823 = vmatprep.subr.mxu0 0.0
      %3824 = vmatpush1.msra.mxu0 0.0
      %3825 = vmatprep.subr.mxu0 0.0
      %3826 = vmatpush1.msra.mxu0 0.0
      %3827 = vmatprep.mubr.f32.mxu0 0.0
      %3828 = vmatmul.mubr.f32.gmra.mrb[0].mxu0 %v3755
      %v3829 = vpop.f32.mrb[0].mxu0
      %v3830 = vadd.f32 0.0, %v3829
      %v3831 = vpop.f32.mrb[0].mxu0
      %3832 = vmatprep.mubr.f32.mxu0 0.0
      %3833 = vmatmul.mubr.f32.gmra.mrb[0].mxu0 %v3757
      %v3834 = vpop.f32.mrb[0].mxu0
      %v3835 = vadd.f32 0.0, %v3834
      %v3836 = vpop.f32.mrb[0].mxu0
      %3837 = vmatprep.mubr.f32.mxu0 0.0
      %3838 = vmatmul.mubr.f32.gmra.mrb[0].mxu0 %v3759
      %v3839 = vpop.f32.mrb[0].mxu0
      %v3840 = vadd.f32 0.0, %v3839
      %v3841 = vpop.f32.mrb[0].mxu0
      %3842 = vmatprep.mubr.f32.mxu0 0.0
      %3843 = vmatmul.mubr.f32.gmra.mrb[0].mxu0 %v3761
      %v3844 = vpop.f32.mrb[0].mxu0
      %v3845 = vadd.f32 0.0, %v3844
      %v3846 = vpop.f32.mrb[0].mxu0
      %3847 = vdwg.mxu0
      %v3849 = vsel %vm2249, %v3635, 0
      %v3852 = vsel %vm2249, %v3637, 0
      %v3855 = vsel %vm2249, %v3639, 0
      %v3858 = vsel %vm2249, %v3641, 0
      %3860 = vmatprep.subr.mxu0 0.0
      %3861 = vmatpush1.msra.mxu0 %v3642
      %3862 = vmatprep.subr.mxu0 0.0
      %3863 = vmatpush1.msra.mxu0 %v3643
      %3864 = vmatprep.subr.mxu0 0.0
      %3865 = vmatpush1.msra.mxu0 %v3644
      %3866 = vmatprep.subr.mxu0 0.0
      %3867 = vmatpush1.msra.mxu0 %v3645
      %3868 = vmatprep.subr.mxu0 0.0
      %3869 = vmatpush1.msra.mxu0 %v3646
      %3870 = vmatprep.subr.mxu0 0.0
      %3871 = vmatpush1.msra.mxu0 %v3647
      %3872 = vmatprep.subr.mxu0 0.0
      %3873 = vmatpush1.msra.mxu0 %v3648
      %3874 = vmatprep.subr.mxu0 0.0
      %3875 = vmatpush1.msra.mxu0 %v3649
      %3876 = vmatprep.subr.mxu0 0.0
      %3877 = vmatpush1.msra.mxu0 0.0
      %3878 = vmatprep.subr.mxu0 0.0
      %3879 = vmatpush1.msra.mxu0 0.0
      %3880 = vmatprep.subr.mxu0 0.0
      %3881 = vmatpush1.msra.mxu0 0.0
      %3882 = vmatprep.subr.mxu0 0.0
      %3883 = vmatpush1.msra.mxu0 0.0
      %3884 = vmatprep.subr.mxu0 0.0
      %3885 = vmatpush1.msra.mxu0 0.0
      %3886 = vmatprep.subr.mxu0 0.0
      %3887 = vmatpush1.msra.mxu0 0.0
      %3888 = vmatprep.subr.mxu0 0.0
      %3889 = vmatpush1.msra.mxu0 0.0
      %3890 = vmatprep.subr.mxu0 0.0
      %3891 = vmatpush1.msra.mxu0 0.0
      %3892 = vmatprep.subr.mxu0 0.0
      %3893 = vmatpush1.msra.mxu0 0.0
      %3894 = vmatprep.subr.mxu0 0.0
      %3895 = vmatpush1.msra.mxu0 0.0
      %3896 = vmatprep.subr.mxu0 0.0
      %3897 = vmatpush1.msra.mxu0 0.0
      %3898 = vmatprep.subr.mxu0 0.0
      %3899 = vmatpush1.msra.mxu0 0.0
      %3900 = vmatprep.subr.mxu0 0.0
      %3901 = vmatpush1.msra.mxu0 0.0
      %3902 = vmatprep.subr.mxu0 0.0
      %3903 = vmatpush1.msra.mxu0 0.0
      %3904 = vmatprep.subr.mxu0 0.0
      %3905 = vmatpush1.msra.mxu0 0.0
      %3906 = vmatprep.subr.mxu0 0.0
      %3907 = vmatpush1.msra.mxu0 0.0
      %3908 = vmatprep.subr.mxu0 0.0
      %3909 = vmatpush1.msra.mxu0 0.0
      %3910 = vmatprep.subr.mxu0 0.0
      %3911 = vmatpush1.msra.mxu0 0.0
      %3912 = vmatprep.subr.mxu0 0.0
      %3913 = vmatpush1.msra.mxu0 0.0
      %3914 = vmatprep.subr.mxu0 0.0
      %3915 = vmatpush1.msra.mxu0 0.0
      %3916 = vmatprep.subr.mxu0 0.0
      %3917 = vmatpush1.msra.mxu0 0.0
      %3918 = vmatprep.subr.mxu0 0.0
      %3919 = vmatpush1.msra.mxu0 0.0
      %3920 = vmatprep.subr.mxu0 0.0
      %3921 = vmatpush1.msra.mxu0 0.0
      %3922 = vmatprep.subr.mxu0 0.0
      %3923 = vmatpush1.msra.mxu0 0.0
      %3924 = vmatprep.mubr.f32.mxu0 0.0
      %3925 = vmatmul.mubr.f32.gmra.mrb[0].mxu0 %v3849
      %v3926 = vpop.f32.mrb[0].mxu0
      %v3927 = vadd.f32 0.0, %v3926
      %v3928 = vpop.f32.mrb[0].mxu0
      %3929 = vmatprep.mubr.f32.mxu0 0.0
      %3930 = vmatmul.mubr.f32.gmra.mrb[0].mxu0 %v3852
      %v3931 = vpop.f32.mrb[0].mxu0
      %v3932 = vadd.f32 0.0, %v3931
      %v3933 = vpop.f32.mrb[0].mxu0
      %3934 = vmatprep.mubr.f32.mxu0 0.0
      %3935 = vmatmul.mubr.f32.gmra.mrb[0].mxu0 %v3855
      %v3936 = vpop.f32.mrb[0].mxu0
      %v3937 = vadd.f32 0.0, %v3936
      %v3938 = vpop.f32.mrb[0].mxu0
      %3939 = vmatprep.mubr.f32.mxu0 0.0
      %3940 = vmatmul.mubr.f32.gmra.mrb[0].mxu0 %v3858
      %v3941 = vpop.f32.mrb[0].mxu0
      %v3942 = vadd.f32 0.0, %v3941
      %v3943 = vpop.f32.mrb[0].mxu0
      %3944 = vdwg.mxu0
      %3945 = vrot.lane.b32.xlu0 %v3635, 64
      %v3946 = vpop.permute.xlu0 %3945
      %3947 = vrot.lane.b32.xlu0 %v3637, 64
      %v3948 = vpop.permute.xlu0 %3947
      %3949 = vrot.lane.b32.xlu0 %v3639, 64
      %v3950 = vpop.permute.xlu0 %3949
      %3951 = vrot.lane.b32.xlu0 %v3641, 64
      %v3952 = vpop.permute.xlu0 %3951
      %v3953 = vsel %vm2249, %v3946, 0
      %v3955 = vsel %vm2249, %v3948, 0
      %v3957 = vsel %vm2249, %v3950, 0
      %v3959 = vsel %vm2249, %v3952, 0
      %3961 = vmatprep.subr.mxu0 0.0
      %3962 = vmatpush1.msra.mxu0 %v3642
      %3963 = vmatprep.subr.mxu0 0.0
      %3964 = vmatpush1.msra.mxu0 %v3643
      %3965 = vmatprep.subr.mxu0 0.0
      %3966 = vmatpush1.msra.mxu0 %v3644
      %3967 = vmatprep.subr.mxu0 0.0
      %3968 = vmatpush1.msra.mxu0 %v3645
      %3969 = vmatprep.subr.mxu0 0.0
      %3970 = vmatpush1.msra.mxu0 %v3646
      %3971 = vmatprep.subr.mxu0 0.0
      %3972 = vmatpush1.msra.mxu0 %v3647
      %3973 = vmatprep.subr.mxu0 0.0
      %3974 = vmatpush1.msra.mxu0 %v3648
      %3975 = vmatprep.subr.mxu0 0.0
      %3976 = vmatpush1.msra.mxu0 %v3649
      %3977 = vmatprep.subr.mxu0 0.0
      %3978 = vmatpush1.msra.mxu0 0.0
      %3979 = vmatprep.subr.mxu0 0.0
      %3980 = vmatpush1.msra.mxu0 0.0
      %3981 = vmatprep.subr.mxu0 0.0
      %3982 = vmatpush1.msra.mxu0 0.0
      %3983 = vmatprep.subr.mxu0 0.0
      %3984 = vmatpush1.msra.mxu0 0.0
      %3985 = vmatprep.subr.mxu0 0.0
      %3986 = vmatpush1.msra.mxu0 0.0
      %3987 = vmatprep.subr.mxu0 0.0
      %3988 = vmatpush1.msra.mxu0 0.0
      %3989 = vmatprep.subr.mxu0 0.0
      %3990 = vmatpush1.msra.mxu0 0.0
      %3991 = vmatprep.subr.mxu0 0.0
      %3992 = vmatpush1.msra.mxu0 0.0
      %3993 = vmatprep.subr.mxu0 0.0
      %3994 = vmatpush1.msra.mxu0 0.0
      %3995 = vmatprep.subr.mxu0 0.0
      %3996 = vmatpush1.msra.mxu0 0.0
      %3997 = vmatprep.subr.mxu0 0.0
      %3998 = vmatpush1.msra.mxu0 0.0
      %3999 = vmatprep.subr.mxu0 0.0
      %4000 = vmatpush1.msra.mxu0 0.0
      %4001 = vmatprep.subr.mxu0 0.0
      %4002 = vmatpush1.msra.mxu0 0.0
      %4003 = vmatprep.subr.mxu0 0.0
      %4004 = vmatpush1.msra.mxu0 0.0
      %4005 = vmatprep.subr.mxu0 0.0
      %4006 = vmatpush1.msra.mxu0 0.0
      %4007 = vmatprep.subr.mxu0 0.0
      %4008 = vmatpush1.msra.mxu0 0.0
      %4009 = vmatprep.subr.mxu0 0.0
      %4010 = vmatpush1.msra.mxu0 0.0
      %4011 = vmatprep.subr.mxu0 0.0
      %4012 = vmatpush1.msra.mxu0 0.0
      %4013 = vmatprep.subr.mxu0 0.0
      %4014 = vmatpush1.msra.mxu0 0.0
      %4015 = vmatprep.subr.mxu0 0.0
      %4016 = vmatpush1.msra.mxu0 0.0
      %4017 = vmatprep.subr.mxu0 0.0
      %4018 = vmatpush1.msra.mxu0 0.0
      %4019 = vmatprep.subr.mxu0 0.0
      %4020 = vmatpush1.msra.mxu0 0.0
      %4021 = vmatprep.subr.mxu0 0.0
      %4022 = vmatpush1.msra.mxu0 0.0
      %4023 = vmatprep.subr.mxu0 0.0
      %4024 = vmatpush1.msra.mxu0 0.0
      %4025 = vmatprep.mubr.f32.mxu0 0.0
      %4026 = vmatmul.mubr.f32.gmra.mrb[0].mxu0 %v3953
      %v4027 = vpop.f32.mrb[0].mxu0
      %v4028 = vadd.f32 0.0, %v4027
      %v4029 = vpop.f32.mrb[0].mxu0
      %4030 = vmatprep.mubr.f32.mxu0 0.0
      %4031 = vmatmul.mubr.f32.gmra.mrb[0].mxu0 %v3955
      %v4032 = vpop.f32.mrb[0].mxu0
      %v4033 = vadd.f32 0.0, %v4032
      %v4034 = vpop.f32.mrb[0].mxu0
      %4035 = vmatprep.mubr.f32.mxu0 0.0
      %4036 = vmatmul.mubr.f32.gmra.mrb[0].mxu0 %v3957
      %v4037 = vpop.f32.mrb[0].mxu0
      %v4038 = vadd.f32 0.0, %v4037
      %v4039 = vpop.f32.mrb[0].mxu0
      %4040 = vmatprep.mubr.f32.mxu0 0.0
      %4041 = vmatmul.mubr.f32.gmra.mrb[0].mxu0 %v3959
      %v4042 = vpop.f32.mrb[0].mxu0
      %v4043 = vadd.f32 0.0, %v4042
      %v4044 = vpop.f32.mrb[0].mxu0
      %4045 = vdwg.mxu0
      %4050 = vrot.lane.b32.xlu0 %v3830, 16
      %v4051 = vpop.permute.xlu0 %4050
      %4052 = vrot.lane.b32.xlu0 %v3835, 16
      %v4053 = vpop.permute.xlu0 %4052
      %4054 = vrot.lane.b32.xlu0 %v3840, 16
      %v4055 = vpop.permute.xlu0 %4054
      %4056 = vrot.lane.b32.xlu0 %v3845, 16
      %v4057 = vpop.permute.xlu0 %4056
      %4066 = vrot.lane.b32.xlu0 %v3927, 32
      %v4067 = vpop.permute.xlu0 %4066
      %4068 = vrot.lane.b32.xlu0 %v3932, 32
      %v4069 = vpop.permute.xlu0 %4068
      %4070 = vrot.lane.b32.xlu0 %v3937, 32
      %v4071 = vpop.permute.xlu0 %4070
      %4072 = vrot.lane.b32.xlu0 %v3942, 32
      %v4073 = vpop.permute.xlu0 %4072
      %4082 = vrot.lane.b32.xlu0 %v4028, 48
      %v4083 = vpop.permute.xlu0 %4082
      %4084 = vrot.lane.b32.xlu0 %v4033, 48
      %v4085 = vpop.permute.xlu0 %4084
      %4086 = vrot.lane.b32.xlu0 %v4038, 48
      %v4087 = vpop.permute.xlu0 %4086
      %4088 = vrot.lane.b32.xlu0 %v4043, 48
      %v4089 = vpop.permute.xlu0 %4088
      %v4094 = vsel %vm2407, %v3729, %v4051
      %v4095 = vsel %vm2407, %v3734, %v4053
      %v4096 = vsel %vm2407, %v3739, %v4055
      %v4097 = vsel %vm2407, %v3744, %v4057
      %vm4098 = vcmask 261120
      %v4099 = vsel %vm4098, %v4094, %v4067
      %v4100 = vsel %vm4098, %v4095, %v4069
      %v4101 = vsel %vm4098, %v4096, %v4071
      %v4102 = vsel %vm4098, %v4097, %v4073
      %vm4103 = vcmask 392192
      %v4104 = vsel %vm4103, %v4099, %v4083
      %v4105 = vsel %vm4103, %v4100, %v4085
      %v4106 = vsel %vm4103, %v4101, %v4087
      %v4107 = vsel %vm4103, %v4102, %v4089
      %v4108 = vld [vmem:[%s9] sm:$0xff]
      %v4109 = vld [vmem:[%s9 + $0x8] sm:$0xff]
      %v4110 = vld [vmem:[%s9 + $0x10] sm:$0xff]
      %v4111 = vld [vmem:[%s9 + $0x18] sm:$0xff]
      %v4112 = vld [vmem:[%s9 + $0x20] sm:$0xff]
      %v4113 = vld [vmem:[%s9 + $0x28] sm:$0xff]
      %v4114 = vld [vmem:[%s9 + $0x30] sm:$0xff]
      %v4115 = vld [vmem:[%s9 + $0x38] sm:$0xff]
      %v4117 = vsel %vm4098, %v4108, 0
      %v4120 = vsel %vm4098, %v4109, 0
      %v4123 = vsel %vm4098, %v4110, 0
      %v4126 = vsel %vm4098, %v4111, 0
      %v4129 = vsel %vm4098, %v4112, 0
      %v4132 = vsel %vm4098, %v4113, 0
      %v4135 = vsel %vm4098, %v4114, 0
      %v4138 = vsel %vm4098, %v4115, 0
      %4140 = vmatprep.subr.mxu0 0.0
      %4141 = vmatpush1.msra.mxu0 %v4104
      %4142 = vmatprep.subr.mxu0 0.0
      %4143 = vmatpush1.msra.mxu0 %v4105
      %4144 = vmatprep.subr.mxu0 0.0
      %4145 = vmatpush1.msra.mxu0 %v4106
      %4146 = vmatprep.subr.mxu0 0.0
      %4147 = vmatpush1.msra.mxu0 %v4107
      %4148 = vmatprep.subr.mxu0 0.0
      %4149 = vmatpush1.msra.mxu0 0.0
      %4150 = vmatprep.subr.mxu0 0.0
      %4151 = vmatpush1.msra.mxu0 0.0
      %4152 = vmatprep.subr.mxu0 0.0
      %4153 = vmatpush1.msra.mxu0 0.0
      %4154 = vmatprep.subr.mxu0 0.0
      %4155 = vmatpush1.msra.mxu0 0.0
      %4156 = vmatprep.subr.mxu0 0.0
      %4157 = vmatpush1.msra.mxu0 0.0
      %4158 = vmatprep.subr.mxu0 0.0
      %4159 = vmatpush1.msra.mxu0 0.0
      %4160 = vmatprep.subr.mxu0 0.0
      %4161 = vmatpush1.msra.mxu0 0.0
      %4162 = vmatprep.subr.mxu0 0.0
      %4163 = vmatpush1.msra.mxu0 0.0
      %4164 = vmatprep.subr.mxu0 0.0
      %4165 = vmatpush1.msra.mxu0 0.0
      %4166 = vmatprep.subr.mxu0 0.0
      %4167 = vmatpush1.msra.mxu0 0.0
      %4168 = vmatprep.subr.mxu0 0.0
      %4169 = vmatpush1.msra.mxu0 0.0
      %4170 = vmatprep.subr.mxu0 0.0
      %4171 = vmatpush1.msra.mxu0 0.0
      %4172 = vmatprep.subr.mxu0 0.0
      %4173 = vmatpush1.msra.mxu0 0.0
      %4174 = vmatprep.subr.mxu0 0.0
      %4175 = vmatpush1.msra.mxu0 0.0
      %4176 = vmatprep.subr.mxu0 0.0
      %4177 = vmatpush1.msra.mxu0 0.0
      %4178 = vmatprep.subr.mxu0 0.0
      %4179 = vmatpush1.msra.mxu0 0.0
      %4180 = vmatprep.subr.mxu0 0.0
      %4181 = vmatpush1.msra.mxu0 0.0
      %4182 = vmatprep.subr.mxu0 0.0
      %4183 = vmatpush1.msra.mxu0 0.0
      %4184 = vmatprep.subr.mxu0 0.0
      %4185 = vmatpush1.msra.mxu0 0.0
      %4186 = vmatprep.subr.mxu0 0.0
      %4187 = vmatpush1.msra.mxu0 0.0
      %4188 = vmatprep.subr.mxu0 0.0
      %4189 = vmatpush1.msra.mxu0 0.0
      %4190 = vmatprep.subr.mxu0 0.0
      %4191 = vmatpush1.msra.mxu0 0.0
      %4192 = vmatprep.subr.mxu0 0.0
      %4193 = vmatpush1.msra.mxu0 0.0
      %4194 = vmatprep.subr.mxu0 0.0
      %4195 = vmatpush1.msra.mxu0 0.0
      %4196 = vmatprep.subr.mxu0 0.0
      %4197 = vmatpush1.msra.mxu0 0.0
      %4198 = vmatprep.subr.mxu0 0.0
      %4199 = vmatpush1.msra.mxu0 0.0
      %4200 = vmatprep.subr.mxu0 0.0
      %4201 = vmatpush1.msra.mxu0 0.0
      %4202 = vmatprep.subr.mxu0 0.0
      %4203 = vmatpush1.msra.mxu0 0.0
      %4204 = vmatprep.mubr.f32.mxu0 0.0
      %4205 = vmatmul.mubr.f32.gmra.mrb[0].mxu0 %v4117
      %v4206 = vpop.f32.mrb[0].mxu0
      %v4207 = vadd.f32 0.0, %v4206
      %v4208 = vpop.f32.mrb[0].mxu0
      %4209 = vmatprep.mubr.f32.mxu0 0.0
      %4210 = vmatmul.mubr.f32.gmra.mrb[0].mxu0 %v4120
      %v4211 = vpop.f32.mrb[0].mxu0
      %v4212 = vadd.f32 0.0, %v4211
      %v4213 = vpop.f32.mrb[0].mxu0
      %4214 = vmatprep.mubr.f32.mxu0 0.0
      %4215 = vmatmul.mubr.f32.gmra.mrb[0].mxu0 %v4123
      %v4216 = vpop.f32.mrb[0].mxu0
      %v4217 = vadd.f32 0.0, %v4216
      %v4218 = vpop.f32.mrb[0].mxu0
      %4219 = vmatprep.mubr.f32.mxu0 0.0
      %4220 = vmatmul.mubr.f32.gmra.mrb[0].mxu0 %v4126
      %v4221 = vpop.f32.mrb[0].mxu0
      %v4222 = vadd.f32 0.0, %v4221
      %v4223 = vpop.f32.mrb[0].mxu0
      %4224 = vmatprep.mubr.f32.mxu0 0.0
      %4225 = vmatmul.mubr.f32.gmra.mrb[0].mxu0 %v4129
      %v4226 = vpop.f32.mrb[0].mxu0
      %v4227 = vadd.f32 0.0, %v4226
      %v4228 = vpop.f32.mrb[0].mxu0
      %4229 = vmatprep.mubr.f32.mxu0 0.0
      %4230 = vmatmul.mubr.f32.gmra.mrb[0].mxu0 %v4132
      %v4231 = vpop.f32.mrb[0].mxu0
      %v4232 = vadd.f32 0.0, %v4231
      %v4233 = vpop.f32.mrb[0].mxu0
      %4234 = vmatprep.mubr.f32.mxu0 0.0
      %4235 = vmatmul.mubr.f32.gmra.mrb[0].mxu0 %v4135
      %v4236 = vpop.f32.mrb[0].mxu0
      %v4237 = vadd.f32 0.0, %v4236
      %v4238 = vpop.f32.mrb[0].mxu0
      %4239 = vmatprep.mubr.f32.mxu0 0.0
      %4240 = vmatmul.mubr.f32.gmra.mrb[0].mxu0 %v4138
      %v4241 = vpop.f32.mrb[0].mxu0
      %v4242 = vadd.f32 0.0, %v4241
      %v4243 = vpop.f32.mrb[0].mxu0
      %4244 = vdwg.mxu0
      %v4245 = vld [vmem:[%s11] sm:$0xff]
      %v4246 = vld [vmem:[%s11 + $0x8] sm:$0xff]
      %v4247 = vld [vmem:[%s11 + $0x10] sm:$0xff]
      %v4248 = vld [vmem:[%s11 + $0x18] sm:$0xff]
      %v4249 = vld [vmem:[%s11 + $0x20] sm:$0xff]
      %v4250 = vld [vmem:[%s11 + $0x28] sm:$0xff]
      %v4251 = vld [vmem:[%s11 + $0x30] sm:$0xff]
      %v4252 = vld [vmem:[%s11 + $0x38] sm:$0xff]
      %v4253 = vmul.f32 %v4207, 2.0
      %v4254 = vmul.f32 %v4212, 2.0
      %v4255 = vmul.f32 %v4217, 2.0
      %v4256 = vmul.f32 %v4222, 2.0
      %v4257 = vmul.f32 %v4227, 2.0
      %v4258 = vmul.f32 %v4232, 2.0
      %v4259 = vmul.f32 %v4237, 2.0
      %v4260 = vmul.f32 %v4242, 2.0
      %4262 = vset.pattern.permute.xlu0 0
      %4263 = vperm.xlu0 %4262, %v4245
      %v4264 = vpop.permute.xlu0 %4263
      %4267 = vset.pattern.permute.xlu0 0
      %4268 = vperm.xlu0 %4267, %v4246
      %v4269 = vpop.permute.xlu0 %4268
      %4272 = vset.pattern.permute.xlu0 0
      %4273 = vperm.xlu0 %4272, %v4247
      %v4274 = vpop.permute.xlu0 %4273
      %4277 = vset.pattern.permute.xlu0 0
      %4278 = vperm.xlu0 %4277, %v4248
      %v4279 = vpop.permute.xlu0 %4278
      %4282 = vset.pattern.permute.xlu0 0
      %4283 = vperm.xlu0 %4282, %v4249
      %v4284 = vpop.permute.xlu0 %4283
      %4287 = vset.pattern.permute.xlu0 0
      %4288 = vperm.xlu0 %4287, %v4250
      %v4289 = vpop.permute.xlu0 %4288
      %4292 = vset.pattern.permute.xlu0 0
      %4293 = vperm.xlu0 %4292, %v4251
      %v4294 = vpop.permute.xlu0 %4293
      %4297 = vset.pattern.permute.xlu0 0
      %4298 = vperm.xlu0 %4297, %v4252
      %v4299 = vpop.permute.xlu0 %4298
      %v4301 = vsub.f32 %v4264, %v4253
      %v4302 = vsub.f32 %v4269, %v4254
      %v4303 = vsub.f32 %v4274, %v4255
      %v4304 = vsub.f32 %v4279, %v4256
      %v4305 = vsub.f32 %v4284, %v4257
      %v4306 = vsub.f32 %v4289, %v4258
      %v4307 = vsub.f32 %v4294, %v4259
      %v4308 = vsub.f32 %v4299, %v4260
      %v4309 = vsel %vm2249, %v4301, inf
      %v4310 = vsel %vm2249, %v4302, inf
      %v4311 = vsel %vm2249, %v4303, inf
      %v4312 = vsel %vm2249, %v4304, inf
      %v4313 = vsel %vm2249, %v4305, inf
      %v4314 = vmin.f32 %v4309, %v4313
      %v4315 = vsel %vm2249, %v4306, inf
      %v4316 = vmin.f32 %v4310, %v4315
      %v4317 = vsel %vm2249, %v4307, inf
      %v4318 = vmin.f32 %v4311, %v4317
      %v4319 = vsel %vm2249, %v4308, inf
      %v4320 = vmin.f32 %v4312, %v4319
      %v4321 = vmin.f32 %v4314, %v4316
      %v4322 = vmin.f32 %v4318, %v4320
      %v4323 = vmin.f32 %v4321, %v4322
      %v4324 = vrot.slane %v4323, 4
      %v4325 = vmin.f32 %v4323, %v4324
      %v4326 = vrot.slane %v4325, 2
      %v4327 = vmin.f32 %v4325, %v4326
      %v4328 = vrot.slane %v4327, 1
      %v4329 = vmin.f32 %v4327, %v4328
      %v4330 = vlaneseq
      %v4331 = vshrl.u32 %v4330, 7
      %v4332 = vadd.s32 %v4331, 8
      %v4333 = vadd.s32 %v4331, 16
      %v4334 = vadd.s32 %v4331, 24
      %v4335 = vadd.s32 %v4331, 32
      %v4336 = vadd.s32 %v4331, 40
      %v4337 = vadd.s32 %v4331, 48
      %v4338 = vadd.s32 %v4331, 56
      %v4339 = vcvt.s32.f32 %v4331
      %v4340 = vcvt.s32.f32 %v4332
      %v4341 = vcvt.s32.f32 %v4333
      %v4342 = vcvt.s32.f32 %v4334
      %v4343 = vcvt.s32.f32 %v4335
      %v4344 = vcvt.s32.f32 %v4336
      %v4345 = vcvt.s32.f32 %v4337
      %v4346 = vcvt.s32.f32 %v4338
      %vm4347 = vcmp.le.f32.partialorder %v4301, %v4329
      %vm4348 = vcmp.le.f32.partialorder %v4302, %v4329
      %vm4349 = vcmp.le.f32.partialorder %v4303, %v4329
      %vm4350 = vcmp.le.f32.partialorder %v4304, %v4329
      %vm4351 = vcmp.le.f32.partialorder %v4305, %v4329
      %vm4352 = vcmp.le.f32.partialorder %v4306, %v4329
      %vm4353 = vcmp.le.f32.partialorder %v4307, %v4329
      %vm4354 = vcmp.le.f32.partialorder %v4308, %v4329
      %v4355 = vsel %vm4347, %v4339, 64.0
      %v4356 = vsel %vm4348, %v4340, 64.0
      %v4357 = vsel %vm4349, %v4341, 64.0
      %v4358 = vsel %vm4350, %v4342, 64.0
      %v4359 = vsel %vm4351, %v4343, 64.0
      %v4360 = vsel %vm4352, %v4344, 64.0
      %v4361 = vsel %vm4353, %v4345, 64.0
      %v4362 = vsel %vm4354, %v4346, 64.0
      %v4363 = vsel %vm2249, %v4355, inf
      %v4364 = vsel %vm2249, %v4356, inf
      %v4365 = vsel %vm2249, %v4357, inf
      %v4366 = vsel %vm2249, %v4358, inf
      %v4367 = vsel %vm2249, %v4359, inf
      %v4368 = vmin.f32 %v4363, %v4367
      %v4369 = vsel %vm2249, %v4360, inf
      %v4370 = vmin.f32 %v4364, %v4369
      %v4371 = vsel %vm2249, %v4361, inf
      %v4372 = vmin.f32 %v4365, %v4371
      %v4373 = vsel %vm2249, %v4362, inf
      %v4374 = vmin.f32 %v4366, %v4373
      %v4375 = vmin.f32 %v4368, %v4370
      %v4376 = vmin.f32 %v4372, %v4374
      %v4377 = vmin.f32 %v4375, %v4376
      %v4378 = vrot.slane %v4377, 4
      %v4379 = vmin.f32 %v4377, %v4378
      %v4380 = vrot.slane %v4379, 2
      %v4381 = vmin.f32 %v4379, %v4380
      %v4382 = vrot.slane %v4381, 1
      %v4383 = vmin.f32 %v4381, %v4382
      %v4384 = vcvt.f32.s32.to.zero.pseudo %v4383
      %vm4385 = vcmask 516096
      %4386 = vst.msk [vmem:[%s586] sm:$0x1] %vm4385, %v4384
      %vm4387 = vcmp.eq.f32.partialorder %v4339, %v4383
      %vm4388 = vcmp.eq.f32.partialorder %v4340, %v4383
      %vm4389 = vcmp.eq.f32.partialorder %v4341, %v4383
      %vm4390 = vcmp.eq.f32.partialorder %v4342, %v4383
      %vm4391 = vcmp.eq.f32.partialorder %v4343, %v4383
      %vm4392 = vcmp.eq.f32.partialorder %v4344, %v4383
      %vm4393 = vcmp.eq.f32.partialorder %v4345, %v4383
      %vm4394 = vcmp.eq.f32.partialorder %v4346, %v4383
      %v4395 = vsel %vm4387, 1, 0
      %v4396 = vsel %vm4388, 1, 0
      %v4397 = vsel %vm4389, 1, 0
      %v4398 = vsel %vm4390, 1, 0
      %v4399 = vsel %vm4391, 1, 0
      %v4400 = vsel %vm4392, 1, 0
      %v4401 = vsel %vm4393, 1, 0
      %v4402 = vsel %vm4394, 1, 0
      %v4403 = vcvt.s32.f32 %v4395
      %v4404 = vcvt.s32.f32 %v4396
      %v4405 = vcvt.s32.f32 %v4397
      %v4406 = vcvt.s32.f32 %v4398
      %v4407 = vcvt.s32.f32 %v4399
      %v4408 = vcvt.s32.f32 %v4400
      %v4409 = vcvt.s32.f32 %v4401
      %v4410 = vcvt.s32.f32 %v4402
      %v4411 = vld [vmem:[%s10] sm:$0xff]
      %v4412 = vld [vmem:[%s10 + $0x8] sm:$0xff]
      %v4413 = vld [vmem:[%s10 + $0x10] sm:$0xff]
      %v4414 = vld [vmem:[%s10 + $0x18] sm:$0xff]
      %v4416 = vsel %vm2249, %v4411, 0
      %v4419 = vsel %vm2249, %v4412, 0
      %v4422 = vsel %vm2249, %v4413, 0
      %v4425 = vsel %vm2249, %v4414, 0
      %4427 = vmatprep.subr.mxu0 0.0
      %4428 = vmatpush1.msra.mxu0 %v4403
      %4429 = vmatprep.subr.mxu0 0.0
      %4430 = vmatpush1.msra.mxu0 %v4404
      %4431 = vmatprep.subr.mxu0 0.0
      %4432 = vmatpush1.msra.mxu0 %v4405
      %4433 = vmatprep.subr.mxu0 0.0
      %4434 = vmatpush1.msra.mxu0 %v4406
      %4435 = vmatprep.subr.mxu0 0.0
      %4436 = vmatpush1.msra.mxu0 %v4407
      %4437 = vmatprep.subr.mxu0 0.0
      %4438 = vmatpush1.msra.mxu0 %v4408
      %4439 = vmatprep.subr.mxu0 0.0
      %4440 = vmatpush1.msra.mxu0 %v4409
      %4441 = vmatprep.subr.mxu0 0.0
      %4442 = vmatpush1.msra.mxu0 %v4410
      %4443 = vmatprep.subr.mxu0 0.0
      %4444 = vmatpush1.msra.mxu0 0.0
      %4445 = vmatprep.subr.mxu0 0.0
      %4446 = vmatpush1.msra.mxu0 0.0
      %4447 = vmatprep.subr.mxu0 0.0
      %4448 = vmatpush1.msra.mxu0 0.0
      %4449 = vmatprep.subr.mxu0 0.0
      %4450 = vmatpush1.msra.mxu0 0.0
      %4451 = vmatprep.subr.mxu0 0.0
      %4452 = vmatpush1.msra.mxu0 0.0
      %4453 = vmatprep.subr.mxu0 0.0
      %4454 = vmatpush1.msra.mxu0 0.0
      %4455 = vmatprep.subr.mxu0 0.0
      %4456 = vmatpush1.msra.mxu0 0.0
      %4457 = vmatprep.subr.mxu0 0.0
      %4458 = vmatpush1.msra.mxu0 0.0
      %4459 = vmatprep.subr.mxu0 0.0
      %4460 = vmatpush1.msra.mxu0 0.0
      %4461 = vmatprep.subr.mxu0 0.0
      %4462 = vmatpush1.msra.mxu0 0.0
      %4463 = vmatprep.subr.mxu0 0.0
      %4464 = vmatpush1.msra.mxu0 0.0
      %4465 = vmatprep.subr.mxu0 0.0
      %4466 = vmatpush1.msra.mxu0 0.0
      %4467 = vmatprep.subr.mxu0 0.0
      %4468 = vmatpush1.msra.mxu0 0.0
      %4469 = vmatprep.subr.mxu0 0.0
      %4470 = vmatpush1.msra.mxu0 0.0
      %4471 = vmatprep.subr.mxu0 0.0
      %4472 = vmatpush1.msra.mxu0 0.0
      %4473 = vmatprep.subr.mxu0 0.0
      %4474 = vmatpush1.msra.mxu0 0.0
      %4475 = vmatprep.subr.mxu0 0.0
      %4476 = vmatpush1.msra.mxu0 0.0
      %4477 = vmatprep.subr.mxu0 0.0
      %4478 = vmatpush1.msra.mxu0 0.0
      %4479 = vmatprep.subr.mxu0 0.0
      %4480 = vmatpush1.msra.mxu0 0.0
      %4481 = vmatprep.subr.mxu0 0.0
      %4482 = vmatpush1.msra.mxu0 0.0
      %4483 = vmatprep.subr.mxu0 0.0
      %4484 = vmatpush1.msra.mxu0 0.0
      %4485 = vmatprep.subr.mxu0 0.0
      %4486 = vmatpush1.msra.mxu0 0.0
      %4487 = vmatprep.subr.mxu0 0.0
      %4488 = vmatpush1.msra.mxu0 0.0
      %4489 = vmatprep.subr.mxu0 0.0
      %4490 = vmatpush1.msra.mxu0 0.0
      %4491 = vmatprep.mubr.f32.mxu0 0.0
      %4492 = vmatmul.mubr.f32.gmra.mrb[0].mxu0 %v4416
      %v4493 = vpop.f32.mrb[0].mxu0
      %v4494 = vadd.f32 0.0, %v4493
      %v4495 = vpop.f32.mrb[0].mxu0
      %4496 = vmatprep.mubr.f32.mxu0 0.0
      %4497 = vmatmul.mubr.f32.gmra.mrb[0].mxu0 %v4419
      %v4498 = vpop.f32.mrb[0].mxu0
      %v4499 = vadd.f32 0.0, %v4498
      %v4500 = vpop.f32.mrb[0].mxu0
      %4501 = vmatprep.mubr.f32.mxu0 0.0
      %4502 = vmatmul.mubr.f32.gmra.mrb[0].mxu0 %v4422
      %v4503 = vpop.f32.mrb[0].mxu0
      %v4504 = vadd.f32 0.0, %v4503
      %v4505 = vpop.f32.mrb[0].mxu0
      %4506 = vmatprep.mubr.f32.mxu0 0.0
      %4507 = vmatmul.mubr.f32.gmra.mrb[0].mxu0 %v4425
      %v4508 = vpop.f32.mrb[0].mxu0
      %v4509 = vadd.f32 0.0, %v4508
      %v4510 = vpop.f32.mrb[0].mxu0
      %4511 = vdwg.mxu0
      %v4512 = vsub.f32 %v4494, %v4104
      %v4513 = vsub.f32 %v4499, %v4105
      %v4514 = vsub.f32 %v4504, %v4106
      %v4515 = vsub.f32 %v4509, %v4107
      %v4516 = vmul.f32 %v4512, %v4512
      %v4517 = vmul.f32 %v4513, %v4513
      %v4518 = vmul.f32 %v4514, %v4514
      %v4519 = vmul.f32 %v4515, %v4515
      %v4520 = vsel %vm2249, %v4516, 0.0
      %v4521 = vsel %vm2249, %v4517, 0.0
      %v4522 = vadd.f32 %v4520, %v4521
      %v4523 = vsel %vm2249, %v4518, 0.0
      %v4524 = vadd.f32 %v4522, %v4523
      %v4525 = vsel %vm2249, %v4519, 0.0
      %v4526 = vadd.f32 %v4524, %v4525
      %v4527 = vrot.slane %v4526, 4
      %v4528 = vadd.f32 %v4526, %v4527
      %v4529 = vrot.slane %v4528, 2
      %v4530 = vadd.f32 %v4528, %v4529
      %v4531 = vrot.slane %v4530, 1
      %v4532 = vadd.f32 %v4530, %v4531
      %v4533 = vsel %vm2249, %v4532, 0.0
      %4534 = vadd.xlane.f32.xlu0 %v4533
      %v4535 = vpop.xlane.xlu0 %4534
      %vm4536 = vcmask 0
      %4537 = vst.msk [vmem:[%s589] sm:$0x1] %vm4536, %v4535
      %v4538 = vld [vmem:[%s14] sm:$0xff]
      %v4539 = vld [vmem:[%s14 + $0x8] sm:$0xff]
      %v4541 = vsel %vm2407, %v4494, 0
      %v4544 = vsel %vm2407, %v4499, 0
      %v4547 = vsel %vm2407, %v4504, 0
      %v4550 = vsel %vm2407, %v4509, 0
      %4552 = vmatprep.subr.mxu0 0.0
      %4553 = vmatpush1.msra.mxu0 %v4538
      %4554 = vmatprep.subr.mxu0 0.0
      %4555 = vmatpush1.msra.mxu0 %v4539
      %4556 = vmatprep.subr.mxu0 0.0
      %4557 = vmatpush1.msra.mxu0 0.0
      %4558 = vmatprep.subr.mxu0 0.0
      %4559 = vmatpush1.msra.mxu0 0.0
      %4560 = vmatprep.subr.mxu0 0.0
      %4561 = vmatpush1.msra.mxu0 0.0
      %4562 = vmatprep.subr.mxu0 0.0
      %4563 = vmatpush1.msra.mxu0 0.0
      %4564 = vmatprep.subr.mxu0 0.0
      %4565 = vmatpush1.msra.mxu0 0.0
      %4566 = vmatprep.subr.mxu0 0.0
      %4567 = vmatpush1.msra.mxu0 0.0
      %4568 = vmatprep.subr.mxu0 0.0
      %4569 = vmatpush1.msra.mxu0 0.0
      %4570 = vmatprep.subr.mxu0 0.0
      %4571 = vmatpush1.msra.mxu0 0.0
      %4572 = vmatprep.subr.mxu0 0.0
      %4573 = vmatpush1.msra.mxu0 0.0
      %4574 = vmatprep.subr.mxu0 0.0
      %4575 = vmatpush1.msra.mxu0 0.0
      %4576 = vmatprep.subr.mxu0 0.0
      %4577 = vmatpush1.msra.mxu0 0.0
      %4578 = vmatprep.subr.mxu0 0.0
      %4579 = vmatpush1.msra.mxu0 0.0
      %4580 = vmatprep.subr.mxu0 0.0
      %4581 = vmatpush1.msra.mxu0 0.0
      %4582 = vmatprep.subr.mxu0 0.0
      %4583 = vmatpush1.msra.mxu0 0.0
      %4584 = vmatprep.subr.mxu0 0.0
      %4585 = vmatpush1.msra.mxu0 0.0
      %4586 = vmatprep.subr.mxu0 0.0
      %4587 = vmatpush1.msra.mxu0 0.0
      %4588 = vmatprep.subr.mxu0 0.0
      %4589 = vmatpush1.msra.mxu0 0.0
      %4590 = vmatprep.subr.mxu0 0.0
      %4591 = vmatpush1.msra.mxu0 0.0
      %4592 = vmatprep.subr.mxu0 0.0
      %4593 = vmatpush1.msra.mxu0 0.0
      %4594 = vmatprep.subr.mxu0 0.0
      %4595 = vmatpush1.msra.mxu0 0.0
      %4596 = vmatprep.subr.mxu0 0.0
      %4597 = vmatpush1.msra.mxu0 0.0
      %4598 = vmatprep.subr.mxu0 0.0
      %4599 = vmatpush1.msra.mxu0 0.0
      %4600 = vmatprep.subr.mxu0 0.0
      %4601 = vmatpush1.msra.mxu0 0.0
      %4602 = vmatprep.subr.mxu0 0.0
      %4603 = vmatpush1.msra.mxu0 0.0
      %4604 = vmatprep.subr.mxu0 0.0
      %4605 = vmatpush1.msra.mxu0 0.0
      %4606 = vmatprep.subr.mxu0 0.0
      %4607 = vmatpush1.msra.mxu0 0.0
      %4608 = vmatprep.subr.mxu0 0.0
      %4609 = vmatpush1.msra.mxu0 0.0
      %4610 = vmatprep.subr.mxu0 0.0
      %4611 = vmatpush1.msra.mxu0 0.0
      %4612 = vmatprep.subr.mxu0 0.0
      %4613 = vmatpush1.msra.mxu0 0.0
      %4614 = vmatprep.subr.mxu0 0.0
      %4615 = vmatpush1.msra.mxu0 0.0
      %4616 = vmatprep.mubr.f32.mxu0 0.0
      %4617 = vmatmul.mubr.f32.gmra.mrb[0].mxu0 %v4541
      %v4618 = vpop.f32.mrb[0].mxu0
      %v4619 = vadd.f32 0.0, %v4618
      %v4620 = vpop.f32.mrb[0].mxu0
      %4621 = vmatprep.mubr.f32.mxu0 0.0
      %4622 = vmatmul.mubr.f32.gmra.mrb[0].mxu0 %v4544
      %v4623 = vpop.f32.mrb[0].mxu0
      %v4624 = vadd.f32 0.0, %v4623
      %v4625 = vpop.f32.mrb[0].mxu0
      %4626 = vmatprep.mubr.f32.mxu0 0.0
      %4627 = vmatmul.mubr.f32.gmra.mrb[0].mxu0 %v4547
      %v4628 = vpop.f32.mrb[0].mxu0
      %v4629 = vadd.f32 0.0, %v4628
      %v4630 = vpop.f32.mrb[0].mxu0
      %4631 = vmatprep.mubr.f32.mxu0 0.0
      %4632 = vmatmul.mubr.f32.gmra.mrb[0].mxu0 %v4550
      %v4633 = vpop.f32.mrb[0].mxu0
      %v4634 = vadd.f32 0.0, %v4633
      %v4635 = vpop.f32.mrb[0].mxu0
      %4636 = vdwg.mxu0
      %4637 = vrot.lane.b32.xlu0 %v4494, 112
      %v4638 = vpop.permute.xlu0 %4637
      %4639 = vrot.lane.b32.xlu0 %v4499, 112
      %v4640 = vpop.permute.xlu0 %4639
      %4641 = vrot.lane.b32.xlu0 %v4504, 112
      %v4642 = vpop.permute.xlu0 %4641
      %4643 = vrot.lane.b32.xlu0 %v4509, 112
      %v4644 = vpop.permute.xlu0 %4643
      %v4645 = vsel %vm2407, %v4638, 0
      %v4647 = vsel %vm2407, %v4640, 0
      %v4649 = vsel %vm2407, %v4642, 0
      %v4651 = vsel %vm2407, %v4644, 0
      %4653 = vmatprep.subr.mxu0 0.0
      %4654 = vmatpush1.msra.mxu0 %v4538
      %4655 = vmatprep.subr.mxu0 0.0
      %4656 = vmatpush1.msra.mxu0 %v4539
      %4657 = vmatprep.subr.mxu0 0.0
      %4658 = vmatpush1.msra.mxu0 0.0
      %4659 = vmatprep.subr.mxu0 0.0
      %4660 = vmatpush1.msra.mxu0 0.0
      %4661 = vmatprep.subr.mxu0 0.0
      %4662 = vmatpush1.msra.mxu0 0.0
      %4663 = vmatprep.subr.mxu0 0.0
      %4664 = vmatpush1.msra.mxu0 0.0
      %4665 = vmatprep.subr.mxu0 0.0
      %4666 = vmatpush1.msra.mxu0 0.0
      %4667 = vmatprep.subr.mxu0 0.0
      %4668 = vmatpush1.msra.mxu0 0.0
      %4669 = vmatprep.subr.mxu0 0.0
      %4670 = vmatpush1.msra.mxu0 0.0
      %4671 = vmatprep.subr.mxu0 0.0
      %4672 = vmatpush1.msra.mxu0 0.0
      %4673 = vmatprep.subr.mxu0 0.0
      %4674 = vmatpush1.msra.mxu0 0.0
      %4675 = vmatprep.subr.mxu0 0.0
      %4676 = vmatpush1.msra.mxu0 0.0
      %4677 = vmatprep.subr.mxu0 0.0
      %4678 = vmatpush1.msra.mxu0 0.0
      %4679 = vmatprep.subr.mxu0 0.0
      %4680 = vmatpush1.msra.mxu0 0.0
      %4681 = vmatprep.subr.mxu0 0.0
      %4682 = vmatpush1.msra.mxu0 0.0
      %4683 = vmatprep.subr.mxu0 0.0
      %4684 = vmatpush1.msra.mxu0 0.0
      %4685 = vmatprep.subr.mxu0 0.0
      %4686 = vmatpush1.msra.mxu0 0.0
      %4687 = vmatprep.subr.mxu0 0.0
      %4688 = vmatpush1.msra.mxu0 0.0
      %4689 = vmatprep.subr.mxu0 0.0
      %4690 = vmatpush1.msra.mxu0 0.0
      %4691 = vmatprep.subr.mxu0 0.0
      %4692 = vmatpush1.msra.mxu0 0.0
      %4693 = vmatprep.subr.mxu0 0.0
      %4694 = vmatpush1.msra.mxu0 0.0
      %4695 = vmatprep.subr.mxu0 0.0
      %4696 = vmatpush1.msra.mxu0 0.0
      %4697 = vmatprep.subr.mxu0 0.0
      %4698 = vmatpush1.msra.mxu0 0.0
      %4699 = vmatprep.subr.mxu0 0.0
      %4700 = vmatpush1.msra.mxu0 0.0
      %4701 = vmatprep.subr.mxu0 0.0
      %4702 = vmatpush1.msra.mxu0 0.0
      %4703 = vmatprep.subr.mxu0 0.0
      %4704 = vmatpush1.msra.mxu0 0.0
      %4705 = vmatprep.subr.mxu0 0.0
      %4706 = vmatpush1.msra.mxu0 0.0
      %4707 = vmatprep.subr.mxu0 0.0
      %4708 = vmatpush1.msra.mxu0 0.0
      %4709 = vmatprep.subr.mxu0 0.0
      %4710 = vmatpush1.msra.mxu0 0.0
      %4711 = vmatprep.subr.mxu0 0.0
      %4712 = vmatpush1.msra.mxu0 0.0
      %4713 = vmatprep.subr.mxu0 0.0
      %4714 = vmatpush1.msra.mxu0 0.0
      %4715 = vmatprep.subr.mxu0 0.0
      %4716 = vmatpush1.msra.mxu0 0.0
      %4717 = vmatprep.mubr.f32.mxu0 0.0
      %4718 = vmatmul.mubr.f32.gmra.mrb[0].mxu0 %v4645
      %v4719 = vpop.f32.mrb[0].mxu0
      %v4720 = vadd.f32 0.0, %v4719
      %v4721 = vpop.f32.mrb[0].mxu0
      %4722 = vmatprep.mubr.f32.mxu0 0.0
      %4723 = vmatmul.mubr.f32.gmra.mrb[0].mxu0 %v4647
      %v4724 = vpop.f32.mrb[0].mxu0
      %v4725 = vadd.f32 0.0, %v4724
      %v4726 = vpop.f32.mrb[0].mxu0
      %4727 = vmatprep.mubr.f32.mxu0 0.0
      %4728 = vmatmul.mubr.f32.gmra.mrb[0].mxu0 %v4649
      %v4729 = vpop.f32.mrb[0].mxu0
      %v4730 = vadd.f32 0.0, %v4729
      %v4731 = vpop.f32.mrb[0].mxu0
      %4732 = vmatprep.mubr.f32.mxu0 0.0
      %4733 = vmatmul.mubr.f32.gmra.mrb[0].mxu0 %v4651
      %v4734 = vpop.f32.mrb[0].mxu0
      %v4735 = vadd.f32 0.0, %v4734
      %v4736 = vpop.f32.mrb[0].mxu0
      %4737 = vdwg.mxu0
      %4738 = vrot.lane.b32.xlu0 %v4494, 96
      %v4739 = vpop.permute.xlu0 %4738
      %4740 = vrot.lane.b32.xlu0 %v4499, 96
      %v4741 = vpop.permute.xlu0 %4740
      %4742 = vrot.lane.b32.xlu0 %v4504, 96
      %v4743 = vpop.permute.xlu0 %4742
      %4744 = vrot.lane.b32.xlu0 %v4509, 96
      %v4745 = vpop.permute.xlu0 %4744
      %v4746 = vsel %vm2407, %v4739, 0
      %v4748 = vsel %vm2407, %v4741, 0
      %v4750 = vsel %vm2407, %v4743, 0
      %v4752 = vsel %vm2407, %v4745, 0
      %4754 = vmatprep.subr.mxu0 0.0
      %4755 = vmatpush1.msra.mxu0 %v4538
      %4756 = vmatprep.subr.mxu0 0.0
      %4757 = vmatpush1.msra.mxu0 %v4539
      %4758 = vmatprep.subr.mxu0 0.0
      %4759 = vmatpush1.msra.mxu0 0.0
      %4760 = vmatprep.subr.mxu0 0.0
      %4761 = vmatpush1.msra.mxu0 0.0
      %4762 = vmatprep.subr.mxu0 0.0
      %4763 = vmatpush1.msra.mxu0 0.0
      %4764 = vmatprep.subr.mxu0 0.0
      %4765 = vmatpush1.msra.mxu0 0.0
      %4766 = vmatprep.subr.mxu0 0.0
      %4767 = vmatpush1.msra.mxu0 0.0
      %4768 = vmatprep.subr.mxu0 0.0
      %4769 = vmatpush1.msra.mxu0 0.0
      %4770 = vmatprep.subr.mxu0 0.0
      %4771 = vmatpush1.msra.mxu0 0.0
      %4772 = vmatprep.subr.mxu0 0.0
      %4773 = vmatpush1.msra.mxu0 0.0
      %4774 = vmatprep.subr.mxu0 0.0
      %4775 = vmatpush1.msra.mxu0 0.0
      %4776 = vmatprep.subr.mxu0 0.0
      %4777 = vmatpush1.msra.mxu0 0.0
      %4778 = vmatprep.subr.mxu0 0.0
      %4779 = vmatpush1.msra.mxu0 0.0
      %4780 = vmatprep.subr.mxu0 0.0
      %4781 = vmatpush1.msra.mxu0 0.0
      %4782 = vmatprep.subr.mxu0 0.0
      %4783 = vmatpush1.msra.mxu0 0.0
      %4784 = vmatprep.subr.mxu0 0.0
      %4785 = vmatpush1.msra.mxu0 0.0
      %4786 = vmatprep.subr.mxu0 0.0
      %4787 = vmatpush1.msra.mxu0 0.0
      %4788 = vmatprep.subr.mxu0 0.0
      %4789 = vmatpush1.msra.mxu0 0.0
      %4790 = vmatprep.subr.mxu0 0.0
      %4791 = vmatpush1.msra.mxu0 0.0
      %4792 = vmatprep.subr.mxu0 0.0
      %4793 = vmatpush1.msra.mxu0 0.0
      %4794 = vmatprep.subr.mxu0 0.0
      %4795 = vmatpush1.msra.mxu0 0.0
      %4796 = vmatprep.subr.mxu0 0.0
      %4797 = vmatpush1.msra.mxu0 0.0
      %4798 = vmatprep.subr.mxu0 0.0
      %4799 = vmatpush1.msra.mxu0 0.0
      %4800 = vmatprep.subr.mxu0 0.0
      %4801 = vmatpush1.msra.mxu0 0.0
      %4802 = vmatprep.subr.mxu0 0.0
      %4803 = vmatpush1.msra.mxu0 0.0
      %4804 = vmatprep.subr.mxu0 0.0
      %4805 = vmatpush1.msra.mxu0 0.0
      %4806 = vmatprep.subr.mxu0 0.0
      %4807 = vmatpush1.msra.mxu0 0.0
      %4808 = vmatprep.subr.mxu0 0.0
      %4809 = vmatpush1.msra.mxu0 0.0
      %4810 = vmatprep.subr.mxu0 0.0
      %4811 = vmatpush1.msra.mxu0 0.0
      %4812 = vmatprep.subr.mxu0 0.0
      %4813 = vmatpush1.msra.mxu0 0.0
      %4814 = vmatprep.subr.mxu0 0.0
      %4815 = vmatpush1.msra.mxu0 0.0
      %4816 = vmatprep.subr.mxu0 0.0
      %4817 = vmatpush1.msra.mxu0 0.0
      %4818 = vmatprep.mubr.f32.mxu0 0.0
      %4819 = vmatmul.mubr.f32.gmra.mrb[0].mxu0 %v4746
      %v4820 = vpop.f32.mrb[0].mxu0
      %v4821 = vadd.f32 0.0, %v4820
      %v4822 = vpop.f32.mrb[0].mxu0
      %4823 = vmatprep.mubr.f32.mxu0 0.0
      %4824 = vmatmul.mubr.f32.gmra.mrb[0].mxu0 %v4748
      %v4825 = vpop.f32.mrb[0].mxu0
      %v4826 = vadd.f32 0.0, %v4825
      %v4827 = vpop.f32.mrb[0].mxu0
      %4828 = vmatprep.mubr.f32.mxu0 0.0
      %4829 = vmatmul.mubr.f32.gmra.mrb[0].mxu0 %v4750
      %v4830 = vpop.f32.mrb[0].mxu0
      %v4831 = vadd.f32 0.0, %v4830
      %v4832 = vpop.f32.mrb[0].mxu0
      %4833 = vmatprep.mubr.f32.mxu0 0.0
      %4834 = vmatmul.mubr.f32.gmra.mrb[0].mxu0 %v4752
      %v4835 = vpop.f32.mrb[0].mxu0
      %v4836 = vadd.f32 0.0, %v4835
      %v4837 = vpop.f32.mrb[0].mxu0
      %4838 = vdwg.mxu0
      %4839 = vrot.lane.b32.xlu0 %v4494, 80
      %v4840 = vpop.permute.xlu0 %4839
      %4841 = vrot.lane.b32.xlu0 %v4499, 80
      %v4842 = vpop.permute.xlu0 %4841
      %4843 = vrot.lane.b32.xlu0 %v4504, 80
      %v4844 = vpop.permute.xlu0 %4843
      %4845 = vrot.lane.b32.xlu0 %v4509, 80
      %v4846 = vpop.permute.xlu0 %4845
      %v4847 = vsel %vm2407, %v4840, 0
      %v4849 = vsel %vm2407, %v4842, 0
      %v4851 = vsel %vm2407, %v4844, 0
      %v4853 = vsel %vm2407, %v4846, 0
      %4855 = vmatprep.subr.mxu0 0.0
      %4856 = vmatpush1.msra.mxu0 %v4538
      %4857 = vmatprep.subr.mxu0 0.0
      %4858 = vmatpush1.msra.mxu0 %v4539
      %4859 = vmatprep.subr.mxu0 0.0
      %4860 = vmatpush1.msra.mxu0 0.0
      %4861 = vmatprep.subr.mxu0 0.0
      %4862 = vmatpush1.msra.mxu0 0.0
      %4863 = vmatprep.subr.mxu0 0.0
      %4864 = vmatpush1.msra.mxu0 0.0
      %4865 = vmatprep.subr.mxu0 0.0
      %4866 = vmatpush1.msra.mxu0 0.0
      %4867 = vmatprep.subr.mxu0 0.0
      %4868 = vmatpush1.msra.mxu0 0.0
      %4869 = vmatprep.subr.mxu0 0.0
      %4870 = vmatpush1.msra.mxu0 0.0
      %4871 = vmatprep.subr.mxu0 0.0
      %4872 = vmatpush1.msra.mxu0 0.0
      %4873 = vmatprep.subr.mxu0 0.0
      %4874 = vmatpush1.msra.mxu0 0.0
      %4875 = vmatprep.subr.mxu0 0.0
      %4876 = vmatpush1.msra.mxu0 0.0
      %4877 = vmatprep.subr.mxu0 0.0
      %4878 = vmatpush1.msra.mxu0 0.0
      %4879 = vmatprep.subr.mxu0 0.0
      %4880 = vmatpush1.msra.mxu0 0.0
      %4881 = vmatprep.subr.mxu0 0.0
      %4882 = vmatpush1.msra.mxu0 0.0
      %4883 = vmatprep.subr.mxu0 0.0
      %4884 = vmatpush1.msra.mxu0 0.0
      %4885 = vmatprep.subr.mxu0 0.0
      %4886 = vmatpush1.msra.mxu0 0.0
      %4887 = vmatprep.subr.mxu0 0.0
      %4888 = vmatpush1.msra.mxu0 0.0
      %4889 = vmatprep.subr.mxu0 0.0
      %4890 = vmatpush1.msra.mxu0 0.0
      %4891 = vmatprep.subr.mxu0 0.0
      %4892 = vmatpush1.msra.mxu0 0.0
      %4893 = vmatprep.subr.mxu0 0.0
      %4894 = vmatpush1.msra.mxu0 0.0
      %4895 = vmatprep.subr.mxu0 0.0
      %4896 = vmatpush1.msra.mxu0 0.0
      %4897 = vmatprep.subr.mxu0 0.0
      %4898 = vmatpush1.msra.mxu0 0.0
      %4899 = vmatprep.subr.mxu0 0.0
      %4900 = vmatpush1.msra.mxu0 0.0
      %4901 = vmatprep.subr.mxu0 0.0
      %4902 = vmatpush1.msra.mxu0 0.0
      %4903 = vmatprep.subr.mxu0 0.0
      %4904 = vmatpush1.msra.mxu0 0.0
      %4905 = vmatprep.subr.mxu0 0.0
      %4906 = vmatpush1.msra.mxu0 0.0
      %4907 = vmatprep.subr.mxu0 0.0
      %4908 = vmatpush1.msra.mxu0 0.0
      %4909 = vmatprep.subr.mxu0 0.0
      %4910 = vmatpush1.msra.mxu0 0.0
      %4911 = vmatprep.subr.mxu0 0.0
      %4912 = vmatpush1.msra.mxu0 0.0
      %4913 = vmatprep.subr.mxu0 0.0
      %4914 = vmatpush1.msra.mxu0 0.0
      %4915 = vmatprep.subr.mxu0 0.0
      %4916 = vmatpush1.msra.mxu0 0.0
      %4917 = vmatprep.subr.mxu0 0.0
      %4918 = vmatpush1.msra.mxu0 0.0
      %4919 = vmatprep.mubr.f32.mxu0 0.0
      %4920 = vmatmul.mubr.f32.gmra.mrb[0].mxu0 %v4847
      %v4921 = vpop.f32.mrb[0].mxu0
      %v4922 = vadd.f32 0.0, %v4921
      %v4923 = vpop.f32.mrb[0].mxu0
      %4924 = vmatprep.mubr.f32.mxu0 0.0
      %4925 = vmatmul.mubr.f32.gmra.mrb[0].mxu0 %v4849
      %v4926 = vpop.f32.mrb[0].mxu0
      %v4927 = vadd.f32 0.0, %v4926
      %v4928 = vpop.f32.mrb[0].mxu0
      %4929 = vmatprep.mubr.f32.mxu0 0.0
      %4930 = vmatmul.mubr.f32.gmra.mrb[0].mxu0 %v4851
      %v4931 = vpop.f32.mrb[0].mxu0
      %v4932 = vadd.f32 0.0, %v4931
      %v4933 = vpop.f32.mrb[0].mxu0
      %4934 = vmatprep.mubr.f32.mxu0 0.0
      %4935 = vmatmul.mubr.f32.gmra.mrb[0].mxu0 %v4853
      %v4936 = vpop.f32.mrb[0].mxu0
      %v4937 = vadd.f32 0.0, %v4936
      %v4938 = vpop.f32.mrb[0].mxu0
      %4939 = vdwg.mxu0
      %4944 = vrot.lane.b32.xlu0 %v4720, 64
      %v4945 = vpop.permute.xlu0 %4944
      %4946 = vrot.lane.b32.xlu0 %v4725, 64
      %v4947 = vpop.permute.xlu0 %4946
      %4948 = vrot.lane.b32.xlu0 %v4730, 64
      %v4949 = vpop.permute.xlu0 %4948
      %4950 = vrot.lane.b32.xlu0 %v4735, 64
      %v4951 = vpop.permute.xlu0 %4950
      %4960 = vrot.lane.b32.xlu0 %v4922, 64
      %v4961 = vpop.permute.xlu0 %4960
      %4962 = vrot.lane.b32.xlu0 %v4927, 64
      %v4963 = vpop.permute.xlu0 %4962
      %4964 = vrot.lane.b32.xlu0 %v4932, 64
      %v4965 = vpop.permute.xlu0 %4964
      %4966 = vrot.lane.b32.xlu0 %v4937, 64
      %v4967 = vpop.permute.xlu0 %4966
      %v4972 = vsel %vm2249, %v4619, %v4945
      %v4973 = vsel %vm2249, %v4624, %v4947
      %v4974 = vsel %vm2249, %v4629, %v4949
      %v4975 = vsel %vm2249, %v4634, %v4951
      %v4976 = vsel %vm2249, %v4821, %v4961
      %v4977 = vsel %vm2249, %v4826, %v4963
      %v4978 = vsel %vm2249, %v4831, %v4965
      %v4979 = vsel %vm2249, %v4836, %v4967
      %4980 = vrot.lane.b32.xlu0 %v4972, 9
      %v4981 = vpop.permute.xlu0 %4980
      %4982 = vrot.lane.b32.xlu0 %v4973, 9
      %v4983 = vpop.permute.xlu0 %4982
      %4984 = vrot.lane.b32.xlu0 %v4974, 9
      %v4985 = vpop.permute.xlu0 %4984
      %4986 = vrot.lane.b32.xlu0 %v4975, 9
      %v4987 = vpop.permute.xlu0 %4986
      %4988 = vrot.lane.b32.xlu0 %v4976, 9
      %v4989 = vpop.permute.xlu0 %4988
      %4990 = vrot.lane.b32.xlu0 %v4977, 9
      %v4991 = vpop.permute.xlu0 %4990
      %4992 = vrot.lane.b32.xlu0 %v4978, 9
      %v4993 = vpop.permute.xlu0 %4992
      %4994 = vrot.lane.b32.xlu0 %v4979, 9
      %v4995 = vpop.permute.xlu0 %4994
      %v4996 = vsel %vm2370, %v4981, %v4989
      %v4997 = vsel %vm2370, %v4983, %v4991
      %v4998 = vsel %vm2370, %v4985, %v4993
      %v4999 = vsel %vm2370, %v4987, %v4995
      %v5000 = vsel %vm2370, %v4989, %v4981
      %v5001 = vsel %vm2370, %v4991, %v4983
      %v5002 = vsel %vm2370, %v4993, %v4985
      %v5003 = vsel %vm2370, %v4995, %v4987
      %v5004 = vmul.f32 %v5000, %v2375
      %v5005 = vmul.f32 %v4996, %v2376
      %v5006 = vmul.f32 %v5001, %v2375
      %v5007 = vmul.f32 %v4997, %v2376
      %v5008 = vmul.f32 %v5002, %v2375
      %v5009 = vmul.f32 %v4998, %v2376
      %v5010 = vmul.f32 %v5003, %v2375
      %v5011 = vmul.f32 %v4999, %v2376
      %v5012 = vld [vmem:[%s5] sm:$0xff]
      %v5013 = vld [vmem:[%s5 + $0x8] sm:$0xff]
      %5014 = vrot.lane.b32.xlu0 %v4972, 8
      %v5015 = vpop.permute.xlu0 %5014
      %5016 = vrot.lane.b32.xlu0 %v4973, 8
      %v5017 = vpop.permute.xlu0 %5016
      %5018 = vrot.lane.b32.xlu0 %v4974, 8
      %v5019 = vpop.permute.xlu0 %5018
      %5020 = vrot.lane.b32.xlu0 %v4975, 8
      %v5021 = vpop.permute.xlu0 %5020
      %5022 = vrot.lane.b32.xlu0 %v4976, 8
      %v5023 = vpop.permute.xlu0 %5022
      %5024 = vrot.lane.b32.xlu0 %v4977, 8
      %v5025 = vpop.permute.xlu0 %5024
      %5026 = vrot.lane.b32.xlu0 %v4978, 8
      %v5027 = vpop.permute.xlu0 %5026
      %5028 = vrot.lane.b32.xlu0 %v4979, 8
      %v5029 = vpop.permute.xlu0 %5028
      %v5030 = vsel %vm2393, %v5015, %v5023
      %v5031 = vsel %vm2393, %v5017, %v5025
      %v5032 = vsel %vm2393, %v5019, %v5027
      %v5033 = vsel %vm2393, %v5021, %v5029
      %v5034 = vsel %vm2393, %v5023, %v5015
      %v5035 = vsel %vm2393, %v5025, %v5017
      %v5036 = vsel %vm2393, %v5027, %v5019
      %v5037 = vsel %vm2393, %v5029, %v5021
      %v5038 = vmul.f32 %v5034, %v731
      %v5039 = vmul.f32 %v5030, %v732
      %v5040 = vmul.f32 %v5035, %v731
      %v5041 = vmul.f32 %v5031, %v732
      %v5042 = vmul.f32 %v5036, %v731
      %v5043 = vmul.f32 %v5032, %v732
      %v5044 = vmul.f32 %v5037, %v731
      %v5045 = vmul.f32 %v5033, %v732
      %s5046 = scalar_lea.vmem %s5, 16
      %v5047 = vld [vmem:[%s5046] sm:$0xff]
      %v5048 = vld [vmem:[%s5046 + $0x8] sm:$0xff]
      %v5050 = vsel %vm4098, %v5047, 0
      %v5053 = vsel %vm4098, %v5048, 0
      %5055 = vmatprep.subr.mxu0 %v5039
      %5056 = vmatpush1.msra.mxu0 %v5038
      %5057 = vmatprep.subr.mxu0 %v5041
      %5058 = vmatpush1.msra.mxu0 %v5040
      %5059 = vmatprep.subr.mxu0 %v5043
      %5060 = vmatpush1.msra.mxu0 %v5042
      %5061 = vmatprep.subr.mxu0 %v5045
      %5062 = vmatpush1.msra.mxu0 %v5044
      %5063 = vmatprep.subr.mxu0 0.0
      %5064 = vmatpush1.msra.mxu0 0.0
      %5065 = vmatprep.subr.mxu0 0.0
      %5066 = vmatpush1.msra.mxu0 0.0
      %5067 = vmatprep.subr.mxu0 0.0
      %5068 = vmatpush1.msra.mxu0 0.0
      %5069 = vmatprep.subr.mxu0 0.0
      %5070 = vmatpush1.msra.mxu0 0.0
      %5071 = vmatprep.subr.mxu0 0.0
      %5072 = vmatpush1.msra.mxu0 0.0
      %5073 = vmatprep.subr.mxu0 0.0
      %5074 = vmatpush1.msra.mxu0 0.0
      %5075 = vmatprep.subr.mxu0 0.0
      %5076 = vmatpush1.msra.mxu0 0.0
      %5077 = vmatprep.subr.mxu0 0.0
      %5078 = vmatpush1.msra.mxu0 0.0
      %5079 = vmatprep.subr.mxu0 0.0
      %5080 = vmatpush1.msra.mxu0 0.0
      %5081 = vmatprep.subr.mxu0 0.0
      %5082 = vmatpush1.msra.mxu0 0.0
      %5083 = vmatprep.subr.mxu0 0.0
      %5084 = vmatpush1.msra.mxu0 0.0
      %5085 = vmatprep.subr.mxu0 0.0
      %5086 = vmatpush1.msra.mxu0 0.0
      %5087 = vmatprep.subr.mxu0 0.0
      %5088 = vmatpush1.msra.mxu0 0.0
      %5089 = vmatprep.subr.mxu0 0.0
      %5090 = vmatpush1.msra.mxu0 0.0
      %5091 = vmatprep.subr.mxu0 0.0
      %5092 = vmatpush1.msra.mxu0 0.0
      %5093 = vmatprep.subr.mxu0 0.0
      %5094 = vmatpush1.msra.mxu0 0.0
      %5095 = vmatprep.subr.mxu0 0.0
      %5096 = vmatpush1.msra.mxu0 0.0
      %5097 = vmatprep.subr.mxu0 0.0
      %5098 = vmatpush1.msra.mxu0 0.0
      %5099 = vmatprep.subr.mxu0 0.0
      %5100 = vmatpush1.msra.mxu0 0.0
      %5101 = vmatprep.subr.mxu0 0.0
      %5102 = vmatpush1.msra.mxu0 0.0
      %5103 = vmatprep.subr.mxu0 0.0
      %5104 = vmatpush1.msra.mxu0 0.0
      %5105 = vmatprep.subr.mxu0 0.0
      %5106 = vmatpush1.msra.mxu0 0.0
      %5107 = vmatprep.subr.mxu0 0.0
      %5108 = vmatpush1.msra.mxu0 0.0
      %5109 = vmatprep.subr.mxu0 0.0
      %5110 = vmatpush1.msra.mxu0 0.0
      %5111 = vmatprep.subr.mxu0 0.0
      %5112 = vmatpush1.msra.mxu0 0.0
      %5113 = vmatprep.subr.mxu0 0.0
      %5114 = vmatpush1.msra.mxu0 0.0
      %5115 = vmatprep.subr.mxu0 0.0
      %5116 = vmatpush1.msra.mxu0 0.0
      %5117 = vmatprep.subr.mxu0 0.0
      %5118 = vmatpush1.msra.mxu0 0.0
      %5119 = vmatprep.mubr.f32.mxu0 0.0
      %5120 = vmatmul.mubr.f32.gmra.mrb[0].mxu0 %v5050
      %v5121 = vpop.f32.mrb[0].mxu0
      %v5122 = vadd.f32 0.0, %v5121
      %v5123 = vpop.f32.mrb[0].mxu0
      %v5124 = vadd.f32 0.0, %v5123
      %5125 = vmatprep.mubr.f32.mxu0 0.0
      %5126 = vmatmul.mubr.f32.gmra.mrb[0].mxu0 %v5053
      %v5127 = vpop.f32.mrb[0].mxu0
      %v5128 = vadd.f32 0.0, %v5127
      %v5129 = vpop.f32.mrb[0].mxu0
      %v5130 = vadd.f32 0.0, %v5129
      %5131 = vdwg.mxu0
      %v5133 = vsel %vm4098, %v5012, 0
      %v5136 = vsel %vm4098, %v5013, 0
      %5138 = vmatprep.subr.mxu0 %v5005
      %5139 = vmatpush1.msra.mxu0 %v5004
      %5140 = vmatprep.subr.mxu0 %v5007
      %5141 = vmatpush1.msra.mxu0 %v5006
      %5142 = vmatprep.subr.mxu0 %v5009
      %5143 = vmatpush1.msra.mxu0 %v5008
      %5144 = vmatprep.subr.mxu0 %v5011
      %5145 = vmatpush1.msra.mxu0 %v5010
      %5146 = vmatprep.subr.mxu0 0.0
      %5147 = vmatpush1.msra.mxu0 0.0
      %5148 = vmatprep.subr.mxu0 0.0
      %5149 = vmatpush1.msra.mxu0 0.0
      %5150 = vmatprep.subr.mxu0 0.0
      %5151 = vmatpush1.msra.mxu0 0.0
      %5152 = vmatprep.subr.mxu0 0.0
      %5153 = vmatpush1.msra.mxu0 0.0
      %5154 = vmatprep.subr.mxu0 0.0
      %5155 = vmatpush1.msra.mxu0 0.0
      %5156 = vmatprep.subr.mxu0 0.0
      %5157 = vmatpush1.msra.mxu0 0.0
      %5158 = vmatprep.subr.mxu0 0.0
      %5159 = vmatpush1.msra.mxu0 0.0
      %5160 = vmatprep.subr.mxu0 0.0
      %5161 = vmatpush1.msra.mxu0 0.0
      %5162 = vmatprep.subr.mxu0 0.0
      %5163 = vmatpush1.msra.mxu0 0.0
      %5164 = vmatprep.subr.mxu0 0.0
      %5165 = vmatpush1.msra.mxu0 0.0
      %5166 = vmatprep.subr.mxu0 0.0
      %5167 = vmatpush1.msra.mxu0 0.0
      %5168 = vmatprep.subr.mxu0 0.0
      %5169 = vmatpush1.msra.mxu0 0.0
      %5170 = vmatprep.subr.mxu0 0.0
      %5171 = vmatpush1.msra.mxu0 0.0
      %5172 = vmatprep.subr.mxu0 0.0
      %5173 = vmatpush1.msra.mxu0 0.0
      %5174 = vmatprep.subr.mxu0 0.0
      %5175 = vmatpush1.msra.mxu0 0.0
      %5176 = vmatprep.subr.mxu0 0.0
      %5177 = vmatpush1.msra.mxu0 0.0
      %5178 = vmatprep.subr.mxu0 0.0
      %5179 = vmatpush1.msra.mxu0 0.0
      %5180 = vmatprep.subr.mxu0 0.0
      %5181 = vmatpush1.msra.mxu0 0.0
      %5182 = vmatprep.subr.mxu0 0.0
      %5183 = vmatpush1.msra.mxu0 0.0
      %5184 = vmatprep.subr.mxu0 0.0
      %5185 = vmatpush1.msra.mxu0 0.0
      %5186 = vmatprep.subr.mxu0 0.0
      %5187 = vmatpush1.msra.mxu0 0.0
      %5188 = vmatprep.subr.mxu0 0.0
      %5189 = vmatpush1.msra.mxu0 0.0
      %5190 = vmatprep.subr.mxu0 0.0
      %5191 = vmatpush1.msra.mxu0 0.0
      %5192 = vmatprep.subr.mxu0 0.0
      %5193 = vmatpush1.msra.mxu0 0.0
      %5194 = vmatprep.subr.mxu0 0.0
      %5195 = vmatpush1.msra.mxu0 0.0
      %5196 = vmatprep.subr.mxu0 0.0
      %5197 = vmatpush1.msra.mxu0 0.0
      %5198 = vmatprep.subr.mxu0 0.0
      %5199 = vmatpush1.msra.mxu0 0.0
      %5200 = vmatprep.subr.mxu0 0.0
      %5201 = vmatpush1.msra.mxu0 0.0
      %5202 = vmatprep.mubr.f32.mxu0 0.0
      %5203 = vmatmul.mubr.f32.gmra.mrb[0].mxu0 %v5133
      %v5204 = vpop.f32.mrb[0].mxu0
      %v5205 = vadd.f32 %v5122, %v5204
      %v5206 = vpop.f32.mrb[0].mxu0
      %v5207 = vadd.f32 %v5124, %v5206
      %5208 = vmatprep.mubr.f32.mxu0 0.0
      %5209 = vmatmul.mubr.f32.gmra.mrb[0].mxu0 %v5136
      %v5210 = vpop.f32.mrb[0].mxu0
      %v5211 = vadd.f32 %v5128, %v5210
      %v5212 = vpop.f32.mrb[0].mxu0
      %v5213 = vadd.f32 %v5130, %v5212
      %5214 = vdwg.mxu0
      %5215 = vrot.lane.b32.xlu0 %v4972, 7
      %v5216 = vpop.permute.xlu0 %5215
      %5217 = vrot.lane.b32.xlu0 %v4973, 7
      %v5218 = vpop.permute.xlu0 %5217
      %5219 = vrot.lane.b32.xlu0 %v4974, 7
      %v5220 = vpop.permute.xlu0 %5219
      %5221 = vrot.lane.b32.xlu0 %v4975, 7
      %v5222 = vpop.permute.xlu0 %5221
      %5223 = vrot.lane.b32.xlu0 %v4976, 7
      %v5224 = vpop.permute.xlu0 %5223
      %5225 = vrot.lane.b32.xlu0 %v4977, 7
      %v5226 = vpop.permute.xlu0 %5225
      %5227 = vrot.lane.b32.xlu0 %v4978, 7
      %v5228 = vpop.permute.xlu0 %5227
      %5229 = vrot.lane.b32.xlu0 %v4979, 7
      %v5230 = vpop.permute.xlu0 %5229
      %v5231 = vsel %vm2618, %v5216, %v5224
      %v5232 = vsel %vm2618, %v5218, %v5226
      %v5233 = vsel %vm2618, %v5220, %v5228
      %v5234 = vsel %vm2618, %v5222, %v5230
      %v5235 = vsel %vm2618, %v5224, %v5216
      %v5236 = vsel %vm2618, %v5226, %v5218
      %v5237 = vsel %vm2618, %v5228, %v5220
      %v5238 = vsel %vm2618, %v5230, %v5222
      %v5239 = vmul.f32 %v5235, %v2623
      %v5240 = vmul.f32 %v5231, %v2624
      %v5241 = vmul.f32 %v5236, %v2623
      %v5242 = vmul.f32 %v5232, %v2624
      %v5243 = vmul.f32 %v5237, %v2623
      %v5244 = vmul.f32 %v5233, %v2624
      %v5245 = vmul.f32 %v5238, %v2623
      %v5246 = vmul.f32 %v5234, %v2624
      %s5247 = scalar_lea.vmem %s5, 32
      %v5248 = vld [vmem:[%s5247] sm:$0xff]
      %v5249 = vld [vmem:[%s5247 + $0x8] sm:$0xff]
      %v5251 = vsel %vm4098, %v5248, 0
      %v5254 = vsel %vm4098, %v5249, 0
      %5256 = vmatprep.subr.mxu0 %v5240
      %5257 = vmatpush1.msra.mxu0 %v5239
      %5258 = vmatprep.subr.mxu0 %v5242
      %5259 = vmatpush1.msra.mxu0 %v5241
      %5260 = vmatprep.subr.mxu0 %v5244
      %5261 = vmatpush1.msra.mxu0 %v5243
      %5262 = vmatprep.subr.mxu0 %v5246
      %5263 = vmatpush1.msra.mxu0 %v5245
      %5264 = vmatprep.subr.mxu0 0.0
      %5265 = vmatpush1.msra.mxu0 0.0
      %5266 = vmatprep.subr.mxu0 0.0
      %5267 = vmatpush1.msra.mxu0 0.0
      %5268 = vmatprep.subr.mxu0 0.0
      %5269 = vmatpush1.msra.mxu0 0.0
      %5270 = vmatprep.subr.mxu0 0.0
      %5271 = vmatpush1.msra.mxu0 0.0
      %5272 = vmatprep.subr.mxu0 0.0
      %5273 = vmatpush1.msra.mxu0 0.0
      %5274 = vmatprep.subr.mxu0 0.0
      %5275 = vmatpush1.msra.mxu0 0.0
      %5276 = vmatprep.subr.mxu0 0.0
      %5277 = vmatpush1.msra.mxu0 0.0
      %5278 = vmatprep.subr.mxu0 0.0
      %5279 = vmatpush1.msra.mxu0 0.0
      %5280 = vmatprep.subr.mxu0 0.0
      %5281 = vmatpush1.msra.mxu0 0.0
      %5282 = vmatprep.subr.mxu0 0.0
      %5283 = vmatpush1.msra.mxu0 0.0
      %5284 = vmatprep.subr.mxu0 0.0
      %5285 = vmatpush1.msra.mxu0 0.0
      %5286 = vmatprep.subr.mxu0 0.0
      %5287 = vmatpush1.msra.mxu0 0.0
      %5288 = vmatprep.subr.mxu0 0.0
      %5289 = vmatpush1.msra.mxu0 0.0
      %5290 = vmatprep.subr.mxu0 0.0
      %5291 = vmatpush1.msra.mxu0 0.0
      %5292 = vmatprep.subr.mxu0 0.0
      %5293 = vmatpush1.msra.mxu0 0.0
      %5294 = vmatprep.subr.mxu0 0.0
      %5295 = vmatpush1.msra.mxu0 0.0
      %5296 = vmatprep.subr.mxu0 0.0
      %5297 = vmatpush1.msra.mxu0 0.0
      %5298 = vmatprep.subr.mxu0 0.0
      %5299 = vmatpush1.msra.mxu0 0.0
      %5300 = vmatprep.subr.mxu0 0.0
      %5301 = vmatpush1.msra.mxu0 0.0
      %5302 = vmatprep.subr.mxu0 0.0
      %5303 = vmatpush1.msra.mxu0 0.0
      %5304 = vmatprep.subr.mxu0 0.0
      %5305 = vmatpush1.msra.mxu0 0.0
      %5306 = vmatprep.subr.mxu0 0.0
      %5307 = vmatpush1.msra.mxu0 0.0
      %5308 = vmatprep.subr.mxu0 0.0
      %5309 = vmatpush1.msra.mxu0 0.0
      %5310 = vmatprep.subr.mxu0 0.0
      %5311 = vmatpush1.msra.mxu0 0.0
      %5312 = vmatprep.subr.mxu0 0.0
      %5313 = vmatpush1.msra.mxu0 0.0
      %5314 = vmatprep.subr.mxu0 0.0
      %5315 = vmatpush1.msra.mxu0 0.0
      %5316 = vmatprep.subr.mxu0 0.0
      %5317 = vmatpush1.msra.mxu0 0.0
      %5318 = vmatprep.subr.mxu0 0.0
      %5319 = vmatpush1.msra.mxu0 0.0
      %5320 = vmatprep.mubr.f32.mxu0 0.0
      %5321 = vmatmul.mubr.f32.gmra.mrb[0].mxu0 %v5251
      %v5322 = vpop.f32.mrb[0].mxu0
      %v5323 = vadd.f32 0.0, %v5322
      %v5324 = vpop.f32.mrb[0].mxu0
      %v5325 = vadd.f32 0.0, %v5324
      %5326 = vmatprep.mubr.f32.mxu0 0.0
      %5327 = vmatmul.mubr.f32.gmra.mrb[0].mxu0 %v5254
      %v5328 = vpop.f32.mrb[0].mxu0
      %v5329 = vadd.f32 0.0, %v5328
      %v5330 = vpop.f32.mrb[0].mxu0
      %v5331 = vadd.f32 0.0, %v5330
      %5332 = vdwg.mxu0
      %v5333 = vadd.f32 %v5205, %v5323
      %v5334 = vadd.f32 %v5207, %v5325
      %v5335 = vadd.f32 %v5211, %v5329
      %v5336 = vadd.f32 %v5213, %v5331
      %5337 = vrot.lane.b32.xlu0 %v4972, 1
      %v5338 = vpop.permute.xlu0 %5337
      %5339 = vrot.lane.b32.xlu0 %v4973, 1
      %v5340 = vpop.permute.xlu0 %5339
      %5341 = vrot.lane.b32.xlu0 %v4974, 1
      %v5342 = vpop.permute.xlu0 %5341
      %5343 = vrot.lane.b32.xlu0 %v4975, 1
      %v5344 = vpop.permute.xlu0 %5343
      %5345 = vrot.lane.b32.xlu0 %v4976, 1
      %v5346 = vpop.permute.xlu0 %5345
      %5347 = vrot.lane.b32.xlu0 %v4977, 1
      %v5348 = vpop.permute.xlu0 %5347
      %5349 = vrot.lane.b32.xlu0 %v4978, 1
      %v5350 = vpop.permute.xlu0 %5349
      %5351 = vrot.lane.b32.xlu0 %v4979, 1
      %v5352 = vpop.permute.xlu0 %5351
      %v5353 = vsel %vm1116, %v5338, %v5346
      %v5354 = vsel %vm1116, %v5340, %v5348
      %v5355 = vsel %vm1116, %v5342, %v5350
      %v5356 = vsel %vm1116, %v5344, %v5352
      %v5357 = vsel %vm1116, %v5346, %v5338
      %v5358 = vsel %vm1116, %v5348, %v5340
      %v5359 = vsel %vm1116, %v5350, %v5342
      %v5360 = vsel %vm1116, %v5352, %v5344
      %v5361 = vmul.f32 %v5357, %v719
      %v5362 = vmul.f32 %v5353, %v720
      %v5363 = vmul.f32 %v5358, %v719
      %v5364 = vmul.f32 %v5354, %v720
      %v5365 = vmul.f32 %v5359, %v719
      %v5366 = vmul.f32 %v5355, %v720
      %v5367 = vmul.f32 %v5360, %v719
      %v5368 = vmul.f32 %v5356, %v720
      %s5369 = scalar_lea.vmem %s5, 48
      %v5370 = vld [vmem:[%s5369] sm:$0xff]
      %v5371 = vld [vmem:[%s5369 + $0x8] sm:$0xff]
      %v5373 = vsel %vm4098, %v5370, 0
      %v5376 = vsel %vm4098, %v5371, 0
      %5378 = vmatprep.subr.mxu0 %v5362
      %5379 = vmatpush1.msra.mxu0 %v5361
      %5380 = vmatprep.subr.mxu0 %v5364
      %5381 = vmatpush1.msra.mxu0 %v5363
      %5382 = vmatprep.subr.mxu0 %v5366
      %5383 = vmatpush1.msra.mxu0 %v5365
      %5384 = vmatprep.subr.mxu0 %v5368
      %5385 = vmatpush1.msra.mxu0 %v5367
      %5386 = vmatprep.subr.mxu0 0.0
      %5387 = vmatpush1.msra.mxu0 0.0
      %5388 = vmatprep.subr.mxu0 0.0
      %5389 = vmatpush1.msra.mxu0 0.0
      %5390 = vmatprep.subr.mxu0 0.0
      %5391 = vmatpush1.msra.mxu0 0.0
      %5392 = vmatprep.subr.mxu0 0.0
      %5393 = vmatpush1.msra.mxu0 0.0
      %5394 = vmatprep.subr.mxu0 0.0
      %5395 = vmatpush1.msra.mxu0 0.0
      %5396 = vmatprep.subr.mxu0 0.0
      %5397 = vmatpush1.msra.mxu0 0.0
      %5398 = vmatprep.subr.mxu0 0.0
      %5399 = vmatpush1.msra.mxu0 0.0
      %5400 = vmatprep.subr.mxu0 0.0
      %5401 = vmatpush1.msra.mxu0 0.0
      %5402 = vmatprep.subr.mxu0 0.0
      %5403 = vmatpush1.msra.mxu0 0.0
      %5404 = vmatprep.subr.mxu0 0.0
      %5405 = vmatpush1.msra.mxu0 0.0
      %5406 = vmatprep.subr.mxu0 0.0
      %5407 = vmatpush1.msra.mxu0 0.0
      %5408 = vmatprep.subr.mxu0 0.0
      %5409 = vmatpush1.msra.mxu0 0.0
      %5410 = vmatprep.subr.mxu0 0.0
      %5411 = vmatpush1.msra.mxu0 0.0
      %5412 = vmatprep.subr.mxu0 0.0
      %5413 = vmatpush1.msra.mxu0 0.0
      %5414 = vmatprep.subr.mxu0 0.0
      %5415 = vmatpush1.msra.mxu0 0.0
      %5416 = vmatprep.subr.mxu0 0.0
      %5417 = vmatpush1.msra.mxu0 0.0
      %5418 = vmatprep.subr.mxu0 0.0
      %5419 = vmatpush1.msra.mxu0 0.0
      %5420 = vmatprep.subr.mxu0 0.0
      %5421 = vmatpush1.msra.mxu0 0.0
      %5422 = vmatprep.subr.mxu0 0.0
      %5423 = vmatpush1.msra.mxu0 0.0
      %5424 = vmatprep.subr.mxu0 0.0
      %5425 = vmatpush1.msra.mxu0 0.0
      %5426 = vmatprep.subr.mxu0 0.0
      %5427 = vmatpush1.msra.mxu0 0.0
      %5428 = vmatprep.subr.mxu0 0.0
      %5429 = vmatpush1.msra.mxu0 0.0
      %5430 = vmatprep.subr.mxu0 0.0
      %5431 = vmatpush1.msra.mxu0 0.0
      %5432 = vmatprep.subr.mxu0 0.0
      %5433 = vmatpush1.msra.mxu0 0.0
      %5434 = vmatprep.subr.mxu0 0.0
      %5435 = vmatpush1.msra.mxu0 0.0
      %5436 = vmatprep.subr.mxu0 0.0
      %5437 = vmatpush1.msra.mxu0 0.0
      %5438 = vmatprep.subr.mxu0 0.0
      %5439 = vmatpush1.msra.mxu0 0.0
      %5440 = vmatprep.subr.mxu0 0.0
      %5441 = vmatpush1.msra.mxu0 0.0
      %5442 = vmatprep.mubr.f32.mxu0 0.0
      %5443 = vmatmul.mubr.f32.gmra.mrb[0].mxu0 %v5373
      %v5444 = vpop.f32.mrb[0].mxu0
      %v5445 = vadd.f32 0.0, %v5444
      %v5446 = vpop.f32.mrb[0].mxu0
      %v5447 = vadd.f32 0.0, %v5446
      %5448 = vmatprep.mubr.f32.mxu0 0.0
      %5449 = vmatmul.mubr.f32.gmra.mrb[0].mxu0 %v5376
      %v5450 = vpop.f32.mrb[0].mxu0
      %v5451 = vadd.f32 0.0, %v5450
      %v5452 = vpop.f32.mrb[0].mxu0
      %v5453 = vadd.f32 0.0, %v5452
      %5454 = vdwg.mxu0
      %v5455 = vadd.f32 %v5333, %v5445
      %v5456 = vadd.f32 %v5334, %v5447
      %v5457 = vadd.f32 %v5335, %v5451
      %v5458 = vadd.f32 %v5336, %v5453
      %s5459 = scalar_lea.vmem %s5, 64
      %v5460 = vld [vmem:[%s5459] sm:$0xff]
      %v5461 = vld [vmem:[%s5459 + $0x8] sm:$0xff]
      %v5463 = vsel %vm4098, %v5460, 0
      %v5466 = vsel %vm4098, %v5461, 0
      %5468 = vmatprep.subr.mxu0 %v4976
      %5469 = vmatpush1.msra.mxu0 %v4972
      %5470 = vmatprep.subr.mxu0 %v4977
      %5471 = vmatpush1.msra.mxu0 %v4973
      %5472 = vmatprep.subr.mxu0 %v4978
      %5473 = vmatpush1.msra.mxu0 %v4974
      %5474 = vmatprep.subr.mxu0 %v4979
      %5475 = vmatpush1.msra.mxu0 %v4975
      %5476 = vmatprep.subr.mxu0 0.0
      %5477 = vmatpush1.msra.mxu0 0.0
      %5478 = vmatprep.subr.mxu0 0.0
      %5479 = vmatpush1.msra.mxu0 0.0
      %5480 = vmatprep.subr.mxu0 0.0
      %5481 = vmatpush1.msra.mxu0 0.0
      %5482 = vmatprep.subr.mxu0 0.0
      %5483 = vmatpush1.msra.mxu0 0.0
      %5484 = vmatprep.subr.mxu0 0.0
      %5485 = vmatpush1.msra.mxu0 0.0
      %5486 = vmatprep.subr.mxu0 0.0
      %5487 = vmatpush1.msra.mxu0 0.0
      %5488 = vmatprep.subr.mxu0 0.0
      %5489 = vmatpush1.msra.mxu0 0.0
      %5490 = vmatprep.subr.mxu0 0.0
      %5491 = vmatpush1.msra.mxu0 0.0
      %5492 = vmatprep.subr.mxu0 0.0
      %5493 = vmatpush1.msra.mxu0 0.0
      %5494 = vmatprep.subr.mxu0 0.0
      %5495 = vmatpush1.msra.mxu0 0.0
      %5496 = vmatprep.subr.mxu0 0.0
      %5497 = vmatpush1.msra.mxu0 0.0
      %5498 = vmatprep.subr.mxu0 0.0
      %5499 = vmatpush1.msra.mxu0 0.0
      %5500 = vmatprep.subr.mxu0 0.0
      %5501 = vmatpush1.msra.mxu0 0.0
      %5502 = vmatprep.subr.mxu0 0.0
      %5503 = vmatpush1.msra.mxu0 0.0
      %5504 = vmatprep.subr.mxu0 0.0
      %5505 = vmatpush1.msra.mxu0 0.0
      %5506 = vmatprep.subr.mxu0 0.0
      %5507 = vmatpush1.msra.mxu0 0.0
      %5508 = vmatprep.subr.mxu0 0.0
      %5509 = vmatpush1.msra.mxu0 0.0
      %5510 = vmatprep.subr.mxu0 0.0
      %5511 = vmatpush1.msra.mxu0 0.0
      %5512 = vmatprep.subr.mxu0 0.0
      %5513 = vmatpush1.msra.mxu0 0.0
      %5514 = vmatprep.subr.mxu0 0.0
      %5515 = vmatpush1.msra.mxu0 0.0
      %5516 = vmatprep.subr.mxu0 0.0
      %5517 = vmatpush1.msra.mxu0 0.0
      %5518 = vmatprep.subr.mxu0 0.0
      %5519 = vmatpush1.msra.mxu0 0.0
      %5520 = vmatprep.subr.mxu0 0.0
      %5521 = vmatpush1.msra.mxu0 0.0
      %5522 = vmatprep.subr.mxu0 0.0
      %5523 = vmatpush1.msra.mxu0 0.0
      %5524 = vmatprep.subr.mxu0 0.0
      %5525 = vmatpush1.msra.mxu0 0.0
      %5526 = vmatprep.subr.mxu0 0.0
      %5527 = vmatpush1.msra.mxu0 0.0
      %5528 = vmatprep.subr.mxu0 0.0
      %5529 = vmatpush1.msra.mxu0 0.0
      %5530 = vmatprep.subr.mxu0 0.0
      %5531 = vmatpush1.msra.mxu0 0.0
      %5532 = vmatprep.mubr.f32.mxu0 0.0
      %5533 = vmatmul.mubr.f32.gmra.mrb[0].mxu0 %v5463
      %v5534 = vpop.f32.mrb[0].mxu0
      %v5535 = vadd.f32 0.0, %v5534
      %v5536 = vpop.f32.mrb[0].mxu0
      %v5537 = vadd.f32 0.0, %v5536
      %5538 = vmatprep.mubr.f32.mxu0 0.0
      %5539 = vmatmul.mubr.f32.gmra.mrb[0].mxu0 %v5466
      %v5540 = vpop.f32.mrb[0].mxu0
      %v5541 = vadd.f32 0.0, %v5540
      %v5542 = vpop.f32.mrb[0].mxu0
      %v5543 = vadd.f32 0.0, %v5542
      %5544 = vdwg.mxu0
      %v5545 = vadd.f32 %v5455, %v5535
      %v5546 = vadd.f32 %v5456, %v5537
      %v5547 = vadd.f32 %v5457, %v5541
      %v5548 = vadd.f32 %v5458, %v5543
      %5549 = vrot.lane.b32.xlu0 %v4972, 127
      %v5550 = vpop.permute.xlu0 %5549
      %5551 = vrot.lane.b32.xlu0 %v4973, 127
      %v5552 = vpop.permute.xlu0 %5551
      %5553 = vrot.lane.b32.xlu0 %v4974, 127
      %v5554 = vpop.permute.xlu0 %5553
      %5555 = vrot.lane.b32.xlu0 %v4975, 127
      %v5556 = vpop.permute.xlu0 %5555
      %5557 = vrot.lane.b32.xlu0 %v4976, 127
      %v5558 = vpop.permute.xlu0 %5557
      %5559 = vrot.lane.b32.xlu0 %v4977, 127
      %v5560 = vpop.permute.xlu0 %5559
      %5561 = vrot.lane.b32.xlu0 %v4978, 127
      %v5562 = vpop.permute.xlu0 %5561
      %5563 = vrot.lane.b32.xlu0 %v4979, 127
      %v5564 = vpop.permute.xlu0 %5563
      %v5565 = vsel %vm1261, %v5550, %v5558
      %v5566 = vsel %vm1261, %v5552, %v5560
      %v5567 = vsel %vm1261, %v5554, %v5562
      %v5568 = vsel %vm1261, %v5556, %v5564
      %v5569 = vsel %vm1261, %v5558, %v5550
      %v5570 = vsel %vm1261, %v5560, %v5552
      %v5571 = vsel %vm1261, %v5562, %v5554
      %v5572 = vsel %vm1261, %v5564, %v5556
      %v5573 = vmul.f32 %v5565, %v725
      %v5574 = vmul.f32 %v5569, %v726
      %v5575 = vmul.f32 %v5566, %v725
      %v5576 = vmul.f32 %v5570, %v726
      %v5577 = vmul.f32 %v5567, %v725
      %v5578 = vmul.f32 %v5571, %v726
      %v5579 = vmul.f32 %v5568, %v725
      %v5580 = vmul.f32 %v5572, %v726
      %s5581 = scalar_lea.vmem %s5, 80
      %v5582 = vld [vmem:[%s5581] sm:$0xff]
      %v5583 = vld [vmem:[%s5581 + $0x8] sm:$0xff]
      %v5585 = vsel %vm4098, %v5582, 0
      %v5588 = vsel %vm4098, %v5583, 0
      %5590 = vmatprep.subr.mxu0 %v5574
      %5591 = vmatpush1.msra.mxu0 %v5573
      %5592 = vmatprep.subr.mxu0 %v5576
      %5593 = vmatpush1.msra.mxu0 %v5575
      %5594 = vmatprep.subr.mxu0 %v5578
      %5595 = vmatpush1.msra.mxu0 %v5577
      %5596 = vmatprep.subr.mxu0 %v5580
      %5597 = vmatpush1.msra.mxu0 %v5579
      %5598 = vmatprep.subr.mxu0 0.0
      %5599 = vmatpush1.msra.mxu0 0.0
      %5600 = vmatprep.subr.mxu0 0.0
      %5601 = vmatpush1.msra.mxu0 0.0
      %5602 = vmatprep.subr.mxu0 0.0
      %5603 = vmatpush1.msra.mxu0 0.0
      %5604 = vmatprep.subr.mxu0 0.0
      %5605 = vmatpush1.msra.mxu0 0.0
      %5606 = vmatprep.subr.mxu0 0.0
      %5607 = vmatpush1.msra.mxu0 0.0
      %5608 = vmatprep.subr.mxu0 0.0
      %5609 = vmatpush1.msra.mxu0 0.0
      %5610 = vmatprep.subr.mxu0 0.0
      %5611 = vmatpush1.msra.mxu0 0.0
      %5612 = vmatprep.subr.mxu0 0.0
      %5613 = vmatpush1.msra.mxu0 0.0
      %5614 = vmatprep.subr.mxu0 0.0
      %5615 = vmatpush1.msra.mxu0 0.0
      %5616 = vmatprep.subr.mxu0 0.0
      %5617 = vmatpush1.msra.mxu0 0.0
      %5618 = vmatprep.subr.mxu0 0.0
      %5619 = vmatpush1.msra.mxu0 0.0
      %5620 = vmatprep.subr.mxu0 0.0
      %5621 = vmatpush1.msra.mxu0 0.0
      %5622 = vmatprep.subr.mxu0 0.0
      %5623 = vmatpush1.msra.mxu0 0.0
      %5624 = vmatprep.subr.mxu0 0.0
      %5625 = vmatpush1.msra.mxu0 0.0
      %5626 = vmatprep.subr.mxu0 0.0
      %5627 = vmatpush1.msra.mxu0 0.0
      %5628 = vmatprep.subr.mxu0 0.0
      %5629 = vmatpush1.msra.mxu0 0.0
      %5630 = vmatprep.subr.mxu0 0.0
      %5631 = vmatpush1.msra.mxu0 0.0
      %5632 = vmatprep.subr.mxu0 0.0
      %5633 = vmatpush1.msra.mxu0 0.0
      %5634 = vmatprep.subr.mxu0 0.0
      %5635 = vmatpush1.msra.mxu0 0.0
      %5636 = vmatprep.subr.mxu0 0.0
      %5637 = vmatpush1.msra.mxu0 0.0
      %5638 = vmatprep.subr.mxu0 0.0
      %5639 = vmatpush1.msra.mxu0 0.0
      %5640 = vmatprep.subr.mxu0 0.0
      %5641 = vmatpush1.msra.mxu0 0.0
      %5642 = vmatprep.subr.mxu0 0.0
      %5643 = vmatpush1.msra.mxu0 0.0
      %5644 = vmatprep.subr.mxu0 0.0
      %5645 = vmatpush1.msra.mxu0 0.0
      %5646 = vmatprep.subr.mxu0 0.0
      %5647 = vmatpush1.msra.mxu0 0.0
      %5648 = vmatprep.subr.mxu0 0.0
      %5649 = vmatpush1.msra.mxu0 0.0
      %5650 = vmatprep.subr.mxu0 0.0
      %5651 = vmatpush1.msra.mxu0 0.0
      %5652 = vmatprep.subr.mxu0 0.0
      %5653 = vmatpush1.msra.mxu0 0.0
      %5654 = vmatprep.mubr.f32.mxu0 0.0
      %5655 = vmatmul.mubr.f32.gmra.mrb[0].mxu0 %v5585
      %v5656 = vpop.f32.mrb[0].mxu0
      %v5657 = vadd.f32 0.0, %v5656
      %v5658 = vpop.f32.mrb[0].mxu0
      %v5659 = vadd.f32 0.0, %v5658
      %5660 = vmatprep.mubr.f32.mxu0 0.0
      %5661 = vmatmul.mubr.f32.gmra.mrb[0].mxu0 %v5588
      %v5662 = vpop.f32.mrb[0].mxu0
      %v5663 = vadd.f32 0.0, %v5662
      %v5664 = vpop.f32.mrb[0].mxu0
      %v5665 = vadd.f32 0.0, %v5664
      %5666 = vdwg.mxu0
      %v5667 = vadd.f32 %v5545, %v5657
      %v5668 = vadd.f32 %v5546, %v5659
      %v5669 = vadd.f32 %v5547, %v5663
      %v5670 = vadd.f32 %v5548, %v5665
      %5671 = vrot.lane.b32.xlu0 %v4972, 121
      %v5672 = vpop.permute.xlu0 %5671
      %5673 = vrot.lane.b32.xlu0 %v4973, 121
      %v5674 = vpop.permute.xlu0 %5673
      %5675 = vrot.lane.b32.xlu0 %v4974, 121
      %v5676 = vpop.permute.xlu0 %5675
      %5677 = vrot.lane.b32.xlu0 %v4975, 121
      %v5678 = vpop.permute.xlu0 %5677
      %5679 = vrot.lane.b32.xlu0 %v4976, 121
      %v5680 = vpop.permute.xlu0 %5679
      %5681 = vrot.lane.b32.xlu0 %v4977, 121
      %v5682 = vpop.permute.xlu0 %5681
      %5683 = vrot.lane.b32.xlu0 %v4978, 121
      %v5684 = vpop.permute.xlu0 %5683
      %5685 = vrot.lane.b32.xlu0 %v4979, 121
      %v5686 = vpop.permute.xlu0 %5685
      %v5687 = vsel %vm3125, %v5672, %v5680
      %v5688 = vsel %vm3125, %v5674, %v5682
      %v5689 = vsel %vm3125, %v5676, %v5684
      %v5690 = vsel %vm3125, %v5678, %v5686
      %v5691 = vsel %vm3125, %v5680, %v5672
      %v5692 = vsel %vm3125, %v5682, %v5674
      %v5693 = vsel %vm3125, %v5684, %v5676
      %v5694 = vsel %vm3125, %v5686, %v5678
      %v5695 = vmul.f32 %v5687, %v3130
      %v5696 = vmul.f32 %v5691, %v3131
      %v5697 = vmul.f32 %v5688, %v3130
      %v5698 = vmul.f32 %v5692, %v3131
      %v5699 = vmul.f32 %v5689, %v3130
      %v5700 = vmul.f32 %v5693, %v3131
      %v5701 = vmul.f32 %v5690, %v3130
      %v5702 = vmul.f32 %v5694, %v3131
      %s5703 = scalar_lea.vmem %s5, 96
      %v5704 = vld [vmem:[%s5703] sm:$0xff]
      %v5705 = vld [vmem:[%s5703 + $0x8] sm:$0xff]
      %v5707 = vsel %vm4098, %v5704, 0
      %v5710 = vsel %vm4098, %v5705, 0
      %5712 = vmatprep.subr.mxu0 %v5696
      %5713 = vmatpush1.msra.mxu0 %v5695
      %5714 = vmatprep.subr.mxu0 %v5698
      %5715 = vmatpush1.msra.mxu0 %v5697
      %5716 = vmatprep.subr.mxu0 %v5700
      %5717 = vmatpush1.msra.mxu0 %v5699
      %5718 = vmatprep.subr.mxu0 %v5702
      %5719 = vmatpush1.msra.mxu0 %v5701
      %5720 = vmatprep.subr.mxu0 0.0
      %5721 = vmatpush1.msra.mxu0 0.0
      %5722 = vmatprep.subr.mxu0 0.0
      %5723 = vmatpush1.msra.mxu0 0.0
      %5724 = vmatprep.subr.mxu0 0.0
      %5725 = vmatpush1.msra.mxu0 0.0
      %5726 = vmatprep.subr.mxu0 0.0
      %5727 = vmatpush1.msra.mxu0 0.0
      %5728 = vmatprep.subr.mxu0 0.0
      %5729 = vmatpush1.msra.mxu0 0.0
      %5730 = vmatprep.subr.mxu0 0.0
      %5731 = vmatpush1.msra.mxu0 0.0
      %5732 = vmatprep.subr.mxu0 0.0
      %5733 = vmatpush1.msra.mxu0 0.0
      %5734 = vmatprep.subr.mxu0 0.0
      %5735 = vmatpush1.msra.mxu0 0.0
      %5736 = vmatprep.subr.mxu0 0.0
      %5737 = vmatpush1.msra.mxu0 0.0
      %5738 = vmatprep.subr.mxu0 0.0
      %5739 = vmatpush1.msra.mxu0 0.0
      %5740 = vmatprep.subr.mxu0 0.0
      %5741 = vmatpush1.msra.mxu0 0.0
      %5742 = vmatprep.subr.mxu0 0.0
      %5743 = vmatpush1.msra.mxu0 0.0
      %5744 = vmatprep.subr.mxu0 0.0
      %5745 = vmatpush1.msra.mxu0 0.0
      %5746 = vmatprep.subr.mxu0 0.0
      %5747 = vmatpush1.msra.mxu0 0.0
      %5748 = vmatprep.subr.mxu0 0.0
      %5749 = vmatpush1.msra.mxu0 0.0
      %5750 = vmatprep.subr.mxu0 0.0
      %5751 = vmatpush1.msra.mxu0 0.0
      %5752 = vmatprep.subr.mxu0 0.0
      %5753 = vmatpush1.msra.mxu0 0.0
      %5754 = vmatprep.subr.mxu0 0.0
      %5755 = vmatpush1.msra.mxu0 0.0
      %5756 = vmatprep.subr.mxu0 0.0
      %5757 = vmatpush1.msra.mxu0 0.0
      %5758 = vmatprep.subr.mxu0 0.0
      %5759 = vmatpush1.msra.mxu0 0.0
      %5760 = vmatprep.subr.mxu0 0.0
      %5761 = vmatpush1.msra.mxu0 0.0
      %5762 = vmatprep.subr.mxu0 0.0
      %5763 = vmatpush1.msra.mxu0 0.0
      %5764 = vmatprep.subr.mxu0 0.0
      %5765 = vmatpush1.msra.mxu0 0.0
      %5766 = vmatprep.subr.mxu0 0.0
      %5767 = vmatpush1.msra.mxu0 0.0
      %5768 = vmatprep.subr.mxu0 0.0
      %5769 = vmatpush1.msra.mxu0 0.0
      %5770 = vmatprep.subr.mxu0 0.0
      %5771 = vmatpush1.msra.mxu0 0.0
      %5772 = vmatprep.subr.mxu0 0.0
      %5773 = vmatpush1.msra.mxu0 0.0
      %5774 = vmatprep.subr.mxu0 0.0
      %5775 = vmatpush1.msra.mxu0 0.0
      %5776 = vmatprep.mubr.f32.mxu0 0.0
      %5777 = vmatmul.mubr.f32.gmra.mrb[0].mxu0 %v5707
      %v5778 = vpop.f32.mrb[0].mxu0
      %v5779 = vadd.f32 0.0, %v5778
      %v5780 = vpop.f32.mrb[0].mxu0
      %v5781 = vadd.f32 0.0, %v5780
      %5782 = vmatprep.mubr.f32.mxu0 0.0
      %5783 = vmatmul.mubr.f32.gmra.mrb[0].mxu0 %v5710
      %v5784 = vpop.f32.mrb[0].mxu0
      %v5785 = vadd.f32 0.0, %v5784
      %v5786 = vpop.f32.mrb[0].mxu0
      %v5787 = vadd.f32 0.0, %v5786
      %5788 = vdwg.mxu0
      %v5789 = vadd.f32 %v5667, %v5779
      %v5790 = vadd.f32 %v5668, %v5781
      %v5791 = vadd.f32 %v5669, %v5785
      %v5792 = vadd.f32 %v5670, %v5787
      %5793 = vrot.lane.b32.xlu0 %v4972, 120
      %v5794 = vpop.permute.xlu0 %5793
      %5795 = vrot.lane.b32.xlu0 %v4973, 120
      %v5796 = vpop.permute.xlu0 %5795
      %5797 = vrot.lane.b32.xlu0 %v4974, 120
      %v5798 = vpop.permute.xlu0 %5797
      %5799 = vrot.lane.b32.xlu0 %v4975, 120
      %v5800 = vpop.permute.xlu0 %5799
      %5801 = vrot.lane.b32.xlu0 %v4976, 120
      %v5802 = vpop.permute.xlu0 %5801
      %5803 = vrot.lane.b32.xlu0 %v4977, 120
      %v5804 = vpop.permute.xlu0 %5803
      %5805 = vrot.lane.b32.xlu0 %v4978, 120
      %v5806 = vpop.permute.xlu0 %5805
      %5807 = vrot.lane.b32.xlu0 %v4979, 120
      %v5808 = vpop.permute.xlu0 %5807
      %v5809 = vsel %vm3258, %v5794, %v5802
      %v5810 = vsel %vm3258, %v5796, %v5804
      %v5811 = vsel %vm3258, %v5798, %v5806
      %v5812 = vsel %vm3258, %v5800, %v5808
      %v5813 = vsel %vm3258, %v5802, %v5794
      %v5814 = vsel %vm3258, %v5804, %v5796
      %v5815 = vsel %vm3258, %v5806, %v5798
      %v5816 = vsel %vm3258, %v5808, %v5800
      %v5817 = vmul.f32 %v5809, %v737
      %v5818 = vmul.f32 %v5813, %v738
      %v5819 = vmul.f32 %v5810, %v737
      %v5820 = vmul.f32 %v5814, %v738
      %v5821 = vmul.f32 %v5811, %v737
      %v5822 = vmul.f32 %v5815, %v738
      %v5823 = vmul.f32 %v5812, %v737
      %v5824 = vmul.f32 %v5816, %v738
      %s5825 = scalar_lea.vmem %s5, 112
      %v5826 = vld [vmem:[%s5825] sm:$0xff]
      %v5827 = vld [vmem:[%s5825 + $0x8] sm:$0xff]
      %v5829 = vsel %vm4098, %v5826, 0
      %v5832 = vsel %vm4098, %v5827, 0
      %5834 = vmatprep.subr.mxu0 %v5818
      %5835 = vmatpush1.msra.mxu0 %v5817
      %5836 = vmatprep.subr.mxu0 %v5820
      %5837 = vmatpush1.msra.mxu0 %v5819
      %5838 = vmatprep.subr.mxu0 %v5822
      %5839 = vmatpush1.msra.mxu0 %v5821
      %5840 = vmatprep.subr.mxu0 %v5824
      %5841 = vmatpush1.msra.mxu0 %v5823
      %5842 = vmatprep.subr.mxu0 0.0
      %5843 = vmatpush1.msra.mxu0 0.0
      %5844 = vmatprep.subr.mxu0 0.0
      %5845 = vmatpush1.msra.mxu0 0.0
      %5846 = vmatprep.subr.mxu0 0.0
      %5847 = vmatpush1.msra.mxu0 0.0
      %5848 = vmatprep.subr.mxu0 0.0
      %5849 = vmatpush1.msra.mxu0 0.0
      %5850 = vmatprep.subr.mxu0 0.0
      %5851 = vmatpush1.msra.mxu0 0.0
      %5852 = vmatprep.subr.mxu0 0.0
      %5853 = vmatpush1.msra.mxu0 0.0
      %5854 = vmatprep.subr.mxu0 0.0
      %5855 = vmatpush1.msra.mxu0 0.0
      %5856 = vmatprep.subr.mxu0 0.0
      %5857 = vmatpush1.msra.mxu0 0.0
      %5858 = vmatprep.subr.mxu0 0.0
      %5859 = vmatpush1.msra.mxu0 0.0
      %5860 = vmatprep.subr.mxu0 0.0
      %5861 = vmatpush1.msra.mxu0 0.0
      %5862 = vmatprep.subr.mxu0 0.0
      %5863 = vmatpush1.msra.mxu0 0.0
      %5864 = vmatprep.subr.mxu0 0.0
      %5865 = vmatpush1.msra.mxu0 0.0
      %5866 = vmatprep.subr.mxu0 0.0
      %5867 = vmatpush1.msra.mxu0 0.0
      %5868 = vmatprep.subr.mxu0 0.0
      %5869 = vmatpush1.msra.mxu0 0.0
      %5870 = vmatprep.subr.mxu0 0.0
      %5871 = vmatpush1.msra.mxu0 0.0
      %5872 = vmatprep.subr.mxu0 0.0
      %5873 = vmatpush1.msra.mxu0 0.0
      %5874 = vmatprep.subr.mxu0 0.0
      %5875 = vmatpush1.msra.mxu0 0.0
      %5876 = vmatprep.subr.mxu0 0.0
      %5877 = vmatpush1.msra.mxu0 0.0
      %5878 = vmatprep.subr.mxu0 0.0
      %5879 = vmatpush1.msra.mxu0 0.0
      %5880 = vmatprep.subr.mxu0 0.0
      %5881 = vmatpush1.msra.mxu0 0.0
      %5882 = vmatprep.subr.mxu0 0.0
      %5883 = vmatpush1.msra.mxu0 0.0
      %5884 = vmatprep.subr.mxu0 0.0
      %5885 = vmatpush1.msra.mxu0 0.0
      %5886 = vmatprep.subr.mxu0 0.0
      %5887 = vmatpush1.msra.mxu0 0.0
      %5888 = vmatprep.subr.mxu0 0.0
      %5889 = vmatpush1.msra.mxu0 0.0
      %5890 = vmatprep.subr.mxu0 0.0
      %5891 = vmatpush1.msra.mxu0 0.0
      %5892 = vmatprep.subr.mxu0 0.0
      %5893 = vmatpush1.msra.mxu0 0.0
      %5894 = vmatprep.subr.mxu0 0.0
      %5895 = vmatpush1.msra.mxu0 0.0
      %5896 = vmatprep.subr.mxu0 0.0
      %5897 = vmatpush1.msra.mxu0 0.0
      %5898 = vmatprep.mubr.f32.mxu0 0.0
      %5899 = vmatmul.mubr.f32.gmra.mrb[0].mxu0 %v5829
      %v5900 = vpop.f32.mrb[0].mxu0
      %v5901 = vadd.f32 0.0, %v5900
      %v5902 = vpop.f32.mrb[0].mxu0
      %v5903 = vadd.f32 0.0, %v5902
      %5904 = vmatprep.mubr.f32.mxu0 0.0
      %5905 = vmatmul.mubr.f32.gmra.mrb[0].mxu0 %v5832
      %v5906 = vpop.f32.mrb[0].mxu0
      %v5907 = vadd.f32 0.0, %v5906
      %v5908 = vpop.f32.mrb[0].mxu0
      %v5909 = vadd.f32 0.0, %v5908
      %5910 = vdwg.mxu0
      %v5911 = vadd.f32 %v5789, %v5901
      %v5912 = vadd.f32 %v5790, %v5903
      %v5913 = vadd.f32 %v5791, %v5907
      %v5914 = vadd.f32 %v5792, %v5909
      %5915 = vrot.lane.b32.xlu0 %v4972, 119
      %v5916 = vpop.permute.xlu0 %5915
      %5917 = vrot.lane.b32.xlu0 %v4973, 119
      %v5918 = vpop.permute.xlu0 %5917
      %5919 = vrot.lane.b32.xlu0 %v4974, 119
      %v5920 = vpop.permute.xlu0 %5919
      %5921 = vrot.lane.b32.xlu0 %v4975, 119
      %v5922 = vpop.permute.xlu0 %5921
      %5923 = vrot.lane.b32.xlu0 %v4976, 119
      %v5924 = vpop.permute.xlu0 %5923
      %5925 = vrot.lane.b32.xlu0 %v4977, 119
      %v5926 = vpop.permute.xlu0 %5925
      %5927 = vrot.lane.b32.xlu0 %v4978, 119
      %v5928 = vpop.permute.xlu0 %5927
      %5929 = vrot.lane.b32.xlu0 %v4979, 119
      %v5930 = vpop.permute.xlu0 %5929
      %v5931 = vsel %vm3389, %v5916, %v5924
      %v5932 = vsel %vm3389, %v5918, %v5926
      %v5933 = vsel %vm3389, %v5920, %v5928
      %v5934 = vsel %vm3389, %v5922, %v5930
      %v5935 = vsel %vm3389, %v5924, %v5916
      %v5936 = vsel %vm3389, %v5926, %v5918
      %v5937 = vsel %vm3389, %v5928, %v5920
      %v5938 = vsel %vm3389, %v5930, %v5922
      %v5939 = vmul.f32 %v5931, %v3394
      %v5940 = vmul.f32 %v5935, %v3395
      %v5941 = vmul.f32 %v5932, %v3394
      %v5942 = vmul.f32 %v5936, %v3395
      %v5943 = vmul.f32 %v5933, %v3394
      %v5944 = vmul.f32 %v5937, %v3395
      %v5945 = vmul.f32 %v5934, %v3394
      %v5946 = vmul.f32 %v5938, %v3395
      %s5947 = scalar_lea.vmem %s5, 128
      %v5948 = vld [vmem:[%s5947] sm:$0xff]
      %v5949 = vld [vmem:[%s5947 + $0x8] sm:$0xff]
      %v5951 = vsel %vm4098, %v5948, 0
      %v5954 = vsel %vm4098, %v5949, 0
      %5956 = vmatprep.subr.mxu0 %v5940
      %5957 = vmatpush1.msra.mxu0 %v5939
      %5958 = vmatprep.subr.mxu0 %v5942
      %5959 = vmatpush1.msra.mxu0 %v5941
      %5960 = vmatprep.subr.mxu0 %v5944
      %5961 = vmatpush1.msra.mxu0 %v5943
      %5962 = vmatprep.subr.mxu0 %v5946
      %5963 = vmatpush1.msra.mxu0 %v5945
      %5964 = vmatprep.subr.mxu0 0.0
      %5965 = vmatpush1.msra.mxu0 0.0
      %5966 = vmatprep.subr.mxu0 0.0
      %5967 = vmatpush1.msra.mxu0 0.0
      %5968 = vmatprep.subr.mxu0 0.0
      %5969 = vmatpush1.msra.mxu0 0.0
      %5970 = vmatprep.subr.mxu0 0.0
      %5971 = vmatpush1.msra.mxu0 0.0
      %5972 = vmatprep.subr.mxu0 0.0
      %5973 = vmatpush1.msra.mxu0 0.0
      %5974 = vmatprep.subr.mxu0 0.0
      %5975 = vmatpush1.msra.mxu0 0.0
      %5976 = vmatprep.subr.mxu0 0.0
      %5977 = vmatpush1.msra.mxu0 0.0
      %5978 = vmatprep.subr.mxu0 0.0
      %5979 = vmatpush1.msra.mxu0 0.0
      %5980 = vmatprep.subr.mxu0 0.0
      %5981 = vmatpush1.msra.mxu0 0.0
      %5982 = vmatprep.subr.mxu0 0.0
      %5983 = vmatpush1.msra.mxu0 0.0
      %5984 = vmatprep.subr.mxu0 0.0
      %5985 = vmatpush1.msra.mxu0 0.0
      %5986 = vmatprep.subr.mxu0 0.0
      %5987 = vmatpush1.msra.mxu0 0.0
      %5988 = vmatprep.subr.mxu0 0.0
      %5989 = vmatpush1.msra.mxu0 0.0
      %5990 = vmatprep.subr.mxu0 0.0
      %5991 = vmatpush1.msra.mxu0 0.0
      %5992 = vmatprep.subr.mxu0 0.0
      %5993 = vmatpush1.msra.mxu0 0.0
      %5994 = vmatprep.subr.mxu0 0.0
      %5995 = vmatpush1.msra.mxu0 0.0
      %5996 = vmatprep.subr.mxu0 0.0
      %5997 = vmatpush1.msra.mxu0 0.0
      %5998 = vmatprep.subr.mxu0 0.0
      %5999 = vmatpush1.msra.mxu0 0.0
      %6000 = vmatprep.subr.mxu0 0.0
      %6001 = vmatpush1.msra.mxu0 0.0
      %6002 = vmatprep.subr.mxu0 0.0
      %6003 = vmatpush1.msra.mxu0 0.0
      %6004 = vmatprep.subr.mxu0 0.0
      %6005 = vmatpush1.msra.mxu0 0.0
      %6006 = vmatprep.subr.mxu0 0.0
      %6007 = vmatpush1.msra.mxu0 0.0
      %6008 = vmatprep.subr.mxu0 0.0
      %6009 = vmatpush1.msra.mxu0 0.0
      %6010 = vmatprep.subr.mxu0 0.0
      %6011 = vmatpush1.msra.mxu0 0.0
      %6012 = vmatprep.subr.mxu0 0.0
      %6013 = vmatpush1.msra.mxu0 0.0
      %6014 = vmatprep.subr.mxu0 0.0
      %6015 = vmatpush1.msra.mxu0 0.0
      %6016 = vmatprep.subr.mxu0 0.0
      %6017 = vmatpush1.msra.mxu0 0.0
      %6018 = vmatprep.subr.mxu0 0.0
      %6019 = vmatpush1.msra.mxu0 0.0
      %6020 = vmatprep.mubr.f32.mxu0 0.0
      %6021 = vmatmul.mubr.f32.gmra.mrb[0].mxu0 %v5951
      %v6022 = vpop.f32.mrb[0].mxu0
      %v6023 = vadd.f32 0.0, %v6022
      %v6024 = vpop.f32.mrb[0].mxu0
      %v6025 = vadd.f32 0.0, %v6024
      %6026 = vmatprep.mubr.f32.mxu0 0.0
      %6027 = vmatmul.mubr.f32.gmra.mrb[0].mxu0 %v5954
      %v6028 = vpop.f32.mrb[0].mxu0
      %v6029 = vadd.f32 0.0, %v6028
      %v6030 = vpop.f32.mrb[0].mxu0
      %v6031 = vadd.f32 0.0, %v6030
      %6032 = vdwg.mxu0
      %v6033 = vadd.f32 %v5911, %v6023
      %v6034 = vadd.f32 %v5912, %v6025
      %v6035 = vadd.f32 %v5913, %v6029
      %v6036 = vadd.f32 %v5914, %v6031
      %v6037 = vld [vmem:[%s6] sm:$0xff]
      %v6038 = vld [vmem:[%s6 + $0x8] sm:$0xff]
      %6040 = vset.pattern.permute.xlu0 0
      %6041 = vperm.xlu0 %6040, %v6037
      %v6042 = vpop.permute.xlu0 %6041
      %6045 = vset.pattern.permute.xlu0 0
      %6046 = vperm.xlu0 %6045, %v6038
      %v6047 = vpop.permute.xlu0 %6046
      %v6049 = vadd.f32 %v6033, %v6042
      %v6050 = vadd.f32 %v6034, %v6042
      %v6051 = vadd.f32 %v6035, %v6047
      %v6052 = vadd.f32 %v6036, %v6047
      %v6053 = vmul.f32 %v6049, 0.5
      %v6054 = vmul.f32 %v6050, 0.5
      %v6055 = vmul.f32 %v6051, 0.5
      %v6056 = vmul.f32 %v6052, 0.5
      %v6057 = vmul.f32 %v6049, 0.70710677
      %v6058 = vmul.f32 %v6050, 0.70710677
      %v6059 = vmul.f32 %v6051, 0.70710677
      %v6060 = vmul.f32 %v6052, 0.70710677
      %vm6061 = vcmp.ge.f32.partialorder %v6057, 0.0
      %vm6062 = vcmp.ge.f32.partialorder %v6058, 0.0
      %vm6063 = vcmp.ge.f32.partialorder %v6059, 0.0
      %vm6064 = vcmp.ge.f32.partialorder %v6060, 0.0
      %v6065 = vsel %vm6061, 1.0, -1.0
      %v6066 = vsel %vm6062, 1.0, -1.0
      %v6067 = vsel %vm6063, 1.0, -1.0
      %v6068 = vsel %vm6064, 1.0, -1.0
      %v6069 = vand.u32 2147483647, %v6057
      %v6070 = vand.u32 2147483647, %v6058
      %v6071 = vand.u32 2147483647, %v6059
      %v6072 = vand.u32 2147483647, %v6060
      %v6073 = vmul.f32 %v6069, 0.3275911
      %v6074 = vmul.f32 %v6070, 0.3275911
      %v6075 = vmul.f32 %v6071, 0.3275911
      %v6076 = vmul.f32 %v6072, 0.3275911
      %v6077 = vadd.f32 %v6073, 1.0
      %v6078 = vadd.f32 %v6074, 1.0
      %v6079 = vadd.f32 %v6075, 1.0
      %v6080 = vadd.f32 %v6076, 1.0
      %v6081 = vrcp.pop %v6077
      %v6082 = vmul.f32 1.0, %v6081
      %v6083 = vrcp.pop %v6078
      %v6084 = vmul.f32 1.0, %v6083
      %v6085 = vrcp.pop %v6079
      %v6086 = vmul.f32 1.0, %v6085
      %v6087 = vrcp.pop %v6080
      %v6088 = vmul.f32 1.0, %v6087
      %v6089 = vmul.f32 %v6082, 1.0614054
      %v6090 = vmul.f32 %v6084, 1.0614054
      %v6091 = vmul.f32 %v6086, 1.0614054
      %v6092 = vmul.f32 %v6088, 1.0614054
      %v6093 = vadd.f32 %v6089, -1.4531521
      %v6094 = vadd.f32 %v6090, -1.4531521
      %v6095 = vadd.f32 %v6091, -1.4531521
      %v6096 = vadd.f32 %v6092, -1.4531521
      %v6097 = vmul.f32 %v6093, %v6082
      %v6098 = vmul.f32 %v6094, %v6084
      %v6099 = vmul.f32 %v6095, %v6086
      %v6100 = vmul.f32 %v6096, %v6088
      %v6101 = vadd.f32 %v6097, 1.4214138
      %v6102 = vadd.f32 %v6098, 1.4214138
      %v6103 = vadd.f32 %v6099, 1.4214138
      %v6104 = vadd.f32 %v6100, 1.4214138
      %v6105 = vmul.f32 %v6101, %v6082
      %v6106 = vmul.f32 %v6102, %v6084
      %v6107 = vmul.f32 %v6103, %v6086
      %v6108 = vmul.f32 %v6104, %v6088
      %v6109 = vadd.f32 %v6105, -0.28449672
      %v6110 = vadd.f32 %v6106, -0.28449672
      %v6111 = vadd.f32 %v6107, -0.28449672
      %v6112 = vadd.f32 %v6108, -0.28449672
      %v6113 = vmul.f32 %v6109, %v6082
      %v6114 = vmul.f32 %v6110, %v6084
      %v6115 = vmul.f32 %v6111, %v6086
      %v6116 = vmul.f32 %v6112, %v6088
      %v6117 = vadd.f32 %v6113, 0.2548296
      %v6118 = vadd.f32 %v6114, 0.2548296
      %v6119 = vadd.f32 %v6115, 0.2548296
      %v6120 = vadd.f32 %v6116, 0.2548296
      %v6121 = vmul.f32 %v6117, %v6082
      %v6122 = vmul.f32 %v6118, %v6084
      %v6123 = vmul.f32 %v6119, %v6086
      %v6124 = vmul.f32 %v6120, %v6088
      %v6125 = vsub.f32 0.0, %v6069
      %v6126 = vsub.f32 0.0, %v6070
      %v6127 = vsub.f32 0.0, %v6071
      %v6128 = vsub.f32 0.0, %v6072
      %v6129 = vmul.f32 %v6125, %v6069
      %v6130 = vmul.f32 %v6126, %v6070
      %v6131 = vmul.f32 %v6127, %v6071
      %v6132 = vmul.f32 %v6128, %v6072
      %v6133 = vmul.f32 %v6129, 1.442695
      %v6134 = vpow.pop %v6133
      %v6135 = vmul.f32 %v6130, 1.442695
      %v6136 = vpow.pop %v6135
      %v6137 = vmul.f32 %v6131, 1.442695
      %v6138 = vpow.pop %v6137
      %v6139 = vmul.f32 %v6132, 1.442695
      %v6140 = vpow.pop %v6139
      %v6141 = vmul.f32 %v6121, %v6134
      %v6142 = vmul.f32 %v6122, %v6136
      %v6143 = vmul.f32 %v6123, %v6138
      %v6144 = vmul.f32 %v6124, %v6140
      %v6145 = vsub.f32 1.0, %v6141
      %v6146 = vsub.f32 1.0, %v6142
      %v6147 = vsub.f32 1.0, %v6143
      %v6148 = vsub.f32 1.0, %v6144
      %v6149 = vmul.f32 %v6065, %v6145
      %v6150 = vmul.f32 %v6066, %v6146
      %v6151 = vmul.f32 %v6067, %v6147
      %v6152 = vmul.f32 %v6068, %v6148
      %v6153 = vadd.f32 %v6149, 1.0
      %v6154 = vadd.f32 %v6150, 1.0
      %v6155 = vadd.f32 %v6151, 1.0
      %v6156 = vadd.f32 %v6152, 1.0
      %v6157 = vmul.f32 %v6053, %v6153
      %v6158 = vmul.f32 %v6054, %v6154
      %v6159 = vmul.f32 %v6055, %v6155
      %v6160 = vmul.f32 %v6056, %v6156
      %v6161 = vld [vmem:[%s15] sm:$0xff]
      %v6162 = vld [vmem:[%s15 + $0x8] sm:$0xff]
      %v6163 = vld [vmem:[%s15 + $0x10] sm:$0xff]
      %v6164 = vld [vmem:[%s15 + $0x18] sm:$0xff]
      %v6165 = vld [vmem:[%s15 + $0x20] sm:$0xff]
      %v6166 = vld [vmem:[%s15 + $0x28] sm:$0xff]
      %v6167 = vld [vmem:[%s15 + $0x30] sm:$0xff]
      %v6168 = vld [vmem:[%s15 + $0x38] sm:$0xff]
      %v6169 = vld [vmem:[%s15 + $0x40] sm:$0xff]
      %v6170 = vld [vmem:[%s15 + $0x48] sm:$0xff]
      %v6171 = vld [vmem:[%s15 + $0x50] sm:$0xff]
      %v6172 = vld [vmem:[%s15 + $0x58] sm:$0xff]
      %v6173 = vld [vmem:[%s15 + $0x60] sm:$0xff]
      %v6174 = vld [vmem:[%s15 + $0x68] sm:$0xff]
      %v6175 = vld [vmem:[%s15 + $0x70] sm:$0xff]
      %v6176 = vld [vmem:[%s15 + $0x78] sm:$0xff]
      %v6178 = vsel %vm2249, %v6157, 0
      %v6181 = vsel %vm2249, %v6159, 0
      %6183 = vmatprep.subr.mxu0 %v6162
      %6184 = vmatpush1.msra.mxu0 %v6161
      %6185 = vmatprep.subr.mxu0 %v6164
      %6186 = vmatpush1.msra.mxu0 %v6163
      %6187 = vmatprep.subr.mxu0 %v6166
      %6188 = vmatpush1.msra.mxu0 %v6165
      %6189 = vmatprep.subr.mxu0 %v6168
      %6190 = vmatpush1.msra.mxu0 %v6167
      %6191 = vmatprep.subr.mxu0 %v6170
      %6192 = vmatpush1.msra.mxu0 %v6169
      %6193 = vmatprep.subr.mxu0 %v6172
      %6194 = vmatpush1.msra.mxu0 %v6171
      %6195 = vmatprep.subr.mxu0 %v6174
      %6196 = vmatpush1.msra.mxu0 %v6173
      %6197 = vmatprep.subr.mxu0 %v6176
      %6198 = vmatpush1.msra.mxu0 %v6175
      %6199 = vmatprep.subr.mxu0 0.0
      %6200 = vmatpush1.msra.mxu0 0.0
      %6201 = vmatprep.subr.mxu0 0.0
      %6202 = vmatpush1.msra.mxu0 0.0
      %6203 = vmatprep.subr.mxu0 0.0
      %6204 = vmatpush1.msra.mxu0 0.0
      %6205 = vmatprep.subr.mxu0 0.0
      %6206 = vmatpush1.msra.mxu0 0.0
      %6207 = vmatprep.subr.mxu0 0.0
      %6208 = vmatpush1.msra.mxu0 0.0
      %6209 = vmatprep.subr.mxu0 0.0
      %6210 = vmatpush1.msra.mxu0 0.0
      %6211 = vmatprep.subr.mxu0 0.0
      %6212 = vmatpush1.msra.mxu0 0.0
      %6213 = vmatprep.subr.mxu0 0.0
      %6214 = vmatpush1.msra.mxu0 0.0
      %6215 = vmatprep.subr.mxu0 0.0
      %6216 = vmatpush1.msra.mxu0 0.0
      %6217 = vmatprep.subr.mxu0 0.0
      %6218 = vmatpush1.msra.mxu0 0.0
      %6219 = vmatprep.subr.mxu0 0.0
      %6220 = vmatpush1.msra.mxu0 0.0
      %6221 = vmatprep.subr.mxu0 0.0
      %6222 = vmatpush1.msra.mxu0 0.0
      %6223 = vmatprep.subr.mxu0 0.0
      %6224 = vmatpush1.msra.mxu0 0.0
      %6225 = vmatprep.subr.mxu0 0.0
      %6226 = vmatpush1.msra.mxu0 0.0
      %6227 = vmatprep.subr.mxu0 0.0
      %6228 = vmatpush1.msra.mxu0 0.0
      %6229 = vmatprep.subr.mxu0 0.0
      %6230 = vmatpush1.msra.mxu0 0.0
      %6231 = vmatprep.subr.mxu0 0.0
      %6232 = vmatpush1.msra.mxu0 0.0
      %6233 = vmatprep.subr.mxu0 0.0
      %6234 = vmatpush1.msra.mxu0 0.0
      %6235 = vmatprep.subr.mxu0 0.0
      %6236 = vmatpush1.msra.mxu0 0.0
      %6237 = vmatprep.subr.mxu0 0.0
      %6238 = vmatpush1.msra.mxu0 0.0
      %6239 = vmatprep.subr.mxu0 0.0
      %6240 = vmatpush1.msra.mxu0 0.0
      %6241 = vmatprep.subr.mxu0 0.0
      %6242 = vmatpush1.msra.mxu0 0.0
      %6243 = vmatprep.subr.mxu0 0.0
      %6244 = vmatpush1.msra.mxu0 0.0
      %6245 = vmatprep.subr.mxu0 0.0
      %6246 = vmatpush1.msra.mxu0 0.0
      %6247 = vmatprep.mubr.f32.mxu0 0.0
      %6248 = vmatmul.mubr.f32.gmra.mrb[0].mxu0 %v6178
      %v6249 = vpop.f32.mrb[0].mxu0
      %v6250 = vadd.f32 0.0, %v6249
      %v6251 = vpop.f32.mrb[0].mxu0
      %v6252 = vadd.f32 0.0, %v6251
      %6253 = vmatprep.mubr.f32.mxu0 0.0
      %6254 = vmatmul.mubr.f32.gmra.mrb[0].mxu0 %v6181
      %v6255 = vpop.f32.mrb[0].mxu0
      %v6256 = vadd.f32 0.0, %v6255
      %v6257 = vpop.f32.mrb[0].mxu0
      %v6258 = vadd.f32 0.0, %v6257
      %6259 = vdwg.mxu0
      %6260 = vrot.lane.b32.xlu0 %v6157, 64
      %v6261 = vpop.permute.xlu0 %6260
      %6262 = vrot.lane.b32.xlu0 %v6159, 64
      %v6263 = vpop.permute.xlu0 %6262
      %v6264 = vsel %vm2249, %v6261, 0
      %v6266 = vsel %vm2249, %v6263, 0
      %6268 = vmatprep.subr.mxu0 %v6162
      %6269 = vmatpush1.msra.mxu0 %v6161
      %6270 = vmatprep.subr.mxu0 %v6164
      %6271 = vmatpush1.msra.mxu0 %v6163
      %6272 = vmatprep.subr.mxu0 %v6166
      %6273 = vmatpush1.msra.mxu0 %v6165
      %6274 = vmatprep.subr.mxu0 %v6168
      %6275 = vmatpush1.msra.mxu0 %v6167
      %6276 = vmatprep.subr.mxu0 %v6170
      %6277 = vmatpush1.msra.mxu0 %v6169
      %6278 = vmatprep.subr.mxu0 %v6172
      %6279 = vmatpush1.msra.mxu0 %v6171
      %6280 = vmatprep.subr.mxu0 %v6174
      %6281 = vmatpush1.msra.mxu0 %v6173
      %6282 = vmatprep.subr.mxu0 %v6176
      %6283 = vmatpush1.msra.mxu0 %v6175
      %6284 = vmatprep.subr.mxu0 0.0
      %6285 = vmatpush1.msra.mxu0 0.0
      %6286 = vmatprep.subr.mxu0 0.0
      %6287 = vmatpush1.msra.mxu0 0.0
      %6288 = vmatprep.subr.mxu0 0.0
      %6289 = vmatpush1.msra.mxu0 0.0
      %6290 = vmatprep.subr.mxu0 0.0
      %6291 = vmatpush1.msra.mxu0 0.0
      %6292 = vmatprep.subr.mxu0 0.0
      %6293 = vmatpush1.msra.mxu0 0.0
      %6294 = vmatprep.subr.mxu0 0.0
      %6295 = vmatpush1.msra.mxu0 0.0
      %6296 = vmatprep.subr.mxu0 0.0
      %6297 = vmatpush1.msra.mxu0 0.0
      %6298 = vmatprep.subr.mxu0 0.0
      %6299 = vmatpush1.msra.mxu0 0.0
      %6300 = vmatprep.subr.mxu0 0.0
      %6301 = vmatpush1.msra.mxu0 0.0
      %6302 = vmatprep.subr.mxu0 0.0
      %6303 = vmatpush1.msra.mxu0 0.0
      %6304 = vmatprep.subr.mxu0 0.0
      %6305 = vmatpush1.msra.mxu0 0.0
      %6306 = vmatprep.subr.mxu0 0.0
      %6307 = vmatpush1.msra.mxu0 0.0
      %6308 = vmatprep.subr.mxu0 0.0
      %6309 = vmatpush1.msra.mxu0 0.0
      %6310 = vmatprep.subr.mxu0 0.0
      %6311 = vmatpush1.msra.mxu0 0.0
      %6312 = vmatprep.subr.mxu0 0.0
      %6313 = vmatpush1.msra.mxu0 0.0
      %6314 = vmatprep.subr.mxu0 0.0
      %6315 = vmatpush1.msra.mxu0 0.0
      %6316 = vmatprep.subr.mxu0 0.0
      %6317 = vmatpush1.msra.mxu0 0.0
      %6318 = vmatprep.subr.mxu0 0.0
      %6319 = vmatpush1.msra.mxu0 0.0
      %6320 = vmatprep.subr.mxu0 0.0
      %6321 = vmatpush1.msra.mxu0 0.0
      %6322 = vmatprep.subr.mxu0 0.0
      %6323 = vmatpush1.msra.mxu0 0.0
      %6324 = vmatprep.subr.mxu0 0.0
      %6325 = vmatpush1.msra.mxu0 0.0
      %6326 = vmatprep.subr.mxu0 0.0
      %6327 = vmatpush1.msra.mxu0 0.0
      %6328 = vmatprep.subr.mxu0 0.0
      %6329 = vmatpush1.msra.mxu0 0.0
      %6330 = vmatprep.subr.mxu0 0.0
      %6331 = vmatpush1.msra.mxu0 0.0
      %6332 = vmatprep.mubr.f32.mxu0 0.0
      %6333 = vmatmul.mubr.f32.gmra.mrb[0].mxu0 %v6264
      %v6334 = vpop.f32.mrb[0].mxu0
      %v6335 = vadd.f32 0.0, %v6334
      %v6336 = vpop.f32.mrb[0].mxu0
      %v6337 = vadd.f32 0.0, %v6336
      %6338 = vmatprep.mubr.f32.mxu0 0.0
      %6339 = vmatmul.mubr.f32.gmra.mrb[0].mxu0 %v6266
      %v6340 = vpop.f32.mrb[0].mxu0
      %v6341 = vadd.f32 0.0, %v6340
      %v6342 = vpop.f32.mrb[0].mxu0
      %v6343 = vadd.f32 0.0, %v6342
      %6344 = vdwg.mxu0
      %v6346 = vsel %vm2249, %v6158, 0
      %v6349 = vsel %vm2249, %v6160, 0
      %6351 = vmatprep.subr.mxu0 %v6162
      %6352 = vmatpush1.msra.mxu0 %v6161
      %6353 = vmatprep.subr.mxu0 %v6164
      %6354 = vmatpush1.msra.mxu0 %v6163
      %6355 = vmatprep.subr.mxu0 %v6166
      %6356 = vmatpush1.msra.mxu0 %v6165
      %6357 = vmatprep.subr.mxu0 %v6168
      %6358 = vmatpush1.msra.mxu0 %v6167
      %6359 = vmatprep.subr.mxu0 %v6170
      %6360 = vmatpush1.msra.mxu0 %v6169
      %6361 = vmatprep.subr.mxu0 %v6172
      %6362 = vmatpush1.msra.mxu0 %v6171
      %6363 = vmatprep.subr.mxu0 %v6174
      %6364 = vmatpush1.msra.mxu0 %v6173
      %6365 = vmatprep.subr.mxu0 %v6176
      %6366 = vmatpush1.msra.mxu0 %v6175
      %6367 = vmatprep.subr.mxu0 0.0
      %6368 = vmatpush1.msra.mxu0 0.0
      %6369 = vmatprep.subr.mxu0 0.0
      %6370 = vmatpush1.msra.mxu0 0.0
      %6371 = vmatprep.subr.mxu0 0.0
      %6372 = vmatpush1.msra.mxu0 0.0
      %6373 = vmatprep.subr.mxu0 0.0
      %6374 = vmatpush1.msra.mxu0 0.0
      %6375 = vmatprep.subr.mxu0 0.0
      %6376 = vmatpush1.msra.mxu0 0.0
      %6377 = vmatprep.subr.mxu0 0.0
      %6378 = vmatpush1.msra.mxu0 0.0
      %6379 = vmatprep.subr.mxu0 0.0
      %6380 = vmatpush1.msra.mxu0 0.0
      %6381 = vmatprep.subr.mxu0 0.0
      %6382 = vmatpush1.msra.mxu0 0.0
      %6383 = vmatprep.subr.mxu0 0.0
      %6384 = vmatpush1.msra.mxu0 0.0
      %6385 = vmatprep.subr.mxu0 0.0
      %6386 = vmatpush1.msra.mxu0 0.0
      %6387 = vmatprep.subr.mxu0 0.0
      %6388 = vmatpush1.msra.mxu0 0.0
      %6389 = vmatprep.subr.mxu0 0.0
      %6390 = vmatpush1.msra.mxu0 0.0
      %6391 = vmatprep.subr.mxu0 0.0
      %6392 = vmatpush1.msra.mxu0 0.0
      %6393 = vmatprep.subr.mxu0 0.0
      %6394 = vmatpush1.msra.mxu0 0.0
      %6395 = vmatprep.subr.mxu0 0.0
      %6396 = vmatpush1.msra.mxu0 0.0
      %6397 = vmatprep.subr.mxu0 0.0
      %6398 = vmatpush1.msra.mxu0 0.0
      %6399 = vmatprep.subr.mxu0 0.0
      %6400 = vmatpush1.msra.mxu0 0.0
      %6401 = vmatprep.subr.mxu0 0.0
      %6402 = vmatpush1.msra.mxu0 0.0
      %6403 = vmatprep.subr.mxu0 0.0
      %6404 = vmatpush1.msra.mxu0 0.0
      %6405 = vmatprep.subr.mxu0 0.0
      %6406 = vmatpush1.msra.mxu0 0.0
      %6407 = vmatprep.subr.mxu0 0.0
      %6408 = vmatpush1.msra.mxu0 0.0
      %6409 = vmatprep.subr.mxu0 0.0
      %6410 = vmatpush1.msra.mxu0 0.0
      %6411 = vmatprep.subr.mxu0 0.0
      %6412 = vmatpush1.msra.mxu0 0.0
      %6413 = vmatprep.subr.mxu0 0.0
      %6414 = vmatpush1.msra.mxu0 0.0
      %6415 = vmatprep.mubr.f32.mxu0 0.0
      %6416 = vmatmul.mubr.f32.gmra.mrb[0].mxu0 %v6346
      %v6417 = vpop.f32.mrb[0].mxu0
      %v6418 = vadd.f32 0.0, %v6417
      %v6419 = vpop.f32.mrb[0].mxu0
      %v6420 = vadd.f32 0.0, %v6419
      %6421 = vmatprep.mubr.f32.mxu0 0.0
      %6422 = vmatmul.mubr.f32.gmra.mrb[0].mxu0 %v6349
      %v6423 = vpop.f32.mrb[0].mxu0
      %v6424 = vadd.f32 0.0, %v6423
      %v6425 = vpop.f32.mrb[0].mxu0
      %v6426 = vadd.f32 0.0, %v6425
      %6427 = vdwg.mxu0
      %6428 = vrot.lane.b32.xlu0 %v6158, 64
      %v6429 = vpop.permute.xlu0 %6428
      %6430 = vrot.lane.b32.xlu0 %v6160, 64
      %v6431 = vpop.permute.xlu0 %6430
      %v6432 = vsel %vm2249, %v6429, 0
      %v6434 = vsel %vm2249, %v6431, 0
      %6436 = vmatprep.subr.mxu0 %v6162
      %6437 = vmatpush1.msra.mxu0 %v6161
      %6438 = vmatprep.subr.mxu0 %v6164
      %6439 = vmatpush1.msra.mxu0 %v6163
      %6440 = vmatprep.subr.mxu0 %v6166
      %6441 = vmatpush1.msra.mxu0 %v6165
      %6442 = vmatprep.subr.mxu0 %v6168
      %6443 = vmatpush1.msra.mxu0 %v6167
      %6444 = vmatprep.subr.mxu0 %v6170
      %6445 = vmatpush1.msra.mxu0 %v6169
      %6446 = vmatprep.subr.mxu0 %v6172
      %6447 = vmatpush1.msra.mxu0 %v6171
      %6448 = vmatprep.subr.mxu0 %v6174
      %6449 = vmatpush1.msra.mxu0 %v6173
      %6450 = vmatprep.subr.mxu0 %v6176
      %6451 = vmatpush1.msra.mxu0 %v6175
      %6452 = vmatprep.subr.mxu0 0.0
      %6453 = vmatpush1.msra.mxu0 0.0
      %6454 = vmatprep.subr.mxu0 0.0
      %6455 = vmatpush1.msra.mxu0 0.0
      %6456 = vmatprep.subr.mxu0 0.0
      %6457 = vmatpush1.msra.mxu0 0.0
      %6458 = vmatprep.subr.mxu0 0.0
      %6459 = vmatpush1.msra.mxu0 0.0
      %6460 = vmatprep.subr.mxu0 0.0
      %6461 = vmatpush1.msra.mxu0 0.0
      %6462 = vmatprep.subr.mxu0 0.0
      %6463 = vmatpush1.msra.mxu0 0.0
      %6464 = vmatprep.subr.mxu0 0.0
      %6465 = vmatpush1.msra.mxu0 0.0
      %6466 = vmatprep.subr.mxu0 0.0
      %6467 = vmatpush1.msra.mxu0 0.0
      %6468 = vmatprep.subr.mxu0 0.0
      %6469 = vmatpush1.msra.mxu0 0.0
      %6470 = vmatprep.subr.mxu0 0.0
      %6471 = vmatpush1.msra.mxu0 0.0
      %6472 = vmatprep.subr.mxu0 0.0
      %6473 = vmatpush1.msra.mxu0 0.0
      %6474 = vmatprep.subr.mxu0 0.0
      %6475 = vmatpush1.msra.mxu0 0.0
      %6476 = vmatprep.subr.mxu0 0.0
      %6477 = vmatpush1.msra.mxu0 0.0
      %6478 = vmatprep.subr.mxu0 0.0
      %6479 = vmatpush1.msra.mxu0 0.0
      %6480 = vmatprep.subr.mxu0 0.0
      %6481 = vmatpush1.msra.mxu0 0.0
      %6482 = vmatprep.subr.mxu0 0.0
      %6483 = vmatpush1.msra.mxu0 0.0
      %6484 = vmatprep.subr.mxu0 0.0
      %6485 = vmatpush1.msra.mxu0 0.0
      %6486 = vmatprep.subr.mxu0 0.0
      %6487 = vmatpush1.msra.mxu0 0.0
      %6488 = vmatprep.subr.mxu0 0.0
      %6489 = vmatpush1.msra.mxu0 0.0
      %6490 = vmatprep.subr.mxu0 0.0
      %6491 = vmatpush1.msra.mxu0 0.0
      %6492 = vmatprep.subr.mxu0 0.0
      %6493 = vmatpush1.msra.mxu0 0.0
      %6494 = vmatprep.subr.mxu0 0.0
      %6495 = vmatpush1.msra.mxu0 0.0
      %6496 = vmatprep.subr.mxu0 0.0
      %6497 = vmatpush1.msra.mxu0 0.0
      %6498 = vmatprep.subr.mxu0 0.0
      %6499 = vmatpush1.msra.mxu0 0.0
      %6500 = vmatprep.mubr.f32.mxu0 0.0
      %6501 = vmatmul.mubr.f32.gmra.mrb[0].mxu0 %v6432
      %v6502 = vpop.f32.mrb[0].mxu0
      %v6503 = vadd.f32 0.0, %v6502
      %v6504 = vpop.f32.mrb[0].mxu0
      %v6505 = vadd.f32 0.0, %v6504
      %6506 = vmatprep.mubr.f32.mxu0 0.0
      %6507 = vmatmul.mubr.f32.gmra.mrb[0].mxu0 %v6434
      %v6508 = vpop.f32.mrb[0].mxu0
      %v6509 = vadd.f32 0.0, %v6508
      %v6510 = vpop.f32.mrb[0].mxu0
      %v6511 = vadd.f32 0.0, %v6510
      %6512 = vdwg.mxu0
      %6513 = vrot.lane.b32.xlu0 %v6250, 17
      %v6514 = vpop.permute.xlu0 %6513
      %6515 = vrot.lane.b32.xlu0 %v6256, 17
      %v6516 = vpop.permute.xlu0 %6515
      %6517 = vrot.lane.b32.xlu0 %v6252, 17
      %v6518 = vpop.permute.xlu0 %6517
      %6519 = vrot.lane.b32.xlu0 %v6258, 17
      %v6520 = vpop.permute.xlu0 %6519
      %6521 = vrot.lane.b32.xlu0 %v6335, 17
      %v6522 = vpop.permute.xlu0 %6521
      %6523 = vrot.lane.b32.xlu0 %v6341, 17
      %v6524 = vpop.permute.xlu0 %6523
      %6525 = vrot.lane.b32.xlu0 %v6337, 17
      %v6526 = vpop.permute.xlu0 %6525
      %6527 = vrot.lane.b32.xlu0 %v6343, 17
      %v6528 = vpop.permute.xlu0 %6527
      %6529 = vrot.lane.b32.xlu0 %v6418, 17
      %v6530 = vpop.permute.xlu0 %6529
      %6531 = vrot.lane.b32.xlu0 %v6424, 17
      %v6532 = vpop.permute.xlu0 %6531
      %6533 = vrot.lane.b32.xlu0 %v6420, 17
      %v6534 = vpop.permute.xlu0 %6533
      %6535 = vrot.lane.b32.xlu0 %v6426, 17
      %v6536 = vpop.permute.xlu0 %6535
      %6537 = vrot.lane.b32.xlu0 %v6503, 17
      %v6538 = vpop.permute.xlu0 %6537
      %6539 = vrot.lane.b32.xlu0 %v6509, 17
      %v6540 = vpop.permute.xlu0 %6539
      %6541 = vrot.lane.b32.xlu0 %v6505, 17
      %v6542 = vpop.permute.xlu0 %6541
      %6543 = vrot.lane.b32.xlu0 %v6511, 17
      %v6544 = vpop.permute.xlu0 %6543
      %v6545 = vsel %vm797, %v6538, %v6542
      %v6546 = vsel %vm797, %v6540, %v6544
      %v6547 = vsel %vm797, %v6534, %v6538
      %v6548 = vsel %vm797, %v6536, %v6540
      %v6549 = vsel %vm797, %v6530, %v6534
      %v6550 = vsel %vm797, %v6532, %v6536
      %v6551 = vsel %vm797, %v6526, %v6530
      %v6552 = vsel %vm797, %v6528, %v6532
      %v6553 = vsel %vm797, %v6522, %v6526
      %v6554 = vsel %vm797, %v6524, %v6528
      %v6555 = vsel %vm797, %v6518, %v6522
      %v6556 = vsel %vm797, %v6520, %v6524
      %v6557 = vsel %vm797, %v6514, %v6518
      %v6558 = vsel %vm797, %v6516, %v6520
      %v6559 = vsel %vm797, %v6542, %v6514
      %v6560 = vsel %vm797, %v6544, %v6516
      %v6561 = vmul.f32 %v6559, %v806
      %v6562 = vmul.f32 %v6557, %v807
      %v6563 = vmul.f32 %v6555, %v808
      %v6564 = vmul.f32 %v6553, %v809
      %v6565 = vmul.f32 %v6551, %v810
      %v6566 = vmul.f32 %v6549, %v811
      %v6567 = vmul.f32 %v6547, %v812
      %v6568 = vmul.f32 %v6545, %v813
      %v6569 = vmul.f32 %v6560, %v806
      %v6570 = vmul.f32 %v6558, %v807
      %v6571 = vmul.f32 %v6556, %v808
      %v6572 = vmul.f32 %v6554, %v809
      %v6573 = vmul.f32 %v6552, %v810
      %v6574 = vmul.f32 %v6550, %v811
      %v6575 = vmul.f32 %v6548, %v812
      %v6576 = vmul.f32 %v6546, %v813
      %v6577 = vld [vmem:[%s7] sm:$0xff]
      %v6578 = vld [vmem:[%s7 + $0x8] sm:$0xff]
      %6580 = vset.pattern.permute.xlu0 0
      %6581 = vperm.xlu0 %6580, %v6577
      %v6582 = vpop.permute.xlu0 %6581
      %6585 = vset.pattern.permute.xlu0 0
      %6586 = vperm.xlu0 %6585, %v6578
      %v6587 = vpop.permute.xlu0 %6586
      %v6589 = vmul.f32 %v6582, %v6561
      %v6590 = vmul.f32 %v6582, %v6562
      %v6591 = vmul.f32 %v6582, %v6563
      %v6592 = vmul.f32 %v6582, %v6564
      %v6593 = vmul.f32 %v6582, %v6565
      %v6594 = vmul.f32 %v6582, %v6566
      %v6595 = vmul.f32 %v6582, %v6567
      %v6596 = vmul.f32 %v6582, %v6568
      %v6597 = vmul.f32 %v6587, %v6569
      %v6598 = vmul.f32 %v6587, %v6570
      %v6599 = vmul.f32 %v6587, %v6571
      %v6600 = vmul.f32 %v6587, %v6572
      %v6601 = vmul.f32 %v6587, %v6573
      %v6602 = vmul.f32 %v6587, %v6574
      %v6603 = vmul.f32 %v6587, %v6575
      %v6604 = vmul.f32 %v6587, %v6576
      %6605 = vrot.lane.b32.xlu0 %v6250, 16
      %v6606 = vpop.permute.xlu0 %6605
      %6607 = vrot.lane.b32.xlu0 %v6256, 16
      %v6608 = vpop.permute.xlu0 %6607
      %6609 = vrot.lane.b32.xlu0 %v6252, 16
      %v6610 = vpop.permute.xlu0 %6609
      %6611 = vrot.lane.b32.xlu0 %v6258, 16
      %v6612 = vpop.permute.xlu0 %6611
      %6613 = vrot.lane.b32.xlu0 %v6335, 16
      %v6614 = vpop.permute.xlu0 %6613
      %6615 = vrot.lane.b32.xlu0 %v6341, 16
      %v6616 = vpop.permute.xlu0 %6615
      %6617 = vrot.lane.b32.xlu0 %v6337, 16
      %v6618 = vpop.permute.xlu0 %6617
      %6619 = vrot.lane.b32.xlu0 %v6343, 16
      %v6620 = vpop.permute.xlu0 %6619
      %6621 = vrot.lane.b32.xlu0 %v6418, 16
      %v6622 = vpop.permute.xlu0 %6621
      %6623 = vrot.lane.b32.xlu0 %v6424, 16
      %v6624 = vpop.permute.xlu0 %6623
      %6625 = vrot.lane.b32.xlu0 %v6420, 16
      %v6626 = vpop.permute.xlu0 %6625
      %6627 = vrot.lane.b32.xlu0 %v6426, 16
      %v6628 = vpop.permute.xlu0 %6627
      %6629 = vrot.lane.b32.xlu0 %v6503, 16
      %v6630 = vpop.permute.xlu0 %6629
      %6631 = vrot.lane.b32.xlu0 %v6509, 16
      %v6632 = vpop.permute.xlu0 %6631
      %6633 = vrot.lane.b32.xlu0 %v6505, 16
      %v6634 = vpop.permute.xlu0 %6633
      %6635 = vrot.lane.b32.xlu0 %v6511, 16
      %v6636 = vpop.permute.xlu0 %6635
      %v6637 = vsel %vm898, %v6630, %v6634
      %v6638 = vsel %vm898, %v6632, %v6636
      %v6639 = vsel %vm898, %v6626, %v6630
      %v6640 = vsel %vm898, %v6628, %v6632
      %v6641 = vsel %vm898, %v6622, %v6626
      %v6642 = vsel %vm898, %v6624, %v6628
      %v6643 = vsel %vm898, %v6618, %v6622
      %v6644 = vsel %vm898, %v6620, %v6624
      %v6645 = vsel %vm898, %v6614, %v6618
      %v6646 = vsel %vm898, %v6616, %v6620
      %v6647 = vsel %vm898, %v6610, %v6614
      %v6648 = vsel %vm898, %v6612, %v6616
      %v6649 = vsel %vm898, %v6606, %v6610
      %v6650 = vsel %vm898, %v6608, %v6612
      %v6651 = vsel %vm898, %v6634, %v6606
      %v6652 = vsel %vm898, %v6636, %v6608
      %v6653 = vmul.f32 %v6651, %v679
      %v6654 = vmul.f32 %v6649, %v680
      %v6655 = vmul.f32 %v6647, %v681
      %v6656 = vmul.f32 %v6645, %v682
      %v6657 = vmul.f32 %v6643, %v683
      %v6658 = vmul.f32 %v6641, %v684
      %v6659 = vmul.f32 %v6639, %v685
      %v6660 = vmul.f32 %v6637, %v686
      %v6661 = vmul.f32 %v6652, %v679
      %v6662 = vmul.f32 %v6650, %v680
      %v6663 = vmul.f32 %v6648, %v681
      %v6664 = vmul.f32 %v6646, %v682
      %v6665 = vmul.f32 %v6644, %v683
      %v6666 = vmul.f32 %v6642, %v684
      %v6667 = vmul.f32 %v6640, %v685
      %v6668 = vmul.f32 %v6638, %v686
      %6669 = vset.pattern.permute.xlu0 1
      %6670 = vperm.xlu0 %6669, %v6577
      %v6671 = vpop.permute.xlu0 %6670
      %6673 = vset.pattern.permute.xlu0 1
      %6674 = vperm.xlu0 %6673, %v6578
      %v6675 = vpop.permute.xlu0 %6674
      %v6677 = vmul.f32 %v6671, %v6653
      %v6678 = vmul.f32 %v6671, %v6654
      %v6679 = vmul.f32 %v6671, %v6655
      %v6680 = vmul.f32 %v6671, %v6656
      %v6681 = vmul.f32 %v6671, %v6657
      %v6682 = vmul.f32 %v6671, %v6658
      %v6683 = vmul.f32 %v6671, %v6659
      %v6684 = vmul.f32 %v6671, %v6660
      %v6685 = vmul.f32 %v6675, %v6661
      %v6686 = vmul.f32 %v6675, %v6662
      %v6687 = vmul.f32 %v6675, %v6663
      %v6688 = vmul.f32 %v6675, %v6664
      %v6689 = vmul.f32 %v6675, %v6665
      %v6690 = vmul.f32 %v6675, %v6666
      %v6691 = vmul.f32 %v6675, %v6667
      %v6692 = vmul.f32 %v6675, %v6668
      %v6693 = vadd.f32 %v6589, %v6677
      %v6694 = vadd.f32 %v6590, %v6678
      %v6695 = vadd.f32 %v6591, %v6679
      %v6696 = vadd.f32 %v6592, %v6680
      %v6697 = vadd.f32 %v6593, %v6681
      %v6698 = vadd.f32 %v6594, %v6682
      %v6699 = vadd.f32 %v6595, %v6683
      %v6700 = vadd.f32 %v6596, %v6684
      %v6701 = vadd.f32 %v6597, %v6685
      %v6702 = vadd.f32 %v6598, %v6686
      %v6703 = vadd.f32 %v6599, %v6687
      %v6704 = vadd.f32 %v6600, %v6688
      %v6705 = vadd.f32 %v6601, %v6689
      %v6706 = vadd.f32 %v6602, %v6690
      %v6707 = vadd.f32 %v6603, %v6691
      %v6708 = vadd.f32 %v6604, %v6692
      %6709 = vrot.lane.b32.xlu0 %v6250, 15
      %v6710 = vpop.permute.xlu0 %6709
      %6711 = vrot.lane.b32.xlu0 %v6256, 15
      %v6712 = vpop.permute.xlu0 %6711
      %6713 = vrot.lane.b32.xlu0 %v6252, 15
      %v6714 = vpop.permute.xlu0 %6713
      %6715 = vrot.lane.b32.xlu0 %v6258, 15
      %v6716 = vpop.permute.xlu0 %6715
      %6717 = vrot.lane.b32.xlu0 %v6335, 15
      %v6718 = vpop.permute.xlu0 %6717
      %6719 = vrot.lane.b32.xlu0 %v6341, 15
      %v6720 = vpop.permute.xlu0 %6719
      %6721 = vrot.lane.b32.xlu0 %v6337, 15
      %v6722 = vpop.permute.xlu0 %6721
      %6723 = vrot.lane.b32.xlu0 %v6343, 15
      %v6724 = vpop.permute.xlu0 %6723
      %6725 = vrot.lane.b32.xlu0 %v6418, 15
      %v6726 = vpop.permute.xlu0 %6725
      %6727 = vrot.lane.b32.xlu0 %v6424, 15
      %v6728 = vpop.permute.xlu0 %6727
      %6729 = vrot.lane.b32.xlu0 %v6420, 15
      %v6730 = vpop.permute.xlu0 %6729
      %6731 = vrot.lane.b32.xlu0 %v6426, 15
      %v6732 = vpop.permute.xlu0 %6731
      %6733 = vrot.lane.b32.xlu0 %v6503, 15
      %v6734 = vpop.permute.xlu0 %6733
      %6735 = vrot.lane.b32.xlu0 %v6509, 15
      %v6736 = vpop.permute.xlu0 %6735
      %6737 = vrot.lane.b32.xlu0 %v6505, 15
      %v6738 = vpop.permute.xlu0 %6737
      %6739 = vrot.lane.b32.xlu0 %v6511, 15
      %v6740 = vpop.permute.xlu0 %6739
      %v6741 = vsel %vm1003, %v6734, %v6738
      %v6742 = vsel %vm1003, %v6736, %v6740
      %v6743 = vsel %vm1003, %v6730, %v6734
      %v6744 = vsel %vm1003, %v6732, %v6736
      %v6745 = vsel %vm1003, %v6726, %v6730
      %v6746 = vsel %vm1003, %v6728, %v6732
      %v6747 = vsel %vm1003, %v6722, %v6726
      %v6748 = vsel %vm1003, %v6724, %v6728
      %v6749 = vsel %vm1003, %v6718, %v6722
      %v6750 = vsel %vm1003, %v6720, %v6724
      %v6751 = vsel %vm1003, %v6714, %v6718
      %v6752 = vsel %vm1003, %v6716, %v6720
      %v6753 = vsel %vm1003, %v6710, %v6714
      %v6754 = vsel %vm1003, %v6712, %v6716
      %v6755 = vsel %vm1003, %v6738, %v6710
      %v6756 = vsel %vm1003, %v6740, %v6712
      %v6757 = vmul.f32 %v6755, %v1012
      %v6758 = vmul.f32 %v6753, %v1013
      %v6759 = vmul.f32 %v6751, %v1014
      %v6760 = vmul.f32 %v6749, %v1015
      %v6761 = vmul.f32 %v6747, %v1016
      %v6762 = vmul.f32 %v6745, %v1017
      %v6763 = vmul.f32 %v6743, %v1018
      %v6764 = vmul.f32 %v6741, %v1019
      %v6765 = vmul.f32 %v6756, %v1012
      %v6766 = vmul.f32 %v6754, %v1013
      %v6767 = vmul.f32 %v6752, %v1014
      %v6768 = vmul.f32 %v6750, %v1015
      %v6769 = vmul.f32 %v6748, %v1016
      %v6770 = vmul.f32 %v6746, %v1017
      %v6771 = vmul.f32 %v6744, %v1018
      %v6772 = vmul.f32 %v6742, %v1019
      %6773 = vset.pattern.permute.xlu0 2
      %6774 = vperm.xlu0 %6773, %v6577
      %v6775 = vpop.permute.xlu0 %6774
      %6777 = vset.pattern.permute.xlu0 2
      %6778 = vperm.xlu0 %6777, %v6578
      %v6779 = vpop.permute.xlu0 %6778
      %v6781 = vmul.f32 %v6775, %v6757
      %v6782 = vmul.f32 %v6775, %v6758
      %v6783 = vmul.f32 %v6775, %v6759
      %v6784 = vmul.f32 %v6775, %v6760
      %v6785 = vmul.f32 %v6775, %v6761
      %v6786 = vmul.f32 %v6775, %v6762
      %v6787 = vmul.f32 %v6775, %v6763
      %v6788 = vmul.f32 %v6775, %v6764
      %v6789 = vmul.f32 %v6779, %v6765
      %v6790 = vmul.f32 %v6779, %v6766
      %v6791 = vmul.f32 %v6779, %v6767
      %v6792 = vmul.f32 %v6779, %v6768
      %v6793 = vmul.f32 %v6779, %v6769
      %v6794 = vmul.f32 %v6779, %v6770
      %v6795 = vmul.f32 %v6779, %v6771
      %v6796 = vmul.f32 %v6779, %v6772
      %v6797 = vadd.f32 %v6693, %v6781
      %v6798 = vadd.f32 %v6694, %v6782
      %v6799 = vadd.f32 %v6695, %v6783
      %v6800 = vadd.f32 %v6696, %v6784
      %v6801 = vadd.f32 %v6697, %v6785
      %v6802 = vadd.f32 %v6698, %v6786
      %v6803 = vadd.f32 %v6699, %v6787
      %v6804 = vadd.f32 %v6700, %v6788
      %v6805 = vadd.f32 %v6701, %v6789
      %v6806 = vadd.f32 %v6702, %v6790
      %v6807 = vadd.f32 %v6703, %v6791
      %v6808 = vadd.f32 %v6704, %v6792
      %v6809 = vadd.f32 %v6705, %v6793
      %v6810 = vadd.f32 %v6706, %v6794
      %v6811 = vadd.f32 %v6707, %v6795
      %v6812 = vadd.f32 %v6708, %v6796
      %6813 = vrot.lane.b32.xlu0 %v6250, 1
      %v6814 = vpop.permute.xlu0 %6813
      %6815 = vrot.lane.b32.xlu0 %v6256, 1
      %v6816 = vpop.permute.xlu0 %6815
      %6817 = vrot.lane.b32.xlu0 %v6252, 1
      %v6818 = vpop.permute.xlu0 %6817
      %6819 = vrot.lane.b32.xlu0 %v6258, 1
      %v6820 = vpop.permute.xlu0 %6819
      %6821 = vrot.lane.b32.xlu0 %v6335, 1
      %v6822 = vpop.permute.xlu0 %6821
      %6823 = vrot.lane.b32.xlu0 %v6341, 1
      %v6824 = vpop.permute.xlu0 %6823
      %6825 = vrot.lane.b32.xlu0 %v6337, 1
      %v6826 = vpop.permute.xlu0 %6825
      %6827 = vrot.lane.b32.xlu0 %v6343, 1
      %v6828 = vpop.permute.xlu0 %6827
      %6829 = vrot.lane.b32.xlu0 %v6418, 1
      %v6830 = vpop.permute.xlu0 %6829
      %6831 = vrot.lane.b32.xlu0 %v6424, 1
      %v6832 = vpop.permute.xlu0 %6831
      %6833 = vrot.lane.b32.xlu0 %v6420, 1
      %v6834 = vpop.permute.xlu0 %6833
      %6835 = vrot.lane.b32.xlu0 %v6426, 1
      %v6836 = vpop.permute.xlu0 %6835
      %6837 = vrot.lane.b32.xlu0 %v6503, 1
      %v6838 = vpop.permute.xlu0 %6837
      %6839 = vrot.lane.b32.xlu0 %v6509, 1
      %v6840 = vpop.permute.xlu0 %6839
      %6841 = vrot.lane.b32.xlu0 %v6505, 1
      %v6842 = vpop.permute.xlu0 %6841
      %6843 = vrot.lane.b32.xlu0 %v6511, 1
      %v6844 = vpop.permute.xlu0 %6843
      %v6845 = vsel %vm1116, %v6838, %v6842
      %v6846 = vsel %vm1116, %v6840, %v6844
      %v6847 = vsel %vm1116, %v6834, %v6838
      %v6848 = vsel %vm1116, %v6836, %v6840
      %v6849 = vsel %vm1116, %v6830, %v6834
      %v6850 = vsel %vm1116, %v6832, %v6836
      %v6851 = vsel %vm1116, %v6826, %v6830
      %v6852 = vsel %vm1116, %v6828, %v6832
      %v6853 = vsel %vm1116, %v6822, %v6826
      %v6854 = vsel %vm1116, %v6824, %v6828
      %v6855 = vsel %vm1116, %v6818, %v6822
      %v6856 = vsel %vm1116, %v6820, %v6824
      %v6857 = vsel %vm1116, %v6814, %v6818
      %v6858 = vsel %vm1116, %v6816, %v6820
      %v6859 = vsel %vm1116, %v6842, %v6814
      %v6860 = vsel %vm1116, %v6844, %v6816
      %v6861 = vmul.f32 %v6859, %v631
      %v6862 = vmul.f32 %v6857, %v632
      %v6863 = vmul.f32 %v6855, %v633
      %v6864 = vmul.f32 %v6853, %v634
      %v6865 = vmul.f32 %v6851, %v635
      %v6866 = vmul.f32 %v6849, %v636
      %v6867 = vmul.f32 %v6847, %v637
      %v6868 = vmul.f32 %v6845, %v638
      %v6869 = vmul.f32 %v6860, %v631
      %v6870 = vmul.f32 %v6858, %v632
      %v6871 = vmul.f32 %v6856, %v633
      %v6872 = vmul.f32 %v6854, %v634
      %v6873 = vmul.f32 %v6852, %v635
      %v6874 = vmul.f32 %v6850, %v636
      %v6875 = vmul.f32 %v6848, %v637
      %v6876 = vmul.f32 %v6846, %v638
      %6877 = vset.pattern.permute.xlu0 3
      %6878 = vperm.xlu0 %6877, %v6577
      %v6879 = vpop.permute.xlu0 %6878
      %6881 = vset.pattern.permute.xlu0 3
      %6882 = vperm.xlu0 %6881, %v6578
      %v6883 = vpop.permute.xlu0 %6882
      %v6885 = vmul.f32 %v6879, %v6861
      %v6886 = vmul.f32 %v6879, %v6862
      %v6887 = vmul.f32 %v6879, %v6863
      %v6888 = vmul.f32 %v6879, %v6864
      %v6889 = vmul.f32 %v6879, %v6865
      %v6890 = vmul.f32 %v6879, %v6866
      %v6891 = vmul.f32 %v6879, %v6867
      %v6892 = vmul.f32 %v6879, %v6868
      %v6893 = vmul.f32 %v6883, %v6869
      %v6894 = vmul.f32 %v6883, %v6870
      %v6895 = vmul.f32 %v6883, %v6871
      %v6896 = vmul.f32 %v6883, %v6872
      %v6897 = vmul.f32 %v6883, %v6873
      %v6898 = vmul.f32 %v6883, %v6874
      %v6899 = vmul.f32 %v6883, %v6875
      %v6900 = vmul.f32 %v6883, %v6876
      %v6901 = vadd.f32 %v6797, %v6885
      %v6902 = vadd.f32 %v6798, %v6886
      %v6903 = vadd.f32 %v6799, %v6887
      %v6904 = vadd.f32 %v6800, %v6888
      %v6905 = vadd.f32 %v6801, %v6889
      %v6906 = vadd.f32 %v6802, %v6890
      %v6907 = vadd.f32 %v6803, %v6891
      %v6908 = vadd.f32 %v6804, %v6892
      %v6909 = vadd.f32 %v6805, %v6893
      %v6910 = vadd.f32 %v6806, %v6894
      %v6911 = vadd.f32 %v6807, %v6895
      %v6912 = vadd.f32 %v6808, %v6896
      %v6913 = vadd.f32 %v6809, %v6897
      %v6914 = vadd.f32 %v6810, %v6898
      %v6915 = vadd.f32 %v6811, %v6899
      %v6916 = vadd.f32 %v6812, %v6900
      %6917 = vset.pattern.permute.xlu0 4
      %6918 = vperm.xlu0 %6917, %v6577
      %v6919 = vpop.permute.xlu0 %6918
      %6921 = vset.pattern.permute.xlu0 4
      %6922 = vperm.xlu0 %6921, %v6578
      %v6923 = vpop.permute.xlu0 %6922
      %v6925 = vmul.f32 %v6919, %v6250
      %v6926 = vmul.f32 %v6919, %v6252
      %v6927 = vmul.f32 %v6919, %v6335
      %v6928 = vmul.f32 %v6919, %v6337
      %v6929 = vmul.f32 %v6919, %v6418
      %v6930 = vmul.f32 %v6919, %v6420
      %v6931 = vmul.f32 %v6919, %v6503
      %v6932 = vmul.f32 %v6919, %v6505
      %v6933 = vmul.f32 %v6923, %v6256
      %v6934 = vmul.f32 %v6923, %v6258
      %v6935 = vmul.f32 %v6923, %v6341
      %v6936 = vmul.f32 %v6923, %v6343
      %v6937 = vmul.f32 %v6923, %v6424
      %v6938 = vmul.f32 %v6923, %v6426
      %v6939 = vmul.f32 %v6923, %v6509
      %v6940 = vmul.f32 %v6923, %v6511
      %v6941 = vadd.f32 %v6901, %v6925
      %v6942 = vadd.f32 %v6902, %v6926
      %v6943 = vadd.f32 %v6903, %v6927
      %v6944 = vadd.f32 %v6904, %v6928
      %v6945 = vadd.f32 %v6905, %v6929
      %v6946 = vadd.f32 %v6906, %v6930
      %v6947 = vadd.f32 %v6907, %v6931
      %v6948 = vadd.f32 %v6908, %v6932
      %v6949 = vadd.f32 %v6909, %v6933
      %v6950 = vadd.f32 %v6910, %v6934
      %v6951 = vadd.f32 %v6911, %v6935
      %v6952 = vadd.f32 %v6912, %v6936
      %v6953 = vadd.f32 %v6913, %v6937
      %v6954 = vadd.f32 %v6914, %v6938
      %v6955 = vadd.f32 %v6915, %v6939
      %v6956 = vadd.f32 %v6916, %v6940
      %6957 = vrot.lane.b32.xlu0 %v6250, 127
      %v6958 = vpop.permute.xlu0 %6957
      %6959 = vrot.lane.b32.xlu0 %v6256, 127
      %v6960 = vpop.permute.xlu0 %6959
      %6961 = vrot.lane.b32.xlu0 %v6252, 127
      %v6962 = vpop.permute.xlu0 %6961
      %6963 = vrot.lane.b32.xlu0 %v6258, 127
      %v6964 = vpop.permute.xlu0 %6963
      %6965 = vrot.lane.b32.xlu0 %v6335, 127
      %v6966 = vpop.permute.xlu0 %6965
      %6967 = vrot.lane.b32.xlu0 %v6341, 127
      %v6968 = vpop.permute.xlu0 %6967
      %6969 = vrot.lane.b32.xlu0 %v6337, 127
      %v6970 = vpop.permute.xlu0 %6969
      %6971 = vrot.lane.b32.xlu0 %v6343, 127
      %v6972 = vpop.permute.xlu0 %6971
      %6973 = vrot.lane.b32.xlu0 %v6418, 127
      %v6974 = vpop.permute.xlu0 %6973
      %6975 = vrot.lane.b32.xlu0 %v6424, 127
      %v6976 = vpop.permute.xlu0 %6975
      %6977 = vrot.lane.b32.xlu0 %v6420, 127
      %v6978 = vpop.permute.xlu0 %6977
      %6979 = vrot.lane.b32.xlu0 %v6426, 127
      %v6980 = vpop.permute.xlu0 %6979
      %6981 = vrot.lane.b32.xlu0 %v6503, 127
      %v6982 = vpop.permute.xlu0 %6981
      %6983 = vrot.lane.b32.xlu0 %v6509, 127
      %v6984 = vpop.permute.xlu0 %6983
      %6985 = vrot.lane.b32.xlu0 %v6505, 127
      %v6986 = vpop.permute.xlu0 %6985
      %6987 = vrot.lane.b32.xlu0 %v6511, 127
      %v6988 = vpop.permute.xlu0 %6987
      %v6989 = vsel %vm1261, %v6982, %v6986
      %v6990 = vsel %vm1261, %v6984, %v6988
      %v6991 = vsel %vm1261, %v6978, %v6982
      %v6992 = vsel %vm1261, %v6980, %v6984
      %v6993 = vsel %vm1261, %v6974, %v6978
      %v6994 = vsel %vm1261, %v6976, %v6980
      %v6995 = vsel %vm1261, %v6970, %v6974
      %v6996 = vsel %vm1261, %v6972, %v6976
      %v6997 = vsel %vm1261, %v6966, %v6970
      %v6998 = vsel %vm1261, %v6968, %v6972
      %v6999 = vsel %vm1261, %v6962, %v6966
      %v7000 = vsel %vm1261, %v6964, %v6968
      %v7001 = vsel %vm1261, %v6958, %v6962
      %v7002 = vsel %vm1261, %v6960, %v6964
      %v7003 = vsel %vm1261, %v6986, %v6958
      %v7004 = vsel %vm1261, %v6988, %v6960
      %v7005 = vmul.f32 %v7001, %v655
      %v7006 = vmul.f32 %v6999, %v656
      %v7007 = vmul.f32 %v6997, %v657
      %v7008 = vmul.f32 %v6995, %v658
      %v7009 = vmul.f32 %v6993, %v659
      %v7010 = vmul.f32 %v6991, %v660
      %v7011 = vmul.f32 %v6989, %v661
      %v7012 = vmul.f32 %v7003, %v662
      %v7013 = vmul.f32 %v7002, %v655
      %v7014 = vmul.f32 %v7000, %v656
      %v7015 = vmul.f32 %v6998, %v657
      %v7016 = vmul.f32 %v6996, %v658
      %v7017 = vmul.f32 %v6994, %v659
      %v7018 = vmul.f32 %v6992, %v660
      %v7019 = vmul.f32 %v6990, %v661
      %v7020 = vmul.f32 %v7004, %v662
      %7021 = vset.pattern.permute.xlu0 5
      %7022 = vperm.xlu0 %7021, %v6577
      %v7023 = vpop.permute.xlu0 %7022
      %7025 = vset.pattern.permute.xlu0 5
      %7026 = vperm.xlu0 %7025, %v6578
      %v7027 = vpop.permute.xlu0 %7026
      %v7029 = vmul.f32 %v7023, %v7005
      %v7030 = vmul.f32 %v7023, %v7006
      %v7031 = vmul.f32 %v7023, %v7007
      %v7032 = vmul.f32 %v7023, %v7008
      %v7033 = vmul.f32 %v7023, %v7009
      %v7034 = vmul.f32 %v7023, %v7010
      %v7035 = vmul.f32 %v7023, %v7011
      %v7036 = vmul.f32 %v7023, %v7012
      %v7037 = vmul.f32 %v7027, %v7013
      %v7038 = vmul.f32 %v7027, %v7014
      %v7039 = vmul.f32 %v7027, %v7015
      %v7040 = vmul.f32 %v7027, %v7016
      %v7041 = vmul.f32 %v7027, %v7017
      %v7042 = vmul.f32 %v7027, %v7018
      %v7043 = vmul.f32 %v7027, %v7019
      %v7044 = vmul.f32 %v7027, %v7020
      %v7045 = vadd.f32 %v6941, %v7029
      %v7046 = vadd.f32 %v6942, %v7030
      %v7047 = vadd.f32 %v6943, %v7031
      %v7048 = vadd.f32 %v6944, %v7032
      %v7049 = vadd.f32 %v6945, %v7033
      %v7050 = vadd.f32 %v6946, %v7034
      %v7051 = vadd.f32 %v6947, %v7035
      %v7052 = vadd.f32 %v6948, %v7036
      %v7053 = vadd.f32 %v6949, %v7037
      %v7054 = vadd.f32 %v6950, %v7038
      %v7055 = vadd.f32 %v6951, %v7039
      %v7056 = vadd.f32 %v6952, %v7040
      %v7057 = vadd.f32 %v6953, %v7041
      %v7058 = vadd.f32 %v6954, %v7042
      %v7059 = vadd.f32 %v6955, %v7043
      %v7060 = vadd.f32 %v6956, %v7044
      %7061 = vrot.lane.b32.xlu0 %v6250, 113
      %v7062 = vpop.permute.xlu0 %7061
      %7063 = vrot.lane.b32.xlu0 %v6256, 113
      %v7064 = vpop.permute.xlu0 %7063
      %7065 = vrot.lane.b32.xlu0 %v6252, 113
      %v7066 = vpop.permute.xlu0 %7065
      %7067 = vrot.lane.b32.xlu0 %v6258, 113
      %v7068 = vpop.permute.xlu0 %7067
      %7069 = vrot.lane.b32.xlu0 %v6335, 113
      %v7070 = vpop.permute.xlu0 %7069
      %7071 = vrot.lane.b32.xlu0 %v6341, 113
      %v7072 = vpop.permute.xlu0 %7071
      %7073 = vrot.lane.b32.xlu0 %v6337, 113
      %v7074 = vpop.permute.xlu0 %7073
      %7075 = vrot.lane.b32.xlu0 %v6343, 113
      %v7076 = vpop.permute.xlu0 %7075
      %7077 = vrot.lane.b32.xlu0 %v6418, 113
      %v7078 = vpop.permute.xlu0 %7077
      %7079 = vrot.lane.b32.xlu0 %v6424, 113
      %v7080 = vpop.permute.xlu0 %7079
      %7081 = vrot.lane.b32.xlu0 %v6420, 113
      %v7082 = vpop.permute.xlu0 %7081
      %7083 = vrot.lane.b32.xlu0 %v6426, 113
      %v7084 = vpop.permute.xlu0 %7083
      %7085 = vrot.lane.b32.xlu0 %v6503, 113
      %v7086 = vpop.permute.xlu0 %7085
      %7087 = vrot.lane.b32.xlu0 %v6509, 113
      %v7088 = vpop.permute.xlu0 %7087
      %7089 = vrot.lane.b32.xlu0 %v6505, 113
      %v7090 = vpop.permute.xlu0 %7089
      %7091 = vrot.lane.b32.xlu0 %v6511, 113
      %v7092 = vpop.permute.xlu0 %7091
      %v7093 = vsel %vm1366, %v7086, %v7090
      %v7094 = vsel %vm1366, %v7088, %v7092
      %v7095 = vsel %vm1366, %v7082, %v7086
      %v7096 = vsel %vm1366, %v7084, %v7088
      %v7097 = vsel %vm1366, %v7078, %v7082
      %v7098 = vsel %vm1366, %v7080, %v7084
      %v7099 = vsel %vm1366, %v7074, %v7078
      %v7100 = vsel %vm1366, %v7076, %v7080
      %v7101 = vsel %vm1366, %v7070, %v7074
      %v7102 = vsel %vm1366, %v7072, %v7076
      %v7103 = vsel %vm1366, %v7066, %v7070
      %v7104 = vsel %vm1366, %v7068, %v7072
      %v7105 = vsel %vm1366, %v7062, %v7066
      %v7106 = vsel %vm1366, %v7064, %v7068
      %v7107 = vsel %vm1366, %v7090, %v7062
      %v7108 = vsel %vm1366, %v7092, %v7064
      %v7109 = vmul.f32 %v7105, %v1375
      %v7110 = vmul.f32 %v7103, %v1376
      %v7111 = vmul.f32 %v7101, %v1377
      %v7112 = vmul.f32 %v7099, %v1378
      %v7113 = vmul.f32 %v7097, %v1379
      %v7114 = vmul.f32 %v7095, %v1380
      %v7115 = vmul.f32 %v7093, %v1381
      %v7116 = vmul.f32 %v7107, %v1382
      %v7117 = vmul.f32 %v7106, %v1375
      %v7118 = vmul.f32 %v7104, %v1376
      %v7119 = vmul.f32 %v7102, %v1377
      %v7120 = vmul.f32 %v7100, %v1378
      %v7121 = vmul.f32 %v7098, %v1379
      %v7122 = vmul.f32 %v7096, %v1380
      %v7123 = vmul.f32 %v7094, %v1381
      %v7124 = vmul.f32 %v7108, %v1382
      %7125 = vset.pattern.permute.xlu0 6
      %7126 = vperm.xlu0 %7125, %v6577
      %v7127 = vpop.permute.xlu0 %7126
      %7129 = vset.pattern.permute.xlu0 6
      %7130 = vperm.xlu0 %7129, %v6578
      %v7131 = vpop.permute.xlu0 %7130
      %v7133 = vmul.f32 %v7127, %v7109
      %v7134 = vmul.f32 %v7127, %v7110
      %v7135 = vmul.f32 %v7127, %v7111
      %v7136 = vmul.f32 %v7127, %v7112
      %v7137 = vmul.f32 %v7127, %v7113
      %v7138 = vmul.f32 %v7127, %v7114
      %v7139 = vmul.f32 %v7127, %v7115
      %v7140 = vmul.f32 %v7127, %v7116
      %v7141 = vmul.f32 %v7131, %v7117
      %v7142 = vmul.f32 %v7131, %v7118
      %v7143 = vmul.f32 %v7131, %v7119
      %v7144 = vmul.f32 %v7131, %v7120
      %v7145 = vmul.f32 %v7131, %v7121
      %v7146 = vmul.f32 %v7131, %v7122
      %v7147 = vmul.f32 %v7131, %v7123
      %v7148 = vmul.f32 %v7131, %v7124
      %v7149 = vadd.f32 %v7045, %v7133
      %v7150 = vadd.f32 %v7046, %v7134
      %v7151 = vadd.f32 %v7047, %v7135
      %v7152 = vadd.f32 %v7048, %v7136
      %v7153 = vadd.f32 %v7049, %v7137
      %v7154 = vadd.f32 %v7050, %v7138
      %v7155 = vadd.f32 %v7051, %v7139
      %v7156 = vadd.f32 %v7052, %v7140
      %v7157 = vadd.f32 %v7053, %v7141
      %v7158 = vadd.f32 %v7054, %v7142
      %v7159 = vadd.f32 %v7055, %v7143
      %v7160 = vadd.f32 %v7056, %v7144
      %v7161 = vadd.f32 %v7057, %v7145
      %v7162 = vadd.f32 %v7058, %v7146
      %v7163 = vadd.f32 %v7059, %v7147
      %v7164 = vadd.f32 %v7060, %v7148
      %7165 = vrot.lane.b32.xlu0 %v6250, 112
      %v7166 = vpop.permute.xlu0 %7165
      %7167 = vrot.lane.b32.xlu0 %v6256, 112
      %v7168 = vpop.permute.xlu0 %7167
      %7169 = vrot.lane.b32.xlu0 %v6252, 112
      %v7170 = vpop.permute.xlu0 %7169
      %7171 = vrot.lane.b32.xlu0 %v6258, 112
      %v7172 = vpop.permute.xlu0 %7171
      %7173 = vrot.lane.b32.xlu0 %v6335, 112
      %v7174 = vpop.permute.xlu0 %7173
      %7175 = vrot.lane.b32.xlu0 %v6341, 112
      %v7176 = vpop.permute.xlu0 %7175
      %7177 = vrot.lane.b32.xlu0 %v6337, 112
      %v7178 = vpop.permute.xlu0 %7177
      %7179 = vrot.lane.b32.xlu0 %v6343, 112
      %v7180 = vpop.permute.xlu0 %7179
      %7181 = vrot.lane.b32.xlu0 %v6418, 112
      %v7182 = vpop.permute.xlu0 %7181
      %7183 = vrot.lane.b32.xlu0 %v6424, 112
      %v7184 = vpop.permute.xlu0 %7183
      %7185 = vrot.lane.b32.xlu0 %v6420, 112
      %v7186 = vpop.permute.xlu0 %7185
      %7187 = vrot.lane.b32.xlu0 %v6426, 112
      %v7188 = vpop.permute.xlu0 %7187
      %7189 = vrot.lane.b32.xlu0 %v6503, 112
      %v7190 = vpop.permute.xlu0 %7189
      %7191 = vrot.lane.b32.xlu0 %v6509, 112
      %v7192 = vpop.permute.xlu0 %7191
      %7193 = vrot.lane.b32.xlu0 %v6505, 112
      %v7194 = vpop.permute.xlu0 %7193
      %7195 = vrot.lane.b32.xlu0 %v6511, 112
      %v7196 = vpop.permute.xlu0 %7195
      %v7197 = vsel %vm1479, %v7190, %v7194
      %v7198 = vsel %vm1479, %v7192, %v7196
      %v7199 = vsel %vm1479, %v7186, %v7190
      %v7200 = vsel %vm1479, %v7188, %v7192
      %v7201 = vsel %vm1479, %v7182, %v7186
      %v7202 = vsel %vm1479, %v7184, %v7188
      %v7203 = vsel %vm1479, %v7178, %v7182
      %v7204 = vsel %vm1479, %v7180, %v7184
      %v7205 = vsel %vm1479, %v7174, %v7178
      %v7206 = vsel %vm1479, %v7176, %v7180
      %v7207 = vsel %vm1479, %v7170, %v7174
      %v7208 = vsel %vm1479, %v7172, %v7176
      %v7209 = vsel %vm1479, %v7166, %v7170
      %v7210 = vsel %vm1479, %v7168, %v7172
      %v7211 = vsel %vm1479, %v7194, %v7166
      %v7212 = vsel %vm1479, %v7196, %v7168
      %v7213 = vmul.f32 %v7209, %v703
      %v7214 = vmul.f32 %v7207, %v704
      %v7215 = vmul.f32 %v7205, %v705
      %v7216 = vmul.f32 %v7203, %v706
      %v7217 = vmul.f32 %v7201, %v707
      %v7218 = vmul.f32 %v7199, %v708
      %v7219 = vmul.f32 %v7197, %v709
      %v7220 = vmul.f32 %v7211, %v710
      %v7221 = vmul.f32 %v7210, %v703
      %v7222 = vmul.f32 %v7208, %v704
      %v7223 = vmul.f32 %v7206, %v705
      %v7224 = vmul.f32 %v7204, %v706
      %v7225 = vmul.f32 %v7202, %v707
      %v7226 = vmul.f32 %v7200, %v708
      %v7227 = vmul.f32 %v7198, %v709
      %v7228 = vmul.f32 %v7212, %v710
      %7229 = vset.pattern.permute.xlu0 7
      %7230 = vperm.xlu0 %7229, %v6577
      %v7231 = vpop.permute.xlu0 %7230
      %7233 = vset.pattern.permute.xlu0 7
      %7234 = vperm.xlu0 %7233, %v6578
      %v7235 = vpop.permute.xlu0 %7234
      %v7237 = vmul.f32 %v7231, %v7213
      %v7238 = vmul.f32 %v7231, %v7214
      %v7239 = vmul.f32 %v7231, %v7215
      %v7240 = vmul.f32 %v7231, %v7216
      %v7241 = vmul.f32 %v7231, %v7217
      %v7242 = vmul.f32 %v7231, %v7218
      %v7243 = vmul.f32 %v7231, %v7219
      %v7244 = vmul.f32 %v7231, %v7220
      %v7245 = vmul.f32 %v7235, %v7221
      %v7246 = vmul.f32 %v7235, %v7222
      %v7247 = vmul.f32 %v7235, %v7223
      %v7248 = vmul.f32 %v7235, %v7224
      %v7249 = vmul.f32 %v7235, %v7225
      %v7250 = vmul.f32 %v7235, %v7226
      %v7251 = vmul.f32 %v7235, %v7227
      %v7252 = vmul.f32 %v7235, %v7228
      %v7253 = vadd.f32 %v7149, %v7237
      %v7254 = vadd.f32 %v7150, %v7238
      %v7255 = vadd.f32 %v7151, %v7239
      %v7256 = vadd.f32 %v7152, %v7240
      %v7257 = vadd.f32 %v7153, %v7241
      %v7258 = vadd.f32 %v7154, %v7242
      %v7259 = vadd.f32 %v7155, %v7243
      %v7260 = vadd.f32 %v7156, %v7244
      %v7261 = vadd.f32 %v7157, %v7245
      %v7262 = vadd.f32 %v7158, %v7246
      %v7263 = vadd.f32 %v7159, %v7247
      %v7264 = vadd.f32 %v7160, %v7248
      %v7265 = vadd.f32 %v7161, %v7249
      %v7266 = vadd.f32 %v7162, %v7250
      %v7267 = vadd.f32 %v7163, %v7251
      %v7268 = vadd.f32 %v7164, %v7252
      %7269 = vrot.lane.b32.xlu0 %v6250, 111
      %v7270 = vpop.permute.xlu0 %7269
      %7271 = vrot.lane.b32.xlu0 %v6256, 111
      %v7272 = vpop.permute.xlu0 %7271
      %7273 = vrot.lane.b32.xlu0 %v6252, 111
      %v7274 = vpop.permute.xlu0 %7273
      %7275 = vrot.lane.b32.xlu0 %v6258, 111
      %v7276 = vpop.permute.xlu0 %7275
      %7277 = vrot.lane.b32.xlu0 %v6335, 111
      %v7278 = vpop.permute.xlu0 %7277
      %7279 = vrot.lane.b32.xlu0 %v6341, 111
      %v7280 = vpop.permute.xlu0 %7279
      %7281 = vrot.lane.b32.xlu0 %v6337, 111
      %v7282 = vpop.permute.xlu0 %7281
      %7283 = vrot.lane.b32.xlu0 %v6343, 111
      %v7284 = vpop.permute.xlu0 %7283
      %7285 = vrot.lane.b32.xlu0 %v6418, 111
      %v7286 = vpop.permute.xlu0 %7285
      %7287 = vrot.lane.b32.xlu0 %v6424, 111
      %v7288 = vpop.permute.xlu0 %7287
      %7289 = vrot.lane.b32.xlu0 %v6420, 111
      %v7290 = vpop.permute.xlu0 %7289
      %7291 = vrot.lane.b32.xlu0 %v6426, 111
      %v7292 = vpop.permute.xlu0 %7291
      %7293 = vrot.lane.b32.xlu0 %v6503, 111
      %v7294 = vpop.permute.xlu0 %7293
      %7295 = vrot.lane.b32.xlu0 %v6509, 111
      %v7296 = vpop.permute.xlu0 %7295
      %7297 = vrot.lane.b32.xlu0 %v6505, 111
      %v7298 = vpop.permute.xlu0 %7297
      %7299 = vrot.lane.b32.xlu0 %v6511, 111
      %v7300 = vpop.permute.xlu0 %7299
      %v7301 = vsel %vm1584, %v7294, %v7298
      %v7302 = vsel %vm1584, %v7296, %v7300
      %v7303 = vsel %vm1584, %v7290, %v7294
      %v7304 = vsel %vm1584, %v7292, %v7296
      %v7305 = vsel %vm1584, %v7286, %v7290
      %v7306 = vsel %vm1584, %v7288, %v7292
      %v7307 = vsel %vm1584, %v7282, %v7286
      %v7308 = vsel %vm1584, %v7284, %v7288
      %v7309 = vsel %vm1584, %v7278, %v7282
      %v7310 = vsel %vm1584, %v7280, %v7284
      %v7311 = vsel %vm1584, %v7274, %v7278
      %v7312 = vsel %vm1584, %v7276, %v7280
      %v7313 = vsel %vm1584, %v7270, %v7274
      %v7314 = vsel %vm1584, %v7272, %v7276
      %v7315 = vsel %vm1584, %v7298, %v7270
      %v7316 = vsel %vm1584, %v7300, %v7272
      %v7317 = vmul.f32 %v7313, %v1593
      %v7318 = vmul.f32 %v7311, %v1594
      %v7319 = vmul.f32 %v7309, %v1595
      %v7320 = vmul.f32 %v7307, %v1596
      %v7321 = vmul.f32 %v7305, %v1597
      %v7322 = vmul.f32 %v7303, %v1598
      %v7323 = vmul.f32 %v7301, %v1599
      %v7324 = vmul.f32 %v7315, %v1600
      %v7325 = vmul.f32 %v7314, %v1593
      %v7326 = vmul.f32 %v7312, %v1594
      %v7327 = vmul.f32 %v7310, %v1595
      %v7328 = vmul.f32 %v7308, %v1596
      %v7329 = vmul.f32 %v7306, %v1597
      %v7330 = vmul.f32 %v7304, %v1598
      %v7331 = vmul.f32 %v7302, %v1599
      %v7332 = vmul.f32 %v7316, %v1600
      %7333 = vset.pattern.permute.xlu0 8
      %7334 = vperm.xlu0 %7333, %v6577
      %v7335 = vpop.permute.xlu0 %7334
      %7337 = vset.pattern.permute.xlu0 8
      %7338 = vperm.xlu0 %7337, %v6578
      %v7339 = vpop.permute.xlu0 %7338
      %v7341 = vmul.f32 %v7335, %v7317
      %v7342 = vmul.f32 %v7335, %v7318
      %v7343 = vmul.f32 %v7335, %v7319
      %v7344 = vmul.f32 %v7335, %v7320
      %v7345 = vmul.f32 %v7335, %v7321
      %v7346 = vmul.f32 %v7335, %v7322
      %v7347 = vmul.f32 %v7335, %v7323
      %v7348 = vmul.f32 %v7335, %v7324
      %v7349 = vmul.f32 %v7339, %v7325
      %v7350 = vmul.f32 %v7339, %v7326
      %v7351 = vmul.f32 %v7339, %v7327
      %v7352 = vmul.f32 %v7339, %v7328
      %v7353 = vmul.f32 %v7339, %v7329
      %v7354 = vmul.f32 %v7339, %v7330
      %v7355 = vmul.f32 %v7339, %v7331
      %v7356 = vmul.f32 %v7339, %v7332
      %v7357 = vadd.f32 %v7253, %v7341
      %v7358 = vadd.f32 %v7254, %v7342
      %v7359 = vadd.f32 %v7255, %v7343
      %v7360 = vadd.f32 %v7256, %v7344
      %v7361 = vadd.f32 %v7257, %v7345
      %v7362 = vadd.f32 %v7258, %v7346
      %v7363 = vadd.f32 %v7259, %v7347
      %v7364 = vadd.f32 %v7260, %v7348
      %v7365 = vadd.f32 %v7261, %v7349
      %v7366 = vadd.f32 %v7262, %v7350
      %v7367 = vadd.f32 %v7263, %v7351
      %v7368 = vadd.f32 %v7264, %v7352
      %v7369 = vadd.f32 %v7265, %v7353
      %v7370 = vadd.f32 %v7266, %v7354
      %v7371 = vadd.f32 %v7267, %v7355
      %v7372 = vadd.f32 %v7268, %v7356
      %v7373 = vadd.f32 %v7357, %v7365
      %v7374 = vrot.slane %v7373, 4
      %v7375 = vadd.f32 %v7373, %v7374
      %v7376 = vrot.slane %v7375, 2
      %v7377 = vadd.f32 %v7375, %v7376
      %v7378 = vrot.slane %v7377, 1
      %v7379 = vadd.f32 %v7377, %v7378
      %v7380 = vadd.f32 %v7358, %v7366
      %v7381 = vrot.slane %v7380, 4
      %v7382 = vadd.f32 %v7380, %v7381
      %v7383 = vrot.slane %v7382, 2
      %v7384 = vadd.f32 %v7382, %v7383
      %v7385 = vrot.slane %v7384, 1
      %v7386 = vadd.f32 %v7384, %v7385
      %v7387 = vadd.f32 %v7359, %v7367
      %v7388 = vrot.slane %v7387, 4
      %v7389 = vadd.f32 %v7387, %v7388
      %v7390 = vrot.slane %v7389, 2
      %v7391 = vadd.f32 %v7389, %v7390
      %v7392 = vrot.slane %v7391, 1
      %v7393 = vadd.f32 %v7391, %v7392
      %v7394 = vadd.f32 %v7360, %v7368
      %v7395 = vrot.slane %v7394, 4
      %v7396 = vadd.f32 %v7394, %v7395
      %v7397 = vrot.slane %v7396, 2
      %v7398 = vadd.f32 %v7396, %v7397
      %v7399 = vrot.slane %v7398, 1
      %v7400 = vadd.f32 %v7398, %v7399
      %v7401 = vadd.f32 %v7361, %v7369
      %v7402 = vrot.slane %v7401, 4
      %v7403 = vadd.f32 %v7401, %v7402
      %v7404 = vrot.slane %v7403, 2
      %v7405 = vadd.f32 %v7403, %v7404
      %v7406 = vrot.slane %v7405, 1
      %v7407 = vadd.f32 %v7405, %v7406
      %v7408 = vadd.f32 %v7362, %v7370
      %v7409 = vrot.slane %v7408, 4
      %v7410 = vadd.f32 %v7408, %v7409
      %v7411 = vrot.slane %v7410, 2
      %v7412 = vadd.f32 %v7410, %v7411
      %v7413 = vrot.slane %v7412, 1
      %v7414 = vadd.f32 %v7412, %v7413
      %v7415 = vadd.f32 %v7363, %v7371
      %v7416 = vrot.slane %v7415, 4
      %v7417 = vadd.f32 %v7415, %v7416
      %v7418 = vrot.slane %v7417, 2
      %v7419 = vadd.f32 %v7417, %v7418
      %v7420 = vrot.slane %v7419, 1
      %v7421 = vadd.f32 %v7419, %v7420
      %v7422 = vadd.f32 %v7364, %v7372
      %v7423 = vrot.slane %v7422, 4
      %v7424 = vadd.f32 %v7422, %v7423
      %v7425 = vrot.slane %v7424, 2
      %v7426 = vadd.f32 %v7424, %v7425
      %v7427 = vrot.slane %v7426, 1
      %v7428 = vadd.f32 %v7426, %v7427
      %v7429 = vld [vmem:[#allocation2] sm:$0x1]
      %7431 = vset.pattern.permute.xlu0 0
      %7432 = vperm.xlu0 %7431, %v7429
      %v7433 = vpop.permute.xlu0 %7432
      %v7435 = vlaneseq
      %v7436 = vshrl.u32 %v7435, 7
      %v7437 = vsub.s32 0, %v7436
      %v7438 = vrot.slane %v7433, %v7437
      %v7439 = vadd.f32 %v7379, %v7438
      %v7440 = vadd.f32 %v7386, %v7438
      %v7441 = vadd.f32 %v7393, %v7438
      %v7442 = vadd.f32 %v7400, %v7438
      %v7443 = vadd.f32 %v7407, %v7438
      %v7444 = vadd.f32 %v7414, %v7438
      %v7445 = vadd.f32 %v7421, %v7438
      %v7446 = vadd.f32 %v7428, %v7438
      %v7447 = vmax.f32 %v7439, -1.0
      %v7448 = vmax.f32 %v7440, -1.0
      %v7449 = vmax.f32 %v7441, -1.0
      %v7450 = vmax.f32 %v7442, -1.0
      %v7451 = vmax.f32 %v7443, -1.0
      %v7452 = vmax.f32 %v7444, -1.0
      %v7453 = vmax.f32 %v7445, -1.0
      %v7454 = vmax.f32 %v7446, -1.0
      %v7455 = vmin.f32 %v7447, 1.0
      %v7456 = vmin.f32 %v7448, 1.0
      %v7457 = vmin.f32 %v7449, 1.0
      %v7458 = vmin.f32 %v7450, 1.0
      %v7459 = vmin.f32 %v7451, 1.0
      %v7460 = vmin.f32 %v7452, 1.0
      %v7461 = vmin.f32 %v7453, 1.0
      %v7462 = vmin.f32 %v7454, 1.0
      %v7471 = vcombine.low %v7455, %v7456
      %v7472 = vcombine.low %v7457, %v7458
      %v7473 = vcombine.low %v7459, %v7460
      %v7474 = vcombine.low %v7461, %v7462
      %v7476 = vunpack.c.l.s4 1966171168
      %v7477 = vunpack.c.0.s8 %v7476
      %v7478 = vlaneseq
      %v7479 = vshrl.u32 %v7478, 7
      %v7480 = vsub.s32 %v7477, %v7479
      %v7481 = vrot.slane %v7471, %v7480
      %v7483 = vunpack.c.l.s4 1966171168
      %v7484 = vunpack.c.0.s8 %v7483
      %v7485 = vlaneseq
      %v7486 = vshrl.u32 %v7485, 7
      %v7487 = vsub.s32 %v7484, %v7486
      %v7488 = vrot.slane %v7472, %v7487
      %v7490 = vunpack.c.l.s4 1966171168
      %v7491 = vunpack.c.0.s8 %v7490
      %v7492 = vlaneseq
      %v7493 = vshrl.u32 %v7492, 7
      %v7494 = vsub.s32 %v7491, %v7493
      %v7495 = vrot.slane %v7473, %v7494
      %v7497 = vunpack.c.l.s4 1966171168
      %v7498 = vunpack.c.0.s8 %v7497
      %v7499 = vlaneseq
      %v7500 = vshrl.u32 %v7499, 7
      %v7501 = vsub.s32 %v7498, %v7500
      %v7502 = vrot.slane %v7474, %v7501
      %v7503 = vcombine.low %v7481, %v7488
      %v7504 = vcombine.low %v7495, %v7502
      %v7506 = vunpack.c.l.s4 1966171168
      %v7507 = vunpack.c.0.s8 %v7506
      %v7508 = vlaneseq
      %v7509 = vshrl.u32 %v7508, 7
      %v7510 = vsub.s32 %v7507, %v7509
      %v7511 = vrot.slane %v7503, %v7510
      %v7513 = vunpack.c.l.s4 1966171168
      %v7514 = vunpack.c.0.s8 %v7513
      %v7515 = vlaneseq
      %v7516 = vshrl.u32 %v7515, 7
      %v7517 = vsub.s32 %v7514, %v7516
      %v7518 = vrot.slane %v7504, %v7517
      %v7519 = vcombine.low %v7511, %v7518
      %7521 = vst [vmem:[%s583] sm:$0xff] %v7519
      %p7522 = scmp.lt.s32.totalorder %s32, 1
      %s7523 = scalar_select %p7522, %s32, 1
      %s7524 = smul.addr %s7523, 8
      %s7525 = scalar_lea.vmem %s16, %s7524
      %p7526 = scmp.lt.s32.totalorder %s32, 1
      %s7527 = scalar_select %p7526, %s32, 1
      %s7528 = scalar_lea.vmem %s17, %s7527
      %p7529 = scmp.lt.s32.totalorder %s32, 1
      %s7530 = scalar_select %p7529, %s32, 1
      %s7531 = scalar_lea.vmem %s18, %s7530
      // Predicated region
      $region85: #{simple_vq_autoencoder_forward.1} parent=83 // pred_check
        %p7532 = pneg %p391
      $region86: #{simple_vq_autoencoder_forward.1} parent=83 // pred_check_branch
        %7534 = sbr.rel (%p7532) target = $region88
      $region87: #{simple_vq_autoencoder_forward.1} parent=83 // pred_region
        _
      $region88: #{simple_vq_autoencoder_forward.1} parent=83 // pred_fallthru
        _
      // Predicated region
      $region89: #{simple_vq_autoencoder_forward.1} parent=83 // pred_check
        %p7535 = pneg %p417
      $region90: #{simple_vq_autoencoder_forward.1} parent=83 // pred_check_branch
        %7537 = sbr.rel (%p7535) target = $region92
      $region91: #{simple_vq_autoencoder_forward.1} parent=83 // pred_region
        _
      $region92: #{simple_vq_autoencoder_forward.1} parent=83 // pred_fallthru
        _
      // Predicated region
      $region93: #{simple_vq_autoencoder_forward.1} parent=83 // pred_check
        %p7538 = pneg %p443
      $region94: #{simple_vq_autoencoder_forward.1} parent=83 // pred_check_branch
        %7540 = sbr.rel (%p7538) target = $region96
      $region95: #{simple_vq_autoencoder_forward.1} parent=83 // pred_region
        _
      $region96: #{simple_vq_autoencoder_forward.1} parent=83 // pred_fallthru
        _
    $region84: #{simple_vq_autoencoder_forward.1} parent=5 // pred_fallthru
      _
    %p7541 = scmp.le.s32.totalorder 2, %s27
    // Predicated region
    $region97: #{simple_vq_autoencoder_forward.1} parent=5 // pred_check
      %p7542 = pneg %p7541
    $region98: #{simple_vq_autoencoder_forward.1} parent=5 // pred_check_branch
      %7544 = sbr.rel (%p7542) target = $region100
    $region99: #{simple_vq_autoencoder_forward.1} parent=5 // pred_region
      %s7545 = ssub.s32 %s27, 2
      // Predicated region
      $region101: #{simple_vq_autoencoder_forward.1} parent=99 // pred_check
        %p7546 = pneg %p397
      $region102: #{simple_vq_autoencoder_forward.1} parent=99 // pred_check_branch
        %7548 = sbr.rel (%p7546) target = $region104
      $region103: #{simple_vq_autoencoder_forward.1} parent=99 // pred_region
        %p7549 = scmp.lt.s32.totalorder %s33, 1
        %s7550 = scalar_select %p7549, %s33, 1
        %s7551 = smul.addr %s7550, 8
        %s7552 = scalar_lea.vmem %s16, %s7551
      $region104: #{simple_vq_autoencoder_forward.1} parent=99 // pred_fallthru
        _
      // Predicated region
      $region105: #{simple_vq_autoencoder_forward.1} parent=99 // pred_check
        %p7553 = pneg %p423
      $region106: #{simple_vq_autoencoder_forward.1} parent=99 // pred_check_branch
        %7555 = sbr.rel (%p7553) target = $region108
      $region107: #{simple_vq_autoencoder_forward.1} parent=99 // pred_region
        %p7556 = scmp.lt.s32.totalorder %s33, 1
        %s7557 = scalar_select %p7556, %s33, 1
        %s7558 = scalar_lea.vmem %s17, %s7557
      $region108: #{simple_vq_autoencoder_forward.1} parent=99 // pred_fallthru
        _
      // Predicated region
      $region109: #{simple_vq_autoencoder_forward.1} parent=99 // pred_check
        %p7559 = pneg %p449
      $region110: #{simple_vq_autoencoder_forward.1} parent=99 // pred_check_branch
        %7561 = sbr.rel (%p7559) target = $region112
      $region111: #{simple_vq_autoencoder_forward.1} parent=99 // pred_region
        %p7562 = scmp.lt.s32.totalorder %s33, 1
        %s7563 = scalar_select %p7562, %s33, 1
        %s7564 = scalar_lea.vmem %s18, %s7563
      $region112: #{simple_vq_autoencoder_forward.1} parent=99 // pred_fallthru
        _
    $region100: #{simple_vq_autoencoder_forward.1} parent=5 // pred_fallthru
      _
  $region6: #{simple_vq_autoencoder_forward.1} parent=0 // loop_footer
    %s31 = sadd.s32 1, %s27
  $region7: #{simple_vq_autoencoder_forward.1} parent=0 // loop_footer_branch
    %26 = sbr.rel target = $region3
  $region8: #{simple_vq_autoencoder_forward.1} parent=0 // loop_exit
    _

</llo_original>
